<compile_context>
chip_gen: v6e
topology: v6e:2x2x1
jax: 0.10.0
libtpu: 0.0.40
codegen_flags: <defaults>
</compile_context>

<pallas_src>
import functools

import jax
import jax.numpy as jnp
from jax.experimental import pallas as pl
from jax.experimental.pallas import tpu as pltpu


# ------------------------------- model dims ---------------------------------
L0, C_IN = 48, 1024           # input length, input channels
C1, K1, P1 = 32, 5, 2         # conv1
C2, K2, P2 = 64, 3, 1         # conv2
C3, K3, P3 = 64, 3, 1         # conv3
L1, L2, L3 = 24, 12, 6        # lengths after each MaxPool1d(2, 2)
F1, F2 = 10, 2                # fc1 / fc2 output features


# ------------------------------- kernel -------------------------------------

def cnn1d_kernel(B,
                 x_ref,                      # (48*B, 1024) bf16, L-major batch-minor
                 w1_ref, b1_ref,             # (1024, 160) bf16, (1, 32) f32
                 w2_ref, b2_ref,             # (32, 192),   (1, 64)
                 w3_ref, b3_ref,             # (64, 192),   (1, 64)
                 wf_ref, bf_ref,             # (64, 12) folded fc1@fc2, (1, 2)
                 out_ref,                    # (B, 2)
                 z1_ref, s1_ref,             # (52*B,160), (48,B,32)
                 z2_ref, s2_ref,             # (26*B,192), (24,B,64)
                 z3_ref, s3_ref):            # (14*B,192), (12,B,64)
    f32 = jnp.float32

    # ---- conv1 (K=5, pad=2): one tap-folded bf16 matmul (48B,1024)@(1024,160),
    #      f32 accumulate on the MXU ----
    z1 = jnp.dot(x_ref[...], w1_ref[...], preferred_element_type=f32)
    z1_ref[pl.ds(0, 2 * B), :] = jnp.zeros((2 * B, K1 * C1), f32)       # left pad
    z1_ref[pl.ds(2 * B, L0 * B), :] = z1
    z1_ref[pl.ds((L0 + 2) * B, 2 * B), :] = jnp.zeros((2 * B, K1 * C1), f32)
    acc = z1_ref[pl.ds(0, L0 * B), pl.ds(0, C1)]
    for k in range(1, K1):
        acc = acc + z1_ref[pl.ds(k * B, L0 * B), pl.ds(k * C1, C1)]
    s1_ref[...] = jnp.maximum(acc + b1_ref[...], 0.0).reshape(L0, B, C1)

    # ---- maxpool(2,2) 48->24, conv2 (K=3, pad=1): (24B,32)@(32,192) ----
    h1 = jnp.maximum(s1_ref[pl.ds(0, L1, stride=2), :, :],
                     s1_ref[pl.ds(1, L1, stride=2), :, :])              # (24,B,32)
    z2 = jnp.dot(h1.reshape(L1 * B, C1), w2_ref[...], preferred_element_type=f32)
    z2_ref[pl.ds(0, B), :] = jnp.zeros((B, K2 * C2), f32)
    z2_ref[pl.ds(B, L1 * B), :] = z2
    z2_ref[pl.ds((L1 + 1) * B, B), :] = jnp.zeros((B, K2 * C2), f32)
    acc = z2_ref[pl.ds(0, L1 * B), pl.ds(0, C2)]
    for k in range(1, K2):
        acc = acc + z2_ref[pl.ds(k * B, L1 * B), pl.ds(k * C2, C2)]
    s2_ref[...] = jnp.maximum(acc + b2_ref[...], 0.0).reshape(L1, B, C2)

    # ---- maxpool(2,2) 24->12, conv3 (K=3, pad=1): (12B,64)@(64,192) ----
    h2 = jnp.maximum(s2_ref[pl.ds(0, L2, stride=2), :, :],
                     s2_ref[pl.ds(1, L2, stride=2), :, :])              # (12,B,64)
    z3 = jnp.dot(h2.reshape(L2 * B, C2), w3_ref[...], preferred_element_type=f32)
    z3_ref[pl.ds(0, B), :] = jnp.zeros((B, K3 * C3), f32)
    z3_ref[pl.ds(B, L2 * B), :] = z3
    z3_ref[pl.ds((L2 + 1) * B, B), :] = jnp.zeros((B, K3 * C3), f32)
    acc = z3_ref[pl.ds(0, L2 * B), pl.ds(0, C3)]
    for k in range(1, K3):
        acc = acc + z3_ref[pl.ds(k * B, L2 * B), pl.ds(k * C3, C3)]
    s3_ref[...] = jnp.maximum(acc + b3_ref[...], 0.0).reshape(L2, B, C3)

    # ---- maxpool(2,2) 12->6, folded fc1·fc2: ONE matmul (6B,64)@(64,12),
    #      then sum the 6 (row-block, column-block) diagonal tiles ----
    h3 = jnp.maximum(s3_ref[pl.ds(0, L3, stride=2), :, :],
                     s3_ref[pl.ds(1, L3, stride=2), :, :])              # (6,B,64)
    zf = jnp.dot(h3.reshape(L3 * B, C3), wf_ref[...],
                 preferred_element_type=f32)                            # (6B, 12)
    y = bf_ref[...]                                                     # (1, 2)
    for l in range(L3):
        y = y + zf[l * B:(l + 1) * B, F2 * l:F2 * (l + 1)]
    out_ref[...] = y


# ------------------------------- wrapper ------------------------------------

def cnn1d_forward(x_ncl, params, *, block_b=None):
    """x_ncl: (N, 1024, 48) float32, PyTorch NCL layout.  Returns (N, 2)."""
    N, Cin, L = x_ncl.shape
    assert Cin == C_IN and L == L0

    # batch block: multiple of 16 so M = 48*B is a multiple of 256 (and the
    # L-major flatten stays layout-trivial).  Mid sizes keep Nb >= 2 so the
    # megacore "parallel" grid can use both TCs.
    if block_b is not None:
        B = block_b
    elif N <= 16:
        B = 16
    elif N <= 128:
        B = 32
    else:
        B = 64
    assert B % 16 == 0
    Nb = pl.cdiv(N, B)
    Npad = Nb * B

    xb = x_ncl if Npad == N else jnp.pad(x_ncl, ((0, Npad - N), (0, 0), (0, 0)))
    # NCL -> per-block (l*B + b, ci) layout, fused with the bf16 cast so XLA
    # emits a single f32-read / bf16-write transpose pass (no separate f32
    # relayout pass over HBM):  x_blocks[nb, l*B + b, ci] = x[nb*B+b, ci, l]
    x_blocks = (xb.astype(jnp.bfloat16)
                  .reshape(Nb, B, C_IN, L0)
                  .transpose(0, 3, 1, 2)
                  .reshape(Nb, L0 * B, C_IN))

    # tap-folded conv weights: columns [k*Cout : (k+1)*Cout] hold tap k
    w1 = (jnp.transpose(params["conv1_w"], (1, 2, 0))
             .reshape(C_IN, K1 * C1).astype(jnp.bfloat16))                    # (1024,160) bf16
    w2 = jnp.transpose(params["conv2_w"], (1, 2, 0)).reshape(C1, K2 * C2)    # (32,192)
    w3 = jnp.transpose(params["conv3_w"], (1, 2, 0)).reshape(C2, K3 * C3)    # (64,192)
    b1 = params["conv1_b"].reshape(1, C1)
    b2 = params["conv2_b"].reshape(1, C2)
    b3 = params["conv3_b"].reshape(1, C3)

    # fc1 -> fc2 has no activation in the PyTorch module, so fold them offline.
    # torch flatten of (N, 64, 6) uses index c*6 + l; kernel h3 is (l, b, c).
    wf1 = jnp.transpose(params["fc1_w"].reshape(F1, C3, L3), (2, 1, 0))       # (6,64,10)
    wf_fold = jnp.einsum("lcf,of->lco", wf1, params["fc2_w"])                 # (6,64,2)
    wf = jnp.transpose(wf_fold, (1, 0, 2)).reshape(C3, L3 * F2)               # (64,12)
    bf = (params["fc1_b"] @ params["fc2_w"].T + params["fc2_b"]).reshape(1, F2)

    full = lambda a: pl.BlockSpec(a.shape, lambda n, _nd=a.ndim: (0,) * _nd)

    flops = 2 * Npad * (L0 * C_IN * K1 * C1 + L1 * C1 * K2 * C2
                        + L2 * C2 * K3 * C3 + L3 * C3 * L3 * F2)
    bytes_accessed = (2 * (Npad * L0 * C_IN + w1.size)
                      + 4 * (w2.size + w3.size + wf.size + C1 + C2 + C3 + F2)
                      + 4 * Npad * F2)

    out = pl.pallas_call(
        functools.partial(cnn1d_kernel, B),
        out_shape=jax.ShapeDtypeStruct((Npad, F2), jnp.float32),
        grid=(Nb,),
        in_specs=[
            pl.BlockSpec((None, L0 * B, C_IN), lambda n: (n, 0, 0)),   # x (batch block)
            full(w1), full(b1),
            full(w2), full(b2),
            full(w3), full(b3),
            full(wf), full(bf),
        ],
        out_specs=pl.BlockSpec((B, F2), lambda n: (n, 0)),
        scratch_shapes=[
            pltpu.VMEM(((L0 + 2 * P1) * B, K1 * C1), jnp.float32),   # z1 (padded taps)
            pltpu.VMEM((L0, B, C1), jnp.float32),                    # s1: conv1+relu
            pltpu.VMEM(((L1 + 2 * P2) * B, K2 * C2), jnp.float32),   # z2
            pltpu.VMEM((L1, B, C2), jnp.float32),                    # s2: conv2+relu
            pltpu.VMEM(((L2 + 2 * P3) * B, K3 * C3), jnp.float32),   # z3
            pltpu.VMEM((L2, B, C3), jnp.float32),                    # s3: conv3+relu
        ],
        compiler_params=pltpu.CompilerParams(
            dimension_semantics=("parallel",),
            vmem_limit_bytes=48 * 1024 * 1024),
        cost_estimate=pl.CostEstimate(flops=flops, transcendentals=0,
                                      bytes_accessed=bytes_accessed),
    )(x_blocks, w1, b1, w2, b2, w3, b3, wf, bf)

    return out[:N]


# --------------------------- pure-JAX reference ------------------------------

def ref_forward(x_ncl, p):
    def conv1d(x, w, b, pad):
        y = jax.lax.conv_general_dilated(
            x, w, window_strides=(1,), padding=[(pad, pad)],
            dimension_numbers=("NCH", "OIH", "NCH"))
        return y + b[None, :, None]

    def pool(x):
        N, C, L = x.shape
        return jnp.max(x.reshape(N, C, L // 2, 2), axis=-1)

    h = pool(jnp.maximum(conv1d(x_ncl, p["conv1_w"], p["conv1_b"], 2), 0.0))
    h = pool(jnp.maximum(conv1d(h, p["conv2_w"], p["conv2_b"], 1), 0.0))
    h = pool(jnp.maximum(conv1d(h, p["conv3_w"], p["conv3_b"], 1), 0.0))
    flat = h.reshape(h.shape[0], 64 * 6)
    y = flat @ p["fc1_w"].T + p["fc1_b"]
    return y @ p["fc2_w"].T + p["fc2_b"]


# --------------------------------- main --------------------------------------

if __name__ == "__main__":
    key = jax.random.PRNGKey(0)
    ks = jax.random.split(key, 12)

    # deterministic synthetic parameters (PyTorch weight-shape conventions)
    params = {
        "conv1_w": jax.random.normal(ks[0], (32, 1024, 5), jnp.float32) * 0.02,
        "conv1_b": jax.random.normal(ks[1], (32,), jnp.float32) * 0.02,
        "conv2_w": jax.random.normal(ks[2], (64, 32, 3), jnp.float32) * 0.05,
        "conv2_b": jax.random.normal(ks[3], (64,), jnp.float32) * 0.05,
        "conv3_w": jax.random.normal(ks[4], (64, 64, 3), jnp.float32) * 0.05,
        "conv3_b": jax.random.normal(ks[5], (64,), jnp.float32) * 0.05,
        "fc1_w":   jax.random.normal(ks[6], (10, 64 * 6), jnp.float32) * 0.05,
        "fc1_b":   jax.random.normal(ks[7], (10,), jnp.float32) * 0.05,
        "fc2_w":   jax.random.normal(ks[8], (2, 10), jnp.float32) * 0.1,
        "fc2_b":   jax.random.normal(ks[9], (2,), jnp.float32) * 0.1,
    }

    # input: batch=2, channels=1024, length=48 (48 -> 24 -> 12 -> 6 = 64*6 flatten)
    x = jax.random.normal(ks[10], (2, 1024, 48), jnp.float32)

    out = jax.block_until_ready(cnn1d_forward(x, params))
    ref = jax.block_until_ready(ref_forward(x, params))

    assert out.shape == (2, 2), out.shape
    assert jnp.allclose(out, ref, atol=1e-3, rtol=1e-3), (out, ref)

    print("KERNEL_OK")
</pallas_src>

<mosaic_0001>
module attributes {stable_mosaic.version = 11 : i64} {
  func.func @cnn1d_kernel(%arg0: i32, %arg1: memref<1x768x1024xbf16, #tpu.memory_space<vmem>>, %arg2: memref<1024x160xbf16, #tpu.memory_space<vmem>>, %arg3: memref<1x32xf32, #tpu.memory_space<vmem>>, %arg4: memref<32x192xf32, #tpu.memory_space<vmem>>, %arg5: memref<1x64xf32, #tpu.memory_space<vmem>>, %arg6: memref<64x192xf32, #tpu.memory_space<vmem>>, %arg7: memref<1x64xf32, #tpu.memory_space<vmem>>, %arg8: memref<64x12xf32, #tpu.memory_space<vmem>>, %arg9: memref<1x2xf32, #tpu.memory_space<vmem>>, %arg10: memref<16x2xf32, #tpu.memory_space<vmem>>, %arg11: memref<832x160xf32, #tpu.memory_space<vmem>>, %arg12: memref<48x16x32xf32, #tpu.memory_space<vmem>>, %arg13: memref<416x192xf32, #tpu.memory_space<vmem>>, %arg14: memref<24x16x64xf32, #tpu.memory_space<vmem>>, %arg15: memref<224x192xf32, #tpu.memory_space<vmem>>, %arg16: memref<12x16x64xf32, #tpu.memory_space<vmem>>) attributes {dimension_semantics = [#tpu.dimension_semantics<parallel>], iteration_bounds = array<i64: 1>, scalar_prefetch = 0 : i64, scratch_operands = 6 : i64, tpu.core_type = #tpu.core_type<tc>, window_params = [{transform_indices = @transform_0, window_bounds = array<i64: 1, 768, 1024>}, {pipeline_mode = #tpu.pipeline_mode<synchronous>, transform_indices = @transform_1, window_bounds = array<i64: 1024, 160>}, {pipeline_mode = #tpu.pipeline_mode<synchronous>, transform_indices = @transform_2, window_bounds = array<i64: 1, 32>}, {pipeline_mode = #tpu.pipeline_mode<synchronous>, transform_indices = @transform_3, window_bounds = array<i64: 32, 192>}, {pipeline_mode = #tpu.pipeline_mode<synchronous>, transform_indices = @transform_4, window_bounds = array<i64: 1, 64>}, {pipeline_mode = #tpu.pipeline_mode<synchronous>, transform_indices = @transform_5, window_bounds = array<i64: 64, 192>}, {pipeline_mode = #tpu.pipeline_mode<synchronous>, transform_indices = @transform_6, window_bounds = array<i64: 1, 64>}, {pipeline_mode = #tpu.pipeline_mode<synchronous>, transform_indices = @transform_7, window_bounds = array<i64: 64, 12>}, {pipeline_mode = #tpu.pipeline_mode<synchronous>, transform_indices = @transform_8, window_bounds = array<i64: 1, 2>}, {transform_indices = @transform_9, window_bounds = array<i64: 16, 2>}]} {
    %c0 = arith.constant 0 : index
    %c0_0 = arith.constant 0 : index
    %c0_1 = arith.constant 0 : index
    %0 = vector.load %arg1[%c0, %c0_0, %c0_1] : memref<1x768x1024xbf16, #tpu.memory_space<vmem>>, vector<1x768x1024xbf16>
    %1 = vector.shape_cast %0 : vector<1x768x1024xbf16> to vector<768x1024xbf16>
    %c0_2 = arith.constant 0 : index
    %c0_3 = arith.constant 0 : index
    %2 = vector.load %arg2[%c0_2, %c0_3] : memref<1024x160xbf16, #tpu.memory_space<vmem>>, vector<1024x160xbf16>
    %cst = arith.constant dense<0.000000e+00> : vector<768x160xf32>
    %3 = tpu.matmul %1, %2, %cst {dimension_numbers = #tpu.dot_dimension_numbers<[1], [0], [0], [1], [0, 0, 1, 1], [], []>} : vector<768x1024xbf16>, vector<1024x160xbf16>, vector<768x160xf32> -> vector<768x160xf32>
    %cst_4 = arith.constant 0.000000e+00 : f32
    %4 = vector.broadcast %cst_4 : f32 to vector<32x160xf32>
    %c0_5 = arith.constant 0 : index
    %c0_6 = arith.constant 0 : index
    %5 = vector.load %arg11[%c0_5, %c0_6] : memref<832x160xf32, #tpu.memory_space<vmem>>, vector<32x160xf32>
    tpu.vector_store %arg11[%c0_5, %c0_6], %4 {strides = array<i32>} : memref<832x160xf32, #tpu.memory_space<vmem>>, vector<32x160xf32>,
    %c32 = arith.constant 32 : index
    %c0_7 = arith.constant 0 : index
    %6 = vector.load %arg11[%c32, %c0_7] : memref<832x160xf32, #tpu.memory_space<vmem>>, vector<768x160xf32>
    tpu.vector_store %arg11[%c32, %c0_7], %3 {strides = array<i32>} : memref<832x160xf32, #tpu.memory_space<vmem>>, vector<768x160xf32>,
    %cst_8 = arith.constant 0.000000e+00 : f32
    %7 = vector.broadcast %cst_8 : f32 to vector<32x160xf32>
    %c800 = arith.constant 800 : index
    %c0_9 = arith.constant 0 : index
    %8 = vector.load %arg11[%c800, %c0_9] : memref<832x160xf32, #tpu.memory_space<vmem>>, vector<32x160xf32>
    tpu.vector_store %arg11[%c800, %c0_9], %7 {strides = array<i32>} : memref<832x160xf32, #tpu.memory_space<vmem>>, vector<32x160xf32>,
    %c0_10 = arith.constant 0 : index
    %c0_11 = arith.constant 0 : index
    %9 = vector.load %arg11[%c0_10, %c0_11] : memref<832x160xf32, #tpu.memory_space<vmem>>, vector<768x32xf32>
    %c16 = arith.constant 16 : index
    %c32_12 = arith.constant 32 : index
    %10 = vector.load %arg11[%c16, %c32_12] : memref<832x160xf32, #tpu.memory_space<vmem>>, vector<768x32xf32>
    %11 = arith.addf %9, %10 : vector<768x32xf32>
    %c32_13 = arith.constant 32 : index
    %c64 = arith.constant 64 : index
    %12 = vector.load %arg11[%c32_13, %c64] : memref<832x160xf32, #tpu.memory_space<vmem>>, vector<768x32xf32>
    %13 = arith.addf %11, %12 : vector<768x32xf32>
    %c48 = arith.constant 48 : index
    %c96 = arith.constant 96 : index
    %14 = vector.load %arg11[%c48, %c96] : memref<832x160xf32, #tpu.memory_space<vmem>>, vector<768x32xf32>
    %15 = arith.addf %13, %14 : vector<768x32xf32>
    %c64_14 = arith.constant 64 : index
    %c128 = arith.constant 128 : index
    %16 = vector.load %arg11[%c64_14, %c128] : memref<832x160xf32, #tpu.memory_space<vmem>>, vector<768x32xf32>
    %17 = arith.addf %15, %16 : vector<768x32xf32>
    %c0_15 = arith.constant 0 : index
    %c0_16 = arith.constant 0 : index
    %18 = vector.load %arg3[%c0_15, %c0_16] : memref<1x32xf32, #tpu.memory_space<vmem>>, vector<1x32xf32>
    %19 = vector.broadcast %18 : vector<1x32xf32> to vector<768x32xf32>
    %20 = arith.addf %17, %19 : vector<768x32xf32>
    %cst_17 = arith.constant 0.000000e+00 : f32
    %21 = vector.broadcast %cst_17 : f32 to vector<768x32xf32>
    %22 = arith.maximumf %20, %21 : vector<768x32xf32>
    %23 = vector.shape_cast %22 : vector<768x32xf32> to vector<48x16x32xf32>
    %c0_18 = arith.constant 0 : index
    %c0_19 = arith.constant 0 : index
    %c0_20 = arith.constant 0 : index
    %24 = vector.load %arg12[%c0_18, %c0_19, %c0_20] : memref<48x16x32xf32, #tpu.memory_space<vmem>>, vector<48x16x32xf32>
    tpu.vector_store %arg12[%c0_18, %c0_19, %c0_20], %23 {strides = array<i32>} : memref<48x16x32xf32, #tpu.memory_space<vmem>>, vector<48x16x32xf32>,
    %c0_21 = arith.constant 0 : index
    %c0_22 = arith.constant 0 : index
    %c0_23 = arith.constant 0 : index
    %25 = tpu.strided_load %arg12[%c0_21, %c0_22, %c0_23] {strides = array<i32: 2, 1, 1>} : memref<48x16x32xf32, #tpu.memory_space<vmem>>, vector<24x16x32xf32>
    %c1 = arith.constant 1 : index
    %c0_24 = arith.constant 0 : index
    %c0_25 = arith.constant 0 : index
    %26 = tpu.strided_load %arg12[%c1, %c0_24, %c0_25] {strides = array<i32: 2, 1, 1>} : memref<48x16x32xf32, #tpu.memory_space<vmem>>, vector<24x16x32xf32>
    %27 = arith.maximumf %25, %26 : vector<24x16x32xf32>
    %28 = vector.shape_cast %27 : vector<24x16x32xf32> to vector<384x32xf32>
    %c0_26 = arith.constant 0 : index
    %c0_27 = arith.constant 0 : index
    %29 = vector.load %arg4[%c0_26, %c0_27] : memref<32x192xf32, #tpu.memory_space<vmem>>, vector<32x192xf32>
    %cst_28 = arith.constant dense<0.000000e+00> : vector<384x192xf32>
    %30 = tpu.matmul %28, %29, %cst_28 {dimension_numbers = #tpu.dot_dimension_numbers<[1], [0], [0], [1], [0, 0, 1, 1], [], []>} : vector<384x32xf32>, vector<32x192xf32>, vector<384x192xf32> -> vector<384x192xf32>
    %cst_29 = arith.constant 0.000000e+00 : f32
    %31 = vector.broadcast %cst_29 : f32 to vector<16x192xf32>
    %c0_30 = arith.constant 0 : index
    %c0_31 = arith.constant 0 : index
    %32 = vector.load %arg13[%c0_30, %c0_31] : memref<416x192xf32, #tpu.memory_space<vmem>>, vector<16x192xf32>
    tpu.vector_store %arg13[%c0_30, %c0_31], %31 {strides = array<i32>} : memref<416x192xf32, #tpu.memory_space<vmem>>, vector<16x192xf32>,
    %c16_32 = arith.constant 16 : index
    %c0_33 = arith.constant 0 : index
    %33 = vector.load %arg13[%c16_32, %c0_33] : memref<416x192xf32, #tpu.memory_space<vmem>>, vector<384x192xf32>
    tpu.vector_store %arg13[%c16_32, %c0_33], %30 {strides = array<i32>} : memref<416x192xf32, #tpu.memory_space<vmem>>, vector<384x192xf32>,
    %cst_34 = arith.constant 0.000000e+00 : f32
    %34 = vector.broadcast %cst_34 : f32 to vector<16x192xf32>
    %c400 = arith.constant 400 : index
    %c0_35 = arith.constant 0 : index
    %35 = vector.load %arg13[%c400, %c0_35] : memref<416x192xf32, #tpu.memory_space<vmem>>, vector<16x192xf32>
    tpu.vector_store %arg13[%c400, %c0_35], %34 {strides = array<i32>} : memref<416x192xf32, #tpu.memory_space<vmem>>, vector<16x192xf32>,
    %c0_36 = arith.constant 0 : index
    %c0_37 = arith.constant 0 : index
    %36 = vector.load %arg13[%c0_36, %c0_37] : memref<416x192xf32, #tpu.memory_space<vmem>>, vector<384x64xf32>
    %c16_38 = arith.constant 16 : index
    %c64_39 = arith.constant 64 : index
    %37 = vector.load %arg13[%c16_38, %c64_39] : memref<416x192xf32, #tpu.memory_space<vmem>>, vector<384x64xf32>
    %38 = arith.addf %36, %37 : vector<384x64xf32>
    %c32_40 = arith.constant 32 : index
    %c128_41 = arith.constant 128 : index
    %39 = vector.load %arg13[%c32_40, %c128_41] : memref<416x192xf32, #tpu.memory_space<vmem>>, vector<384x64xf32>
    %40 = arith.addf %38, %39 : vector<384x64xf32>
    %c0_42 = arith.constant 0 : index
    %c0_43 = arith.constant 0 : index
    %41 = vector.load %arg5[%c0_42, %c0_43] : memref<1x64xf32, #tpu.memory_space<vmem>>, vector<1x64xf32>
    %42 = vector.broadcast %41 : vector<1x64xf32> to vector<384x64xf32>
    %43 = arith.addf %40, %42 : vector<384x64xf32>
    %cst_44 = arith.constant 0.000000e+00 : f32
    %44 = vector.broadcast %cst_44 : f32 to vector<384x64xf32>
    %45 = arith.maximumf %43, %44 : vector<384x64xf32>
    %46 = vector.shape_cast %45 : vector<384x64xf32> to vector<24x16x64xf32>
    %c0_45 = arith.constant 0 : index
    %c0_46 = arith.constant 0 : index
    %c0_47 = arith.constant 0 : index
    %47 = vector.load %arg14[%c0_45, %c0_46, %c0_47] : memref<24x16x64xf32, #tpu.memory_space<vmem>>, vector<24x16x64xf32>
    tpu.vector_store %arg14[%c0_45, %c0_46, %c0_47], %46 {strides = array<i32>} : memref<24x16x64xf32, #tpu.memory_space<vmem>>, vector<24x16x64xf32>,
    %c0_48 = arith.constant 0 : index
    %c0_49 = arith.constant 0 : index
    %c0_50 = arith.constant 0 : index
    %48 = tpu.strided_load %arg14[%c0_48, %c0_49, %c0_50] {strides = array<i32: 2, 1, 1>} : memref<24x16x64xf32, #tpu.memory_space<vmem>>, vector<12x16x64xf32>
    %c1_51 = arith.constant 1 : index
    %c0_52 = arith.constant 0 : index
    %c0_53 = arith.constant 0 : index
    %49 = tpu.strided_load %arg14[%c1_51, %c0_52, %c0_53] {strides = array<i32: 2, 1, 1>} : memref<24x16x64xf32, #tpu.memory_space<vmem>>, vector<12x16x64xf32>
    %50 = arith.maximumf %48, %49 : vector<12x16x64xf32>
    %51 = vector.shape_cast %50 : vector<12x16x64xf32> to vector<192x64xf32>
    %c0_54 = arith.constant 0 : index
    %c0_55 = arith.constant 0 : index
    %52 = vector.load %arg6[%c0_54, %c0_55] : memref<64x192xf32, #tpu.memory_space<vmem>>, vector<64x192xf32>
    %cst_56 = arith.constant dense<0.000000e+00> : vector<192x192xf32>
    %53 = tpu.matmul %51, %52, %cst_56 {dimension_numbers = #tpu.dot_dimension_numbers<[1], [0], [0], [1], [0, 0, 1, 1], [], []>} : vector<192x64xf32>, vector<64x192xf32>, vector<192x192xf32> -> vector<192x192xf32>
    %cst_57 = arith.constant 0.000000e+00 : f32
    %54 = vector.broadcast %cst_57 : f32 to vector<16x192xf32>
    %c0_58 = arith.constant 0 : index
    %c0_59 = arith.constant 0 : index
    %55 = vector.load %arg15[%c0_58, %c0_59] : memref<224x192xf32, #tpu.memory_space<vmem>>, vector<16x192xf32>
    tpu.vector_store %arg15[%c0_58, %c0_59], %54 {strides = array<i32>} : memref<224x192xf32, #tpu.memory_space<vmem>>, vector<16x192xf32>,
    %c16_60 = arith.constant 16 : index
    %c0_61 = arith.constant 0 : index
    %56 = vector.load %arg15[%c16_60, %c0_61] : memref<224x192xf32, #tpu.memory_space<vmem>>, vector<192x192xf32>
    tpu.vector_store %arg15[%c16_60, %c0_61], %53 {strides = array<i32>} : memref<224x192xf32, #tpu.memory_space<vmem>>, vector<192x192xf32>,
    %cst_62 = arith.constant 0.000000e+00 : f32
    %57 = vector.broadcast %cst_62 : f32 to vector<16x192xf32>
    %c208 = arith.constant 208 : index
    %c0_63 = arith.constant 0 : index
    %58 = vector.load %arg15[%c208, %c0_63] : memref<224x192xf32, #tpu.memory_space<vmem>>, vector<16x192xf32>
    tpu.vector_store %arg15[%c208, %c0_63], %57 {strides = array<i32>} : memref<224x192xf32, #tpu.memory_space<vmem>>, vector<16x192xf32>,
    %c0_64 = arith.constant 0 : index
    %c0_65 = arith.constant 0 : index
    %59 = vector.load %arg15[%c0_64, %c0_65] : memref<224x192xf32, #tpu.memory_space<vmem>>, vector<192x64xf32>
    %c16_66 = arith.constant 16 : index
    %c64_67 = arith.constant 64 : index
    %60 = vector.load %arg15[%c16_66, %c64_67] : memref<224x192xf32, #tpu.memory_space<vmem>>, vector<192x64xf32>
    %61 = arith.addf %59, %60 : vector<192x64xf32>
    %c32_68 = arith.constant 32 : index
    %c128_69 = arith.constant 128 : index
    %62 = vector.load %arg15[%c32_68, %c128_69] : memref<224x192xf32, #tpu.memory_space<vmem>>, vector<192x64xf32>
    %63 = arith.addf %61, %62 : vector<192x64xf32>
    %c0_70 = arith.constant 0 : index
    %c0_71 = arith.constant 0 : index
    %64 = vector.load %arg7[%c0_70, %c0_71] : memref<1x64xf32, #tpu.memory_space<vmem>>, vector<1x64xf32>
    %65 = vector.broadcast %64 : vector<1x64xf32> to vector<192x64xf32>
    %66 = arith.addf %63, %65 : vector<192x64xf32>
    %cst_72 = arith.constant 0.000000e+00 : f32
    %67 = vector.broadcast %cst_72 : f32 to vector<192x64xf32>
    %68 = arith.maximumf %66, %67 : vector<192x64xf32>
    %69 = vector.shape_cast %68 : vector<192x64xf32> to vector<12x16x64xf32>
    %c0_73 = arith.constant 0 : index
    %c0_74 = arith.constant 0 : index
    %c0_75 = arith.constant 0 : index
    %70 = vector.load %arg16[%c0_73, %c0_74, %c0_75] : memref<12x16x64xf32, #tpu.memory_space<vmem>>, vector<12x16x64xf32>
    tpu.vector_store %arg16[%c0_73, %c0_74, %c0_75], %69 {strides = array<i32>} : memref<12x16x64xf32, #tpu.memory_space<vmem>>, vector<12x16x64xf32>,
    %c0_76 = arith.constant 0 : index
    %c0_77 = arith.constant 0 : index
    %c0_78 = arith.constant 0 : index
    %71 = tpu.strided_load %arg16[%c0_76, %c0_77, %c0_78] {strides = array<i32: 2, 1, 1>} : memref<12x16x64xf32, #tpu.memory_space<vmem>>, vector<6x16x64xf32>
    %c1_79 = arith.constant 1 : index
    %c0_80 = arith.constant 0 : index
    %c0_81 = arith.constant 0 : index
    %72 = tpu.strided_load %arg16[%c1_79, %c0_80, %c0_81] {strides = array<i32: 2, 1, 1>} : memref<12x16x64xf32, #tpu.memory_space<vmem>>, vector<6x16x64xf32>
    %73 = arith.maximumf %71, %72 : vector<6x16x64xf32>
    %74 = vector.shape_cast %73 : vector<6x16x64xf32> to vector<96x64xf32>
    %c0_82 = arith.constant 0 : index
    %c0_83 = arith.constant 0 : index
    %75 = vector.load %arg8[%c0_82, %c0_83] : memref<64x12xf32, #tpu.memory_space<vmem>>, vector<64x12xf32>
    %cst_84 = arith.constant dense<0.000000e+00> : vector<96x12xf32>
    %76 = tpu.matmul %74, %75, %cst_84 {dimension_numbers = #tpu.dot_dimension_numbers<[1], [0], [0], [1], [0, 0, 1, 1], [], []>} : vector<96x64xf32>, vector<64x12xf32>, vector<96x12xf32> -> vector<96x12xf32>
    %c0_85 = arith.constant 0 : index
    %c0_86 = arith.constant 0 : index
    %77 = vector.load %arg9[%c0_85, %c0_86] : memref<1x2xf32, #tpu.memory_space<vmem>>, vector<1x2xf32>
    %78 = vector.extract_strided_slice %76 {offsets = [0, 0], sizes = [16, 2], strides = [1, 1]} : vector<96x12xf32> to vector<16x2xf32>
    %79 = vector.broadcast %77 : vector<1x2xf32> to vector<16x2xf32>
    %80 = arith.addf %79, %78 : vector<16x2xf32>
    %81 = vector.extract_strided_slice %76 {offsets = [16, 2], sizes = [16, 2], strides = [1, 1]} : vector<96x12xf32> to vector<16x2xf32>
    %82 = arith.addf %80, %81 : vector<16x2xf32>
    %83 = vector.extract_strided_slice %76 {offsets = [32, 4], sizes = [16, 2], strides = [1, 1]} : vector<96x12xf32> to vector<16x2xf32>
    %84 = arith.addf %82, %83 : vector<16x2xf32>
    %85 = vector.extract_strided_slice %76 {offsets = [48, 6], sizes = [16, 2], strides = [1, 1]} : vector<96x12xf32> to vector<16x2xf32>
    %86 = arith.addf %84, %85 : vector<16x2xf32>
    %87 = vector.extract_strided_slice %76 {offsets = [64, 8], sizes = [16, 2], strides = [1, 1]} : vector<96x12xf32> to vector<16x2xf32>
    %88 = arith.addf %86, %87 : vector<16x2xf32>
    %89 = vector.extract_strided_slice %76 {offsets = [80, 10], sizes = [16, 2], strides = [1, 1]} : vector<96x12xf32> to vector<16x2xf32>
    %90 = arith.addf %88, %89 : vector<16x2xf32>
    %c0_87 = arith.constant 0 : index
    %c0_88 = arith.constant 0 : index
    %91 = vector.load %arg10[%c0_87, %c0_88] : memref<16x2xf32, #tpu.memory_space<vmem>>, vector<16x2xf32>
    tpu.vector_store %arg10[%c0_87, %c0_88], %90 {strides = array<i32>} : memref<16x2xf32, #tpu.memory_space<vmem>>, vector<16x2xf32>,
    return
  }
  func.func @transform_0(%arg0: i32) -> (i32, i32, i32) {
    %c0_i32 = arith.constant 0 : i32
    %c0_i32_0 = arith.constant 0 : i32
    %c0_i32_1 = arith.constant 0 : i32
    return %arg0, %c0_i32, %c0_i32_0 : i32, i32, i32
  }
  func.func @transform_1(%arg0: i32) -> (i32, i32) {
    %c0_i32 = arith.constant 0 : i32
    %c0_i32_0 = arith.constant 0 : i32
    %c0_i32_1 = arith.constant 0 : i32
    return %c0_i32, %c0_i32_0 : i32, i32
  }
  func.func @transform_2(%arg0: i32) -> (i32, i32) {
    %c0_i32 = arith.constant 0 : i32
    %c0_i32_0 = arith.constant 0 : i32
    %c0_i32_1 = arith.constant 0 : i32
    return %c0_i32, %c0_i32_0 : i32, i32
  }
  func.func @transform_3(%arg0: i32) -> (i32, i32) {
    %c0_i32 = arith.constant 0 : i32
    %c0_i32_0 = arith.constant 0 : i32
    %c0_i32_1 = arith.constant 0 : i32
    return %c0_i32, %c0_i32_0 : i32, i32
  }
  func.func @transform_4(%arg0: i32) -> (i32, i32) {
    %c0_i32 = arith.constant 0 : i32
    %c0_i32_0 = arith.constant 0 : i32
    %c0_i32_1 = arith.constant 0 : i32
    return %c0_i32, %c0_i32_0 : i32, i32
  }
  func.func @transform_5(%arg0: i32) -> (i32, i32) {
    %c0_i32 = arith.constant 0 : i32
    %c0_i32_0 = arith.constant 0 : i32
    %c0_i32_1 = arith.constant 0 : i32
    return %c0_i32, %c0_i32_0 : i32, i32
  }
  func.func @transform_6(%arg0: i32) -> (i32, i32) {
    %c0_i32 = arith.constant 0 : i32
    %c0_i32_0 = arith.constant 0 : i32
    %c0_i32_1 = arith.constant 0 : i32
    return %c0_i32, %c0_i32_0 : i32, i32
  }
  func.func @transform_7(%arg0: i32) -> (i32, i32) {
    %c0_i32 = arith.constant 0 : i32
    %c0_i32_0 = arith.constant 0 : i32
    %c0_i32_1 = arith.constant 0 : i32
    return %c0_i32, %c0_i32_0 : i32, i32
  }
  func.func @transform_8(%arg0: i32) -> (i32, i32) {
    %c0_i32 = arith.constant 0 : i32
    %c0_i32_0 = arith.constant 0 : i32
    %c0_i32_1 = arith.constant 0 : i32
    return %c0_i32, %c0_i32_0 : i32, i32
  }
  func.func @transform_9(%arg0: i32) -> (i32, i32) {
    %c0_i32 = arith.constant 0 : i32
    %c0_i32_0 = arith.constant 0 : i32
    return %arg0, %c0_i32 : i32, i32
  }
}

</mosaic_0001>

<llo_original>
// kernel: tpu_custom_call.1
$region0: #{tpu_custom_call.1}
  #allocation0 [shape = 'u32[]', space=smem, size = 0x4, offset = 0x4, fixed_abs, tag = 'smem constant byte address 0x4 - core index']
  #allocation1 [shape = 'u32[144,128]{1,0:T(1,128)}', space=vmem, size = 0x12000, scoped, tag = 'internal scratch']
  #allocation2 [shape = 'f32[832,160]{1,0:T(8,128)}', space=vmem, size = 0xd0000, scoped, tag = 'scratch operand']
  #allocation3 [shape = 'f32[48,16,32]{2,1,0:T(8,128)}', space=vmem, size = 0x60000, scoped, tag = 'scratch operand']
  #allocation4 [shape = 'f32[416,192]{1,0:T(8,128)}', space=vmem, size = 0x68000, scoped, tag = 'scratch operand']
  #allocation5 [shape = 'f32[24,16,64]{2,1,0:T(8,128)}', space=vmem, size = 0x30000, scoped, tag = 'scratch operand']
  #allocation6 [shape = 'f32[224,192]{1,0:T(8,128)}', space=vmem, size = 0x38000, scoped, tag = 'scratch operand']
  #allocation7 [shape = 'f32[12,16,64]{2,1,0:T(8,128)}', space=vmem, size = 0x18000, scoped, tag = 'scratch operand']
  %s0 = inlined_call_operand.hbm [shape: bf16[1,768,1024], index: 0, kind: input, shape index: {}]
  %s1 = inlined_call_operand.vmem [shape: bf16[1024,160], index: 1, kind: input, shape index: {}]
  %s2 = inlined_call_operand.hbm [shape: f32[1,32], index: 2, kind: input, shape index: {}]
  %s3 = inlined_call_operand.hbm [shape: f32[32,192], index: 3, kind: input, shape index: {}]
  %s4 = inlined_call_operand.hbm [shape: f32[1,64], index: 4, kind: input, shape index: {}]
  %s5 = inlined_call_operand.hbm [shape: f32[64,192], index: 5, kind: input, shape index: {}]
  %s6 = inlined_call_operand.hbm [shape: f32[1,64], index: 6, kind: input, shape index: {}]
  %s7 = inlined_call_operand.vmem [shape: f32[64,12], index: 7, kind: input, shape index: {}]
  %s8 = inlined_call_operand.hbm [shape: f32[1,2], index: 8, kind: input, shape index: {}]
  %s9 = inlined_call_operand.vmem [shape: f32[16,2], index: 9, kind: output, shape index: {}]
  %s10 = sld [smem:[#allocation0]]
  $region74: #{tpu_custom_call.1} parent=0
    _
  %s12 = ssub.s32 1, %s10
  %s13 = scalar_select 0, %s12, %s10
  $region1: #{tpu_custom_call.1} parent=0
    #allocation8 [shape = 'u8[1572864]{0}', space=vmem, size = 0x180000, scoped, tag = 'input window, operand 0, single buffered']
    #allocation9 [shape = 's32[1]{0}', space=sflag, size = 0x4, scoped, tag = 'scoped memory for tpu_custom_call.1']
    #allocation10 [shape = 'u8[512]{0}', space=vmem, size = 0x400, scoped, tag = 'input window, operand 2, single buffered']
    #allocation11 [shape = 's32[1]{0}', space=sflag, size = 0x4, scoped, tag = 'scoped memory for tpu_custom_call.1']
    #allocation12 [shape = 'u8[32768]{0}', space=vmem, size = 0x8000, scoped, tag = 'input window, operand 3, single buffered']
    #allocation13 [shape = 'u8[512]{0}', space=vmem, size = 0x400, scoped, tag = 'input window, operand 4, single buffered']
    #allocation14 [shape = 's32[1]{0}', space=sflag, size = 0x4, scoped, tag = 'scoped memory for tpu_custom_call.1']
    #allocation15 [shape = 'u8[65536]{0}', space=vmem, size = 0x10000, scoped, tag = 'input window, operand 5, single buffered']
    #allocation16 [shape = 'u8[512]{0}', space=vmem, size = 0x400, scoped, tag = 'input window, operand 6, single buffered']
    #allocation17 [shape = 's32[1]{0}', space=sflag, size = 0x4, scoped, tag = 'scoped memory for tpu_custom_call.1']
    #allocation18 [shape = 'u8[512]{0}', space=vmem, size = 0x400, scoped, tag = 'input window, operand 8, single buffered']
    %14 = vsyncpa [#allocation9], 0
    %15 = vsyncpa [#allocation11], 0
    %16 = vsyncpa [#allocation14], 0
    %17 = vsyncpa [#allocation17], 0
    // Predicated region
    $region2: #{tpu_custom_call.1} parent=1 // pred_check
      _
    $region3: #{tpu_custom_call.1} parent=1 // pred_check_branch
      %19 = sbr.rel (0) target = $region5
    $region4: #{tpu_custom_call.1} parent=1 // pred_region
      %s21 = ssub.s32 49152, 49152
      %22 = vsyncadd [#allocation9], %s21
      %s23 = sshll.u32 [#allocation8], 4
      %s24 = int_to_ptr.vmem [resolvable:$true] %s23
      %29 = dma.hbm_to_vmem [thread:$0]  %s0, 49152, %s24, [#allocation9], 512, 512, 32
    $region5: #{tpu_custom_call.1} parent=1 // pred_fallthru
      _
    // Predicated region
    $region6: #{tpu_custom_call.1} parent=1 // pred_check
      _
    $region7: #{tpu_custom_call.1} parent=1 // pred_check_branch
      %31 = sbr.rel (0) target = $region9
    $region8: #{tpu_custom_call.1} parent=1 // pred_region
      _
    $region9: #{tpu_custom_call.1} parent=1 // pred_fallthru
      _
    // Predicated region
    $region10: #{tpu_custom_call.1} parent=1 // pred_check
      _
    $region11: #{tpu_custom_call.1} parent=1 // pred_check_branch
      %33 = sbr.rel (0) target = $region13
    $region12: #{tpu_custom_call.1} parent=1 // pred_region
      %s35 = ssub.s32 16, 16
      %36 = vsyncadd [#allocation11], %s35
      %s38 = sshll.u32 [#allocation10], 4
      %s39 = int_to_ptr.vmem [resolvable:$true] %s38
      %41 = dma.hbm_to_vmem [thread:$0]  %s2, 16, %s39, [#allocation11]
    $region13: #{tpu_custom_call.1} parent=1 // pred_fallthru
      _
    // Predicated region
    $region14: #{tpu_custom_call.1} parent=1 // pred_check
      _
    $region15: #{tpu_custom_call.1} parent=1 // pred_check_branch
      %43 = sbr.rel (0) target = $region17
    $region16: #{tpu_custom_call.1} parent=1 // pred_region
      %s45 = ssub.s32 1024, 1024
      %46 = vsyncadd [#allocation11], %s45
      %s47 = sshll.u32 [#allocation12], 4
      %s48 = int_to_ptr.vmem [resolvable:$true] %s47
      %53 = dma.hbm_to_vmem [thread:$0]  %s3, 1024, %s48, [#allocation11], 256, 256, 16
    $region17: #{tpu_custom_call.1} parent=1 // pred_fallthru
      _
    // Predicated region
    $region18: #{tpu_custom_call.1} parent=1 // pred_check
      _
    $region19: #{tpu_custom_call.1} parent=1 // pred_check_branch
      %55 = sbr.rel (0) target = $region21
    $region20: #{tpu_custom_call.1} parent=1 // pred_region
      %s57 = ssub.s32 16, 16
      %58 = vsyncadd [#allocation14], %s57
      %s60 = sshll.u32 [#allocation13], 4
      %s61 = int_to_ptr.vmem [resolvable:$true] %s60
      %63 = dma.hbm_to_vmem [thread:$0]  %s4, 16, %s61, [#allocation14]
    $region21: #{tpu_custom_call.1} parent=1 // pred_fallthru
      _
    // Predicated region
    $region22: #{tpu_custom_call.1} parent=1 // pred_check
      _
    $region23: #{tpu_custom_call.1} parent=1 // pred_check_branch
      %65 = sbr.rel (0) target = $region25
    $region24: #{tpu_custom_call.1} parent=1 // pred_region
      %s67 = ssub.s32 2048, 2048
      %68 = vsyncadd [#allocation14], %s67
      %s69 = sshll.u32 [#allocation15], 4
      %s70 = int_to_ptr.vmem [resolvable:$true] %s69
      %75 = dma.hbm_to_vmem [thread:$0]  %s5, 2048, %s70, [#allocation14], 256, 256, 16
    $region25: #{tpu_custom_call.1} parent=1 // pred_fallthru
      _
    // Predicated region
    $region26: #{tpu_custom_call.1} parent=1 // pred_check
      _
    $region27: #{tpu_custom_call.1} parent=1 // pred_check_branch
      %77 = sbr.rel (0) target = $region29
    $region28: #{tpu_custom_call.1} parent=1 // pred_region
      %s79 = ssub.s32 16, 16
      %80 = vsyncadd [#allocation17], %s79
      %s82 = sshll.u32 [#allocation16], 4
      %s83 = int_to_ptr.vmem [resolvable:$true] %s82
      %85 = dma.hbm_to_vmem [thread:$0]  %s6, 16, %s83, [#allocation17]
    $region29: #{tpu_custom_call.1} parent=1 // pred_fallthru
      _
    // Predicated region
    $region30: #{tpu_custom_call.1} parent=1 // pred_check
      _
    $region31: #{tpu_custom_call.1} parent=1 // pred_check_branch
      %87 = sbr.rel (0) target = $region33
    $region32: #{tpu_custom_call.1} parent=1 // pred_region
      _
    $region33: #{tpu_custom_call.1} parent=1 // pred_fallthru
      _
    // Predicated region
    $region34: #{tpu_custom_call.1} parent=1 // pred_check
      _
    $region35: #{tpu_custom_call.1} parent=1 // pred_check_branch
      %89 = sbr.rel (0) target = $region37
    $region36: #{tpu_custom_call.1} parent=1 // pred_region
      %s91 = ssub.s32 16, 16
      %92 = vsyncadd [#allocation17], %s91
      %s94 = sshll.u32 [#allocation18], 4
      %s95 = int_to_ptr.vmem [resolvable:$true] %s94
      %97 = dma.hbm_to_vmem [thread:$0]  %s8, 16, %s95, [#allocation17]
    $region37: #{tpu_custom_call.1} parent=1 // pred_fallthru
      _
    // Predicated region
    $region38: #{tpu_custom_call.1} parent=1 // pred_check
      _
    $region39: #{tpu_custom_call.1} parent=1 // pred_check_branch
      %99 = sbr.rel (0) target = $region41
    $region40: #{tpu_custom_call.1} parent=1 // pred_region
      %100 = dma.done [#allocation9], 49152
    $region41: #{tpu_custom_call.1} parent=1 // pred_fallthru
      _
    // Predicated region
    $region42: #{tpu_custom_call.1} parent=1 // pred_check
      _
    $region43: #{tpu_custom_call.1} parent=1 // pred_check_branch
      %102 = sbr.rel (0) target = $region45
    $region44: #{tpu_custom_call.1} parent=1 // pred_region
      %103 = dma.done [#allocation11], 16
    $region45: #{tpu_custom_call.1} parent=1 // pred_fallthru
      _
    // Predicated region
    $region46: #{tpu_custom_call.1} parent=1 // pred_check
      _
    $region47: #{tpu_custom_call.1} parent=1 // pred_check_branch
      %105 = sbr.rel (0) target = $region49
    $region48: #{tpu_custom_call.1} parent=1 // pred_region
      %106 = dma.done [#allocation11], 1024
    $region49: #{tpu_custom_call.1} parent=1 // pred_fallthru
      _
    // Predicated region
    $region50: #{tpu_custom_call.1} parent=1 // pred_check
      _
    $region51: #{tpu_custom_call.1} parent=1 // pred_check_branch
      %108 = sbr.rel (0) target = $region53
    $region52: #{tpu_custom_call.1} parent=1 // pred_region
      %109 = dma.done [#allocation14], 16
    $region53: #{tpu_custom_call.1} parent=1 // pred_fallthru
      _
    // Predicated region
    $region54: #{tpu_custom_call.1} parent=1 // pred_check
      _
    $region55: #{tpu_custom_call.1} parent=1 // pred_check_branch
      %111 = sbr.rel (0) target = $region57
    $region56: #{tpu_custom_call.1} parent=1 // pred_region
      %112 = dma.done [#allocation14], 2048
    $region57: #{tpu_custom_call.1} parent=1 // pred_fallthru
      _
    // Predicated region
    $region58: #{tpu_custom_call.1} parent=1 // pred_check
      _
    $region59: #{tpu_custom_call.1} parent=1 // pred_check_branch
      %114 = sbr.rel (0) target = $region61
    $region60: #{tpu_custom_call.1} parent=1 // pred_region
      %115 = dma.done [#allocation17], 16
    $region61: #{tpu_custom_call.1} parent=1 // pred_fallthru
      _
    // Predicated region
    $region62: #{tpu_custom_call.1} parent=1 // pred_check
      _
    $region63: #{tpu_custom_call.1} parent=1 // pred_check_branch
      %117 = sbr.rel (0) target = $region65
    $region64: #{tpu_custom_call.1} parent=1 // pred_region
      %118 = dma.done [#allocation17], 16
    $region65: #{tpu_custom_call.1} parent=1 // pred_fallthru
      _
    %v119 = vld [vmem:[#allocation8] sm:$0xff]
    %v120 = vld [vmem:[#allocation8 + $0x8] sm:$0xff]
    %v121 = vld [vmem:[#allocation8 + $0x10] sm:$0xff]
    %v122 = vld [vmem:[#allocation8 + $0x18] sm:$0xff]
    %v123 = vld [vmem:[#allocation8 + $0x20] sm:$0xff]
    %v124 = vld [vmem:[#allocation8 + $0x28] sm:$0xff]
    %v125 = vld [vmem:[#allocation8 + $0x30] sm:$0xff]
    %v126 = vld [vmem:[#allocation8 + $0x38] sm:$0xff]
    %v127 = vld [vmem:[#allocation8 + $0x40] sm:$0xff]
    %v128 = vld [vmem:[#allocation8 + $0x48] sm:$0xff]
    %v129 = vld [vmem:[#allocation8 + $0x50] sm:$0xff]
    %v130 = vld [vmem:[#allocation8 + $0x58] sm:$0xff]
    %v131 = vld [vmem:[#allocation8 + $0x60] sm:$0xff]
    %v132 = vld [vmem:[#allocation8 + $0x68] sm:$0xff]
    %v133 = vld [vmem:[#allocation8 + $0x70] sm:$0xff]
    %v134 = vld [vmem:[#allocation8 + $0x78] sm:$0xff]
    %v135 = vld [vmem:[#allocation8 + $0x80] sm:$0xff]
    %v136 = vld [vmem:[#allocation8 + $0x88] sm:$0xff]
    %v137 = vld [vmem:[#allocation8 + $0x90] sm:$0xff]
    %v138 = vld [vmem:[#allocation8 + $0x98] sm:$0xff]
    %v139 = vld [vmem:[#allocation8 + $0xa0] sm:$0xff]
    %v140 = vld [vmem:[#allocation8 + $0xa8] sm:$0xff]
    %v141 = vld [vmem:[#allocation8 + $0xb0] sm:$0xff]
    %v142 = vld [vmem:[#allocation8 + $0xb8] sm:$0xff]
    %v143 = vld [vmem:[#allocation8 + $0xc0] sm:$0xff]
    %v144 = vld [vmem:[#allocation8 + $0xc8] sm:$0xff]
    %v145 = vld [vmem:[#allocation8 + $0xd0] sm:$0xff]
    %v146 = vld [vmem:[#allocation8 + $0xd8] sm:$0xff]
    %v147 = vld [vmem:[#allocation8 + $0xe0] sm:$0xff]
    %v148 = vld [vmem:[#allocation8 + $0xe8] sm:$0xff]
    %v149 = vld [vmem:[#allocation8 + $0xf0] sm:$0xff]
    %v150 = vld [vmem:[#allocation8 + $0xf8] sm:$0xff]
    %v151 = vld [vmem:[#allocation8 + $0x100] sm:$0xff]
    %v152 = vld [vmem:[#allocation8 + $0x108] sm:$0xff]
    %v153 = vld [vmem:[#allocation8 + $0x110] sm:$0xff]
    %v154 = vld [vmem:[#allocation8 + $0x118] sm:$0xff]
    %v155 = vld [vmem:[#allocation8 + $0x120] sm:$0xff]
    %v156 = vld [vmem:[#allocation8 + $0x128] sm:$0xff]
    %v157 = vld [vmem:[#allocation8 + $0x130] sm:$0xff]
    %v158 = vld [vmem:[#allocation8 + $0x138] sm:$0xff]
    %v159 = vld [vmem:[#allocation8 + $0x140] sm:$0xff]
    %v160 = vld [vmem:[#allocation8 + $0x148] sm:$0xff]
    %v161 = vld [vmem:[#allocation8 + $0x150] sm:$0xff]
    %v162 = vld [vmem:[#allocation8 + $0x158] sm:$0xff]
    %v163 = vld [vmem:[#allocation8 + $0x160] sm:$0xff]
    %v164 = vld [vmem:[#allocation8 + $0x168] sm:$0xff]
    %v165 = vld [vmem:[#allocation8 + $0x170] sm:$0xff]
    %v166 = vld [vmem:[#allocation8 + $0x178] sm:$0xff]
    %v167 = vld [vmem:[#allocation8 + $0x180] sm:$0xff]
    %v168 = vld [vmem:[#allocation8 + $0x188] sm:$0xff]
    %v169 = vld [vmem:[#allocation8 + $0x190] sm:$0xff]
    %v170 = vld [vmem:[#allocation8 + $0x198] sm:$0xff]
    %v171 = vld [vmem:[#allocation8 + $0x1a0] sm:$0xff]
    %v172 = vld [vmem:[#allocation8 + $0x1a8] sm:$0xff]
    %v173 = vld [vmem:[#allocation8 + $0x1b0] sm:$0xff]
    %v174 = vld [vmem:[#allocation8 + $0x1b8] sm:$0xff]
    %v175 = vld [vmem:[#allocation8 + $0x1c0] sm:$0xff]
    %v176 = vld [vmem:[#allocation8 + $0x1c8] sm:$0xff]
    %v177 = vld [vmem:[#allocation8 + $0x1d0] sm:$0xff]
    %v178 = vld [vmem:[#allocation8 + $0x1d8] sm:$0xff]
    %v179 = vld [vmem:[#allocation8 + $0x1e0] sm:$0xff]
    %v180 = vld [vmem:[#allocation8 + $0x1e8] sm:$0xff]
    %v181 = vld [vmem:[#allocation8 + $0x1f0] sm:$0xff]
    %v182 = vld [vmem:[#allocation8 + $0x1f8] sm:$0xff]
    %v183 = vld [vmem:[#allocation8 + $0x200] sm:$0xff]
    %v184 = vld [vmem:[#allocation8 + $0x208] sm:$0xff]
    %v185 = vld [vmem:[#allocation8 + $0x210] sm:$0xff]
    %v186 = vld [vmem:[#allocation8 + $0x218] sm:$0xff]
    %v187 = vld [vmem:[#allocation8 + $0x220] sm:$0xff]
    %v188 = vld [vmem:[#allocation8 + $0x228] sm:$0xff]
    %v189 = vld [vmem:[#allocation8 + $0x230] sm:$0xff]
    %v190 = vld [vmem:[#allocation8 + $0x238] sm:$0xff]
    %v191 = vld [vmem:[#allocation8 + $0x240] sm:$0xff]
    %v192 = vld [vmem:[#allocation8 + $0x248] sm:$0xff]
    %v193 = vld [vmem:[#allocation8 + $0x250] sm:$0xff]
    %v194 = vld [vmem:[#allocation8 + $0x258] sm:$0xff]
    %v195 = vld [vmem:[#allocation8 + $0x260] sm:$0xff]
    %v196 = vld [vmem:[#allocation8 + $0x268] sm:$0xff]
    %v197 = vld [vmem:[#allocation8 + $0x270] sm:$0xff]
    %v198 = vld [vmem:[#allocation8 + $0x278] sm:$0xff]
    %v199 = vld [vmem:[#allocation8 + $0x280] sm:$0xff]
    %v200 = vld [vmem:[#allocation8 + $0x288] sm:$0xff]
    %v201 = vld [vmem:[#allocation8 + $0x290] sm:$0xff]
    %v202 = vld [vmem:[#allocation8 + $0x298] sm:$0xff]
    %v203 = vld [vmem:[#allocation8 + $0x2a0] sm:$0xff]
    %v204 = vld [vmem:[#allocation8 + $0x2a8] sm:$0xff]
    %v205 = vld [vmem:[#allocation8 + $0x2b0] sm:$0xff]
    %v206 = vld [vmem:[#allocation8 + $0x2b8] sm:$0xff]
    %v207 = vld [vmem:[#allocation8 + $0x2c0] sm:$0xff]
    %v208 = vld [vmem:[#allocation8 + $0x2c8] sm:$0xff]
    %v209 = vld [vmem:[#allocation8 + $0x2d0] sm:$0xff]
    %v210 = vld [vmem:[#allocation8 + $0x2d8] sm:$0xff]
    %v211 = vld [vmem:[#allocation8 + $0x2e0] sm:$0xff]
    %v212 = vld [vmem:[#allocation8 + $0x2e8] sm:$0xff]
    %v213 = vld [vmem:[#allocation8 + $0x2f0] sm:$0xff]
    %v214 = vld [vmem:[#allocation8 + $0x2f8] sm:$0xff]
    %v215 = vld [vmem:[#allocation8 + $0x300] sm:$0xff]
    %v216 = vld [vmem:[#allocation8 + $0x308] sm:$0xff]
    %v217 = vld [vmem:[#allocation8 + $0x310] sm:$0xff]
    %v218 = vld [vmem:[#allocation8 + $0x318] sm:$0xff]
    %v219 = vld [vmem:[#allocation8 + $0x320] sm:$0xff]
    %v220 = vld [vmem:[#allocation8 + $0x328] sm:$0xff]
    %v221 = vld [vmem:[#allocation8 + $0x330] sm:$0xff]
    %v222 = vld [vmem:[#allocation8 + $0x338] sm:$0xff]
    %v223 = vld [vmem:[#allocation8 + $0x340] sm:$0xff]
    %v224 = vld [vmem:[#allocation8 + $0x348] sm:$0xff]
    %v225 = vld [vmem:[#allocation8 + $0x350] sm:$0xff]
    %v226 = vld [vmem:[#allocation8 + $0x358] sm:$0xff]
    %v227 = vld [vmem:[#allocation8 + $0x360] sm:$0xff]
    %v228 = vld [vmem:[#allocation8 + $0x368] sm:$0xff]
    %v229 = vld [vmem:[#allocation8 + $0x370] sm:$0xff]
    %v230 = vld [vmem:[#allocation8 + $0x378] sm:$0xff]
    %v231 = vld [vmem:[#allocation8 + $0x380] sm:$0xff]
    %v232 = vld [vmem:[#allocation8 + $0x388] sm:$0xff]
    %v233 = vld [vmem:[#allocation8 + $0x390] sm:$0xff]
    %v234 = vld [vmem:[#allocation8 + $0x398] sm:$0xff]
    %v235 = vld [vmem:[#allocation8 + $0x3a0] sm:$0xff]
    %v236 = vld [vmem:[#allocation8 + $0x3a8] sm:$0xff]
    %v237 = vld [vmem:[#allocation8 + $0x3b0] sm:$0xff]
    %v238 = vld [vmem:[#allocation8 + $0x3b8] sm:$0xff]
    %v239 = vld [vmem:[#allocation8 + $0x3c0] sm:$0xff]
    %v240 = vld [vmem:[#allocation8 + $0x3c8] sm:$0xff]
    %v241 = vld [vmem:[#allocation8 + $0x3d0] sm:$0xff]
    %v242 = vld [vmem:[#allocation8 + $0x3d8] sm:$0xff]
    %v243 = vld [vmem:[#allocation8 + $0x3e0] sm:$0xff]
    %v244 = vld [vmem:[#allocation8 + $0x3e8] sm:$0xff]
    %v245 = vld [vmem:[#allocation8 + $0x3f0] sm:$0xff]
    %v246 = vld [vmem:[#allocation8 + $0x3f8] sm:$0xff]
    %v247 = vld [vmem:[#allocation8 + $0x400] sm:$0xff]
    %v248 = vld [vmem:[#allocation8 + $0x408] sm:$0xff]
    %v249 = vld [vmem:[#allocation8 + $0x410] sm:$0xff]
    %v250 = vld [vmem:[#allocation8 + $0x418] sm:$0xff]
    %v251 = vld [vmem:[#allocation8 + $0x420] sm:$0xff]
    %v252 = vld [vmem:[#allocation8 + $0x428] sm:$0xff]
    %v253 = vld [vmem:[#allocation8 + $0x430] sm:$0xff]
    %v254 = vld [vmem:[#allocation8 + $0x438] sm:$0xff]
    %v255 = vld [vmem:[#allocation8 + $0x440] sm:$0xff]
    %v256 = vld [vmem:[#allocation8 + $0x448] sm:$0xff]
    %v257 = vld [vmem:[#allocation8 + $0x450] sm:$0xff]
    %v258 = vld [vmem:[#allocation8 + $0x458] sm:$0xff]
    %v259 = vld [vmem:[#allocation8 + $0x460] sm:$0xff]
    %v260 = vld [vmem:[#allocation8 + $0x468] sm:$0xff]
    %v261 = vld [vmem:[#allocation8 + $0x470] sm:$0xff]
    %v262 = vld [vmem:[#allocation8 + $0x478] sm:$0xff]
    %v263 = vld [vmem:[#allocation8 + $0x480] sm:$0xff]
    %v264 = vld [vmem:[#allocation8 + $0x488] sm:$0xff]
    %v265 = vld [vmem:[#allocation8 + $0x490] sm:$0xff]
    %v266 = vld [vmem:[#allocation8 + $0x498] sm:$0xff]
    %v267 = vld [vmem:[#allocation8 + $0x4a0] sm:$0xff]
    %v268 = vld [vmem:[#allocation8 + $0x4a8] sm:$0xff]
    %v269 = vld [vmem:[#allocation8 + $0x4b0] sm:$0xff]
    %v270 = vld [vmem:[#allocation8 + $0x4b8] sm:$0xff]
    %v271 = vld [vmem:[#allocation8 + $0x4c0] sm:$0xff]
    %v272 = vld [vmem:[#allocation8 + $0x4c8] sm:$0xff]
    %v273 = vld [vmem:[#allocation8 + $0x4d0] sm:$0xff]
    %v274 = vld [vmem:[#allocation8 + $0x4d8] sm:$0xff]
    %v275 = vld [vmem:[#allocation8 + $0x4e0] sm:$0xff]
    %v276 = vld [vmem:[#allocation8 + $0x4e8] sm:$0xff]
    %v277 = vld [vmem:[#allocation8 + $0x4f0] sm:$0xff]
    %v278 = vld [vmem:[#allocation8 + $0x4f8] sm:$0xff]
    %v279 = vld [vmem:[#allocation8 + $0x500] sm:$0xff]
    %v280 = vld [vmem:[#allocation8 + $0x508] sm:$0xff]
    %v281 = vld [vmem:[#allocation8 + $0x510] sm:$0xff]
    %v282 = vld [vmem:[#allocation8 + $0x518] sm:$0xff]
    %v283 = vld [vmem:[#allocation8 + $0x520] sm:$0xff]
    %v284 = vld [vmem:[#allocation8 + $0x528] sm:$0xff]
    %v285 = vld [vmem:[#allocation8 + $0x530] sm:$0xff]
    %v286 = vld [vmem:[#allocation8 + $0x538] sm:$0xff]
    %v287 = vld [vmem:[#allocation8 + $0x540] sm:$0xff]
    %v288 = vld [vmem:[#allocation8 + $0x548] sm:$0xff]
    %v289 = vld [vmem:[#allocation8 + $0x550] sm:$0xff]
    %v290 = vld [vmem:[#allocation8 + $0x558] sm:$0xff]
    %v291 = vld [vmem:[#allocation8 + $0x560] sm:$0xff]
    %v292 = vld [vmem:[#allocation8 + $0x568] sm:$0xff]
    %v293 = vld [vmem:[#allocation8 + $0x570] sm:$0xff]
    %v294 = vld [vmem:[#allocation8 + $0x578] sm:$0xff]
    %v295 = vld [vmem:[#allocation8 + $0x580] sm:$0xff]
    %v296 = vld [vmem:[#allocation8 + $0x588] sm:$0xff]
    %v297 = vld [vmem:[#allocation8 + $0x590] sm:$0xff]
    %v298 = vld [vmem:[#allocation8 + $0x598] sm:$0xff]
    %v299 = vld [vmem:[#allocation8 + $0x5a0] sm:$0xff]
    %v300 = vld [vmem:[#allocation8 + $0x5a8] sm:$0xff]
    %v301 = vld [vmem:[#allocation8 + $0x5b0] sm:$0xff]
    %v302 = vld [vmem:[#allocation8 + $0x5b8] sm:$0xff]
    %v303 = vld [vmem:[#allocation8 + $0x5c0] sm:$0xff]
    %v304 = vld [vmem:[#allocation8 + $0x5c8] sm:$0xff]
    %v305 = vld [vmem:[#allocation8 + $0x5d0] sm:$0xff]
    %v306 = vld [vmem:[#allocation8 + $0x5d8] sm:$0xff]
    %v307 = vld [vmem:[#allocation8 + $0x5e0] sm:$0xff]
    %v308 = vld [vmem:[#allocation8 + $0x5e8] sm:$0xff]
    %v309 = vld [vmem:[#allocation8 + $0x5f0] sm:$0xff]
    %v310 = vld [vmem:[#allocation8 + $0x5f8] sm:$0xff]
    %v311 = vld [vmem:[#allocation8 + $0x600] sm:$0xff]
    %v312 = vld [vmem:[#allocation8 + $0x608] sm:$0xff]
    %v313 = vld [vmem:[#allocation8 + $0x610] sm:$0xff]
    %v314 = vld [vmem:[#allocation8 + $0x618] sm:$0xff]
    %v315 = vld [vmem:[#allocation8 + $0x620] sm:$0xff]
    %v316 = vld [vmem:[#allocation8 + $0x628] sm:$0xff]
    %v317 = vld [vmem:[#allocation8 + $0x630] sm:$0xff]
    %v318 = vld [vmem:[#allocation8 + $0x638] sm:$0xff]
    %v319 = vld [vmem:[#allocation8 + $0x640] sm:$0xff]
    %v320 = vld [vmem:[#allocation8 + $0x648] sm:$0xff]
    %v321 = vld [vmem:[#allocation8 + $0x650] sm:$0xff]
    %v322 = vld [vmem:[#allocation8 + $0x658] sm:$0xff]
    %v323 = vld [vmem:[#allocation8 + $0x660] sm:$0xff]
    %v324 = vld [vmem:[#allocation8 + $0x668] sm:$0xff]
    %v325 = vld [vmem:[#allocation8 + $0x670] sm:$0xff]
    %v326 = vld [vmem:[#allocation8 + $0x678] sm:$0xff]
    %v327 = vld [vmem:[#allocation8 + $0x680] sm:$0xff]
    %v328 = vld [vmem:[#allocation8 + $0x688] sm:$0xff]
    %v329 = vld [vmem:[#allocation8 + $0x690] sm:$0xff]
    %v330 = vld [vmem:[#allocation8 + $0x698] sm:$0xff]
    %v331 = vld [vmem:[#allocation8 + $0x6a0] sm:$0xff]
    %v332 = vld [vmem:[#allocation8 + $0x6a8] sm:$0xff]
    %v333 = vld [vmem:[#allocation8 + $0x6b0] sm:$0xff]
    %v334 = vld [vmem:[#allocation8 + $0x6b8] sm:$0xff]
    %v335 = vld [vmem:[#allocation8 + $0x6c0] sm:$0xff]
    %v336 = vld [vmem:[#allocation8 + $0x6c8] sm:$0xff]
    %v337 = vld [vmem:[#allocation8 + $0x6d0] sm:$0xff]
    %v338 = vld [vmem:[#allocation8 + $0x6d8] sm:$0xff]
    %v339 = vld [vmem:[#allocation8 + $0x6e0] sm:$0xff]
    %v340 = vld [vmem:[#allocation8 + $0x6e8] sm:$0xff]
    %v341 = vld [vmem:[#allocation8 + $0x6f0] sm:$0xff]
    %v342 = vld [vmem:[#allocation8 + $0x6f8] sm:$0xff]
    %v343 = vld [vmem:[#allocation8 + $0x700] sm:$0xff]
    %v344 = vld [vmem:[#allocation8 + $0x708] sm:$0xff]
    %v345 = vld [vmem:[#allocation8 + $0x710] sm:$0xff]
    %v346 = vld [vmem:[#allocation8 + $0x718] sm:$0xff]
    %v347 = vld [vmem:[#allocation8 + $0x720] sm:$0xff]
    %v348 = vld [vmem:[#allocation8 + $0x728] sm:$0xff]
    %v349 = vld [vmem:[#allocation8 + $0x730] sm:$0xff]
    %v350 = vld [vmem:[#allocation8 + $0x738] sm:$0xff]
    %v351 = vld [vmem:[#allocation8 + $0x740] sm:$0xff]
    %v352 = vld [vmem:[#allocation8 + $0x748] sm:$0xff]
    %v353 = vld [vmem:[#allocation8 + $0x750] sm:$0xff]
    %v354 = vld [vmem:[#allocation8 + $0x758] sm:$0xff]
    %v355 = vld [vmem:[#allocation8 + $0x760] sm:$0xff]
    %v356 = vld [vmem:[#allocation8 + $0x768] sm:$0xff]
    %v357 = vld [vmem:[#allocation8 + $0x770] sm:$0xff]
    %v358 = vld [vmem:[#allocation8 + $0x778] sm:$0xff]
    %v359 = vld [vmem:[#allocation8 + $0x780] sm:$0xff]
    %v360 = vld [vmem:[#allocation8 + $0x788] sm:$0xff]
    %v361 = vld [vmem:[#allocation8 + $0x790] sm:$0xff]
    %v362 = vld [vmem:[#allocation8 + $0x798] sm:$0xff]
    %v363 = vld [vmem:[#allocation8 + $0x7a0] sm:$0xff]
    %v364 = vld [vmem:[#allocation8 + $0x7a8] sm:$0xff]
    %v365 = vld [vmem:[#allocation8 + $0x7b0] sm:$0xff]
    %v366 = vld [vmem:[#allocation8 + $0x7b8] sm:$0xff]
    %v367 = vld [vmem:[#allocation8 + $0x7c0] sm:$0xff]
    %v368 = vld [vmem:[#allocation8 + $0x7c8] sm:$0xff]
    %v369 = vld [vmem:[#allocation8 + $0x7d0] sm:$0xff]
    %v370 = vld [vmem:[#allocation8 + $0x7d8] sm:$0xff]
    %v371 = vld [vmem:[#allocation8 + $0x7e0] sm:$0xff]
    %v372 = vld [vmem:[#allocation8 + $0x7e8] sm:$0xff]
    %v373 = vld [vmem:[#allocation8 + $0x7f0] sm:$0xff]
    %v374 = vld [vmem:[#allocation8 + $0x7f8] sm:$0xff]
    %v375 = vld [vmem:[#allocation8 + $0x800] sm:$0xff]
    %v376 = vld [vmem:[#allocation8 + $0x808] sm:$0xff]
    %v377 = vld [vmem:[#allocation8 + $0x810] sm:$0xff]
    %v378 = vld [vmem:[#allocation8 + $0x818] sm:$0xff]
    %v379 = vld [vmem:[#allocation8 + $0x820] sm:$0xff]
    %v380 = vld [vmem:[#allocation8 + $0x828] sm:$0xff]
    %v381 = vld [vmem:[#allocation8 + $0x830] sm:$0xff]
    %v382 = vld [vmem:[#allocation8 + $0x838] sm:$0xff]
    %v383 = vld [vmem:[#allocation8 + $0x840] sm:$0xff]
    %v384 = vld [vmem:[#allocation8 + $0x848] sm:$0xff]
    %v385 = vld [vmem:[#allocation8 + $0x850] sm:$0xff]
    %v386 = vld [vmem:[#allocation8 + $0x858] sm:$0xff]
    %v387 = vld [vmem:[#allocation8 + $0x860] sm:$0xff]
    %v388 = vld [vmem:[#allocation8 + $0x868] sm:$0xff]
    %v389 = vld [vmem:[#allocation8 + $0x870] sm:$0xff]
    %v390 = vld [vmem:[#allocation8 + $0x878] sm:$0xff]
    %v391 = vld [vmem:[#allocation8 + $0x880] sm:$0xff]
    %v392 = vld [vmem:[#allocation8 + $0x888] sm:$0xff]
    %v393 = vld [vmem:[#allocation8 + $0x890] sm:$0xff]
    %v394 = vld [vmem:[#allocation8 + $0x898] sm:$0xff]
    %v395 = vld [vmem:[#allocation8 + $0x8a0] sm:$0xff]
    %v396 = vld [vmem:[#allocation8 + $0x8a8] sm:$0xff]
    %v397 = vld [vmem:[#allocation8 + $0x8b0] sm:$0xff]
    %v398 = vld [vmem:[#allocation8 + $0x8b8] sm:$0xff]
    %v399 = vld [vmem:[#allocation8 + $0x8c0] sm:$0xff]
    %v400 = vld [vmem:[#allocation8 + $0x8c8] sm:$0xff]
    %v401 = vld [vmem:[#allocation8 + $0x8d0] sm:$0xff]
    %v402 = vld [vmem:[#allocation8 + $0x8d8] sm:$0xff]
    %v403 = vld [vmem:[#allocation8 + $0x8e0] sm:$0xff]
    %v404 = vld [vmem:[#allocation8 + $0x8e8] sm:$0xff]
    %v405 = vld [vmem:[#allocation8 + $0x8f0] sm:$0xff]
    %v406 = vld [vmem:[#allocation8 + $0x8f8] sm:$0xff]
    %v407 = vld [vmem:[#allocation8 + $0x900] sm:$0xff]
    %v408 = vld [vmem:[#allocation8 + $0x908] sm:$0xff]
    %v409 = vld [vmem:[#allocation8 + $0x910] sm:$0xff]
    %v410 = vld [vmem:[#allocation8 + $0x918] sm:$0xff]
    %v411 = vld [vmem:[#allocation8 + $0x920] sm:$0xff]
    %v412 = vld [vmem:[#allocation8 + $0x928] sm:$0xff]
    %v413 = vld [vmem:[#allocation8 + $0x930] sm:$0xff]
    %v414 = vld [vmem:[#allocation8 + $0x938] sm:$0xff]
    %v415 = vld [vmem:[#allocation8 + $0x940] sm:$0xff]
    %v416 = vld [vmem:[#allocation8 + $0x948] sm:$0xff]
    %v417 = vld [vmem:[#allocation8 + $0x950] sm:$0xff]
    %v418 = vld [vmem:[#allocation8 + $0x958] sm:$0xff]
    %v419 = vld [vmem:[#allocation8 + $0x960] sm:$0xff]
    %v420 = vld [vmem:[#allocation8 + $0x968] sm:$0xff]
    %v421 = vld [vmem:[#allocation8 + $0x970] sm:$0xff]
    %v422 = vld [vmem:[#allocation8 + $0x978] sm:$0xff]
    %v423 = vld [vmem:[#allocation8 + $0x980] sm:$0xff]
    %v424 = vld [vmem:[#allocation8 + $0x988] sm:$0xff]
    %v425 = vld [vmem:[#allocation8 + $0x990] sm:$0xff]
    %v426 = vld [vmem:[#allocation8 + $0x998] sm:$0xff]
    %v427 = vld [vmem:[#allocation8 + $0x9a0] sm:$0xff]
    %v428 = vld [vmem:[#allocation8 + $0x9a8] sm:$0xff]
    %v429 = vld [vmem:[#allocation8 + $0x9b0] sm:$0xff]
    %v430 = vld [vmem:[#allocation8 + $0x9b8] sm:$0xff]
    %v431 = vld [vmem:[#allocation8 + $0x9c0] sm:$0xff]
    %v432 = vld [vmem:[#allocation8 + $0x9c8] sm:$0xff]
    %v433 = vld [vmem:[#allocation8 + $0x9d0] sm:$0xff]
    %v434 = vld [vmem:[#allocation8 + $0x9d8] sm:$0xff]
    %v435 = vld [vmem:[#allocation8 + $0x9e0] sm:$0xff]
    %v436 = vld [vmem:[#allocation8 + $0x9e8] sm:$0xff]
    %v437 = vld [vmem:[#allocation8 + $0x9f0] sm:$0xff]
    %v438 = vld [vmem:[#allocation8 + $0x9f8] sm:$0xff]
    %v439 = vld [vmem:[#allocation8 + $0xa00] sm:$0xff]
    %v440 = vld [vmem:[#allocation8 + $0xa08] sm:$0xff]
    %v441 = vld [vmem:[#allocation8 + $0xa10] sm:$0xff]
    %v442 = vld [vmem:[#allocation8 + $0xa18] sm:$0xff]
    %v443 = vld [vmem:[#allocation8 + $0xa20] sm:$0xff]
    %v444 = vld [vmem:[#allocation8 + $0xa28] sm:$0xff]
    %v445 = vld [vmem:[#allocation8 + $0xa30] sm:$0xff]
    %v446 = vld [vmem:[#allocation8 + $0xa38] sm:$0xff]
    %v447 = vld [vmem:[#allocation8 + $0xa40] sm:$0xff]
    %v448 = vld [vmem:[#allocation8 + $0xa48] sm:$0xff]
    %v449 = vld [vmem:[#allocation8 + $0xa50] sm:$0xff]
    %v450 = vld [vmem:[#allocation8 + $0xa58] sm:$0xff]
    %v451 = vld [vmem:[#allocation8 + $0xa60] sm:$0xff]
    %v452 = vld [vmem:[#allocation8 + $0xa68] sm:$0xff]
    %v453 = vld [vmem:[#allocation8 + $0xa70] sm:$0xff]
    %v454 = vld [vmem:[#allocation8 + $0xa78] sm:$0xff]
    %v455 = vld [vmem:[#allocation8 + $0xa80] sm:$0xff]
    %v456 = vld [vmem:[#allocation8 + $0xa88] sm:$0xff]
    %v457 = vld [vmem:[#allocation8 + $0xa90] sm:$0xff]
    %v458 = vld [vmem:[#allocation8 + $0xa98] sm:$0xff]
    %v459 = vld [vmem:[#allocation8 + $0xaa0] sm:$0xff]
    %v460 = vld [vmem:[#allocation8 + $0xaa8] sm:$0xff]
    %v461 = vld [vmem:[#allocation8 + $0xab0] sm:$0xff]
    %v462 = vld [vmem:[#allocation8 + $0xab8] sm:$0xff]
    %v463 = vld [vmem:[#allocation8 + $0xac0] sm:$0xff]
    %v464 = vld [vmem:[#allocation8 + $0xac8] sm:$0xff]
    %v465 = vld [vmem:[#allocation8 + $0xad0] sm:$0xff]
    %v466 = vld [vmem:[#allocation8 + $0xad8] sm:$0xff]
    %v467 = vld [vmem:[#allocation8 + $0xae0] sm:$0xff]
    %v468 = vld [vmem:[#allocation8 + $0xae8] sm:$0xff]
    %v469 = vld [vmem:[#allocation8 + $0xaf0] sm:$0xff]
    %v470 = vld [vmem:[#allocation8 + $0xaf8] sm:$0xff]
    %v471 = vld [vmem:[#allocation8 + $0xb00] sm:$0xff]
    %v472 = vld [vmem:[#allocation8 + $0xb08] sm:$0xff]
    %v473 = vld [vmem:[#allocation8 + $0xb10] sm:$0xff]
    %v474 = vld [vmem:[#allocation8 + $0xb18] sm:$0xff]
    %v475 = vld [vmem:[#allocation8 + $0xb20] sm:$0xff]
    %v476 = vld [vmem:[#allocation8 + $0xb28] sm:$0xff]
    %v477 = vld [vmem:[#allocation8 + $0xb30] sm:$0xff]
    %v478 = vld [vmem:[#allocation8 + $0xb38] sm:$0xff]
    %v479 = vld [vmem:[#allocation8 + $0xb40] sm:$0xff]
    %v480 = vld [vmem:[#allocation8 + $0xb48] sm:$0xff]
    %v481 = vld [vmem:[#allocation8 + $0xb50] sm:$0xff]
    %v482 = vld [vmem:[#allocation8 + $0xb58] sm:$0xff]
    %v483 = vld [vmem:[#allocation8 + $0xb60] sm:$0xff]
    %v484 = vld [vmem:[#allocation8 + $0xb68] sm:$0xff]
    %v485 = vld [vmem:[#allocation8 + $0xb70] sm:$0xff]
    %v486 = vld [vmem:[#allocation8 + $0xb78] sm:$0xff]
    %v487 = vld [vmem:[#allocation8 + $0xb80] sm:$0xff]
    %v488 = vld [vmem:[#allocation8 + $0xb88] sm:$0xff]
    %v489 = vld [vmem:[#allocation8 + $0xb90] sm:$0xff]
    %v490 = vld [vmem:[#allocation8 + $0xb98] sm:$0xff]
    %v491 = vld [vmem:[#allocation8 + $0xba0] sm:$0xff]
    %v492 = vld [vmem:[#allocation8 + $0xba8] sm:$0xff]
    %v493 = vld [vmem:[#allocation8 + $0xbb0] sm:$0xff]
    %v494 = vld [vmem:[#allocation8 + $0xbb8] sm:$0xff]
    %v495 = vld [vmem:[#allocation8 + $0xbc0] sm:$0xff]
    %v496 = vld [vmem:[#allocation8 + $0xbc8] sm:$0xff]
    %v497 = vld [vmem:[#allocation8 + $0xbd0] sm:$0xff]
    %v498 = vld [vmem:[#allocation8 + $0xbd8] sm:$0xff]
    %v499 = vld [vmem:[#allocation8 + $0xbe0] sm:$0xff]
    %v500 = vld [vmem:[#allocation8 + $0xbe8] sm:$0xff]
    %v501 = vld [vmem:[#allocation8 + $0xbf0] sm:$0xff]
    %v502 = vld [vmem:[#allocation8 + $0xbf8] sm:$0xff]
    %v503 = vld [vmem:[%s1] sm:$0xff]
    %v504 = vld [vmem:[%s1 + $0x8] sm:$0xff]
    %v505 = vld [vmem:[%s1 + $0x10] sm:$0xff]
    %v506 = vld [vmem:[%s1 + $0x18] sm:$0xff]
    %v507 = vld [vmem:[%s1 + $0x20] sm:$0xff]
    %v508 = vld [vmem:[%s1 + $0x28] sm:$0xff]
    %v509 = vld [vmem:[%s1 + $0x30] sm:$0xff]
    %v510 = vld [vmem:[%s1 + $0x38] sm:$0xff]
    %v511 = vld [vmem:[%s1 + $0x40] sm:$0xff]
    %v512 = vld [vmem:[%s1 + $0x48] sm:$0xff]
    %v513 = vld [vmem:[%s1 + $0x50] sm:$0xff]
    %v514 = vld [vmem:[%s1 + $0x58] sm:$0xff]
    %v515 = vld [vmem:[%s1 + $0x60] sm:$0xff]
    %v516 = vld [vmem:[%s1 + $0x68] sm:$0xff]
    %v517 = vld [vmem:[%s1 + $0x70] sm:$0xff]
    %v518 = vld [vmem:[%s1 + $0x78] sm:$0xff]
    %v519 = vld [vmem:[%s1 + $0x80] sm:$0xff]
    %v520 = vld [vmem:[%s1 + $0x88] sm:$0xff]
    %v521 = vld [vmem:[%s1 + $0x90] sm:$0xff]
    %v522 = vld [vmem:[%s1 + $0x98] sm:$0xff]
    %v523 = vld [vmem:[%s1 + $0xa0] sm:$0xff]
    %v524 = vld [vmem:[%s1 + $0xa8] sm:$0xff]
    %v525 = vld [vmem:[%s1 + $0xb0] sm:$0xff]
    %v526 = vld [vmem:[%s1 + $0xb8] sm:$0xff]
    %v527 = vld [vmem:[%s1 + $0xc0] sm:$0xff]
    %v528 = vld [vmem:[%s1 + $0xc8] sm:$0xff]
    %v529 = vld [vmem:[%s1 + $0xd0] sm:$0xff]
    %v530 = vld [vmem:[%s1 + $0xd8] sm:$0xff]
    %v531 = vld [vmem:[%s1 + $0xe0] sm:$0xff]
    %v532 = vld [vmem:[%s1 + $0xe8] sm:$0xff]
    %v533 = vld [vmem:[%s1 + $0xf0] sm:$0xff]
    %v534 = vld [vmem:[%s1 + $0xf8] sm:$0xff]
    %v535 = vld [vmem:[%s1 + $0x100] sm:$0xff]
    %v536 = vld [vmem:[%s1 + $0x108] sm:$0xff]
    %v537 = vld [vmem:[%s1 + $0x110] sm:$0xff]
    %v538 = vld [vmem:[%s1 + $0x118] sm:$0xff]
    %v539 = vld [vmem:[%s1 + $0x120] sm:$0xff]
    %v540 = vld [vmem:[%s1 + $0x128] sm:$0xff]
    %v541 = vld [vmem:[%s1 + $0x130] sm:$0xff]
    %v542 = vld [vmem:[%s1 + $0x138] sm:$0xff]
    %v543 = vld [vmem:[%s1 + $0x140] sm:$0xff]
    %v544 = vld [vmem:[%s1 + $0x148] sm:$0xff]
    %v545 = vld [vmem:[%s1 + $0x150] sm:$0xff]
    %v546 = vld [vmem:[%s1 + $0x158] sm:$0xff]
    %v547 = vld [vmem:[%s1 + $0x160] sm:$0xff]
    %v548 = vld [vmem:[%s1 + $0x168] sm:$0xff]
    %v549 = vld [vmem:[%s1 + $0x170] sm:$0xff]
    %v550 = vld [vmem:[%s1 + $0x178] sm:$0xff]
    %v551 = vld [vmem:[%s1 + $0x180] sm:$0xff]
    %v552 = vld [vmem:[%s1 + $0x188] sm:$0xff]
    %v553 = vld [vmem:[%s1 + $0x190] sm:$0xff]
    %v554 = vld [vmem:[%s1 + $0x198] sm:$0xff]
    %v555 = vld [vmem:[%s1 + $0x1a0] sm:$0xff]
    %v556 = vld [vmem:[%s1 + $0x1a8] sm:$0xff]
    %v557 = vld [vmem:[%s1 + $0x1b0] sm:$0xff]
    %v558 = vld [vmem:[%s1 + $0x1b8] sm:$0xff]
    %v559 = vld [vmem:[%s1 + $0x1c0] sm:$0xff]
    %v560 = vld [vmem:[%s1 + $0x1c8] sm:$0xff]
    %v561 = vld [vmem:[%s1 + $0x1d0] sm:$0xff]
    %v562 = vld [vmem:[%s1 + $0x1d8] sm:$0xff]
    %v563 = vld [vmem:[%s1 + $0x1e0] sm:$0xff]
    %v564 = vld [vmem:[%s1 + $0x1e8] sm:$0xff]
    %v565 = vld [vmem:[%s1 + $0x1f0] sm:$0xff]
    %v566 = vld [vmem:[%s1 + $0x1f8] sm:$0xff]
    %v567 = vld [vmem:[%s1 + $0x200] sm:$0xff]
    %v568 = vld [vmem:[%s1 + $0x208] sm:$0xff]
    %v569 = vld [vmem:[%s1 + $0x210] sm:$0xff]
    %v570 = vld [vmem:[%s1 + $0x218] sm:$0xff]
    %v571 = vld [vmem:[%s1 + $0x220] sm:$0xff]
    %v572 = vld [vmem:[%s1 + $0x228] sm:$0xff]
    %v573 = vld [vmem:[%s1 + $0x230] sm:$0xff]
    %v574 = vld [vmem:[%s1 + $0x238] sm:$0xff]
    %v575 = vld [vmem:[%s1 + $0x240] sm:$0xff]
    %v576 = vld [vmem:[%s1 + $0x248] sm:$0xff]
    %v577 = vld [vmem:[%s1 + $0x250] sm:$0xff]
    %v578 = vld [vmem:[%s1 + $0x258] sm:$0xff]
    %v579 = vld [vmem:[%s1 + $0x260] sm:$0xff]
    %v580 = vld [vmem:[%s1 + $0x268] sm:$0xff]
    %v581 = vld [vmem:[%s1 + $0x270] sm:$0xff]
    %v582 = vld [vmem:[%s1 + $0x278] sm:$0xff]
    %v583 = vld [vmem:[%s1 + $0x280] sm:$0xff]
    %v584 = vld [vmem:[%s1 + $0x288] sm:$0xff]
    %v585 = vld [vmem:[%s1 + $0x290] sm:$0xff]
    %v586 = vld [vmem:[%s1 + $0x298] sm:$0xff]
    %v587 = vld [vmem:[%s1 + $0x2a0] sm:$0xff]
    %v588 = vld [vmem:[%s1 + $0x2a8] sm:$0xff]
    %v589 = vld [vmem:[%s1 + $0x2b0] sm:$0xff]
    %v590 = vld [vmem:[%s1 + $0x2b8] sm:$0xff]
    %v591 = vld [vmem:[%s1 + $0x2c0] sm:$0xff]
    %v592 = vld [vmem:[%s1 + $0x2c8] sm:$0xff]
    %v593 = vld [vmem:[%s1 + $0x2d0] sm:$0xff]
    %v594 = vld [vmem:[%s1 + $0x2d8] sm:$0xff]
    %v595 = vld [vmem:[%s1 + $0x2e0] sm:$0xff]
    %v596 = vld [vmem:[%s1 + $0x2e8] sm:$0xff]
    %v597 = vld [vmem:[%s1 + $0x2f0] sm:$0xff]
    %v598 = vld [vmem:[%s1 + $0x2f8] sm:$0xff]
    %v599 = vld [vmem:[%s1 + $0x300] sm:$0xff]
    %v600 = vld [vmem:[%s1 + $0x308] sm:$0xff]
    %v601 = vld [vmem:[%s1 + $0x310] sm:$0xff]
    %v602 = vld [vmem:[%s1 + $0x318] sm:$0xff]
    %v603 = vld [vmem:[%s1 + $0x320] sm:$0xff]
    %v604 = vld [vmem:[%s1 + $0x328] sm:$0xff]
    %v605 = vld [vmem:[%s1 + $0x330] sm:$0xff]
    %v606 = vld [vmem:[%s1 + $0x338] sm:$0xff]
    %v607 = vld [vmem:[%s1 + $0x340] sm:$0xff]
    %v608 = vld [vmem:[%s1 + $0x348] sm:$0xff]
    %v609 = vld [vmem:[%s1 + $0x350] sm:$0xff]
    %v610 = vld [vmem:[%s1 + $0x358] sm:$0xff]
    %v611 = vld [vmem:[%s1 + $0x360] sm:$0xff]
    %v612 = vld [vmem:[%s1 + $0x368] sm:$0xff]
    %v613 = vld [vmem:[%s1 + $0x370] sm:$0xff]
    %v614 = vld [vmem:[%s1 + $0x378] sm:$0xff]
    %v615 = vld [vmem:[%s1 + $0x380] sm:$0xff]
    %v616 = vld [vmem:[%s1 + $0x388] sm:$0xff]
    %v617 = vld [vmem:[%s1 + $0x390] sm:$0xff]
    %v618 = vld [vmem:[%s1 + $0x398] sm:$0xff]
    %v619 = vld [vmem:[%s1 + $0x3a0] sm:$0xff]
    %v620 = vld [vmem:[%s1 + $0x3a8] sm:$0xff]
    %v621 = vld [vmem:[%s1 + $0x3b0] sm:$0xff]
    %v622 = vld [vmem:[%s1 + $0x3b8] sm:$0xff]
    %v623 = vld [vmem:[%s1 + $0x3c0] sm:$0xff]
    %v624 = vld [vmem:[%s1 + $0x3c8] sm:$0xff]
    %v625 = vld [vmem:[%s1 + $0x3d0] sm:$0xff]
    %v626 = vld [vmem:[%s1 + $0x3d8] sm:$0xff]
    %v627 = vld [vmem:[%s1 + $0x3e0] sm:$0xff]
    %v628 = vld [vmem:[%s1 + $0x3e8] sm:$0xff]
    %v629 = vld [vmem:[%s1 + $0x3f0] sm:$0xff]
    %v630 = vld [vmem:[%s1 + $0x3f8] sm:$0xff]
    %v1015 = vunpack.c.l.b16 %v119
    %v1016 = vunpack.c.h.b16 %v119
    %v1017 = vunpack.c.l.b16 %v120
    %v1018 = vunpack.c.h.b16 %v120
    %v1019 = vunpack.c.l.b16 %v121
    %v1020 = vunpack.c.h.b16 %v121
    %v1021 = vunpack.c.l.b16 %v122
    %v1022 = vunpack.c.h.b16 %v122
    %v1023 = vunpack.c.l.b16 %v123
    %v1024 = vunpack.c.h.b16 %v123
    %v1025 = vunpack.c.l.b16 %v124
    %v1026 = vunpack.c.h.b16 %v124
    %v1027 = vunpack.c.l.b16 %v125
    %v1028 = vunpack.c.h.b16 %v125
    %v1029 = vunpack.c.l.b16 %v126
    %v1030 = vunpack.c.h.b16 %v126
    %v1031 = vunpack.c.l.b16 %v127
    %v1032 = vunpack.c.h.b16 %v127
    %v1033 = vunpack.c.l.b16 %v128
    %v1034 = vunpack.c.h.b16 %v128
    %v1035 = vunpack.c.l.b16 %v129
    %v1036 = vunpack.c.h.b16 %v129
    %v1037 = vunpack.c.l.b16 %v130
    %v1038 = vunpack.c.h.b16 %v130
    %v1039 = vunpack.c.l.b16 %v131
    %v1040 = vunpack.c.h.b16 %v131
    %v1041 = vunpack.c.l.b16 %v132
    %v1042 = vunpack.c.h.b16 %v132
    %v1043 = vunpack.c.l.b16 %v133
    %v1044 = vunpack.c.h.b16 %v133
    %v1045 = vunpack.c.l.b16 %v134
    %v1046 = vunpack.c.h.b16 %v134
    %v1047 = vunpack.c.l.b16 %v135
    %v1048 = vunpack.c.h.b16 %v135
    %v1049 = vunpack.c.l.b16 %v136
    %v1050 = vunpack.c.h.b16 %v136
    %v1051 = vunpack.c.l.b16 %v137
    %v1052 = vunpack.c.h.b16 %v137
    %v1053 = vunpack.c.l.b16 %v138
    %v1054 = vunpack.c.h.b16 %v138
    %v1055 = vunpack.c.l.b16 %v139
    %v1056 = vunpack.c.h.b16 %v139
    %v1057 = vunpack.c.l.b16 %v140
    %v1058 = vunpack.c.h.b16 %v140
    %v1059 = vunpack.c.l.b16 %v141
    %v1060 = vunpack.c.h.b16 %v141
    %v1061 = vunpack.c.l.b16 %v142
    %v1062 = vunpack.c.h.b16 %v142
    %v1063 = vunpack.c.l.b16 %v143
    %v1064 = vunpack.c.h.b16 %v143
    %v1065 = vunpack.c.l.b16 %v144
    %v1066 = vunpack.c.h.b16 %v144
    %v1067 = vunpack.c.l.b16 %v145
    %v1068 = vunpack.c.h.b16 %v145
    %v1069 = vunpack.c.l.b16 %v146
    %v1070 = vunpack.c.h.b16 %v146
    %v1071 = vunpack.c.l.b16 %v147
    %v1072 = vunpack.c.h.b16 %v147
    %v1073 = vunpack.c.l.b16 %v148
    %v1074 = vunpack.c.h.b16 %v148
    %v1075 = vunpack.c.l.b16 %v149
    %v1076 = vunpack.c.h.b16 %v149
    %v1077 = vunpack.c.l.b16 %v150
    %v1078 = vunpack.c.h.b16 %v150
    %v1079 = vunpack.c.l.b16 %v151
    %v1080 = vunpack.c.h.b16 %v151
    %v1081 = vunpack.c.l.b16 %v152
    %v1082 = vunpack.c.h.b16 %v152
    %v1083 = vunpack.c.l.b16 %v153
    %v1084 = vunpack.c.h.b16 %v153
    %v1085 = vunpack.c.l.b16 %v154
    %v1086 = vunpack.c.h.b16 %v154
    %v1087 = vunpack.c.l.b16 %v155
    %v1088 = vunpack.c.h.b16 %v155
    %v1089 = vunpack.c.l.b16 %v156
    %v1090 = vunpack.c.h.b16 %v156
    %v1091 = vunpack.c.l.b16 %v157
    %v1092 = vunpack.c.h.b16 %v157
    %v1093 = vunpack.c.l.b16 %v158
    %v1094 = vunpack.c.h.b16 %v158
    %v1095 = vunpack.c.l.b16 %v159
    %v1096 = vunpack.c.h.b16 %v159
    %v1097 = vunpack.c.l.b16 %v160
    %v1098 = vunpack.c.h.b16 %v160
    %v1099 = vunpack.c.l.b16 %v161
    %v1100 = vunpack.c.h.b16 %v161
    %v1101 = vunpack.c.l.b16 %v162
    %v1102 = vunpack.c.h.b16 %v162
    %v1103 = vunpack.c.l.b16 %v163
    %v1104 = vunpack.c.h.b16 %v163
    %v1105 = vunpack.c.l.b16 %v164
    %v1106 = vunpack.c.h.b16 %v164
    %v1107 = vunpack.c.l.b16 %v165
    %v1108 = vunpack.c.h.b16 %v165
    %v1109 = vunpack.c.l.b16 %v166
    %v1110 = vunpack.c.h.b16 %v166
    %v1111 = vunpack.c.l.b16 %v167
    %v1112 = vunpack.c.h.b16 %v167
    %v1113 = vunpack.c.l.b16 %v168
    %v1114 = vunpack.c.h.b16 %v168
    %v1115 = vunpack.c.l.b16 %v169
    %v1116 = vunpack.c.h.b16 %v169
    %v1117 = vunpack.c.l.b16 %v170
    %v1118 = vunpack.c.h.b16 %v170
    %v1119 = vunpack.c.l.b16 %v171
    %v1120 = vunpack.c.h.b16 %v171
    %v1121 = vunpack.c.l.b16 %v172
    %v1122 = vunpack.c.h.b16 %v172
    %v1123 = vunpack.c.l.b16 %v173
    %v1124 = vunpack.c.h.b16 %v173
    %v1125 = vunpack.c.l.b16 %v174
    %v1126 = vunpack.c.h.b16 %v174
    %v1127 = vunpack.c.l.b16 %v175
    %v1128 = vunpack.c.h.b16 %v175
    %v1129 = vunpack.c.l.b16 %v176
    %v1130 = vunpack.c.h.b16 %v176
    %v1131 = vunpack.c.l.b16 %v177
    %v1132 = vunpack.c.h.b16 %v177
    %v1133 = vunpack.c.l.b16 %v178
    %v1134 = vunpack.c.h.b16 %v178
    %v1135 = vunpack.c.l.b16 %v179
    %v1136 = vunpack.c.h.b16 %v179
    %v1137 = vunpack.c.l.b16 %v180
    %v1138 = vunpack.c.h.b16 %v180
    %v1139 = vunpack.c.l.b16 %v181
    %v1140 = vunpack.c.h.b16 %v181
    %v1141 = vunpack.c.l.b16 %v182
    %v1142 = vunpack.c.h.b16 %v182
    %v1143 = vunpack.c.l.b16 %v183
    %v1144 = vunpack.c.h.b16 %v183
    %v1145 = vunpack.c.l.b16 %v184
    %v1146 = vunpack.c.h.b16 %v184
    %v1147 = vunpack.c.l.b16 %v185
    %v1148 = vunpack.c.h.b16 %v185
    %v1149 = vunpack.c.l.b16 %v186
    %v1150 = vunpack.c.h.b16 %v186
    %v1151 = vunpack.c.l.b16 %v187
    %v1152 = vunpack.c.h.b16 %v187
    %v1153 = vunpack.c.l.b16 %v188
    %v1154 = vunpack.c.h.b16 %v188
    %v1155 = vunpack.c.l.b16 %v189
    %v1156 = vunpack.c.h.b16 %v189
    %v1157 = vunpack.c.l.b16 %v190
    %v1158 = vunpack.c.h.b16 %v190
    %v1159 = vunpack.c.l.b16 %v191
    %v1160 = vunpack.c.h.b16 %v191
    %v1161 = vunpack.c.l.b16 %v192
    %v1162 = vunpack.c.h.b16 %v192
    %v1163 = vunpack.c.l.b16 %v193
    %v1164 = vunpack.c.h.b16 %v193
    %v1165 = vunpack.c.l.b16 %v194
    %v1166 = vunpack.c.h.b16 %v194
    %v1167 = vunpack.c.l.b16 %v195
    %v1168 = vunpack.c.h.b16 %v195
    %v1169 = vunpack.c.l.b16 %v196
    %v1170 = vunpack.c.h.b16 %v196
    %v1171 = vunpack.c.l.b16 %v197
    %v1172 = vunpack.c.h.b16 %v197
    %v1173 = vunpack.c.l.b16 %v198
    %v1174 = vunpack.c.h.b16 %v198
    %v1175 = vunpack.c.l.b16 %v199
    %v1176 = vunpack.c.h.b16 %v199
    %v1177 = vunpack.c.l.b16 %v200
    %v1178 = vunpack.c.h.b16 %v200
    %v1179 = vunpack.c.l.b16 %v201
    %v1180 = vunpack.c.h.b16 %v201
    %v1181 = vunpack.c.l.b16 %v202
    %v1182 = vunpack.c.h.b16 %v202
    %v1183 = vunpack.c.l.b16 %v203
    %v1184 = vunpack.c.h.b16 %v203
    %v1185 = vunpack.c.l.b16 %v204
    %v1186 = vunpack.c.h.b16 %v204
    %v1187 = vunpack.c.l.b16 %v205
    %v1188 = vunpack.c.h.b16 %v205
    %v1189 = vunpack.c.l.b16 %v206
    %v1190 = vunpack.c.h.b16 %v206
    %v1191 = vunpack.c.l.b16 %v207
    %v1192 = vunpack.c.h.b16 %v207
    %v1193 = vunpack.c.l.b16 %v208
    %v1194 = vunpack.c.h.b16 %v208
    %v1195 = vunpack.c.l.b16 %v209
    %v1196 = vunpack.c.h.b16 %v209
    %v1197 = vunpack.c.l.b16 %v210
    %v1198 = vunpack.c.h.b16 %v210
    %v1199 = vunpack.c.l.b16 %v211
    %v1200 = vunpack.c.h.b16 %v211
    %v1201 = vunpack.c.l.b16 %v212
    %v1202 = vunpack.c.h.b16 %v212
    %v1203 = vunpack.c.l.b16 %v213
    %v1204 = vunpack.c.h.b16 %v213
    %v1205 = vunpack.c.l.b16 %v214
    %v1206 = vunpack.c.h.b16 %v214
    %v1207 = vunpack.c.l.b16 %v215
    %v1208 = vunpack.c.h.b16 %v215
    %v1209 = vunpack.c.l.b16 %v216
    %v1210 = vunpack.c.h.b16 %v216
    %v1211 = vunpack.c.l.b16 %v217
    %v1212 = vunpack.c.h.b16 %v217
    %v1213 = vunpack.c.l.b16 %v218
    %v1214 = vunpack.c.h.b16 %v218
    %v1215 = vunpack.c.l.b16 %v219
    %v1216 = vunpack.c.h.b16 %v219
    %v1217 = vunpack.c.l.b16 %v220
    %v1218 = vunpack.c.h.b16 %v220
    %v1219 = vunpack.c.l.b16 %v221
    %v1220 = vunpack.c.h.b16 %v221
    %v1221 = vunpack.c.l.b16 %v222
    %v1222 = vunpack.c.h.b16 %v222
    %v1223 = vunpack.c.l.b16 %v223
    %v1224 = vunpack.c.h.b16 %v223
    %v1225 = vunpack.c.l.b16 %v224
    %v1226 = vunpack.c.h.b16 %v224
    %v1227 = vunpack.c.l.b16 %v225
    %v1228 = vunpack.c.h.b16 %v225
    %v1229 = vunpack.c.l.b16 %v226
    %v1230 = vunpack.c.h.b16 %v226
    %v1231 = vunpack.c.l.b16 %v227
    %v1232 = vunpack.c.h.b16 %v227
    %v1233 = vunpack.c.l.b16 %v228
    %v1234 = vunpack.c.h.b16 %v228
    %v1235 = vunpack.c.l.b16 %v229
    %v1236 = vunpack.c.h.b16 %v229
    %v1237 = vunpack.c.l.b16 %v230
    %v1238 = vunpack.c.h.b16 %v230
    %v1239 = vunpack.c.l.b16 %v231
    %v1240 = vunpack.c.h.b16 %v231
    %v1241 = vunpack.c.l.b16 %v232
    %v1242 = vunpack.c.h.b16 %v232
    %v1243 = vunpack.c.l.b16 %v233
    %v1244 = vunpack.c.h.b16 %v233
    %v1245 = vunpack.c.l.b16 %v234
    %v1246 = vunpack.c.h.b16 %v234
    %v1247 = vunpack.c.l.b16 %v235
    %v1248 = vunpack.c.h.b16 %v235
    %v1249 = vunpack.c.l.b16 %v236
    %v1250 = vunpack.c.h.b16 %v236
    %v1251 = vunpack.c.l.b16 %v237
    %v1252 = vunpack.c.h.b16 %v237
    %v1253 = vunpack.c.l.b16 %v238
    %v1254 = vunpack.c.h.b16 %v238
    %v1255 = vunpack.c.l.b16 %v239
    %v1256 = vunpack.c.h.b16 %v239
    %v1257 = vunpack.c.l.b16 %v240
    %v1258 = vunpack.c.h.b16 %v240
    %v1259 = vunpack.c.l.b16 %v241
    %v1260 = vunpack.c.h.b16 %v241
    %v1261 = vunpack.c.l.b16 %v242
    %v1262 = vunpack.c.h.b16 %v242
    %v1263 = vunpack.c.l.b16 %v243
    %v1264 = vunpack.c.h.b16 %v243
    %v1265 = vunpack.c.l.b16 %v244
    %v1266 = vunpack.c.h.b16 %v244
    %v1267 = vunpack.c.l.b16 %v245
    %v1268 = vunpack.c.h.b16 %v245
    %v1269 = vunpack.c.l.b16 %v246
    %v1270 = vunpack.c.h.b16 %v246
    %v1271 = vunpack.c.l.b16 %v247
    %v1272 = vunpack.c.h.b16 %v247
    %v1273 = vunpack.c.l.b16 %v248
    %v1274 = vunpack.c.h.b16 %v248
    %v1275 = vunpack.c.l.b16 %v249
    %v1276 = vunpack.c.h.b16 %v249
    %v1277 = vunpack.c.l.b16 %v250
    %v1278 = vunpack.c.h.b16 %v250
    %v1279 = vunpack.c.l.b16 %v251
    %v1280 = vunpack.c.h.b16 %v251
    %v1281 = vunpack.c.l.b16 %v252
    %v1282 = vunpack.c.h.b16 %v252
    %v1283 = vunpack.c.l.b16 %v253
    %v1284 = vunpack.c.h.b16 %v253
    %v1285 = vunpack.c.l.b16 %v254
    %v1286 = vunpack.c.h.b16 %v254
    %v1287 = vunpack.c.l.b16 %v255
    %v1288 = vunpack.c.h.b16 %v255
    %v1289 = vunpack.c.l.b16 %v256
    %v1290 = vunpack.c.h.b16 %v256
    %v1291 = vunpack.c.l.b16 %v257
    %v1292 = vunpack.c.h.b16 %v257
    %v1293 = vunpack.c.l.b16 %v258
    %v1294 = vunpack.c.h.b16 %v258
    %v1295 = vunpack.c.l.b16 %v259
    %v1296 = vunpack.c.h.b16 %v259
    %v1297 = vunpack.c.l.b16 %v260
    %v1298 = vunpack.c.h.b16 %v260
    %v1299 = vunpack.c.l.b16 %v261
    %v1300 = vunpack.c.h.b16 %v261
    %v1301 = vunpack.c.l.b16 %v262
    %v1302 = vunpack.c.h.b16 %v262
    %v1303 = vunpack.c.l.b16 %v263
    %v1304 = vunpack.c.h.b16 %v263
    %v1305 = vunpack.c.l.b16 %v264
    %v1306 = vunpack.c.h.b16 %v264
    %v1307 = vunpack.c.l.b16 %v265
    %v1308 = vunpack.c.h.b16 %v265
    %v1309 = vunpack.c.l.b16 %v266
    %v1310 = vunpack.c.h.b16 %v266
    %v1311 = vunpack.c.l.b16 %v267
    %v1312 = vunpack.c.h.b16 %v267
    %v1313 = vunpack.c.l.b16 %v268
    %v1314 = vunpack.c.h.b16 %v268
    %v1315 = vunpack.c.l.b16 %v269
    %v1316 = vunpack.c.h.b16 %v269
    %v1317 = vunpack.c.l.b16 %v270
    %v1318 = vunpack.c.h.b16 %v270
    %v1319 = vunpack.c.l.b16 %v271
    %v1320 = vunpack.c.h.b16 %v271
    %v1321 = vunpack.c.l.b16 %v272
    %v1322 = vunpack.c.h.b16 %v272
    %v1323 = vunpack.c.l.b16 %v273
    %v1324 = vunpack.c.h.b16 %v273
    %v1325 = vunpack.c.l.b16 %v274
    %v1326 = vunpack.c.h.b16 %v274
    %v1327 = vunpack.c.l.b16 %v275
    %v1328 = vunpack.c.h.b16 %v275
    %v1329 = vunpack.c.l.b16 %v276
    %v1330 = vunpack.c.h.b16 %v276
    %v1331 = vunpack.c.l.b16 %v277
    %v1332 = vunpack.c.h.b16 %v277
    %v1333 = vunpack.c.l.b16 %v278
    %v1334 = vunpack.c.h.b16 %v278
    %v1335 = vunpack.c.l.b16 %v279
    %v1336 = vunpack.c.h.b16 %v279
    %v1337 = vunpack.c.l.b16 %v280
    %v1338 = vunpack.c.h.b16 %v280
    %v1339 = vunpack.c.l.b16 %v281
    %v1340 = vunpack.c.h.b16 %v281
    %v1341 = vunpack.c.l.b16 %v282
    %v1342 = vunpack.c.h.b16 %v282
    %v1343 = vunpack.c.l.b16 %v283
    %v1344 = vunpack.c.h.b16 %v283
    %v1345 = vunpack.c.l.b16 %v284
    %v1346 = vunpack.c.h.b16 %v284
    %v1347 = vunpack.c.l.b16 %v285
    %v1348 = vunpack.c.h.b16 %v285
    %v1349 = vunpack.c.l.b16 %v286
    %v1350 = vunpack.c.h.b16 %v286
    %v1351 = vunpack.c.l.b16 %v287
    %v1352 = vunpack.c.h.b16 %v287
    %v1353 = vunpack.c.l.b16 %v288
    %v1354 = vunpack.c.h.b16 %v288
    %v1355 = vunpack.c.l.b16 %v289
    %v1356 = vunpack.c.h.b16 %v289
    %v1357 = vunpack.c.l.b16 %v290
    %v1358 = vunpack.c.h.b16 %v290
    %v1359 = vunpack.c.l.b16 %v291
    %v1360 = vunpack.c.h.b16 %v291
    %v1361 = vunpack.c.l.b16 %v292
    %v1362 = vunpack.c.h.b16 %v292
    %v1363 = vunpack.c.l.b16 %v293
    %v1364 = vunpack.c.h.b16 %v293
    %v1365 = vunpack.c.l.b16 %v294
    %v1366 = vunpack.c.h.b16 %v294
    %v1367 = vunpack.c.l.b16 %v295
    %v1368 = vunpack.c.h.b16 %v295
    %v1369 = vunpack.c.l.b16 %v296
    %v1370 = vunpack.c.h.b16 %v296
    %v1371 = vunpack.c.l.b16 %v297
    %v1372 = vunpack.c.h.b16 %v297
    %v1373 = vunpack.c.l.b16 %v298
    %v1374 = vunpack.c.h.b16 %v298
    %v1375 = vunpack.c.l.b16 %v299
    %v1376 = vunpack.c.h.b16 %v299
    %v1377 = vunpack.c.l.b16 %v300
    %v1378 = vunpack.c.h.b16 %v300
    %v1379 = vunpack.c.l.b16 %v301
    %v1380 = vunpack.c.h.b16 %v301
    %v1381 = vunpack.c.l.b16 %v302
    %v1382 = vunpack.c.h.b16 %v302
    %v1383 = vunpack.c.l.b16 %v303
    %v1384 = vunpack.c.h.b16 %v303
    %v1385 = vunpack.c.l.b16 %v304
    %v1386 = vunpack.c.h.b16 %v304
    %v1387 = vunpack.c.l.b16 %v305
    %v1388 = vunpack.c.h.b16 %v305
    %v1389 = vunpack.c.l.b16 %v306
    %v1390 = vunpack.c.h.b16 %v306
    %v1391 = vunpack.c.l.b16 %v307
    %v1392 = vunpack.c.h.b16 %v307
    %v1393 = vunpack.c.l.b16 %v308
    %v1394 = vunpack.c.h.b16 %v308
    %v1395 = vunpack.c.l.b16 %v309
    %v1396 = vunpack.c.h.b16 %v309
    %v1397 = vunpack.c.l.b16 %v310
    %v1398 = vunpack.c.h.b16 %v310
    %v1399 = vunpack.c.l.b16 %v311
    %v1400 = vunpack.c.h.b16 %v311
    %v1401 = vunpack.c.l.b16 %v312
    %v1402 = vunpack.c.h.b16 %v312
    %v1403 = vunpack.c.l.b16 %v313
    %v1404 = vunpack.c.h.b16 %v313
    %v1405 = vunpack.c.l.b16 %v314
    %v1406 = vunpack.c.h.b16 %v314
    %v1407 = vunpack.c.l.b16 %v315
    %v1408 = vunpack.c.h.b16 %v315
    %v1409 = vunpack.c.l.b16 %v316
    %v1410 = vunpack.c.h.b16 %v316
    %v1411 = vunpack.c.l.b16 %v317
    %v1412 = vunpack.c.h.b16 %v317
    %v1413 = vunpack.c.l.b16 %v318
    %v1414 = vunpack.c.h.b16 %v318
    %v1415 = vunpack.c.l.b16 %v319
    %v1416 = vunpack.c.h.b16 %v319
    %v1417 = vunpack.c.l.b16 %v320
    %v1418 = vunpack.c.h.b16 %v320
    %v1419 = vunpack.c.l.b16 %v321
    %v1420 = vunpack.c.h.b16 %v321
    %v1421 = vunpack.c.l.b16 %v322
    %v1422 = vunpack.c.h.b16 %v322
    %v1423 = vunpack.c.l.b16 %v323
    %v1424 = vunpack.c.h.b16 %v323
    %v1425 = vunpack.c.l.b16 %v324
    %v1426 = vunpack.c.h.b16 %v324
    %v1427 = vunpack.c.l.b16 %v325
    %v1428 = vunpack.c.h.b16 %v325
    %v1429 = vunpack.c.l.b16 %v326
    %v1430 = vunpack.c.h.b16 %v326
    %v1431 = vunpack.c.l.b16 %v327
    %v1432 = vunpack.c.h.b16 %v327
    %v1433 = vunpack.c.l.b16 %v328
    %v1434 = vunpack.c.h.b16 %v328
    %v1435 = vunpack.c.l.b16 %v329
    %v1436 = vunpack.c.h.b16 %v329
    %v1437 = vunpack.c.l.b16 %v330
    %v1438 = vunpack.c.h.b16 %v330
    %v1439 = vunpack.c.l.b16 %v331
    %v1440 = vunpack.c.h.b16 %v331
    %v1441 = vunpack.c.l.b16 %v332
    %v1442 = vunpack.c.h.b16 %v332
    %v1443 = vunpack.c.l.b16 %v333
    %v1444 = vunpack.c.h.b16 %v333
    %v1445 = vunpack.c.l.b16 %v334
    %v1446 = vunpack.c.h.b16 %v334
    %v1447 = vunpack.c.l.b16 %v335
    %v1448 = vunpack.c.h.b16 %v335
    %v1449 = vunpack.c.l.b16 %v336
    %v1450 = vunpack.c.h.b16 %v336
    %v1451 = vunpack.c.l.b16 %v337
    %v1452 = vunpack.c.h.b16 %v337
    %v1453 = vunpack.c.l.b16 %v338
    %v1454 = vunpack.c.h.b16 %v338
    %v1455 = vunpack.c.l.b16 %v339
    %v1456 = vunpack.c.h.b16 %v339
    %v1457 = vunpack.c.l.b16 %v340
    %v1458 = vunpack.c.h.b16 %v340
    %v1459 = vunpack.c.l.b16 %v341
    %v1460 = vunpack.c.h.b16 %v341
    %v1461 = vunpack.c.l.b16 %v342
    %v1462 = vunpack.c.h.b16 %v342
    %v1463 = vunpack.c.l.b16 %v343
    %v1464 = vunpack.c.h.b16 %v343
    %v1465 = vunpack.c.l.b16 %v344
    %v1466 = vunpack.c.h.b16 %v344
    %v1467 = vunpack.c.l.b16 %v345
    %v1468 = vunpack.c.h.b16 %v345
    %v1469 = vunpack.c.l.b16 %v346
    %v1470 = vunpack.c.h.b16 %v346
    %v1471 = vunpack.c.l.b16 %v347
    %v1472 = vunpack.c.h.b16 %v347
    %v1473 = vunpack.c.l.b16 %v348
    %v1474 = vunpack.c.h.b16 %v348
    %v1475 = vunpack.c.l.b16 %v349
    %v1476 = vunpack.c.h.b16 %v349
    %v1477 = vunpack.c.l.b16 %v350
    %v1478 = vunpack.c.h.b16 %v350
    %v1479 = vunpack.c.l.b16 %v351
    %v1480 = vunpack.c.h.b16 %v351
    %v1481 = vunpack.c.l.b16 %v352
    %v1482 = vunpack.c.h.b16 %v352
    %v1483 = vunpack.c.l.b16 %v353
    %v1484 = vunpack.c.h.b16 %v353
    %v1485 = vunpack.c.l.b16 %v354
    %v1486 = vunpack.c.h.b16 %v354
    %v1487 = vunpack.c.l.b16 %v355
    %v1488 = vunpack.c.h.b16 %v355
    %v1489 = vunpack.c.l.b16 %v356
    %v1490 = vunpack.c.h.b16 %v356
    %v1491 = vunpack.c.l.b16 %v357
    %v1492 = vunpack.c.h.b16 %v357
    %v1493 = vunpack.c.l.b16 %v358
    %v1494 = vunpack.c.h.b16 %v358
    %v1495 = vunpack.c.l.b16 %v359
    %v1496 = vunpack.c.h.b16 %v359
    %v1497 = vunpack.c.l.b16 %v360
    %v1498 = vunpack.c.h.b16 %v360
    %v1499 = vunpack.c.l.b16 %v361
    %v1500 = vunpack.c.h.b16 %v361
    %v1501 = vunpack.c.l.b16 %v362
    %v1502 = vunpack.c.h.b16 %v362
    %v1503 = vunpack.c.l.b16 %v363
    %v1504 = vunpack.c.h.b16 %v363
    %v1505 = vunpack.c.l.b16 %v364
    %v1506 = vunpack.c.h.b16 %v364
    %v1507 = vunpack.c.l.b16 %v365
    %v1508 = vunpack.c.h.b16 %v365
    %v1509 = vunpack.c.l.b16 %v366
    %v1510 = vunpack.c.h.b16 %v366
    %v1511 = vunpack.c.l.b16 %v367
    %v1512 = vunpack.c.h.b16 %v367
    %v1513 = vunpack.c.l.b16 %v368
    %v1514 = vunpack.c.h.b16 %v368
    %v1515 = vunpack.c.l.b16 %v369
    %v1516 = vunpack.c.h.b16 %v369
    %v1517 = vunpack.c.l.b16 %v370
    %v1518 = vunpack.c.h.b16 %v370
    %v1519 = vunpack.c.l.b16 %v371
    %v1520 = vunpack.c.h.b16 %v371
    %v1521 = vunpack.c.l.b16 %v372
    %v1522 = vunpack.c.h.b16 %v372
    %v1523 = vunpack.c.l.b16 %v373
    %v1524 = vunpack.c.h.b16 %v373
    %v1525 = vunpack.c.l.b16 %v374
    %v1526 = vunpack.c.h.b16 %v374
    %v1527 = vunpack.c.l.b16 %v375
    %v1528 = vunpack.c.h.b16 %v375
    %v1529 = vunpack.c.l.b16 %v376
    %v1530 = vunpack.c.h.b16 %v376
    %v1531 = vunpack.c.l.b16 %v377
    %v1532 = vunpack.c.h.b16 %v377
    %v1533 = vunpack.c.l.b16 %v378
    %v1534 = vunpack.c.h.b16 %v378
    %v1535 = vunpack.c.l.b16 %v379
    %v1536 = vunpack.c.h.b16 %v379
    %v1537 = vunpack.c.l.b16 %v380
    %v1538 = vunpack.c.h.b16 %v380
    %v1539 = vunpack.c.l.b16 %v381
    %v1540 = vunpack.c.h.b16 %v381
    %v1541 = vunpack.c.l.b16 %v382
    %v1542 = vunpack.c.h.b16 %v382
    %v1543 = vunpack.c.l.b16 %v383
    %v1544 = vunpack.c.h.b16 %v383
    %v1545 = vunpack.c.l.b16 %v384
    %v1546 = vunpack.c.h.b16 %v384
    %v1547 = vunpack.c.l.b16 %v385
    %v1548 = vunpack.c.h.b16 %v385
    %v1549 = vunpack.c.l.b16 %v386
    %v1550 = vunpack.c.h.b16 %v386
    %v1551 = vunpack.c.l.b16 %v387
    %v1552 = vunpack.c.h.b16 %v387
    %v1553 = vunpack.c.l.b16 %v388
    %v1554 = vunpack.c.h.b16 %v388
    %v1555 = vunpack.c.l.b16 %v389
    %v1556 = vunpack.c.h.b16 %v389
    %v1557 = vunpack.c.l.b16 %v390
    %v1558 = vunpack.c.h.b16 %v390
    %v1559 = vunpack.c.l.b16 %v391
    %v1560 = vunpack.c.h.b16 %v391
    %v1561 = vunpack.c.l.b16 %v392
    %v1562 = vunpack.c.h.b16 %v392
    %v1563 = vunpack.c.l.b16 %v393
    %v1564 = vunpack.c.h.b16 %v393
    %v1565 = vunpack.c.l.b16 %v394
    %v1566 = vunpack.c.h.b16 %v394
    %v1567 = vunpack.c.l.b16 %v395
    %v1568 = vunpack.c.h.b16 %v395
    %v1569 = vunpack.c.l.b16 %v396
    %v1570 = vunpack.c.h.b16 %v396
    %v1571 = vunpack.c.l.b16 %v397
    %v1572 = vunpack.c.h.b16 %v397
    %v1573 = vunpack.c.l.b16 %v398
    %v1574 = vunpack.c.h.b16 %v398
    %v1575 = vunpack.c.l.b16 %v399
    %v1576 = vunpack.c.h.b16 %v399
    %v1577 = vunpack.c.l.b16 %v400
    %v1578 = vunpack.c.h.b16 %v400
    %v1579 = vunpack.c.l.b16 %v401
    %v1580 = vunpack.c.h.b16 %v401
    %v1581 = vunpack.c.l.b16 %v402
    %v1582 = vunpack.c.h.b16 %v402
    %v1583 = vunpack.c.l.b16 %v403
    %v1584 = vunpack.c.h.b16 %v403
    %v1585 = vunpack.c.l.b16 %v404
    %v1586 = vunpack.c.h.b16 %v404
    %v1587 = vunpack.c.l.b16 %v405
    %v1588 = vunpack.c.h.b16 %v405
    %v1589 = vunpack.c.l.b16 %v406
    %v1590 = vunpack.c.h.b16 %v406
    %v1591 = vunpack.c.l.b16 %v407
    %v1592 = vunpack.c.h.b16 %v407
    %v1593 = vunpack.c.l.b16 %v408
    %v1594 = vunpack.c.h.b16 %v408
    %v1595 = vunpack.c.l.b16 %v409
    %v1596 = vunpack.c.h.b16 %v409
    %v1597 = vunpack.c.l.b16 %v410
    %v1598 = vunpack.c.h.b16 %v410
    %v1599 = vunpack.c.l.b16 %v411
    %v1600 = vunpack.c.h.b16 %v411
    %v1601 = vunpack.c.l.b16 %v412
    %v1602 = vunpack.c.h.b16 %v412
    %v1603 = vunpack.c.l.b16 %v413
    %v1604 = vunpack.c.h.b16 %v413
    %v1605 = vunpack.c.l.b16 %v414
    %v1606 = vunpack.c.h.b16 %v414
    %v1607 = vunpack.c.l.b16 %v415
    %v1608 = vunpack.c.h.b16 %v415
    %v1609 = vunpack.c.l.b16 %v416
    %v1610 = vunpack.c.h.b16 %v416
    %v1611 = vunpack.c.l.b16 %v417
    %v1612 = vunpack.c.h.b16 %v417
    %v1613 = vunpack.c.l.b16 %v418
    %v1614 = vunpack.c.h.b16 %v418
    %v1615 = vunpack.c.l.b16 %v419
    %v1616 = vunpack.c.h.b16 %v419
    %v1617 = vunpack.c.l.b16 %v420
    %v1618 = vunpack.c.h.b16 %v420
    %v1619 = vunpack.c.l.b16 %v421
    %v1620 = vunpack.c.h.b16 %v421
    %v1621 = vunpack.c.l.b16 %v422
    %v1622 = vunpack.c.h.b16 %v422
    %v1623 = vunpack.c.l.b16 %v423
    %v1624 = vunpack.c.h.b16 %v423
    %v1625 = vunpack.c.l.b16 %v424
    %v1626 = vunpack.c.h.b16 %v424
    %v1627 = vunpack.c.l.b16 %v425
    %v1628 = vunpack.c.h.b16 %v425
    %v1629 = vunpack.c.l.b16 %v426
    %v1630 = vunpack.c.h.b16 %v426
    %v1631 = vunpack.c.l.b16 %v427
    %v1632 = vunpack.c.h.b16 %v427
    %v1633 = vunpack.c.l.b16 %v428
    %v1634 = vunpack.c.h.b16 %v428
    %v1635 = vunpack.c.l.b16 %v429
    %v1636 = vunpack.c.h.b16 %v429
    %v1637 = vunpack.c.l.b16 %v430
    %v1638 = vunpack.c.h.b16 %v430
    %v1639 = vunpack.c.l.b16 %v431
    %v1640 = vunpack.c.h.b16 %v431
    %v1641 = vunpack.c.l.b16 %v432
    %v1642 = vunpack.c.h.b16 %v432
    %v1643 = vunpack.c.l.b16 %v433
    %v1644 = vunpack.c.h.b16 %v433
    %v1645 = vunpack.c.l.b16 %v434
    %v1646 = vunpack.c.h.b16 %v434
    %v1647 = vunpack.c.l.b16 %v435
    %v1648 = vunpack.c.h.b16 %v435
    %v1649 = vunpack.c.l.b16 %v436
    %v1650 = vunpack.c.h.b16 %v436
    %v1651 = vunpack.c.l.b16 %v437
    %v1652 = vunpack.c.h.b16 %v437
    %v1653 = vunpack.c.l.b16 %v438
    %v1654 = vunpack.c.h.b16 %v438
    %v1655 = vunpack.c.l.b16 %v439
    %v1656 = vunpack.c.h.b16 %v439
    %v1657 = vunpack.c.l.b16 %v440
    %v1658 = vunpack.c.h.b16 %v440
    %v1659 = vunpack.c.l.b16 %v441
    %v1660 = vunpack.c.h.b16 %v441
    %v1661 = vunpack.c.l.b16 %v442
    %v1662 = vunpack.c.h.b16 %v442
    %v1663 = vunpack.c.l.b16 %v443
    %v1664 = vunpack.c.h.b16 %v443
    %v1665 = vunpack.c.l.b16 %v444
    %v1666 = vunpack.c.h.b16 %v444
    %v1667 = vunpack.c.l.b16 %v445
    %v1668 = vunpack.c.h.b16 %v445
    %v1669 = vunpack.c.l.b16 %v446
    %v1670 = vunpack.c.h.b16 %v446
    %v1671 = vunpack.c.l.b16 %v447
    %v1672 = vunpack.c.h.b16 %v447
    %v1673 = vunpack.c.l.b16 %v448
    %v1674 = vunpack.c.h.b16 %v448
    %v1675 = vunpack.c.l.b16 %v449
    %v1676 = vunpack.c.h.b16 %v449
    %v1677 = vunpack.c.l.b16 %v450
    %v1678 = vunpack.c.h.b16 %v450
    %v1679 = vunpack.c.l.b16 %v451
    %v1680 = vunpack.c.h.b16 %v451
    %v1681 = vunpack.c.l.b16 %v452
    %v1682 = vunpack.c.h.b16 %v452
    %v1683 = vunpack.c.l.b16 %v453
    %v1684 = vunpack.c.h.b16 %v453
    %v1685 = vunpack.c.l.b16 %v454
    %v1686 = vunpack.c.h.b16 %v454
    %v1687 = vunpack.c.l.b16 %v455
    %v1688 = vunpack.c.h.b16 %v455
    %v1689 = vunpack.c.l.b16 %v456
    %v1690 = vunpack.c.h.b16 %v456
    %v1691 = vunpack.c.l.b16 %v457
    %v1692 = vunpack.c.h.b16 %v457
    %v1693 = vunpack.c.l.b16 %v458
    %v1694 = vunpack.c.h.b16 %v458
    %v1695 = vunpack.c.l.b16 %v459
    %v1696 = vunpack.c.h.b16 %v459
    %v1697 = vunpack.c.l.b16 %v460
    %v1698 = vunpack.c.h.b16 %v460
    %v1699 = vunpack.c.l.b16 %v461
    %v1700 = vunpack.c.h.b16 %v461
    %v1701 = vunpack.c.l.b16 %v462
    %v1702 = vunpack.c.h.b16 %v462
    %v1703 = vunpack.c.l.b16 %v463
    %v1704 = vunpack.c.h.b16 %v463
    %v1705 = vunpack.c.l.b16 %v464
    %v1706 = vunpack.c.h.b16 %v464
    %v1707 = vunpack.c.l.b16 %v465
    %v1708 = vunpack.c.h.b16 %v465
    %v1709 = vunpack.c.l.b16 %v466
    %v1710 = vunpack.c.h.b16 %v466
    %v1711 = vunpack.c.l.b16 %v467
    %v1712 = vunpack.c.h.b16 %v467
    %v1713 = vunpack.c.l.b16 %v468
    %v1714 = vunpack.c.h.b16 %v468
    %v1715 = vunpack.c.l.b16 %v469
    %v1716 = vunpack.c.h.b16 %v469
    %v1717 = vunpack.c.l.b16 %v470
    %v1718 = vunpack.c.h.b16 %v470
    %v1719 = vunpack.c.l.b16 %v471
    %v1720 = vunpack.c.h.b16 %v471
    %v1721 = vunpack.c.l.b16 %v472
    %v1722 = vunpack.c.h.b16 %v472
    %v1723 = vunpack.c.l.b16 %v473
    %v1724 = vunpack.c.h.b16 %v473
    %v1725 = vunpack.c.l.b16 %v474
    %v1726 = vunpack.c.h.b16 %v474
    %v1727 = vunpack.c.l.b16 %v475
    %v1728 = vunpack.c.h.b16 %v475
    %v1729 = vunpack.c.l.b16 %v476
    %v1730 = vunpack.c.h.b16 %v476
    %v1731 = vunpack.c.l.b16 %v477
    %v1732 = vunpack.c.h.b16 %v477
    %v1733 = vunpack.c.l.b16 %v478
    %v1734 = vunpack.c.h.b16 %v478
    %v1735 = vunpack.c.l.b16 %v479
    %v1736 = vunpack.c.h.b16 %v479
    %v1737 = vunpack.c.l.b16 %v480
    %v1738 = vunpack.c.h.b16 %v480
    %v1739 = vunpack.c.l.b16 %v481
    %v1740 = vunpack.c.h.b16 %v481
    %v1741 = vunpack.c.l.b16 %v482
    %v1742 = vunpack.c.h.b16 %v482
    %v1743 = vunpack.c.l.b16 %v483
    %v1744 = vunpack.c.h.b16 %v483
    %v1745 = vunpack.c.l.b16 %v484
    %v1746 = vunpack.c.h.b16 %v484
    %v1747 = vunpack.c.l.b16 %v485
    %v1748 = vunpack.c.h.b16 %v485
    %v1749 = vunpack.c.l.b16 %v486
    %v1750 = vunpack.c.h.b16 %v486
    %v1751 = vunpack.c.l.b16 %v487
    %v1752 = vunpack.c.h.b16 %v487
    %v1753 = vunpack.c.l.b16 %v488
    %v1754 = vunpack.c.h.b16 %v488
    %v1755 = vunpack.c.l.b16 %v489
    %v1756 = vunpack.c.h.b16 %v489
    %v1757 = vunpack.c.l.b16 %v490
    %v1758 = vunpack.c.h.b16 %v490
    %v1759 = vunpack.c.l.b16 %v491
    %v1760 = vunpack.c.h.b16 %v491
    %v1761 = vunpack.c.l.b16 %v492
    %v1762 = vunpack.c.h.b16 %v492
    %v1763 = vunpack.c.l.b16 %v493
    %v1764 = vunpack.c.h.b16 %v493
    %v1765 = vunpack.c.l.b16 %v494
    %v1766 = vunpack.c.h.b16 %v494
    %v1767 = vunpack.c.l.b16 %v495
    %v1768 = vunpack.c.h.b16 %v495
    %v1769 = vunpack.c.l.b16 %v496
    %v1770 = vunpack.c.h.b16 %v496
    %v1771 = vunpack.c.l.b16 %v497
    %v1772 = vunpack.c.h.b16 %v497
    %v1773 = vunpack.c.l.b16 %v498
    %v1774 = vunpack.c.h.b16 %v498
    %v1775 = vunpack.c.l.b16 %v499
    %v1776 = vunpack.c.h.b16 %v499
    %v1777 = vunpack.c.l.b16 %v500
    %v1778 = vunpack.c.h.b16 %v500
    %v1779 = vunpack.c.l.b16 %v501
    %v1780 = vunpack.c.h.b16 %v501
    %v1781 = vunpack.c.l.b16 %v502
    %v1782 = vunpack.c.h.b16 %v502
    %v1783 = vpack.c.b16 %v1023, %v1015
    %v1784 = vpack.c.b16 %v1024, %v1016
    %v1785 = vpack.c.b16 %v1025, %v1017
    %v1786 = vpack.c.b16 %v1026, %v1018
    %v1787 = vpack.c.b16 %v1027, %v1019
    %v1788 = vpack.c.b16 %v1028, %v1020
    %v1789 = vpack.c.b16 %v1029, %v1021
    %v1790 = vpack.c.b16 %v1030, %v1022
    %v1791 = vpack.c.b16 %v1039, %v1031
    %v1792 = vpack.c.b16 %v1040, %v1032
    %v1793 = vpack.c.b16 %v1041, %v1033
    %v1794 = vpack.c.b16 %v1042, %v1034
    %v1795 = vpack.c.b16 %v1043, %v1035
    %v1796 = vpack.c.b16 %v1044, %v1036
    %v1797 = vpack.c.b16 %v1045, %v1037
    %v1798 = vpack.c.b16 %v1046, %v1038
    %v1799 = vpack.c.b16 %v1055, %v1047
    %v1800 = vpack.c.b16 %v1056, %v1048
    %v1801 = vpack.c.b16 %v1057, %v1049
    %v1802 = vpack.c.b16 %v1058, %v1050
    %v1803 = vpack.c.b16 %v1059, %v1051
    %v1804 = vpack.c.b16 %v1060, %v1052
    %v1805 = vpack.c.b16 %v1061, %v1053
    %v1806 = vpack.c.b16 %v1062, %v1054
    %v1807 = vpack.c.b16 %v1071, %v1063
    %v1808 = vpack.c.b16 %v1072, %v1064
    %v1809 = vpack.c.b16 %v1073, %v1065
    %v1810 = vpack.c.b16 %v1074, %v1066
    %v1811 = vpack.c.b16 %v1075, %v1067
    %v1812 = vpack.c.b16 %v1076, %v1068
    %v1813 = vpack.c.b16 %v1077, %v1069
    %v1814 = vpack.c.b16 %v1078, %v1070
    %v1815 = vpack.c.b16 %v1087, %v1079
    %v1816 = vpack.c.b16 %v1088, %v1080
    %v1817 = vpack.c.b16 %v1089, %v1081
    %v1818 = vpack.c.b16 %v1090, %v1082
    %v1819 = vpack.c.b16 %v1091, %v1083
    %v1820 = vpack.c.b16 %v1092, %v1084
    %v1821 = vpack.c.b16 %v1093, %v1085
    %v1822 = vpack.c.b16 %v1094, %v1086
    %v1823 = vpack.c.b16 %v1103, %v1095
    %v1824 = vpack.c.b16 %v1104, %v1096
    %v1825 = vpack.c.b16 %v1105, %v1097
    %v1826 = vpack.c.b16 %v1106, %v1098
    %v1827 = vpack.c.b16 %v1107, %v1099
    %v1828 = vpack.c.b16 %v1108, %v1100
    %v1829 = vpack.c.b16 %v1109, %v1101
    %v1830 = vpack.c.b16 %v1110, %v1102
    %v1831 = vpack.c.b16 %v1119, %v1111
    %v1832 = vpack.c.b16 %v1120, %v1112
    %v1833 = vpack.c.b16 %v1121, %v1113
    %v1834 = vpack.c.b16 %v1122, %v1114
    %v1835 = vpack.c.b16 %v1123, %v1115
    %v1836 = vpack.c.b16 %v1124, %v1116
    %v1837 = vpack.c.b16 %v1125, %v1117
    %v1838 = vpack.c.b16 %v1126, %v1118
    %v1839 = vpack.c.b16 %v1135, %v1127
    %v1840 = vpack.c.b16 %v1136, %v1128
    %v1841 = vpack.c.b16 %v1137, %v1129
    %v1842 = vpack.c.b16 %v1138, %v1130
    %v1843 = vpack.c.b16 %v1139, %v1131
    %v1844 = vpack.c.b16 %v1140, %v1132
    %v1845 = vpack.c.b16 %v1141, %v1133
    %v1846 = vpack.c.b16 %v1142, %v1134
    %v1847 = vpack.c.b16 %v1151, %v1143
    %v1848 = vpack.c.b16 %v1152, %v1144
    %v1849 = vpack.c.b16 %v1153, %v1145
    %v1850 = vpack.c.b16 %v1154, %v1146
    %v1851 = vpack.c.b16 %v1155, %v1147
    %v1852 = vpack.c.b16 %v1156, %v1148
    %v1853 = vpack.c.b16 %v1157, %v1149
    %v1854 = vpack.c.b16 %v1158, %v1150
    %v1855 = vpack.c.b16 %v1167, %v1159
    %v1856 = vpack.c.b16 %v1168, %v1160
    %v1857 = vpack.c.b16 %v1169, %v1161
    %v1858 = vpack.c.b16 %v1170, %v1162
    %v1859 = vpack.c.b16 %v1171, %v1163
    %v1860 = vpack.c.b16 %v1172, %v1164
    %v1861 = vpack.c.b16 %v1173, %v1165
    %v1862 = vpack.c.b16 %v1174, %v1166
    %v1863 = vpack.c.b16 %v1183, %v1175
    %v1864 = vpack.c.b16 %v1184, %v1176
    %v1865 = vpack.c.b16 %v1185, %v1177
    %v1866 = vpack.c.b16 %v1186, %v1178
    %v1867 = vpack.c.b16 %v1187, %v1179
    %v1868 = vpack.c.b16 %v1188, %v1180
    %v1869 = vpack.c.b16 %v1189, %v1181
    %v1870 = vpack.c.b16 %v1190, %v1182
    %v1871 = vpack.c.b16 %v1199, %v1191
    %v1872 = vpack.c.b16 %v1200, %v1192
    %v1873 = vpack.c.b16 %v1201, %v1193
    %v1874 = vpack.c.b16 %v1202, %v1194
    %v1875 = vpack.c.b16 %v1203, %v1195
    %v1876 = vpack.c.b16 %v1204, %v1196
    %v1877 = vpack.c.b16 %v1205, %v1197
    %v1878 = vpack.c.b16 %v1206, %v1198
    %v1879 = vpack.c.b16 %v1215, %v1207
    %v1880 = vpack.c.b16 %v1216, %v1208
    %v1881 = vpack.c.b16 %v1217, %v1209
    %v1882 = vpack.c.b16 %v1218, %v1210
    %v1883 = vpack.c.b16 %v1219, %v1211
    %v1884 = vpack.c.b16 %v1220, %v1212
    %v1885 = vpack.c.b16 %v1221, %v1213
    %v1886 = vpack.c.b16 %v1222, %v1214
    %v1887 = vpack.c.b16 %v1231, %v1223
    %v1888 = vpack.c.b16 %v1232, %v1224
    %v1889 = vpack.c.b16 %v1233, %v1225
    %v1890 = vpack.c.b16 %v1234, %v1226
    %v1891 = vpack.c.b16 %v1235, %v1227
    %v1892 = vpack.c.b16 %v1236, %v1228
    %v1893 = vpack.c.b16 %v1237, %v1229
    %v1894 = vpack.c.b16 %v1238, %v1230
    %v1895 = vpack.c.b16 %v1247, %v1239
    %v1896 = vpack.c.b16 %v1248, %v1240
    %v1897 = vpack.c.b16 %v1249, %v1241
    %v1898 = vpack.c.b16 %v1250, %v1242
    %v1899 = vpack.c.b16 %v1251, %v1243
    %v1900 = vpack.c.b16 %v1252, %v1244
    %v1901 = vpack.c.b16 %v1253, %v1245
    %v1902 = vpack.c.b16 %v1254, %v1246
    %v1903 = vpack.c.b16 %v1263, %v1255
    %v1904 = vpack.c.b16 %v1264, %v1256
    %v1905 = vpack.c.b16 %v1265, %v1257
    %v1906 = vpack.c.b16 %v1266, %v1258
    %v1907 = vpack.c.b16 %v1267, %v1259
    %v1908 = vpack.c.b16 %v1268, %v1260
    %v1909 = vpack.c.b16 %v1269, %v1261
    %v1910 = vpack.c.b16 %v1270, %v1262
    %v1911 = vpack.c.b16 %v1279, %v1271
    %v1912 = vpack.c.b16 %v1280, %v1272
    %v1913 = vpack.c.b16 %v1281, %v1273
    %v1914 = vpack.c.b16 %v1282, %v1274
    %v1915 = vpack.c.b16 %v1283, %v1275
    %v1916 = vpack.c.b16 %v1284, %v1276
    %v1917 = vpack.c.b16 %v1285, %v1277
    %v1918 = vpack.c.b16 %v1286, %v1278
    %v1919 = vpack.c.b16 %v1295, %v1287
    %v1920 = vpack.c.b16 %v1296, %v1288
    %v1921 = vpack.c.b16 %v1297, %v1289
    %v1922 = vpack.c.b16 %v1298, %v1290
    %v1923 = vpack.c.b16 %v1299, %v1291
    %v1924 = vpack.c.b16 %v1300, %v1292
    %v1925 = vpack.c.b16 %v1301, %v1293
    %v1926 = vpack.c.b16 %v1302, %v1294
    %v1927 = vpack.c.b16 %v1311, %v1303
    %v1928 = vpack.c.b16 %v1312, %v1304
    %v1929 = vpack.c.b16 %v1313, %v1305
    %v1930 = vpack.c.b16 %v1314, %v1306
    %v1931 = vpack.c.b16 %v1315, %v1307
    %v1932 = vpack.c.b16 %v1316, %v1308
    %v1933 = vpack.c.b16 %v1317, %v1309
    %v1934 = vpack.c.b16 %v1318, %v1310
    %v1935 = vpack.c.b16 %v1327, %v1319
    %v1936 = vpack.c.b16 %v1328, %v1320
    %v1937 = vpack.c.b16 %v1329, %v1321
    %v1938 = vpack.c.b16 %v1330, %v1322
    %v1939 = vpack.c.b16 %v1331, %v1323
    %v1940 = vpack.c.b16 %v1332, %v1324
    %v1941 = vpack.c.b16 %v1333, %v1325
    %v1942 = vpack.c.b16 %v1334, %v1326
    %v1943 = vpack.c.b16 %v1343, %v1335
    %v1944 = vpack.c.b16 %v1344, %v1336
    %v1945 = vpack.c.b16 %v1345, %v1337
    %v1946 = vpack.c.b16 %v1346, %v1338
    %v1947 = vpack.c.b16 %v1347, %v1339
    %v1948 = vpack.c.b16 %v1348, %v1340
    %v1949 = vpack.c.b16 %v1349, %v1341
    %v1950 = vpack.c.b16 %v1350, %v1342
    %v1951 = vpack.c.b16 %v1359, %v1351
    %v1952 = vpack.c.b16 %v1360, %v1352
    %v1953 = vpack.c.b16 %v1361, %v1353
    %v1954 = vpack.c.b16 %v1362, %v1354
    %v1955 = vpack.c.b16 %v1363, %v1355
    %v1956 = vpack.c.b16 %v1364, %v1356
    %v1957 = vpack.c.b16 %v1365, %v1357
    %v1958 = vpack.c.b16 %v1366, %v1358
    %v1959 = vpack.c.b16 %v1375, %v1367
    %v1960 = vpack.c.b16 %v1376, %v1368
    %v1961 = vpack.c.b16 %v1377, %v1369
    %v1962 = vpack.c.b16 %v1378, %v1370
    %v1963 = vpack.c.b16 %v1379, %v1371
    %v1964 = vpack.c.b16 %v1380, %v1372
    %v1965 = vpack.c.b16 %v1381, %v1373
    %v1966 = vpack.c.b16 %v1382, %v1374
    %v1967 = vpack.c.b16 %v1391, %v1383
    %v1968 = vpack.c.b16 %v1392, %v1384
    %v1969 = vpack.c.b16 %v1393, %v1385
    %v1970 = vpack.c.b16 %v1394, %v1386
    %v1971 = vpack.c.b16 %v1395, %v1387
    %v1972 = vpack.c.b16 %v1396, %v1388
    %v1973 = vpack.c.b16 %v1397, %v1389
    %v1974 = vpack.c.b16 %v1398, %v1390
    %v1975 = vpack.c.b16 %v1407, %v1399
    %v1976 = vpack.c.b16 %v1408, %v1400
    %v1977 = vpack.c.b16 %v1409, %v1401
    %v1978 = vpack.c.b16 %v1410, %v1402
    %v1979 = vpack.c.b16 %v1411, %v1403
    %v1980 = vpack.c.b16 %v1412, %v1404
    %v1981 = vpack.c.b16 %v1413, %v1405
    %v1982 = vpack.c.b16 %v1414, %v1406
    %v1983 = vpack.c.b16 %v1423, %v1415
    %v1984 = vpack.c.b16 %v1424, %v1416
    %v1985 = vpack.c.b16 %v1425, %v1417
    %v1986 = vpack.c.b16 %v1426, %v1418
    %v1987 = vpack.c.b16 %v1427, %v1419
    %v1988 = vpack.c.b16 %v1428, %v1420
    %v1989 = vpack.c.b16 %v1429, %v1421
    %v1990 = vpack.c.b16 %v1430, %v1422
    %v1991 = vpack.c.b16 %v1439, %v1431
    %v1992 = vpack.c.b16 %v1440, %v1432
    %v1993 = vpack.c.b16 %v1441, %v1433
    %v1994 = vpack.c.b16 %v1442, %v1434
    %v1995 = vpack.c.b16 %v1443, %v1435
    %v1996 = vpack.c.b16 %v1444, %v1436
    %v1997 = vpack.c.b16 %v1445, %v1437
    %v1998 = vpack.c.b16 %v1446, %v1438
    %v1999 = vpack.c.b16 %v1455, %v1447
    %v2000 = vpack.c.b16 %v1456, %v1448
    %v2001 = vpack.c.b16 %v1457, %v1449
    %v2002 = vpack.c.b16 %v1458, %v1450
    %v2003 = vpack.c.b16 %v1459, %v1451
    %v2004 = vpack.c.b16 %v1460, %v1452
    %v2005 = vpack.c.b16 %v1461, %v1453
    %v2006 = vpack.c.b16 %v1462, %v1454
    %v2007 = vpack.c.b16 %v1471, %v1463
    %v2008 = vpack.c.b16 %v1472, %v1464
    %v2009 = vpack.c.b16 %v1473, %v1465
    %v2010 = vpack.c.b16 %v1474, %v1466
    %v2011 = vpack.c.b16 %v1475, %v1467
    %v2012 = vpack.c.b16 %v1476, %v1468
    %v2013 = vpack.c.b16 %v1477, %v1469
    %v2014 = vpack.c.b16 %v1478, %v1470
    %v2015 = vpack.c.b16 %v1487, %v1479
    %v2016 = vpack.c.b16 %v1488, %v1480
    %v2017 = vpack.c.b16 %v1489, %v1481
    %v2018 = vpack.c.b16 %v1490, %v1482
    %v2019 = vpack.c.b16 %v1491, %v1483
    %v2020 = vpack.c.b16 %v1492, %v1484
    %v2021 = vpack.c.b16 %v1493, %v1485
    %v2022 = vpack.c.b16 %v1494, %v1486
    %v2023 = vpack.c.b16 %v1503, %v1495
    %v2024 = vpack.c.b16 %v1504, %v1496
    %v2025 = vpack.c.b16 %v1505, %v1497
    %v2026 = vpack.c.b16 %v1506, %v1498
    %v2027 = vpack.c.b16 %v1507, %v1499
    %v2028 = vpack.c.b16 %v1508, %v1500
    %v2029 = vpack.c.b16 %v1509, %v1501
    %v2030 = vpack.c.b16 %v1510, %v1502
    %v2031 = vpack.c.b16 %v1519, %v1511
    %v2032 = vpack.c.b16 %v1520, %v1512
    %v2033 = vpack.c.b16 %v1521, %v1513
    %v2034 = vpack.c.b16 %v1522, %v1514
    %v2035 = vpack.c.b16 %v1523, %v1515
    %v2036 = vpack.c.b16 %v1524, %v1516
    %v2037 = vpack.c.b16 %v1525, %v1517
    %v2038 = vpack.c.b16 %v1526, %v1518
    %v2039 = vpack.c.b16 %v1535, %v1527
    %v2040 = vpack.c.b16 %v1536, %v1528
    %v2041 = vpack.c.b16 %v1537, %v1529
    %v2042 = vpack.c.b16 %v1538, %v1530
    %v2043 = vpack.c.b16 %v1539, %v1531
    %v2044 = vpack.c.b16 %v1540, %v1532
    %v2045 = vpack.c.b16 %v1541, %v1533
    %v2046 = vpack.c.b16 %v1542, %v1534
    %v2047 = vpack.c.b16 %v1551, %v1543
    %v2048 = vpack.c.b16 %v1552, %v1544
    %v2049 = vpack.c.b16 %v1553, %v1545
    %v2050 = vpack.c.b16 %v1554, %v1546
    %v2051 = vpack.c.b16 %v1555, %v1547
    %v2052 = vpack.c.b16 %v1556, %v1548
    %v2053 = vpack.c.b16 %v1557, %v1549
    %v2054 = vpack.c.b16 %v1558, %v1550
    %v2055 = vpack.c.b16 %v1567, %v1559
    %v2056 = vpack.c.b16 %v1568, %v1560
    %v2057 = vpack.c.b16 %v1569, %v1561
    %v2058 = vpack.c.b16 %v1570, %v1562
    %v2059 = vpack.c.b16 %v1571, %v1563
    %v2060 = vpack.c.b16 %v1572, %v1564
    %v2061 = vpack.c.b16 %v1573, %v1565
    %v2062 = vpack.c.b16 %v1574, %v1566
    %v2063 = vpack.c.b16 %v1583, %v1575
    %v2064 = vpack.c.b16 %v1584, %v1576
    %v2065 = vpack.c.b16 %v1585, %v1577
    %v2066 = vpack.c.b16 %v1586, %v1578
    %v2067 = vpack.c.b16 %v1587, %v1579
    %v2068 = vpack.c.b16 %v1588, %v1580
    %v2069 = vpack.c.b16 %v1589, %v1581
    %v2070 = vpack.c.b16 %v1590, %v1582
    %v2071 = vpack.c.b16 %v1599, %v1591
    %v2072 = vpack.c.b16 %v1600, %v1592
    %v2073 = vpack.c.b16 %v1601, %v1593
    %v2074 = vpack.c.b16 %v1602, %v1594
    %v2075 = vpack.c.b16 %v1603, %v1595
    %v2076 = vpack.c.b16 %v1604, %v1596
    %v2077 = vpack.c.b16 %v1605, %v1597
    %v2078 = vpack.c.b16 %v1606, %v1598
    %v2079 = vpack.c.b16 %v1615, %v1607
    %v2080 = vpack.c.b16 %v1616, %v1608
    %v2081 = vpack.c.b16 %v1617, %v1609
    %v2082 = vpack.c.b16 %v1618, %v1610
    %v2083 = vpack.c.b16 %v1619, %v1611
    %v2084 = vpack.c.b16 %v1620, %v1612
    %v2085 = vpack.c.b16 %v1621, %v1613
    %v2086 = vpack.c.b16 %v1622, %v1614
    %v2087 = vpack.c.b16 %v1631, %v1623
    %v2088 = vpack.c.b16 %v1632, %v1624
    %v2089 = vpack.c.b16 %v1633, %v1625
    %v2090 = vpack.c.b16 %v1634, %v1626
    %v2091 = vpack.c.b16 %v1635, %v1627
    %v2092 = vpack.c.b16 %v1636, %v1628
    %v2093 = vpack.c.b16 %v1637, %v1629
    %v2094 = vpack.c.b16 %v1638, %v1630
    %v2095 = vpack.c.b16 %v1647, %v1639
    %v2096 = vpack.c.b16 %v1648, %v1640
    %v2097 = vpack.c.b16 %v1649, %v1641
    %v2098 = vpack.c.b16 %v1650, %v1642
    %v2099 = vpack.c.b16 %v1651, %v1643
    %v2100 = vpack.c.b16 %v1652, %v1644
    %v2101 = vpack.c.b16 %v1653, %v1645
    %v2102 = vpack.c.b16 %v1654, %v1646
    %v2103 = vpack.c.b16 %v1663, %v1655
    %v2104 = vpack.c.b16 %v1664, %v1656
    %v2105 = vpack.c.b16 %v1665, %v1657
    %v2106 = vpack.c.b16 %v1666, %v1658
    %v2107 = vpack.c.b16 %v1667, %v1659
    %v2108 = vpack.c.b16 %v1668, %v1660
    %v2109 = vpack.c.b16 %v1669, %v1661
    %v2110 = vpack.c.b16 %v1670, %v1662
    %v2111 = vpack.c.b16 %v1679, %v1671
    %v2112 = vpack.c.b16 %v1680, %v1672
    %v2113 = vpack.c.b16 %v1681, %v1673
    %v2114 = vpack.c.b16 %v1682, %v1674
    %v2115 = vpack.c.b16 %v1683, %v1675
    %v2116 = vpack.c.b16 %v1684, %v1676
    %v2117 = vpack.c.b16 %v1685, %v1677
    %v2118 = vpack.c.b16 %v1686, %v1678
    %v2119 = vpack.c.b16 %v1695, %v1687
    %v2120 = vpack.c.b16 %v1696, %v1688
    %v2121 = vpack.c.b16 %v1697, %v1689
    %v2122 = vpack.c.b16 %v1698, %v1690
    %v2123 = vpack.c.b16 %v1699, %v1691
    %v2124 = vpack.c.b16 %v1700, %v1692
    %v2125 = vpack.c.b16 %v1701, %v1693
    %v2126 = vpack.c.b16 %v1702, %v1694
    %v2127 = vpack.c.b16 %v1711, %v1703
    %v2128 = vpack.c.b16 %v1712, %v1704
    %v2129 = vpack.c.b16 %v1713, %v1705
    %v2130 = vpack.c.b16 %v1714, %v1706
    %v2131 = vpack.c.b16 %v1715, %v1707
    %v2132 = vpack.c.b16 %v1716, %v1708
    %v2133 = vpack.c.b16 %v1717, %v1709
    %v2134 = vpack.c.b16 %v1718, %v1710
    %v2135 = vpack.c.b16 %v1727, %v1719
    %v2136 = vpack.c.b16 %v1728, %v1720
    %v2137 = vpack.c.b16 %v1729, %v1721
    %v2138 = vpack.c.b16 %v1730, %v1722
    %v2139 = vpack.c.b16 %v1731, %v1723
    %v2140 = vpack.c.b16 %v1732, %v1724
    %v2141 = vpack.c.b16 %v1733, %v1725
    %v2142 = vpack.c.b16 %v1734, %v1726
    %v2143 = vpack.c.b16 %v1743, %v1735
    %v2144 = vpack.c.b16 %v1744, %v1736
    %v2145 = vpack.c.b16 %v1745, %v1737
    %v2146 = vpack.c.b16 %v1746, %v1738
    %v2147 = vpack.c.b16 %v1747, %v1739
    %v2148 = vpack.c.b16 %v1748, %v1740
    %v2149 = vpack.c.b16 %v1749, %v1741
    %v2150 = vpack.c.b16 %v1750, %v1742
    %v2151 = vpack.c.b16 %v1759, %v1751
    %v2152 = vpack.c.b16 %v1760, %v1752
    %v2153 = vpack.c.b16 %v1761, %v1753
    %v2154 = vpack.c.b16 %v1762, %v1754
    %v2155 = vpack.c.b16 %v1763, %v1755
    %v2156 = vpack.c.b16 %v1764, %v1756
    %v2157 = vpack.c.b16 %v1765, %v1757
    %v2158 = vpack.c.b16 %v1766, %v1758
    %v2159 = vpack.c.b16 %v1775, %v1767
    %v2160 = vpack.c.b16 %v1776, %v1768
    %v2161 = vpack.c.b16 %v1777, %v1769
    %v2162 = vpack.c.b16 %v1778, %v1770
    %v2163 = vpack.c.b16 %v1779, %v1771
    %v2164 = vpack.c.b16 %v1780, %v1772
    %v2165 = vpack.c.b16 %v1781, %v1773
    %v2166 = vpack.c.b16 %v1782, %v1774
    %v2679 = vunpack.c.l.b16 %v503
    %v2680 = vunpack.c.h.b16 %v503
    %v2681 = vunpack.c.l.b16 %v504
    %v2682 = vunpack.c.h.b16 %v504
    %v2683 = vunpack.c.l.b16 %v505
    %v2684 = vunpack.c.h.b16 %v505
    %v2685 = vunpack.c.l.b16 %v506
    %v2686 = vunpack.c.h.b16 %v506
    %v2687 = vunpack.c.l.b16 %v507
    %v2688 = vunpack.c.h.b16 %v507
    %v2689 = vunpack.c.l.b16 %v508
    %v2690 = vunpack.c.h.b16 %v508
    %v2691 = vunpack.c.l.b16 %v509
    %v2692 = vunpack.c.h.b16 %v509
    %v2693 = vunpack.c.l.b16 %v510
    %v2694 = vunpack.c.h.b16 %v510
    %v2695 = vunpack.c.l.b16 %v511
    %v2696 = vunpack.c.h.b16 %v511
    %v2697 = vunpack.c.l.b16 %v512
    %v2698 = vunpack.c.h.b16 %v512
    %v2699 = vunpack.c.l.b16 %v513
    %v2700 = vunpack.c.h.b16 %v513
    %v2701 = vunpack.c.l.b16 %v514
    %v2702 = vunpack.c.h.b16 %v514
    %v2703 = vunpack.c.l.b16 %v515
    %v2704 = vunpack.c.h.b16 %v515
    %v2705 = vunpack.c.l.b16 %v516
    %v2706 = vunpack.c.h.b16 %v516
    %v2707 = vunpack.c.l.b16 %v517
    %v2708 = vunpack.c.h.b16 %v517
    %v2709 = vunpack.c.l.b16 %v518
    %v2710 = vunpack.c.h.b16 %v518
    %v2711 = vunpack.c.l.b16 %v519
    %v2712 = vunpack.c.h.b16 %v519
    %v2713 = vunpack.c.l.b16 %v520
    %v2714 = vunpack.c.h.b16 %v520
    %v2715 = vunpack.c.l.b16 %v521
    %v2716 = vunpack.c.h.b16 %v521
    %v2717 = vunpack.c.l.b16 %v522
    %v2718 = vunpack.c.h.b16 %v522
    %v2719 = vunpack.c.l.b16 %v523
    %v2720 = vunpack.c.h.b16 %v523
    %v2721 = vunpack.c.l.b16 %v524
    %v2722 = vunpack.c.h.b16 %v524
    %v2723 = vunpack.c.l.b16 %v525
    %v2724 = vunpack.c.h.b16 %v525
    %v2725 = vunpack.c.l.b16 %v526
    %v2726 = vunpack.c.h.b16 %v526
    %v2727 = vunpack.c.l.b16 %v527
    %v2728 = vunpack.c.h.b16 %v527
    %v2729 = vunpack.c.l.b16 %v528
    %v2730 = vunpack.c.h.b16 %v528
    %v2731 = vunpack.c.l.b16 %v529
    %v2732 = vunpack.c.h.b16 %v529
    %v2733 = vunpack.c.l.b16 %v530
    %v2734 = vunpack.c.h.b16 %v530
    %v2735 = vunpack.c.l.b16 %v531
    %v2736 = vunpack.c.h.b16 %v531
    %v2737 = vunpack.c.l.b16 %v532
    %v2738 = vunpack.c.h.b16 %v532
    %v2739 = vunpack.c.l.b16 %v533
    %v2740 = vunpack.c.h.b16 %v533
    %v2741 = vunpack.c.l.b16 %v534
    %v2742 = vunpack.c.h.b16 %v534
    %v2743 = vunpack.c.l.b16 %v535
    %v2744 = vunpack.c.h.b16 %v535
    %v2745 = vunpack.c.l.b16 %v536
    %v2746 = vunpack.c.h.b16 %v536
    %v2747 = vunpack.c.l.b16 %v537
    %v2748 = vunpack.c.h.b16 %v537
    %v2749 = vunpack.c.l.b16 %v538
    %v2750 = vunpack.c.h.b16 %v538
    %v2751 = vunpack.c.l.b16 %v539
    %v2752 = vunpack.c.h.b16 %v539
    %v2753 = vunpack.c.l.b16 %v540
    %v2754 = vunpack.c.h.b16 %v540
    %v2755 = vunpack.c.l.b16 %v541
    %v2756 = vunpack.c.h.b16 %v541
    %v2757 = vunpack.c.l.b16 %v542
    %v2758 = vunpack.c.h.b16 %v542
    %v2759 = vunpack.c.l.b16 %v543
    %v2760 = vunpack.c.h.b16 %v543
    %v2761 = vunpack.c.l.b16 %v544
    %v2762 = vunpack.c.h.b16 %v544
    %v2763 = vunpack.c.l.b16 %v545
    %v2764 = vunpack.c.h.b16 %v545
    %v2765 = vunpack.c.l.b16 %v546
    %v2766 = vunpack.c.h.b16 %v546
    %v2767 = vunpack.c.l.b16 %v547
    %v2768 = vunpack.c.h.b16 %v547
    %v2769 = vunpack.c.l.b16 %v548
    %v2770 = vunpack.c.h.b16 %v548
    %v2771 = vunpack.c.l.b16 %v549
    %v2772 = vunpack.c.h.b16 %v549
    %v2773 = vunpack.c.l.b16 %v550
    %v2774 = vunpack.c.h.b16 %v550
    %v2775 = vunpack.c.l.b16 %v551
    %v2776 = vunpack.c.h.b16 %v551
    %v2777 = vunpack.c.l.b16 %v552
    %v2778 = vunpack.c.h.b16 %v552
    %v2779 = vunpack.c.l.b16 %v553
    %v2780 = vunpack.c.h.b16 %v553
    %v2781 = vunpack.c.l.b16 %v554
    %v2782 = vunpack.c.h.b16 %v554
    %v2783 = vunpack.c.l.b16 %v555
    %v2784 = vunpack.c.h.b16 %v555
    %v2785 = vunpack.c.l.b16 %v556
    %v2786 = vunpack.c.h.b16 %v556
    %v2787 = vunpack.c.l.b16 %v557
    %v2788 = vunpack.c.h.b16 %v557
    %v2789 = vunpack.c.l.b16 %v558
    %v2790 = vunpack.c.h.b16 %v558
    %v2791 = vunpack.c.l.b16 %v559
    %v2792 = vunpack.c.h.b16 %v559
    %v2793 = vunpack.c.l.b16 %v560
    %v2794 = vunpack.c.h.b16 %v560
    %v2795 = vunpack.c.l.b16 %v561
    %v2796 = vunpack.c.h.b16 %v561
    %v2797 = vunpack.c.l.b16 %v562
    %v2798 = vunpack.c.h.b16 %v562
    %v2799 = vunpack.c.l.b16 %v563
    %v2800 = vunpack.c.h.b16 %v563
    %v2801 = vunpack.c.l.b16 %v564
    %v2802 = vunpack.c.h.b16 %v564
    %v2803 = vunpack.c.l.b16 %v565
    %v2804 = vunpack.c.h.b16 %v565
    %v2805 = vunpack.c.l.b16 %v566
    %v2806 = vunpack.c.h.b16 %v566
    %v2807 = vunpack.c.l.b16 %v567
    %v2808 = vunpack.c.h.b16 %v567
    %v2809 = vunpack.c.l.b16 %v568
    %v2810 = vunpack.c.h.b16 %v568
    %v2811 = vunpack.c.l.b16 %v569
    %v2812 = vunpack.c.h.b16 %v569
    %v2813 = vunpack.c.l.b16 %v570
    %v2814 = vunpack.c.h.b16 %v570
    %v2815 = vunpack.c.l.b16 %v571
    %v2816 = vunpack.c.h.b16 %v571
    %v2817 = vunpack.c.l.b16 %v572
    %v2818 = vunpack.c.h.b16 %v572
    %v2819 = vunpack.c.l.b16 %v573
    %v2820 = vunpack.c.h.b16 %v573
    %v2821 = vunpack.c.l.b16 %v574
    %v2822 = vunpack.c.h.b16 %v574
    %v2823 = vunpack.c.l.b16 %v575
    %v2824 = vunpack.c.h.b16 %v575
    %v2825 = vunpack.c.l.b16 %v576
    %v2826 = vunpack.c.h.b16 %v576
    %v2827 = vunpack.c.l.b16 %v577
    %v2828 = vunpack.c.h.b16 %v577
    %v2829 = vunpack.c.l.b16 %v578
    %v2830 = vunpack.c.h.b16 %v578
    %v2831 = vunpack.c.l.b16 %v579
    %v2832 = vunpack.c.h.b16 %v579
    %v2833 = vunpack.c.l.b16 %v580
    %v2834 = vunpack.c.h.b16 %v580
    %v2835 = vunpack.c.l.b16 %v581
    %v2836 = vunpack.c.h.b16 %v581
    %v2837 = vunpack.c.l.b16 %v582
    %v2838 = vunpack.c.h.b16 %v582
    %v2839 = vunpack.c.l.b16 %v583
    %v2840 = vunpack.c.h.b16 %v583
    %v2841 = vunpack.c.l.b16 %v584
    %v2842 = vunpack.c.h.b16 %v584
    %v2843 = vunpack.c.l.b16 %v585
    %v2844 = vunpack.c.h.b16 %v585
    %v2845 = vunpack.c.l.b16 %v586
    %v2846 = vunpack.c.h.b16 %v586
    %v2847 = vunpack.c.l.b16 %v587
    %v2848 = vunpack.c.h.b16 %v587
    %v2849 = vunpack.c.l.b16 %v588
    %v2850 = vunpack.c.h.b16 %v588
    %v2851 = vunpack.c.l.b16 %v589
    %v2852 = vunpack.c.h.b16 %v589
    %v2853 = vunpack.c.l.b16 %v590
    %v2854 = vunpack.c.h.b16 %v590
    %v2855 = vunpack.c.l.b16 %v591
    %v2856 = vunpack.c.h.b16 %v591
    %v2857 = vunpack.c.l.b16 %v592
    %v2858 = vunpack.c.h.b16 %v592
    %v2859 = vunpack.c.l.b16 %v593
    %v2860 = vunpack.c.h.b16 %v593
    %v2861 = vunpack.c.l.b16 %v594
    %v2862 = vunpack.c.h.b16 %v594
    %v2863 = vunpack.c.l.b16 %v595
    %v2864 = vunpack.c.h.b16 %v595
    %v2865 = vunpack.c.l.b16 %v596
    %v2866 = vunpack.c.h.b16 %v596
    %v2867 = vunpack.c.l.b16 %v597
    %v2868 = vunpack.c.h.b16 %v597
    %v2869 = vunpack.c.l.b16 %v598
    %v2870 = vunpack.c.h.b16 %v598
    %v2871 = vunpack.c.l.b16 %v599
    %v2872 = vunpack.c.h.b16 %v599
    %v2873 = vunpack.c.l.b16 %v600
    %v2874 = vunpack.c.h.b16 %v600
    %v2875 = vunpack.c.l.b16 %v601
    %v2876 = vunpack.c.h.b16 %v601
    %v2877 = vunpack.c.l.b16 %v602
    %v2878 = vunpack.c.h.b16 %v602
    %v2879 = vunpack.c.l.b16 %v603
    %v2880 = vunpack.c.h.b16 %v603
    %v2881 = vunpack.c.l.b16 %v604
    %v2882 = vunpack.c.h.b16 %v604
    %v2883 = vunpack.c.l.b16 %v605
    %v2884 = vunpack.c.h.b16 %v605
    %v2885 = vunpack.c.l.b16 %v606
    %v2886 = vunpack.c.h.b16 %v606
    %v2887 = vunpack.c.l.b16 %v607
    %v2888 = vunpack.c.h.b16 %v607
    %v2889 = vunpack.c.l.b16 %v608
    %v2890 = vunpack.c.h.b16 %v608
    %v2891 = vunpack.c.l.b16 %v609
    %v2892 = vunpack.c.h.b16 %v609
    %v2893 = vunpack.c.l.b16 %v610
    %v2894 = vunpack.c.h.b16 %v610
    %v2895 = vunpack.c.l.b16 %v611
    %v2896 = vunpack.c.h.b16 %v611
    %v2897 = vunpack.c.l.b16 %v612
    %v2898 = vunpack.c.h.b16 %v612
    %v2899 = vunpack.c.l.b16 %v613
    %v2900 = vunpack.c.h.b16 %v613
    %v2901 = vunpack.c.l.b16 %v614
    %v2902 = vunpack.c.h.b16 %v614
    %v2903 = vunpack.c.l.b16 %v615
    %v2904 = vunpack.c.h.b16 %v615
    %v2905 = vunpack.c.l.b16 %v616
    %v2906 = vunpack.c.h.b16 %v616
    %v2907 = vunpack.c.l.b16 %v617
    %v2908 = vunpack.c.h.b16 %v617
    %v2909 = vunpack.c.l.b16 %v618
    %v2910 = vunpack.c.h.b16 %v618
    %v2911 = vunpack.c.l.b16 %v619
    %v2912 = vunpack.c.h.b16 %v619
    %v2913 = vunpack.c.l.b16 %v620
    %v2914 = vunpack.c.h.b16 %v620
    %v2915 = vunpack.c.l.b16 %v621
    %v2916 = vunpack.c.h.b16 %v621
    %v2917 = vunpack.c.l.b16 %v622
    %v2918 = vunpack.c.h.b16 %v622
    %v2919 = vunpack.c.l.b16 %v623
    %v2920 = vunpack.c.h.b16 %v623
    %v2921 = vunpack.c.l.b16 %v624
    %v2922 = vunpack.c.h.b16 %v624
    %v2923 = vunpack.c.l.b16 %v625
    %v2924 = vunpack.c.h.b16 %v625
    %v2925 = vunpack.c.l.b16 %v626
    %v2926 = vunpack.c.h.b16 %v626
    %v2927 = vunpack.c.l.b16 %v627
    %v2928 = vunpack.c.h.b16 %v627
    %v2929 = vunpack.c.l.b16 %v628
    %v2930 = vunpack.c.h.b16 %v628
    %v2931 = vunpack.c.l.b16 %v629
    %v2932 = vunpack.c.h.b16 %v629
    %v2933 = vunpack.c.l.b16 %v630
    %v2934 = vunpack.c.h.b16 %v630
    %v2935 = vpack.c.b16 %v2681, %v2679
    %v2936 = vpack.c.b16 %v2682, %v2680
    %v2937 = vpack.c.b16 %v2685, %v2683
    %v2938 = vpack.c.b16 %v2686, %v2684
    %v2939 = vpack.c.b16 %v2689, %v2687
    %v2940 = vpack.c.b16 %v2690, %v2688
    %v2941 = vpack.c.b16 %v2693, %v2691
    %v2942 = vpack.c.b16 %v2694, %v2692
    %v2943 = vpack.c.b16 %v2697, %v2695
    %v2944 = vpack.c.b16 %v2698, %v2696
    %v2945 = vpack.c.b16 %v2701, %v2699
    %v2946 = vpack.c.b16 %v2702, %v2700
    %v2947 = vpack.c.b16 %v2705, %v2703
    %v2948 = vpack.c.b16 %v2706, %v2704
    %v2949 = vpack.c.b16 %v2709, %v2707
    %v2950 = vpack.c.b16 %v2710, %v2708
    %v2951 = vpack.c.b16 %v2713, %v2711
    %v2952 = vpack.c.b16 %v2714, %v2712
    %v2953 = vpack.c.b16 %v2717, %v2715
    %v2954 = vpack.c.b16 %v2718, %v2716
    %v2955 = vpack.c.b16 %v2721, %v2719
    %v2956 = vpack.c.b16 %v2722, %v2720
    %v2957 = vpack.c.b16 %v2725, %v2723
    %v2958 = vpack.c.b16 %v2726, %v2724
    %v2959 = vpack.c.b16 %v2729, %v2727
    %v2960 = vpack.c.b16 %v2730, %v2728
    %v2961 = vpack.c.b16 %v2733, %v2731
    %v2962 = vpack.c.b16 %v2734, %v2732
    %v2963 = vpack.c.b16 %v2737, %v2735
    %v2964 = vpack.c.b16 %v2738, %v2736
    %v2965 = vpack.c.b16 %v2741, %v2739
    %v2966 = vpack.c.b16 %v2742, %v2740
    %v2967 = vpack.c.b16 %v2745, %v2743
    %v2968 = vpack.c.b16 %v2746, %v2744
    %v2969 = vpack.c.b16 %v2749, %v2747
    %v2970 = vpack.c.b16 %v2750, %v2748
    %v2971 = vpack.c.b16 %v2753, %v2751
    %v2972 = vpack.c.b16 %v2754, %v2752
    %v2973 = vpack.c.b16 %v2757, %v2755
    %v2974 = vpack.c.b16 %v2758, %v2756
    %v2975 = vpack.c.b16 %v2761, %v2759
    %v2976 = vpack.c.b16 %v2762, %v2760
    %v2977 = vpack.c.b16 %v2765, %v2763
    %v2978 = vpack.c.b16 %v2766, %v2764
    %v2979 = vpack.c.b16 %v2769, %v2767
    %v2980 = vpack.c.b16 %v2770, %v2768
    %v2981 = vpack.c.b16 %v2773, %v2771
    %v2982 = vpack.c.b16 %v2774, %v2772
    %v2983 = vpack.c.b16 %v2777, %v2775
    %v2984 = vpack.c.b16 %v2778, %v2776
    %v2985 = vpack.c.b16 %v2781, %v2779
    %v2986 = vpack.c.b16 %v2782, %v2780
    %v2987 = vpack.c.b16 %v2785, %v2783
    %v2988 = vpack.c.b16 %v2786, %v2784
    %v2989 = vpack.c.b16 %v2789, %v2787
    %v2990 = vpack.c.b16 %v2790, %v2788
    %v2991 = vpack.c.b16 %v2793, %v2791
    %v2992 = vpack.c.b16 %v2794, %v2792
    %v2993 = vpack.c.b16 %v2797, %v2795
    %v2994 = vpack.c.b16 %v2798, %v2796
    %v2995 = vpack.c.b16 %v2801, %v2799
    %v2996 = vpack.c.b16 %v2802, %v2800
    %v2997 = vpack.c.b16 %v2805, %v2803
    %v2998 = vpack.c.b16 %v2806, %v2804
    %v2999 = vpack.c.b16 %v2809, %v2807
    %v3000 = vpack.c.b16 %v2810, %v2808
    %v3001 = vpack.c.b16 %v2813, %v2811
    %v3002 = vpack.c.b16 %v2814, %v2812
    %v3003 = vpack.c.b16 %v2817, %v2815
    %v3004 = vpack.c.b16 %v2818, %v2816
    %v3005 = vpack.c.b16 %v2821, %v2819
    %v3006 = vpack.c.b16 %v2822, %v2820
    %v3007 = vpack.c.b16 %v2825, %v2823
    %v3008 = vpack.c.b16 %v2826, %v2824
    %v3009 = vpack.c.b16 %v2829, %v2827
    %v3010 = vpack.c.b16 %v2830, %v2828
    %v3011 = vpack.c.b16 %v2833, %v2831
    %v3012 = vpack.c.b16 %v2834, %v2832
    %v3013 = vpack.c.b16 %v2837, %v2835
    %v3014 = vpack.c.b16 %v2838, %v2836
    %v3015 = vpack.c.b16 %v2841, %v2839
    %v3016 = vpack.c.b16 %v2842, %v2840
    %v3017 = vpack.c.b16 %v2845, %v2843
    %v3018 = vpack.c.b16 %v2846, %v2844
    %v3019 = vpack.c.b16 %v2849, %v2847
    %v3020 = vpack.c.b16 %v2850, %v2848
    %v3021 = vpack.c.b16 %v2853, %v2851
    %v3022 = vpack.c.b16 %v2854, %v2852
    %v3023 = vpack.c.b16 %v2857, %v2855
    %v3024 = vpack.c.b16 %v2858, %v2856
    %v3025 = vpack.c.b16 %v2861, %v2859
    %v3026 = vpack.c.b16 %v2862, %v2860
    %v3027 = vpack.c.b16 %v2865, %v2863
    %v3028 = vpack.c.b16 %v2866, %v2864
    %v3029 = vpack.c.b16 %v2869, %v2867
    %v3030 = vpack.c.b16 %v2870, %v2868
    %v3031 = vpack.c.b16 %v2873, %v2871
    %v3032 = vpack.c.b16 %v2874, %v2872
    %v3033 = vpack.c.b16 %v2877, %v2875
    %v3034 = vpack.c.b16 %v2878, %v2876
    %v3035 = vpack.c.b16 %v2881, %v2879
    %v3036 = vpack.c.b16 %v2882, %v2880
    %v3037 = vpack.c.b16 %v2885, %v2883
    %v3038 = vpack.c.b16 %v2886, %v2884
    %v3039 = vpack.c.b16 %v2889, %v2887
    %v3040 = vpack.c.b16 %v2890, %v2888
    %v3041 = vpack.c.b16 %v2893, %v2891
    %v3042 = vpack.c.b16 %v2894, %v2892
    %v3043 = vpack.c.b16 %v2897, %v2895
    %v3044 = vpack.c.b16 %v2898, %v2896
    %v3045 = vpack.c.b16 %v2901, %v2899
    %v3046 = vpack.c.b16 %v2902, %v2900
    %v3047 = vpack.c.b16 %v2905, %v2903
    %v3048 = vpack.c.b16 %v2906, %v2904
    %v3049 = vpack.c.b16 %v2909, %v2907
    %v3050 = vpack.c.b16 %v2910, %v2908
    %v3051 = vpack.c.b16 %v2913, %v2911
    %v3052 = vpack.c.b16 %v2914, %v2912
    %v3053 = vpack.c.b16 %v2917, %v2915
    %v3054 = vpack.c.b16 %v2918, %v2916
    %v3055 = vpack.c.b16 %v2921, %v2919
    %v3056 = vpack.c.b16 %v2922, %v2920
    %v3057 = vpack.c.b16 %v2925, %v2923
    %v3058 = vpack.c.b16 %v2926, %v2924
    %v3059 = vpack.c.b16 %v2929, %v2927
    %v3060 = vpack.c.b16 %v2930, %v2928
    %v3061 = vpack.c.b16 %v2933, %v2931
    %v3062 = vpack.c.b16 %v2934, %v2932
    %3191 = vmatprep.subr.bf16.mxu0 %v2950
    %3192 = vmatpush1.bf16.msra.mxu0 %v2949
    %3193 = vmatprep.subr.bf16.mxu0 %v2948
    %3194 = vmatpush1.bf16.msra.mxu0 %v2947
    %3195 = vmatprep.subr.bf16.mxu0 %v2946
    %3196 = vmatpush1.bf16.msra.mxu0 %v2945
    %3197 = vmatprep.subr.bf16.mxu0 %v2944
    %3198 = vmatpush1.bf16.msra.mxu0 %v2943
    %3199 = vmatprep.subr.bf16.mxu0 %v2942
    %3200 = vmatpush1.bf16.msra.mxu0 %v2941
    %3201 = vmatprep.subr.bf16.mxu0 %v2940
    %3202 = vmatpush1.bf16.msra.mxu0 %v2939
    %3203 = vmatprep.subr.bf16.mxu0 %v2938
    %3204 = vmatpush1.bf16.msra.mxu0 %v2937
    %3205 = vmatprep.subr.bf16.mxu0 %v2936
    %3206 = vmatpush1.bf16.msra.mxu0 %v2935
    %3207 = vmatprep.subr.bf16.mxu0 %v2966
    %3208 = vmatpush2.bf16.msra.mxu0 %v2965
    %3209 = vmatprep.subr.bf16.mxu0 %v2964
    %3210 = vmatpush2.bf16.msra.mxu0 %v2963
    %3211 = vmatprep.subr.bf16.mxu0 %v2962
    %3212 = vmatpush2.bf16.msra.mxu0 %v2961
    %3213 = vmatprep.subr.bf16.mxu0 %v2960
    %3214 = vmatpush2.bf16.msra.mxu0 %v2959
    %3215 = vmatprep.subr.bf16.mxu0 %v2958
    %3216 = vmatpush2.bf16.msra.mxu0 %v2957
    %3217 = vmatprep.subr.bf16.mxu0 %v2956
    %3218 = vmatpush2.bf16.msra.mxu0 %v2955
    %3219 = vmatprep.subr.bf16.mxu0 %v2954
    %3220 = vmatpush2.bf16.msra.mxu0 %v2953
    %3221 = vmatprep.subr.bf16.mxu0 %v2952
    %3222 = vmatpush2.bf16.msra.mxu0 %v2951
    %3223 = vmatprep.mubr.bf16.mxu0 %v1784
    %3224 = vmatmul.mubr.bf16.gmra.mxu0 %v1783
    %v3225 = vpop.f32.mrf.mxu0
    %v3226 = vadd.f32 0.0, %v3225
    %v3227 = vpop.f32.mrf.mxu0
    %v3228 = vadd.f32 0.0, %v3227
    %v3229 = vpop.f32.mrf.mxu0
    %v3230 = vadd.f32 0.0, %v3229
    %v3231 = vpop.f32.mrf.mxu0
    %v3232 = vadd.f32 0.0, %v3231
    %3233 = vmatprep.mubr.bf16.mxu0 %v1792
    %3234 = vmatmul.mubr.bf16.gmra.mxu0 %v1791
    %v3235 = vpop.f32.mrf.mxu0
    %v3236 = vadd.f32 0.0, %v3235
    %v3237 = vpop.f32.mrf.mxu0
    %v3238 = vadd.f32 0.0, %v3237
    %v3239 = vpop.f32.mrf.mxu0
    %v3240 = vadd.f32 0.0, %v3239
    %v3241 = vpop.f32.mrf.mxu0
    %v3242 = vadd.f32 0.0, %v3241
    %3243 = vmatprep.mubr.bf16.mxu0 %v1800
    %3244 = vmatmul.mubr.bf16.gmra.mxu0 %v1799
    %v3245 = vpop.f32.mrf.mxu0
    %v3246 = vadd.f32 0.0, %v3245
    %v3247 = vpop.f32.mrf.mxu0
    %v3248 = vadd.f32 0.0, %v3247
    %v3249 = vpop.f32.mrf.mxu0
    %v3250 = vadd.f32 0.0, %v3249
    %v3251 = vpop.f32.mrf.mxu0
    %v3252 = vadd.f32 0.0, %v3251
    %3253 = vmatprep.mubr.bf16.mxu0 %v1808
    %3254 = vmatmul.mubr.bf16.gmra.mxu0 %v1807
    %v3255 = vpop.f32.mrf.mxu0
    %v3256 = vadd.f32 0.0, %v3255
    %v3257 = vpop.f32.mrf.mxu0
    %v3258 = vadd.f32 0.0, %v3257
    %v3259 = vpop.f32.mrf.mxu0
    %v3260 = vadd.f32 0.0, %v3259
    %v3261 = vpop.f32.mrf.mxu0
    %v3262 = vadd.f32 0.0, %v3261
    %3263 = vmatprep.mubr.bf16.mxu0 %v1816
    %3264 = vmatmul.mubr.bf16.gmra.mxu0 %v1815
    %v3265 = vpop.f32.mrf.mxu0
    %v3266 = vadd.f32 0.0, %v3265
    %v3267 = vpop.f32.mrf.mxu0
    %v3268 = vadd.f32 0.0, %v3267
    %v3269 = vpop.f32.mrf.mxu0
    %v3270 = vadd.f32 0.0, %v3269
    %v3271 = vpop.f32.mrf.mxu0
    %v3272 = vadd.f32 0.0, %v3271
    %3273 = vmatprep.mubr.bf16.mxu0 %v1824
    %3274 = vmatmul.mubr.bf16.gmra.mxu0 %v1823
    %v3275 = vpop.f32.mrf.mxu0
    %v3276 = vadd.f32 0.0, %v3275
    %v3277 = vpop.f32.mrf.mxu0
    %v3278 = vadd.f32 0.0, %v3277
    %v3279 = vpop.f32.mrf.mxu0
    %v3280 = vadd.f32 0.0, %v3279
    %v3281 = vpop.f32.mrf.mxu0
    %v3282 = vadd.f32 0.0, %v3281
    %3283 = vmatprep.mubr.bf16.mxu0 %v1832
    %3284 = vmatmul.mubr.bf16.gmra.mxu0 %v1831
    %v3285 = vpop.f32.mrf.mxu0
    %v3286 = vadd.f32 0.0, %v3285
    %v3287 = vpop.f32.mrf.mxu0
    %v3288 = vadd.f32 0.0, %v3287
    %v3289 = vpop.f32.mrf.mxu0
    %v3290 = vadd.f32 0.0, %v3289
    %v3291 = vpop.f32.mrf.mxu0
    %v3292 = vadd.f32 0.0, %v3291
    %3293 = vmatprep.mubr.bf16.mxu0 %v1840
    %3294 = vmatmul.mubr.bf16.gmra.mxu0 %v1839
    %v3295 = vpop.f32.mrf.mxu0
    %v3296 = vadd.f32 0.0, %v3295
    %v3297 = vpop.f32.mrf.mxu0
    %v3298 = vadd.f32 0.0, %v3297
    %v3299 = vpop.f32.mrf.mxu0
    %v3300 = vadd.f32 0.0, %v3299
    %v3301 = vpop.f32.mrf.mxu0
    %v3302 = vadd.f32 0.0, %v3301
    %3303 = vmatprep.mubr.bf16.mxu0 %v1848
    %3304 = vmatmul.mubr.bf16.gmra.mxu0 %v1847
    %v3305 = vpop.f32.mrf.mxu0
    %v3306 = vadd.f32 0.0, %v3305
    %v3307 = vpop.f32.mrf.mxu0
    %v3308 = vadd.f32 0.0, %v3307
    %v3309 = vpop.f32.mrf.mxu0
    %v3310 = vadd.f32 0.0, %v3309
    %v3311 = vpop.f32.mrf.mxu0
    %v3312 = vadd.f32 0.0, %v3311
    %3313 = vmatprep.mubr.bf16.mxu0 %v1856
    %3314 = vmatmul.mubr.bf16.gmra.mxu0 %v1855
    %v3315 = vpop.f32.mrf.mxu0
    %v3316 = vadd.f32 0.0, %v3315
    %v3317 = vpop.f32.mrf.mxu0
    %v3318 = vadd.f32 0.0, %v3317
    %v3319 = vpop.f32.mrf.mxu0
    %v3320 = vadd.f32 0.0, %v3319
    %v3321 = vpop.f32.mrf.mxu0
    %v3322 = vadd.f32 0.0, %v3321
    %3323 = vmatprep.mubr.bf16.mxu0 %v1864
    %3324 = vmatmul.mubr.bf16.gmra.mxu0 %v1863
    %v3325 = vpop.f32.mrf.mxu0
    %v3326 = vadd.f32 0.0, %v3325
    %v3327 = vpop.f32.mrf.mxu0
    %v3328 = vadd.f32 0.0, %v3327
    %v3329 = vpop.f32.mrf.mxu0
    %v3330 = vadd.f32 0.0, %v3329
    %v3331 = vpop.f32.mrf.mxu0
    %v3332 = vadd.f32 0.0, %v3331
    %3333 = vmatprep.mubr.bf16.mxu0 %v1872
    %3334 = vmatmul.mubr.bf16.gmra.mxu0 %v1871
    %v3335 = vpop.f32.mrf.mxu0
    %v3336 = vadd.f32 0.0, %v3335
    %v3337 = vpop.f32.mrf.mxu0
    %v3338 = vadd.f32 0.0, %v3337
    %v3339 = vpop.f32.mrf.mxu0
    %v3340 = vadd.f32 0.0, %v3339
    %v3341 = vpop.f32.mrf.mxu0
    %v3342 = vadd.f32 0.0, %v3341
    %3343 = vmatprep.mubr.bf16.mxu0 %v1880
    %3344 = vmatmul.mubr.bf16.gmra.mxu0 %v1879
    %v3345 = vpop.f32.mrf.mxu0
    %v3346 = vadd.f32 0.0, %v3345
    %v3347 = vpop.f32.mrf.mxu0
    %v3348 = vadd.f32 0.0, %v3347
    %v3349 = vpop.f32.mrf.mxu0
    %v3350 = vadd.f32 0.0, %v3349
    %v3351 = vpop.f32.mrf.mxu0
    %v3352 = vadd.f32 0.0, %v3351
    %3353 = vmatprep.mubr.bf16.mxu0 %v1888
    %3354 = vmatmul.mubr.bf16.gmra.mxu0 %v1887
    %v3355 = vpop.f32.mrf.mxu0
    %v3356 = vadd.f32 0.0, %v3355
    %v3357 = vpop.f32.mrf.mxu0
    %v3358 = vadd.f32 0.0, %v3357
    %v3359 = vpop.f32.mrf.mxu0
    %v3360 = vadd.f32 0.0, %v3359
    %v3361 = vpop.f32.mrf.mxu0
    %v3362 = vadd.f32 0.0, %v3361
    %3363 = vmatprep.mubr.bf16.mxu0 %v1896
    %3364 = vmatmul.mubr.bf16.gmra.mxu0 %v1895
    %v3365 = vpop.f32.mrf.mxu0
    %v3366 = vadd.f32 0.0, %v3365
    %v3367 = vpop.f32.mrf.mxu0
    %v3368 = vadd.f32 0.0, %v3367
    %v3369 = vpop.f32.mrf.mxu0
    %v3370 = vadd.f32 0.0, %v3369
    %v3371 = vpop.f32.mrf.mxu0
    %v3372 = vadd.f32 0.0, %v3371
    %3373 = vmatprep.mubr.bf16.mxu0 %v1904
    %3374 = vmatmul.mubr.bf16.gmra.mxu0 %v1903
    %v3375 = vpop.f32.mrf.mxu0
    %v3376 = vadd.f32 0.0, %v3375
    %v3377 = vpop.f32.mrf.mxu0
    %v3378 = vadd.f32 0.0, %v3377
    %v3379 = vpop.f32.mrf.mxu0
    %v3380 = vadd.f32 0.0, %v3379
    %v3381 = vpop.f32.mrf.mxu0
    %v3382 = vadd.f32 0.0, %v3381
    %3383 = vmatprep.mubr.bf16.mxu0 %v1912
    %3384 = vmatmul.mubr.bf16.gmra.mxu0 %v1911
    %v3385 = vpop.f32.mrf.mxu0
    %v3386 = vadd.f32 0.0, %v3385
    %v3387 = vpop.f32.mrf.mxu0
    %v3388 = vadd.f32 0.0, %v3387
    %v3389 = vpop.f32.mrf.mxu0
    %v3390 = vadd.f32 0.0, %v3389
    %v3391 = vpop.f32.mrf.mxu0
    %v3392 = vadd.f32 0.0, %v3391
    %3393 = vmatprep.mubr.bf16.mxu0 %v1920
    %3394 = vmatmul.mubr.bf16.gmra.mxu0 %v1919
    %v3395 = vpop.f32.mrf.mxu0
    %v3396 = vadd.f32 0.0, %v3395
    %v3397 = vpop.f32.mrf.mxu0
    %v3398 = vadd.f32 0.0, %v3397
    %v3399 = vpop.f32.mrf.mxu0
    %v3400 = vadd.f32 0.0, %v3399
    %v3401 = vpop.f32.mrf.mxu0
    %v3402 = vadd.f32 0.0, %v3401
    %3403 = vmatprep.mubr.bf16.mxu0 %v1928
    %3404 = vmatmul.mubr.bf16.gmra.mxu0 %v1927
    %v3405 = vpop.f32.mrf.mxu0
    %v3406 = vadd.f32 0.0, %v3405
    %v3407 = vpop.f32.mrf.mxu0
    %v3408 = vadd.f32 0.0, %v3407
    %v3409 = vpop.f32.mrf.mxu0
    %v3410 = vadd.f32 0.0, %v3409
    %v3411 = vpop.f32.mrf.mxu0
    %v3412 = vadd.f32 0.0, %v3411
    %3413 = vmatprep.mubr.bf16.mxu0 %v1936
    %3414 = vmatmul.mubr.bf16.gmra.mxu0 %v1935
    %v3415 = vpop.f32.mrf.mxu0
    %v3416 = vadd.f32 0.0, %v3415
    %v3417 = vpop.f32.mrf.mxu0
    %v3418 = vadd.f32 0.0, %v3417
    %v3419 = vpop.f32.mrf.mxu0
    %v3420 = vadd.f32 0.0, %v3419
    %v3421 = vpop.f32.mrf.mxu0
    %v3422 = vadd.f32 0.0, %v3421
    %3423 = vmatprep.mubr.bf16.mxu0 %v1944
    %3424 = vmatmul.mubr.bf16.gmra.mxu0 %v1943
    %v3425 = vpop.f32.mrf.mxu0
    %v3426 = vadd.f32 0.0, %v3425
    %v3427 = vpop.f32.mrf.mxu0
    %v3428 = vadd.f32 0.0, %v3427
    %v3429 = vpop.f32.mrf.mxu0
    %v3430 = vadd.f32 0.0, %v3429
    %v3431 = vpop.f32.mrf.mxu0
    %v3432 = vadd.f32 0.0, %v3431
    %3433 = vmatprep.mubr.bf16.mxu0 %v1952
    %3434 = vmatmul.mubr.bf16.gmra.mxu0 %v1951
    %v3435 = vpop.f32.mrf.mxu0
    %v3436 = vadd.f32 0.0, %v3435
    %v3437 = vpop.f32.mrf.mxu0
    %v3438 = vadd.f32 0.0, %v3437
    %v3439 = vpop.f32.mrf.mxu0
    %v3440 = vadd.f32 0.0, %v3439
    %v3441 = vpop.f32.mrf.mxu0
    %v3442 = vadd.f32 0.0, %v3441
    %3443 = vmatprep.mubr.bf16.mxu0 %v1960
    %3444 = vmatmul.mubr.bf16.gmra.mxu0 %v1959
    %v3445 = vpop.f32.mrf.mxu0
    %v3446 = vadd.f32 0.0, %v3445
    %v3447 = vpop.f32.mrf.mxu0
    %v3448 = vadd.f32 0.0, %v3447
    %v3449 = vpop.f32.mrf.mxu0
    %v3450 = vadd.f32 0.0, %v3449
    %v3451 = vpop.f32.mrf.mxu0
    %v3452 = vadd.f32 0.0, %v3451
    %3453 = vmatprep.mubr.bf16.mxu0 %v1968
    %3454 = vmatmul.mubr.bf16.gmra.mxu0 %v1967
    %v3455 = vpop.f32.mrf.mxu0
    %v3456 = vadd.f32 0.0, %v3455
    %v3457 = vpop.f32.mrf.mxu0
    %v3458 = vadd.f32 0.0, %v3457
    %v3459 = vpop.f32.mrf.mxu0
    %v3460 = vadd.f32 0.0, %v3459
    %v3461 = vpop.f32.mrf.mxu0
    %v3462 = vadd.f32 0.0, %v3461
    %3463 = vmatprep.mubr.bf16.mxu0 %v1976
    %3464 = vmatmul.mubr.bf16.gmra.mxu0 %v1975
    %v3465 = vpop.f32.mrf.mxu0
    %v3466 = vadd.f32 0.0, %v3465
    %v3467 = vpop.f32.mrf.mxu0
    %v3468 = vadd.f32 0.0, %v3467
    %v3469 = vpop.f32.mrf.mxu0
    %v3470 = vadd.f32 0.0, %v3469
    %v3471 = vpop.f32.mrf.mxu0
    %v3472 = vadd.f32 0.0, %v3471
    %3473 = vmatprep.mubr.bf16.mxu0 %v1984
    %3474 = vmatmul.mubr.bf16.gmra.mxu0 %v1983
    %v3475 = vpop.f32.mrf.mxu0
    %v3476 = vadd.f32 0.0, %v3475
    %v3477 = vpop.f32.mrf.mxu0
    %v3478 = vadd.f32 0.0, %v3477
    %v3479 = vpop.f32.mrf.mxu0
    %v3480 = vadd.f32 0.0, %v3479
    %v3481 = vpop.f32.mrf.mxu0
    %v3482 = vadd.f32 0.0, %v3481
    %3483 = vmatprep.mubr.bf16.mxu0 %v1992
    %3484 = vmatmul.mubr.bf16.gmra.mxu0 %v1991
    %v3485 = vpop.f32.mrf.mxu0
    %v3486 = vadd.f32 0.0, %v3485
    %v3487 = vpop.f32.mrf.mxu0
    %v3488 = vadd.f32 0.0, %v3487
    %v3489 = vpop.f32.mrf.mxu0
    %v3490 = vadd.f32 0.0, %v3489
    %v3491 = vpop.f32.mrf.mxu0
    %v3492 = vadd.f32 0.0, %v3491
    %3493 = vmatprep.mubr.bf16.mxu0 %v2000
    %3494 = vmatmul.mubr.bf16.gmra.mxu0 %v1999
    %v3495 = vpop.f32.mrf.mxu0
    %v3496 = vadd.f32 0.0, %v3495
    %v3497 = vpop.f32.mrf.mxu0
    %v3498 = vadd.f32 0.0, %v3497
    %v3499 = vpop.f32.mrf.mxu0
    %v3500 = vadd.f32 0.0, %v3499
    %v3501 = vpop.f32.mrf.mxu0
    %v3502 = vadd.f32 0.0, %v3501
    %3503 = vmatprep.mubr.bf16.mxu0 %v2008
    %3504 = vmatmul.mubr.bf16.gmra.mxu0 %v2007
    %v3505 = vpop.f32.mrf.mxu0
    %v3506 = vadd.f32 0.0, %v3505
    %v3507 = vpop.f32.mrf.mxu0
    %v3508 = vadd.f32 0.0, %v3507
    %v3509 = vpop.f32.mrf.mxu0
    %v3510 = vadd.f32 0.0, %v3509
    %v3511 = vpop.f32.mrf.mxu0
    %v3512 = vadd.f32 0.0, %v3511
    %3513 = vmatprep.mubr.bf16.mxu0 %v2016
    %3514 = vmatmul.mubr.bf16.gmra.mxu0 %v2015
    %v3515 = vpop.f32.mrf.mxu0
    %v3516 = vadd.f32 0.0, %v3515
    %v3517 = vpop.f32.mrf.mxu0
    %v3518 = vadd.f32 0.0, %v3517
    %v3519 = vpop.f32.mrf.mxu0
    %v3520 = vadd.f32 0.0, %v3519
    %v3521 = vpop.f32.mrf.mxu0
    %v3522 = vadd.f32 0.0, %v3521
    %3523 = vmatprep.mubr.bf16.mxu0 %v2024
    %3524 = vmatmul.mubr.bf16.gmra.mxu0 %v2023
    %v3525 = vpop.f32.mrf.mxu0
    %v3526 = vadd.f32 0.0, %v3525
    %v3527 = vpop.f32.mrf.mxu0
    %v3528 = vadd.f32 0.0, %v3527
    %v3529 = vpop.f32.mrf.mxu0
    %v3530 = vadd.f32 0.0, %v3529
    %v3531 = vpop.f32.mrf.mxu0
    %v3532 = vadd.f32 0.0, %v3531
    %3533 = vmatprep.mubr.bf16.mxu0 %v2032
    %3534 = vmatmul.mubr.bf16.gmra.mxu0 %v2031
    %v3535 = vpop.f32.mrf.mxu0
    %v3536 = vadd.f32 0.0, %v3535
    %v3537 = vpop.f32.mrf.mxu0
    %v3538 = vadd.f32 0.0, %v3537
    %v3539 = vpop.f32.mrf.mxu0
    %v3540 = vadd.f32 0.0, %v3539
    %v3541 = vpop.f32.mrf.mxu0
    %v3542 = vadd.f32 0.0, %v3541
    %3543 = vmatprep.mubr.bf16.mxu0 %v2040
    %3544 = vmatmul.mubr.bf16.gmra.mxu0 %v2039
    %v3545 = vpop.f32.mrf.mxu0
    %v3546 = vadd.f32 0.0, %v3545
    %v3547 = vpop.f32.mrf.mxu0
    %v3548 = vadd.f32 0.0, %v3547
    %v3549 = vpop.f32.mrf.mxu0
    %v3550 = vadd.f32 0.0, %v3549
    %v3551 = vpop.f32.mrf.mxu0
    %v3552 = vadd.f32 0.0, %v3551
    %3553 = vmatprep.mubr.bf16.mxu0 %v2048
    %3554 = vmatmul.mubr.bf16.gmra.mxu0 %v2047
    %v3555 = vpop.f32.mrf.mxu0
    %v3556 = vadd.f32 0.0, %v3555
    %v3557 = vpop.f32.mrf.mxu0
    %v3558 = vadd.f32 0.0, %v3557
    %v3559 = vpop.f32.mrf.mxu0
    %v3560 = vadd.f32 0.0, %v3559
    %v3561 = vpop.f32.mrf.mxu0
    %v3562 = vadd.f32 0.0, %v3561
    %3563 = vmatprep.mubr.bf16.mxu0 %v2056
    %3564 = vmatmul.mubr.bf16.gmra.mxu0 %v2055
    %v3565 = vpop.f32.mrf.mxu0
    %v3566 = vadd.f32 0.0, %v3565
    %v3567 = vpop.f32.mrf.mxu0
    %v3568 = vadd.f32 0.0, %v3567
    %v3569 = vpop.f32.mrf.mxu0
    %v3570 = vadd.f32 0.0, %v3569
    %v3571 = vpop.f32.mrf.mxu0
    %v3572 = vadd.f32 0.0, %v3571
    %3573 = vmatprep.mubr.bf16.mxu0 %v2064
    %3574 = vmatmul.mubr.bf16.gmra.mxu0 %v2063
    %v3575 = vpop.f32.mrf.mxu0
    %v3576 = vadd.f32 0.0, %v3575
    %v3577 = vpop.f32.mrf.mxu0
    %v3578 = vadd.f32 0.0, %v3577
    %v3579 = vpop.f32.mrf.mxu0
    %v3580 = vadd.f32 0.0, %v3579
    %v3581 = vpop.f32.mrf.mxu0
    %v3582 = vadd.f32 0.0, %v3581
    %3583 = vmatprep.mubr.bf16.mxu0 %v2072
    %3584 = vmatmul.mubr.bf16.gmra.mxu0 %v2071
    %v3585 = vpop.f32.mrf.mxu0
    %v3586 = vadd.f32 0.0, %v3585
    %v3587 = vpop.f32.mrf.mxu0
    %v3588 = vadd.f32 0.0, %v3587
    %v3589 = vpop.f32.mrf.mxu0
    %v3590 = vadd.f32 0.0, %v3589
    %v3591 = vpop.f32.mrf.mxu0
    %v3592 = vadd.f32 0.0, %v3591
    %3593 = vmatprep.mubr.bf16.mxu0 %v2080
    %3594 = vmatmul.mubr.bf16.gmra.mxu0 %v2079
    %v3595 = vpop.f32.mrf.mxu0
    %v3596 = vadd.f32 0.0, %v3595
    %v3597 = vpop.f32.mrf.mxu0
    %v3598 = vadd.f32 0.0, %v3597
    %v3599 = vpop.f32.mrf.mxu0
    %v3600 = vadd.f32 0.0, %v3599
    %v3601 = vpop.f32.mrf.mxu0
    %v3602 = vadd.f32 0.0, %v3601
    %3603 = vmatprep.mubr.bf16.mxu0 %v2088
    %3604 = vmatmul.mubr.bf16.gmra.mxu0 %v2087
    %v3605 = vpop.f32.mrf.mxu0
    %v3606 = vadd.f32 0.0, %v3605
    %v3607 = vpop.f32.mrf.mxu0
    %v3608 = vadd.f32 0.0, %v3607
    %v3609 = vpop.f32.mrf.mxu0
    %v3610 = vadd.f32 0.0, %v3609
    %v3611 = vpop.f32.mrf.mxu0
    %v3612 = vadd.f32 0.0, %v3611
    %3613 = vmatprep.mubr.bf16.mxu0 %v2096
    %3614 = vmatmul.mubr.bf16.gmra.mxu0 %v2095
    %v3615 = vpop.f32.mrf.mxu0
    %v3616 = vadd.f32 0.0, %v3615
    %v3617 = vpop.f32.mrf.mxu0
    %v3618 = vadd.f32 0.0, %v3617
    %v3619 = vpop.f32.mrf.mxu0
    %v3620 = vadd.f32 0.0, %v3619
    %v3621 = vpop.f32.mrf.mxu0
    %v3622 = vadd.f32 0.0, %v3621
    %3623 = vmatprep.mubr.bf16.mxu0 %v2104
    %3624 = vmatmul.mubr.bf16.gmra.mxu0 %v2103
    %v3625 = vpop.f32.mrf.mxu0
    %v3626 = vadd.f32 0.0, %v3625
    %v3627 = vpop.f32.mrf.mxu0
    %v3628 = vadd.f32 0.0, %v3627
    %v3629 = vpop.f32.mrf.mxu0
    %v3630 = vadd.f32 0.0, %v3629
    %v3631 = vpop.f32.mrf.mxu0
    %v3632 = vadd.f32 0.0, %v3631
    %3633 = vmatprep.mubr.bf16.mxu0 %v2112
    %3634 = vmatmul.mubr.bf16.gmra.mxu0 %v2111
    %v3635 = vpop.f32.mrf.mxu0
    %v3636 = vadd.f32 0.0, %v3635
    %v3637 = vpop.f32.mrf.mxu0
    %v3638 = vadd.f32 0.0, %v3637
    %v3639 = vpop.f32.mrf.mxu0
    %v3640 = vadd.f32 0.0, %v3639
    %v3641 = vpop.f32.mrf.mxu0
    %v3642 = vadd.f32 0.0, %v3641
    %3643 = vmatprep.mubr.bf16.mxu0 %v2120
    %3644 = vmatmul.mubr.bf16.gmra.mxu0 %v2119
    %v3645 = vpop.f32.mrf.mxu0
    %v3646 = vadd.f32 0.0, %v3645
    %v3647 = vpop.f32.mrf.mxu0
    %v3648 = vadd.f32 0.0, %v3647
    %v3649 = vpop.f32.mrf.mxu0
    %v3650 = vadd.f32 0.0, %v3649
    %v3651 = vpop.f32.mrf.mxu0
    %v3652 = vadd.f32 0.0, %v3651
    %3653 = vmatprep.mubr.bf16.mxu0 %v2128
    %3654 = vmatmul.mubr.bf16.gmra.mxu0 %v2127
    %v3655 = vpop.f32.mrf.mxu0
    %v3656 = vadd.f32 0.0, %v3655
    %v3657 = vpop.f32.mrf.mxu0
    %v3658 = vadd.f32 0.0, %v3657
    %v3659 = vpop.f32.mrf.mxu0
    %v3660 = vadd.f32 0.0, %v3659
    %v3661 = vpop.f32.mrf.mxu0
    %v3662 = vadd.f32 0.0, %v3661
    %3663 = vmatprep.mubr.bf16.mxu0 %v2136
    %3664 = vmatmul.mubr.bf16.gmra.mxu0 %v2135
    %v3665 = vpop.f32.mrf.mxu0
    %v3666 = vadd.f32 0.0, %v3665
    %v3667 = vpop.f32.mrf.mxu0
    %v3668 = vadd.f32 0.0, %v3667
    %v3669 = vpop.f32.mrf.mxu0
    %v3670 = vadd.f32 0.0, %v3669
    %v3671 = vpop.f32.mrf.mxu0
    %v3672 = vadd.f32 0.0, %v3671
    %3673 = vmatprep.mubr.bf16.mxu0 %v2144
    %3674 = vmatmul.mubr.bf16.gmra.mxu0 %v2143
    %v3675 = vpop.f32.mrf.mxu0
    %v3676 = vadd.f32 0.0, %v3675
    %v3677 = vpop.f32.mrf.mxu0
    %v3678 = vadd.f32 0.0, %v3677
    %v3679 = vpop.f32.mrf.mxu0
    %v3680 = vadd.f32 0.0, %v3679
    %v3681 = vpop.f32.mrf.mxu0
    %v3682 = vadd.f32 0.0, %v3681
    %3683 = vmatprep.mubr.bf16.mxu0 %v2152
    %3684 = vmatmul.mubr.bf16.gmra.mxu0 %v2151
    %v3685 = vpop.f32.mrf.mxu0
    %v3686 = vadd.f32 0.0, %v3685
    %v3687 = vpop.f32.mrf.mxu0
    %v3688 = vadd.f32 0.0, %v3687
    %v3689 = vpop.f32.mrf.mxu0
    %v3690 = vadd.f32 0.0, %v3689
    %v3691 = vpop.f32.mrf.mxu0
    %v3692 = vadd.f32 0.0, %v3691
    %3693 = vmatprep.mubr.bf16.mxu0 %v2160
    %3694 = vmatmul.mubr.bf16.gmra.mxu0 %v2159
    %v3695 = vpop.f32.mrf.mxu0
    %v3696 = vadd.f32 0.0, %v3695
    %v3697 = vpop.f32.mrf.mxu0
    %v3698 = vadd.f32 0.0, %v3697
    %v3699 = vpop.f32.mrf.mxu0
    %v3700 = vadd.f32 0.0, %v3699
    %v3701 = vpop.f32.mrf.mxu0
    %v3702 = vadd.f32 0.0, %v3701
    %3703 = vdwg.mxu0
    %3704 = vmatprep.subr.bf16.mxu0 %v2982
    %3705 = vmatpush1.bf16.msra.mxu0 %v2981
    %3706 = vmatprep.subr.bf16.mxu0 %v2980
    %3707 = vmatpush1.bf16.msra.mxu0 %v2979
    %3708 = vmatprep.subr.bf16.mxu0 %v2978
    %3709 = vmatpush1.bf16.msra.mxu0 %v2977
    %3710 = vmatprep.subr.bf16.mxu0 %v2976
    %3711 = vmatpush1.bf16.msra.mxu0 %v2975
    %3712 = vmatprep.subr.bf16.mxu0 %v2974
    %3713 = vmatpush1.bf16.msra.mxu0 %v2973
    %3714 = vmatprep.subr.bf16.mxu0 %v2972
    %3715 = vmatpush1.bf16.msra.mxu0 %v2971
    %3716 = vmatprep.subr.bf16.mxu0 %v2970
    %3717 = vmatpush1.bf16.msra.mxu0 %v2969
    %3718 = vmatprep.subr.bf16.mxu0 %v2968
    %3719 = vmatpush1.bf16.msra.mxu0 %v2967
    %3720 = vmatprep.subr.bf16.mxu0 %v2998
    %3721 = vmatpush2.bf16.msra.mxu0 %v2997
    %3722 = vmatprep.subr.bf16.mxu0 %v2996
    %3723 = vmatpush2.bf16.msra.mxu0 %v2995
    %3724 = vmatprep.subr.bf16.mxu0 %v2994
    %3725 = vmatpush2.bf16.msra.mxu0 %v2993
    %3726 = vmatprep.subr.bf16.mxu0 %v2992
    %3727 = vmatpush2.bf16.msra.mxu0 %v2991
    %3728 = vmatprep.subr.bf16.mxu0 %v2990
    %3729 = vmatpush2.bf16.msra.mxu0 %v2989
    %3730 = vmatprep.subr.bf16.mxu0 %v2988
    %3731 = vmatpush2.bf16.msra.mxu0 %v2987
    %3732 = vmatprep.subr.bf16.mxu0 %v2986
    %3733 = vmatpush2.bf16.msra.mxu0 %v2985
    %3734 = vmatprep.subr.bf16.mxu0 %v2984
    %3735 = vmatpush2.bf16.msra.mxu0 %v2983
    %3736 = vmatprep.mubr.bf16.mxu0 %v1786
    %3737 = vmatmul.mubr.bf16.gmra.mxu0 %v1785
    %v3738 = vpop.f32.mrf.mxu0
    %v3739 = vadd.f32 %v3226, %v3738
    %v3740 = vpop.f32.mrf.mxu0
    %v3741 = vadd.f32 %v3228, %v3740
    %v3742 = vpop.f32.mrf.mxu0
    %v3743 = vadd.f32 %v3230, %v3742
    %v3744 = vpop.f32.mrf.mxu0
    %v3745 = vadd.f32 %v3232, %v3744
    %3746 = vmatprep.mubr.bf16.mxu0 %v1794
    %3747 = vmatmul.mubr.bf16.gmra.mxu0 %v1793
    %v3748 = vpop.f32.mrf.mxu0
    %v3749 = vadd.f32 %v3236, %v3748
    %v3750 = vpop.f32.mrf.mxu0
    %v3751 = vadd.f32 %v3238, %v3750
    %v3752 = vpop.f32.mrf.mxu0
    %v3753 = vadd.f32 %v3240, %v3752
    %v3754 = vpop.f32.mrf.mxu0
    %v3755 = vadd.f32 %v3242, %v3754
    %3756 = vmatprep.mubr.bf16.mxu0 %v1802
    %3757 = vmatmul.mubr.bf16.gmra.mxu0 %v1801
    %v3758 = vpop.f32.mrf.mxu0
    %v3759 = vadd.f32 %v3246, %v3758
    %v3760 = vpop.f32.mrf.mxu0
    %v3761 = vadd.f32 %v3248, %v3760
    %v3762 = vpop.f32.mrf.mxu0
    %v3763 = vadd.f32 %v3250, %v3762
    %v3764 = vpop.f32.mrf.mxu0
    %v3765 = vadd.f32 %v3252, %v3764
    %3766 = vmatprep.mubr.bf16.mxu0 %v1810
    %3767 = vmatmul.mubr.bf16.gmra.mxu0 %v1809
    %v3768 = vpop.f32.mrf.mxu0
    %v3769 = vadd.f32 %v3256, %v3768
    %v3770 = vpop.f32.mrf.mxu0
    %v3771 = vadd.f32 %v3258, %v3770
    %v3772 = vpop.f32.mrf.mxu0
    %v3773 = vadd.f32 %v3260, %v3772
    %v3774 = vpop.f32.mrf.mxu0
    %v3775 = vadd.f32 %v3262, %v3774
    %3776 = vmatprep.mubr.bf16.mxu0 %v1818
    %3777 = vmatmul.mubr.bf16.gmra.mxu0 %v1817
    %v3778 = vpop.f32.mrf.mxu0
    %v3779 = vadd.f32 %v3266, %v3778
    %v3780 = vpop.f32.mrf.mxu0
    %v3781 = vadd.f32 %v3268, %v3780
    %v3782 = vpop.f32.mrf.mxu0
    %v3783 = vadd.f32 %v3270, %v3782
    %v3784 = vpop.f32.mrf.mxu0
    %v3785 = vadd.f32 %v3272, %v3784
    %3786 = vmatprep.mubr.bf16.mxu0 %v1826
    %3787 = vmatmul.mubr.bf16.gmra.mxu0 %v1825
    %v3788 = vpop.f32.mrf.mxu0
    %v3789 = vadd.f32 %v3276, %v3788
    %v3790 = vpop.f32.mrf.mxu0
    %v3791 = vadd.f32 %v3278, %v3790
    %v3792 = vpop.f32.mrf.mxu0
    %v3793 = vadd.f32 %v3280, %v3792
    %v3794 = vpop.f32.mrf.mxu0
    %v3795 = vadd.f32 %v3282, %v3794
    %3796 = vmatprep.mubr.bf16.mxu0 %v1834
    %3797 = vmatmul.mubr.bf16.gmra.mxu0 %v1833
    %v3798 = vpop.f32.mrf.mxu0
    %v3799 = vadd.f32 %v3286, %v3798
    %v3800 = vpop.f32.mrf.mxu0
    %v3801 = vadd.f32 %v3288, %v3800
    %v3802 = vpop.f32.mrf.mxu0
    %v3803 = vadd.f32 %v3290, %v3802
    %v3804 = vpop.f32.mrf.mxu0
    %v3805 = vadd.f32 %v3292, %v3804
    %3806 = vmatprep.mubr.bf16.mxu0 %v1842
    %3807 = vmatmul.mubr.bf16.gmra.mxu0 %v1841
    %v3808 = vpop.f32.mrf.mxu0
    %v3809 = vadd.f32 %v3296, %v3808
    %v3810 = vpop.f32.mrf.mxu0
    %v3811 = vadd.f32 %v3298, %v3810
    %v3812 = vpop.f32.mrf.mxu0
    %v3813 = vadd.f32 %v3300, %v3812
    %v3814 = vpop.f32.mrf.mxu0
    %v3815 = vadd.f32 %v3302, %v3814
    %3816 = vmatprep.mubr.bf16.mxu0 %v1850
    %3817 = vmatmul.mubr.bf16.gmra.mxu0 %v1849
    %v3818 = vpop.f32.mrf.mxu0
    %v3819 = vadd.f32 %v3306, %v3818
    %v3820 = vpop.f32.mrf.mxu0
    %v3821 = vadd.f32 %v3308, %v3820
    %v3822 = vpop.f32.mrf.mxu0
    %v3823 = vadd.f32 %v3310, %v3822
    %v3824 = vpop.f32.mrf.mxu0
    %v3825 = vadd.f32 %v3312, %v3824
    %3826 = vmatprep.mubr.bf16.mxu0 %v1858
    %3827 = vmatmul.mubr.bf16.gmra.mxu0 %v1857
    %v3828 = vpop.f32.mrf.mxu0
    %v3829 = vadd.f32 %v3316, %v3828
    %v3830 = vpop.f32.mrf.mxu0
    %v3831 = vadd.f32 %v3318, %v3830
    %v3832 = vpop.f32.mrf.mxu0
    %v3833 = vadd.f32 %v3320, %v3832
    %v3834 = vpop.f32.mrf.mxu0
    %v3835 = vadd.f32 %v3322, %v3834
    %3836 = vmatprep.mubr.bf16.mxu0 %v1866
    %3837 = vmatmul.mubr.bf16.gmra.mxu0 %v1865
    %v3838 = vpop.f32.mrf.mxu0
    %v3839 = vadd.f32 %v3326, %v3838
    %v3840 = vpop.f32.mrf.mxu0
    %v3841 = vadd.f32 %v3328, %v3840
    %v3842 = vpop.f32.mrf.mxu0
    %v3843 = vadd.f32 %v3330, %v3842
    %v3844 = vpop.f32.mrf.mxu0
    %v3845 = vadd.f32 %v3332, %v3844
    %3846 = vmatprep.mubr.bf16.mxu0 %v1874
    %3847 = vmatmul.mubr.bf16.gmra.mxu0 %v1873
    %v3848 = vpop.f32.mrf.mxu0
    %v3849 = vadd.f32 %v3336, %v3848
    %v3850 = vpop.f32.mrf.mxu0
    %v3851 = vadd.f32 %v3338, %v3850
    %v3852 = vpop.f32.mrf.mxu0
    %v3853 = vadd.f32 %v3340, %v3852
    %v3854 = vpop.f32.mrf.mxu0
    %v3855 = vadd.f32 %v3342, %v3854
    %3856 = vmatprep.mubr.bf16.mxu0 %v1882
    %3857 = vmatmul.mubr.bf16.gmra.mxu0 %v1881
    %v3858 = vpop.f32.mrf.mxu0
    %v3859 = vadd.f32 %v3346, %v3858
    %v3860 = vpop.f32.mrf.mxu0
    %v3861 = vadd.f32 %v3348, %v3860
    %v3862 = vpop.f32.mrf.mxu0
    %v3863 = vadd.f32 %v3350, %v3862
    %v3864 = vpop.f32.mrf.mxu0
    %v3865 = vadd.f32 %v3352, %v3864
    %3866 = vmatprep.mubr.bf16.mxu0 %v1890
    %3867 = vmatmul.mubr.bf16.gmra.mxu0 %v1889
    %v3868 = vpop.f32.mrf.mxu0
    %v3869 = vadd.f32 %v3356, %v3868
    %v3870 = vpop.f32.mrf.mxu0
    %v3871 = vadd.f32 %v3358, %v3870
    %v3872 = vpop.f32.mrf.mxu0
    %v3873 = vadd.f32 %v3360, %v3872
    %v3874 = vpop.f32.mrf.mxu0
    %v3875 = vadd.f32 %v3362, %v3874
    %3876 = vmatprep.mubr.bf16.mxu0 %v1898
    %3877 = vmatmul.mubr.bf16.gmra.mxu0 %v1897
    %v3878 = vpop.f32.mrf.mxu0
    %v3879 = vadd.f32 %v3366, %v3878
    %v3880 = vpop.f32.mrf.mxu0
    %v3881 = vadd.f32 %v3368, %v3880
    %v3882 = vpop.f32.mrf.mxu0
    %v3883 = vadd.f32 %v3370, %v3882
    %v3884 = vpop.f32.mrf.mxu0
    %v3885 = vadd.f32 %v3372, %v3884
    %3886 = vmatprep.mubr.bf16.mxu0 %v1906
    %3887 = vmatmul.mubr.bf16.gmra.mxu0 %v1905
    %v3888 = vpop.f32.mrf.mxu0
    %v3889 = vadd.f32 %v3376, %v3888
    %v3890 = vpop.f32.mrf.mxu0
    %v3891 = vadd.f32 %v3378, %v3890
    %v3892 = vpop.f32.mrf.mxu0
    %v3893 = vadd.f32 %v3380, %v3892
    %v3894 = vpop.f32.mrf.mxu0
    %v3895 = vadd.f32 %v3382, %v3894
    %3896 = vmatprep.mubr.bf16.mxu0 %v1914
    %3897 = vmatmul.mubr.bf16.gmra.mxu0 %v1913
    %v3898 = vpop.f32.mrf.mxu0
    %v3899 = vadd.f32 %v3386, %v3898
    %v3900 = vpop.f32.mrf.mxu0
    %v3901 = vadd.f32 %v3388, %v3900
    %v3902 = vpop.f32.mrf.mxu0
    %v3903 = vadd.f32 %v3390, %v3902
    %v3904 = vpop.f32.mrf.mxu0
    %v3905 = vadd.f32 %v3392, %v3904
    %3906 = vmatprep.mubr.bf16.mxu0 %v1922
    %3907 = vmatmul.mubr.bf16.gmra.mxu0 %v1921
    %v3908 = vpop.f32.mrf.mxu0
    %v3909 = vadd.f32 %v3396, %v3908
    %v3910 = vpop.f32.mrf.mxu0
    %v3911 = vadd.f32 %v3398, %v3910
    %v3912 = vpop.f32.mrf.mxu0
    %v3913 = vadd.f32 %v3400, %v3912
    %v3914 = vpop.f32.mrf.mxu0
    %v3915 = vadd.f32 %v3402, %v3914
    %3916 = vmatprep.mubr.bf16.mxu0 %v1930
    %3917 = vmatmul.mubr.bf16.gmra.mxu0 %v1929
    %v3918 = vpop.f32.mrf.mxu0
    %v3919 = vadd.f32 %v3406, %v3918
    %v3920 = vpop.f32.mrf.mxu0
    %v3921 = vadd.f32 %v3408, %v3920
    %v3922 = vpop.f32.mrf.mxu0
    %v3923 = vadd.f32 %v3410, %v3922
    %v3924 = vpop.f32.mrf.mxu0
    %v3925 = vadd.f32 %v3412, %v3924
    %3926 = vmatprep.mubr.bf16.mxu0 %v1938
    %3927 = vmatmul.mubr.bf16.gmra.mxu0 %v1937
    %v3928 = vpop.f32.mrf.mxu0
    %v3929 = vadd.f32 %v3416, %v3928
    %v3930 = vpop.f32.mrf.mxu0
    %v3931 = vadd.f32 %v3418, %v3930
    %v3932 = vpop.f32.mrf.mxu0
    %v3933 = vadd.f32 %v3420, %v3932
    %v3934 = vpop.f32.mrf.mxu0
    %v3935 = vadd.f32 %v3422, %v3934
    %3936 = vmatprep.mubr.bf16.mxu0 %v1946
    %3937 = vmatmul.mubr.bf16.gmra.mxu0 %v1945
    %v3938 = vpop.f32.mrf.mxu0
    %v3939 = vadd.f32 %v3426, %v3938
    %v3940 = vpop.f32.mrf.mxu0
    %v3941 = vadd.f32 %v3428, %v3940
    %v3942 = vpop.f32.mrf.mxu0
    %v3943 = vadd.f32 %v3430, %v3942
    %v3944 = vpop.f32.mrf.mxu0
    %v3945 = vadd.f32 %v3432, %v3944
    %3946 = vmatprep.mubr.bf16.mxu0 %v1954
    %3947 = vmatmul.mubr.bf16.gmra.mxu0 %v1953
    %v3948 = vpop.f32.mrf.mxu0
    %v3949 = vadd.f32 %v3436, %v3948
    %v3950 = vpop.f32.mrf.mxu0
    %v3951 = vadd.f32 %v3438, %v3950
    %v3952 = vpop.f32.mrf.mxu0
    %v3953 = vadd.f32 %v3440, %v3952
    %v3954 = vpop.f32.mrf.mxu0
    %v3955 = vadd.f32 %v3442, %v3954
    %3956 = vmatprep.mubr.bf16.mxu0 %v1962
    %3957 = vmatmul.mubr.bf16.gmra.mxu0 %v1961
    %v3958 = vpop.f32.mrf.mxu0
    %v3959 = vadd.f32 %v3446, %v3958
    %v3960 = vpop.f32.mrf.mxu0
    %v3961 = vadd.f32 %v3448, %v3960
    %v3962 = vpop.f32.mrf.mxu0
    %v3963 = vadd.f32 %v3450, %v3962
    %v3964 = vpop.f32.mrf.mxu0
    %v3965 = vadd.f32 %v3452, %v3964
    %3966 = vmatprep.mubr.bf16.mxu0 %v1970
    %3967 = vmatmul.mubr.bf16.gmra.mxu0 %v1969
    %v3968 = vpop.f32.mrf.mxu0
    %v3969 = vadd.f32 %v3456, %v3968
    %v3970 = vpop.f32.mrf.mxu0
    %v3971 = vadd.f32 %v3458, %v3970
    %v3972 = vpop.f32.mrf.mxu0
    %v3973 = vadd.f32 %v3460, %v3972
    %v3974 = vpop.f32.mrf.mxu0
    %v3975 = vadd.f32 %v3462, %v3974
    %3976 = vmatprep.mubr.bf16.mxu0 %v1978
    %3977 = vmatmul.mubr.bf16.gmra.mxu0 %v1977
    %v3978 = vpop.f32.mrf.mxu0
    %v3979 = vadd.f32 %v3466, %v3978
    %v3980 = vpop.f32.mrf.mxu0
    %v3981 = vadd.f32 %v3468, %v3980
    %v3982 = vpop.f32.mrf.mxu0
    %v3983 = vadd.f32 %v3470, %v3982
    %v3984 = vpop.f32.mrf.mxu0
    %v3985 = vadd.f32 %v3472, %v3984
    %3986 = vmatprep.mubr.bf16.mxu0 %v1986
    %3987 = vmatmul.mubr.bf16.gmra.mxu0 %v1985
    %v3988 = vpop.f32.mrf.mxu0
    %v3989 = vadd.f32 %v3476, %v3988
    %v3990 = vpop.f32.mrf.mxu0
    %v3991 = vadd.f32 %v3478, %v3990
    %v3992 = vpop.f32.mrf.mxu0
    %v3993 = vadd.f32 %v3480, %v3992
    %v3994 = vpop.f32.mrf.mxu0
    %v3995 = vadd.f32 %v3482, %v3994
    %3996 = vmatprep.mubr.bf16.mxu0 %v1994
    %3997 = vmatmul.mubr.bf16.gmra.mxu0 %v1993
    %v3998 = vpop.f32.mrf.mxu0
    %v3999 = vadd.f32 %v3486, %v3998
    %v4000 = vpop.f32.mrf.mxu0
    %v4001 = vadd.f32 %v3488, %v4000
    %v4002 = vpop.f32.mrf.mxu0
    %v4003 = vadd.f32 %v3490, %v4002
    %v4004 = vpop.f32.mrf.mxu0
    %v4005 = vadd.f32 %v3492, %v4004
    %4006 = vmatprep.mubr.bf16.mxu0 %v2002
    %4007 = vmatmul.mubr.bf16.gmra.mxu0 %v2001
    %v4008 = vpop.f32.mrf.mxu0
    %v4009 = vadd.f32 %v3496, %v4008
    %v4010 = vpop.f32.mrf.mxu0
    %v4011 = vadd.f32 %v3498, %v4010
    %v4012 = vpop.f32.mrf.mxu0
    %v4013 = vadd.f32 %v3500, %v4012
    %v4014 = vpop.f32.mrf.mxu0
    %v4015 = vadd.f32 %v3502, %v4014
    %4016 = vmatprep.mubr.bf16.mxu0 %v2010
    %4017 = vmatmul.mubr.bf16.gmra.mxu0 %v2009
    %v4018 = vpop.f32.mrf.mxu0
    %v4019 = vadd.f32 %v3506, %v4018
    %v4020 = vpop.f32.mrf.mxu0
    %v4021 = vadd.f32 %v3508, %v4020
    %v4022 = vpop.f32.mrf.mxu0
    %v4023 = vadd.f32 %v3510, %v4022
    %v4024 = vpop.f32.mrf.mxu0
    %v4025 = vadd.f32 %v3512, %v4024
    %4026 = vmatprep.mubr.bf16.mxu0 %v2018
    %4027 = vmatmul.mubr.bf16.gmra.mxu0 %v2017
    %v4028 = vpop.f32.mrf.mxu0
    %v4029 = vadd.f32 %v3516, %v4028
    %v4030 = vpop.f32.mrf.mxu0
    %v4031 = vadd.f32 %v3518, %v4030
    %v4032 = vpop.f32.mrf.mxu0
    %v4033 = vadd.f32 %v3520, %v4032
    %v4034 = vpop.f32.mrf.mxu0
    %v4035 = vadd.f32 %v3522, %v4034
    %4036 = vmatprep.mubr.bf16.mxu0 %v2026
    %4037 = vmatmul.mubr.bf16.gmra.mxu0 %v2025
    %v4038 = vpop.f32.mrf.mxu0
    %v4039 = vadd.f32 %v3526, %v4038
    %v4040 = vpop.f32.mrf.mxu0
    %v4041 = vadd.f32 %v3528, %v4040
    %v4042 = vpop.f32.mrf.mxu0
    %v4043 = vadd.f32 %v3530, %v4042
    %v4044 = vpop.f32.mrf.mxu0
    %v4045 = vadd.f32 %v3532, %v4044
    %4046 = vmatprep.mubr.bf16.mxu0 %v2034
    %4047 = vmatmul.mubr.bf16.gmra.mxu0 %v2033
    %v4048 = vpop.f32.mrf.mxu0
    %v4049 = vadd.f32 %v3536, %v4048
    %v4050 = vpop.f32.mrf.mxu0
    %v4051 = vadd.f32 %v3538, %v4050
    %v4052 = vpop.f32.mrf.mxu0
    %v4053 = vadd.f32 %v3540, %v4052
    %v4054 = vpop.f32.mrf.mxu0
    %v4055 = vadd.f32 %v3542, %v4054
    %4056 = vmatprep.mubr.bf16.mxu0 %v2042
    %4057 = vmatmul.mubr.bf16.gmra.mxu0 %v2041
    %v4058 = vpop.f32.mrf.mxu0
    %v4059 = vadd.f32 %v3546, %v4058
    %v4060 = vpop.f32.mrf.mxu0
    %v4061 = vadd.f32 %v3548, %v4060
    %v4062 = vpop.f32.mrf.mxu0
    %v4063 = vadd.f32 %v3550, %v4062
    %v4064 = vpop.f32.mrf.mxu0
    %v4065 = vadd.f32 %v3552, %v4064
    %4066 = vmatprep.mubr.bf16.mxu0 %v2050
    %4067 = vmatmul.mubr.bf16.gmra.mxu0 %v2049
    %v4068 = vpop.f32.mrf.mxu0
    %v4069 = vadd.f32 %v3556, %v4068
    %v4070 = vpop.f32.mrf.mxu0
    %v4071 = vadd.f32 %v3558, %v4070
    %v4072 = vpop.f32.mrf.mxu0
    %v4073 = vadd.f32 %v3560, %v4072
    %v4074 = vpop.f32.mrf.mxu0
    %v4075 = vadd.f32 %v3562, %v4074
    %4076 = vmatprep.mubr.bf16.mxu0 %v2058
    %4077 = vmatmul.mubr.bf16.gmra.mxu0 %v2057
    %v4078 = vpop.f32.mrf.mxu0
    %v4079 = vadd.f32 %v3566, %v4078
    %v4080 = vpop.f32.mrf.mxu0
    %v4081 = vadd.f32 %v3568, %v4080
    %v4082 = vpop.f32.mrf.mxu0
    %v4083 = vadd.f32 %v3570, %v4082
    %v4084 = vpop.f32.mrf.mxu0
    %v4085 = vadd.f32 %v3572, %v4084
    %4086 = vmatprep.mubr.bf16.mxu0 %v2066
    %4087 = vmatmul.mubr.bf16.gmra.mxu0 %v2065
    %v4088 = vpop.f32.mrf.mxu0
    %v4089 = vadd.f32 %v3576, %v4088
    %v4090 = vpop.f32.mrf.mxu0
    %v4091 = vadd.f32 %v3578, %v4090
    %v4092 = vpop.f32.mrf.mxu0
    %v4093 = vadd.f32 %v3580, %v4092
    %v4094 = vpop.f32.mrf.mxu0
    %v4095 = vadd.f32 %v3582, %v4094
    %4096 = vmatprep.mubr.bf16.mxu0 %v2074
    %4097 = vmatmul.mubr.bf16.gmra.mxu0 %v2073
    %v4098 = vpop.f32.mrf.mxu0
    %v4099 = vadd.f32 %v3586, %v4098
    %v4100 = vpop.f32.mrf.mxu0
    %v4101 = vadd.f32 %v3588, %v4100
    %v4102 = vpop.f32.mrf.mxu0
    %v4103 = vadd.f32 %v3590, %v4102
    %v4104 = vpop.f32.mrf.mxu0
    %v4105 = vadd.f32 %v3592, %v4104
    %4106 = vmatprep.mubr.bf16.mxu0 %v2082
    %4107 = vmatmul.mubr.bf16.gmra.mxu0 %v2081
    %v4108 = vpop.f32.mrf.mxu0
    %v4109 = vadd.f32 %v3596, %v4108
    %v4110 = vpop.f32.mrf.mxu0
    %v4111 = vadd.f32 %v3598, %v4110
    %v4112 = vpop.f32.mrf.mxu0
    %v4113 = vadd.f32 %v3600, %v4112
    %v4114 = vpop.f32.mrf.mxu0
    %v4115 = vadd.f32 %v3602, %v4114
    %4116 = vmatprep.mubr.bf16.mxu0 %v2090
    %4117 = vmatmul.mubr.bf16.gmra.mxu0 %v2089
    %v4118 = vpop.f32.mrf.mxu0
    %v4119 = vadd.f32 %v3606, %v4118
    %v4120 = vpop.f32.mrf.mxu0
    %v4121 = vadd.f32 %v3608, %v4120
    %v4122 = vpop.f32.mrf.mxu0
    %v4123 = vadd.f32 %v3610, %v4122
    %v4124 = vpop.f32.mrf.mxu0
    %v4125 = vadd.f32 %v3612, %v4124
    %4126 = vmatprep.mubr.bf16.mxu0 %v2098
    %4127 = vmatmul.mubr.bf16.gmra.mxu0 %v2097
    %v4128 = vpop.f32.mrf.mxu0
    %v4129 = vadd.f32 %v3616, %v4128
    %v4130 = vpop.f32.mrf.mxu0
    %v4131 = vadd.f32 %v3618, %v4130
    %v4132 = vpop.f32.mrf.mxu0
    %v4133 = vadd.f32 %v3620, %v4132
    %v4134 = vpop.f32.mrf.mxu0
    %v4135 = vadd.f32 %v3622, %v4134
    %4136 = vmatprep.mubr.bf16.mxu0 %v2106
    %4137 = vmatmul.mubr.bf16.gmra.mxu0 %v2105
    %v4138 = vpop.f32.mrf.mxu0
    %v4139 = vadd.f32 %v3626, %v4138
    %v4140 = vpop.f32.mrf.mxu0
    %v4141 = vadd.f32 %v3628, %v4140
    %v4142 = vpop.f32.mrf.mxu0
    %v4143 = vadd.f32 %v3630, %v4142
    %v4144 = vpop.f32.mrf.mxu0
    %v4145 = vadd.f32 %v3632, %v4144
    %4146 = vmatprep.mubr.bf16.mxu0 %v2114
    %4147 = vmatmul.mubr.bf16.gmra.mxu0 %v2113
    %v4148 = vpop.f32.mrf.mxu0
    %v4149 = vadd.f32 %v3636, %v4148
    %v4150 = vpop.f32.mrf.mxu0
    %v4151 = vadd.f32 %v3638, %v4150
    %v4152 = vpop.f32.mrf.mxu0
    %v4153 = vadd.f32 %v3640, %v4152
    %v4154 = vpop.f32.mrf.mxu0
    %v4155 = vadd.f32 %v3642, %v4154
    %4156 = vmatprep.mubr.bf16.mxu0 %v2122
    %4157 = vmatmul.mubr.bf16.gmra.mxu0 %v2121
    %v4158 = vpop.f32.mrf.mxu0
    %v4159 = vadd.f32 %v3646, %v4158
    %v4160 = vpop.f32.mrf.mxu0
    %v4161 = vadd.f32 %v3648, %v4160
    %v4162 = vpop.f32.mrf.mxu0
    %v4163 = vadd.f32 %v3650, %v4162
    %v4164 = vpop.f32.mrf.mxu0
    %v4165 = vadd.f32 %v3652, %v4164
    %4166 = vmatprep.mubr.bf16.mxu0 %v2130
    %4167 = vmatmul.mubr.bf16.gmra.mxu0 %v2129
    %v4168 = vpop.f32.mrf.mxu0
    %v4169 = vadd.f32 %v3656, %v4168
    %v4170 = vpop.f32.mrf.mxu0
    %v4171 = vadd.f32 %v3658, %v4170
    %v4172 = vpop.f32.mrf.mxu0
    %v4173 = vadd.f32 %v3660, %v4172
    %v4174 = vpop.f32.mrf.mxu0
    %v4175 = vadd.f32 %v3662, %v4174
    %4176 = vmatprep.mubr.bf16.mxu0 %v2138
    %4177 = vmatmul.mubr.bf16.gmra.mxu0 %v2137
    %v4178 = vpop.f32.mrf.mxu0
    %v4179 = vadd.f32 %v3666, %v4178
    %v4180 = vpop.f32.mrf.mxu0
    %v4181 = vadd.f32 %v3668, %v4180
    %v4182 = vpop.f32.mrf.mxu0
    %v4183 = vadd.f32 %v3670, %v4182
    %v4184 = vpop.f32.mrf.mxu0
    %v4185 = vadd.f32 %v3672, %v4184
    %4186 = vmatprep.mubr.bf16.mxu0 %v2146
    %4187 = vmatmul.mubr.bf16.gmra.mxu0 %v2145
    %v4188 = vpop.f32.mrf.mxu0
    %v4189 = vadd.f32 %v3676, %v4188
    %v4190 = vpop.f32.mrf.mxu0
    %v4191 = vadd.f32 %v3678, %v4190
    %v4192 = vpop.f32.mrf.mxu0
    %v4193 = vadd.f32 %v3680, %v4192
    %v4194 = vpop.f32.mrf.mxu0
    %v4195 = vadd.f32 %v3682, %v4194
    %4196 = vmatprep.mubr.bf16.mxu0 %v2154
    %4197 = vmatmul.mubr.bf16.gmra.mxu0 %v2153
    %v4198 = vpop.f32.mrf.mxu0
    %v4199 = vadd.f32 %v3686, %v4198
    %v4200 = vpop.f32.mrf.mxu0
    %v4201 = vadd.f32 %v3688, %v4200
    %v4202 = vpop.f32.mrf.mxu0
    %v4203 = vadd.f32 %v3690, %v4202
    %v4204 = vpop.f32.mrf.mxu0
    %v4205 = vadd.f32 %v3692, %v4204
    %4206 = vmatprep.mubr.bf16.mxu0 %v2162
    %4207 = vmatmul.mubr.bf16.gmra.mxu0 %v2161
    %v4208 = vpop.f32.mrf.mxu0
    %v4209 = vadd.f32 %v3696, %v4208
    %v4210 = vpop.f32.mrf.mxu0
    %v4211 = vadd.f32 %v3698, %v4210
    %v4212 = vpop.f32.mrf.mxu0
    %v4213 = vadd.f32 %v3700, %v4212
    %v4214 = vpop.f32.mrf.mxu0
    %v4215 = vadd.f32 %v3702, %v4214
    %4216 = vdwg.mxu0
    %4217 = vmatprep.subr.bf16.mxu0 %v3014
    %4218 = vmatpush1.bf16.msra.mxu0 %v3013
    %4219 = vmatprep.subr.bf16.mxu0 %v3012
    %4220 = vmatpush1.bf16.msra.mxu0 %v3011
    %4221 = vmatprep.subr.bf16.mxu0 %v3010
    %4222 = vmatpush1.bf16.msra.mxu0 %v3009
    %4223 = vmatprep.subr.bf16.mxu0 %v3008
    %4224 = vmatpush1.bf16.msra.mxu0 %v3007
    %4225 = vmatprep.subr.bf16.mxu0 %v3006
    %4226 = vmatpush1.bf16.msra.mxu0 %v3005
    %4227 = vmatprep.subr.bf16.mxu0 %v3004
    %4228 = vmatpush1.bf16.msra.mxu0 %v3003
    %4229 = vmatprep.subr.bf16.mxu0 %v3002
    %4230 = vmatpush1.bf16.msra.mxu0 %v3001
    %4231 = vmatprep.subr.bf16.mxu0 %v3000
    %4232 = vmatpush1.bf16.msra.mxu0 %v2999
    %4233 = vmatprep.subr.bf16.mxu0 %v3030
    %4234 = vmatpush2.bf16.msra.mxu0 %v3029
    %4235 = vmatprep.subr.bf16.mxu0 %v3028
    %4236 = vmatpush2.bf16.msra.mxu0 %v3027
    %4237 = vmatprep.subr.bf16.mxu0 %v3026
    %4238 = vmatpush2.bf16.msra.mxu0 %v3025
    %4239 = vmatprep.subr.bf16.mxu0 %v3024
    %4240 = vmatpush2.bf16.msra.mxu0 %v3023
    %4241 = vmatprep.subr.bf16.mxu0 %v3022
    %4242 = vmatpush2.bf16.msra.mxu0 %v3021
    %4243 = vmatprep.subr.bf16.mxu0 %v3020
    %4244 = vmatpush2.bf16.msra.mxu0 %v3019
    %4245 = vmatprep.subr.bf16.mxu0 %v3018
    %4246 = vmatpush2.bf16.msra.mxu0 %v3017
    %4247 = vmatprep.subr.bf16.mxu0 %v3016
    %4248 = vmatpush2.bf16.msra.mxu0 %v3015
    %4249 = vmatprep.mubr.bf16.mxu0 %v1788
    %4250 = vmatmul.mubr.bf16.gmra.mxu0 %v1787
    %v4251 = vpop.f32.mrf.mxu0
    %v4252 = vadd.f32 %v3739, %v4251
    %v4253 = vpop.f32.mrf.mxu0
    %v4254 = vadd.f32 %v3741, %v4253
    %v4255 = vpop.f32.mrf.mxu0
    %v4256 = vadd.f32 %v3743, %v4255
    %v4257 = vpop.f32.mrf.mxu0
    %v4258 = vadd.f32 %v3745, %v4257
    %4259 = vmatprep.mubr.bf16.mxu0 %v1796
    %4260 = vmatmul.mubr.bf16.gmra.mxu0 %v1795
    %v4261 = vpop.f32.mrf.mxu0
    %v4262 = vadd.f32 %v3749, %v4261
    %v4263 = vpop.f32.mrf.mxu0
    %v4264 = vadd.f32 %v3751, %v4263
    %v4265 = vpop.f32.mrf.mxu0
    %v4266 = vadd.f32 %v3753, %v4265
    %v4267 = vpop.f32.mrf.mxu0
    %v4268 = vadd.f32 %v3755, %v4267
    %4269 = vmatprep.mubr.bf16.mxu0 %v1804
    %4270 = vmatmul.mubr.bf16.gmra.mxu0 %v1803
    %v4271 = vpop.f32.mrf.mxu0
    %v4272 = vadd.f32 %v3759, %v4271
    %v4273 = vpop.f32.mrf.mxu0
    %v4274 = vadd.f32 %v3761, %v4273
    %v4275 = vpop.f32.mrf.mxu0
    %v4276 = vadd.f32 %v3763, %v4275
    %v4277 = vpop.f32.mrf.mxu0
    %v4278 = vadd.f32 %v3765, %v4277
    %4279 = vmatprep.mubr.bf16.mxu0 %v1812
    %4280 = vmatmul.mubr.bf16.gmra.mxu0 %v1811
    %v4281 = vpop.f32.mrf.mxu0
    %v4282 = vadd.f32 %v3769, %v4281
    %v4283 = vpop.f32.mrf.mxu0
    %v4284 = vadd.f32 %v3771, %v4283
    %v4285 = vpop.f32.mrf.mxu0
    %v4286 = vadd.f32 %v3773, %v4285
    %v4287 = vpop.f32.mrf.mxu0
    %v4288 = vadd.f32 %v3775, %v4287
    %4289 = vmatprep.mubr.bf16.mxu0 %v1820
    %4290 = vmatmul.mubr.bf16.gmra.mxu0 %v1819
    %v4291 = vpop.f32.mrf.mxu0
    %v4292 = vadd.f32 %v3779, %v4291
    %v4293 = vpop.f32.mrf.mxu0
    %v4294 = vadd.f32 %v3781, %v4293
    %v4295 = vpop.f32.mrf.mxu0
    %v4296 = vadd.f32 %v3783, %v4295
    %v4297 = vpop.f32.mrf.mxu0
    %v4298 = vadd.f32 %v3785, %v4297
    %4299 = vmatprep.mubr.bf16.mxu0 %v1828
    %4300 = vmatmul.mubr.bf16.gmra.mxu0 %v1827
    %v4301 = vpop.f32.mrf.mxu0
    %v4302 = vadd.f32 %v3789, %v4301
    %v4303 = vpop.f32.mrf.mxu0
    %v4304 = vadd.f32 %v3791, %v4303
    %v4305 = vpop.f32.mrf.mxu0
    %v4306 = vadd.f32 %v3793, %v4305
    %v4307 = vpop.f32.mrf.mxu0
    %v4308 = vadd.f32 %v3795, %v4307
    %4309 = vmatprep.mubr.bf16.mxu0 %v1836
    %4310 = vmatmul.mubr.bf16.gmra.mxu0 %v1835
    %v4311 = vpop.f32.mrf.mxu0
    %v4312 = vadd.f32 %v3799, %v4311
    %v4313 = vpop.f32.mrf.mxu0
    %v4314 = vadd.f32 %v3801, %v4313
    %v4315 = vpop.f32.mrf.mxu0
    %v4316 = vadd.f32 %v3803, %v4315
    %v4317 = vpop.f32.mrf.mxu0
    %v4318 = vadd.f32 %v3805, %v4317
    %4319 = vmatprep.mubr.bf16.mxu0 %v1844
    %4320 = vmatmul.mubr.bf16.gmra.mxu0 %v1843
    %v4321 = vpop.f32.mrf.mxu0
    %v4322 = vadd.f32 %v3809, %v4321
    %v4323 = vpop.f32.mrf.mxu0
    %v4324 = vadd.f32 %v3811, %v4323
    %v4325 = vpop.f32.mrf.mxu0
    %v4326 = vadd.f32 %v3813, %v4325
    %v4327 = vpop.f32.mrf.mxu0
    %v4328 = vadd.f32 %v3815, %v4327
    %4329 = vmatprep.mubr.bf16.mxu0 %v1852
    %4330 = vmatmul.mubr.bf16.gmra.mxu0 %v1851
    %v4331 = vpop.f32.mrf.mxu0
    %v4332 = vadd.f32 %v3819, %v4331
    %v4333 = vpop.f32.mrf.mxu0
    %v4334 = vadd.f32 %v3821, %v4333
    %v4335 = vpop.f32.mrf.mxu0
    %v4336 = vadd.f32 %v3823, %v4335
    %v4337 = vpop.f32.mrf.mxu0
    %v4338 = vadd.f32 %v3825, %v4337
    %4339 = vmatprep.mubr.bf16.mxu0 %v1860
    %4340 = vmatmul.mubr.bf16.gmra.mxu0 %v1859
    %v4341 = vpop.f32.mrf.mxu0
    %v4342 = vadd.f32 %v3829, %v4341
    %v4343 = vpop.f32.mrf.mxu0
    %v4344 = vadd.f32 %v3831, %v4343
    %v4345 = vpop.f32.mrf.mxu0
    %v4346 = vadd.f32 %v3833, %v4345
    %v4347 = vpop.f32.mrf.mxu0
    %v4348 = vadd.f32 %v3835, %v4347
    %4349 = vmatprep.mubr.bf16.mxu0 %v1868
    %4350 = vmatmul.mubr.bf16.gmra.mxu0 %v1867
    %v4351 = vpop.f32.mrf.mxu0
    %v4352 = vadd.f32 %v3839, %v4351
    %v4353 = vpop.f32.mrf.mxu0
    %v4354 = vadd.f32 %v3841, %v4353
    %v4355 = vpop.f32.mrf.mxu0
    %v4356 = vadd.f32 %v3843, %v4355
    %v4357 = vpop.f32.mrf.mxu0
    %v4358 = vadd.f32 %v3845, %v4357
    %4359 = vmatprep.mubr.bf16.mxu0 %v1876
    %4360 = vmatmul.mubr.bf16.gmra.mxu0 %v1875
    %v4361 = vpop.f32.mrf.mxu0
    %v4362 = vadd.f32 %v3849, %v4361
    %v4363 = vpop.f32.mrf.mxu0
    %v4364 = vadd.f32 %v3851, %v4363
    %v4365 = vpop.f32.mrf.mxu0
    %v4366 = vadd.f32 %v3853, %v4365
    %v4367 = vpop.f32.mrf.mxu0
    %v4368 = vadd.f32 %v3855, %v4367
    %4369 = vmatprep.mubr.bf16.mxu0 %v1884
    %4370 = vmatmul.mubr.bf16.gmra.mxu0 %v1883
    %v4371 = vpop.f32.mrf.mxu0
    %v4372 = vadd.f32 %v3859, %v4371
    %v4373 = vpop.f32.mrf.mxu0
    %v4374 = vadd.f32 %v3861, %v4373
    %v4375 = vpop.f32.mrf.mxu0
    %v4376 = vadd.f32 %v3863, %v4375
    %v4377 = vpop.f32.mrf.mxu0
    %v4378 = vadd.f32 %v3865, %v4377
    %4379 = vmatprep.mubr.bf16.mxu0 %v1892
    %4380 = vmatmul.mubr.bf16.gmra.mxu0 %v1891
    %v4381 = vpop.f32.mrf.mxu0
    %v4382 = vadd.f32 %v3869, %v4381
    %v4383 = vpop.f32.mrf.mxu0
    %v4384 = vadd.f32 %v3871, %v4383
    %v4385 = vpop.f32.mrf.mxu0
    %v4386 = vadd.f32 %v3873, %v4385
    %v4387 = vpop.f32.mrf.mxu0
    %v4388 = vadd.f32 %v3875, %v4387
    %4389 = vmatprep.mubr.bf16.mxu0 %v1900
    %4390 = vmatmul.mubr.bf16.gmra.mxu0 %v1899
    %v4391 = vpop.f32.mrf.mxu0
    %v4392 = vadd.f32 %v3879, %v4391
    %v4393 = vpop.f32.mrf.mxu0
    %v4394 = vadd.f32 %v3881, %v4393
    %v4395 = vpop.f32.mrf.mxu0
    %v4396 = vadd.f32 %v3883, %v4395
    %v4397 = vpop.f32.mrf.mxu0
    %v4398 = vadd.f32 %v3885, %v4397
    %4399 = vmatprep.mubr.bf16.mxu0 %v1908
    %4400 = vmatmul.mubr.bf16.gmra.mxu0 %v1907
    %v4401 = vpop.f32.mrf.mxu0
    %v4402 = vadd.f32 %v3889, %v4401
    %v4403 = vpop.f32.mrf.mxu0
    %v4404 = vadd.f32 %v3891, %v4403
    %v4405 = vpop.f32.mrf.mxu0
    %v4406 = vadd.f32 %v3893, %v4405
    %v4407 = vpop.f32.mrf.mxu0
    %v4408 = vadd.f32 %v3895, %v4407
    %4409 = vmatprep.mubr.bf16.mxu0 %v1916
    %4410 = vmatmul.mubr.bf16.gmra.mxu0 %v1915
    %v4411 = vpop.f32.mrf.mxu0
    %v4412 = vadd.f32 %v3899, %v4411
    %v4413 = vpop.f32.mrf.mxu0
    %v4414 = vadd.f32 %v3901, %v4413
    %v4415 = vpop.f32.mrf.mxu0
    %v4416 = vadd.f32 %v3903, %v4415
    %v4417 = vpop.f32.mrf.mxu0
    %v4418 = vadd.f32 %v3905, %v4417
    %4419 = vmatprep.mubr.bf16.mxu0 %v1924
    %4420 = vmatmul.mubr.bf16.gmra.mxu0 %v1923
    %v4421 = vpop.f32.mrf.mxu0
    %v4422 = vadd.f32 %v3909, %v4421
    %v4423 = vpop.f32.mrf.mxu0
    %v4424 = vadd.f32 %v3911, %v4423
    %v4425 = vpop.f32.mrf.mxu0
    %v4426 = vadd.f32 %v3913, %v4425
    %v4427 = vpop.f32.mrf.mxu0
    %v4428 = vadd.f32 %v3915, %v4427
    %4429 = vmatprep.mubr.bf16.mxu0 %v1932
    %4430 = vmatmul.mubr.bf16.gmra.mxu0 %v1931
    %v4431 = vpop.f32.mrf.mxu0
    %v4432 = vadd.f32 %v3919, %v4431
    %v4433 = vpop.f32.mrf.mxu0
    %v4434 = vadd.f32 %v3921, %v4433
    %v4435 = vpop.f32.mrf.mxu0
    %v4436 = vadd.f32 %v3923, %v4435
    %v4437 = vpop.f32.mrf.mxu0
    %v4438 = vadd.f32 %v3925, %v4437
    %4439 = vmatprep.mubr.bf16.mxu0 %v1940
    %4440 = vmatmul.mubr.bf16.gmra.mxu0 %v1939
    %v4441 = vpop.f32.mrf.mxu0
    %v4442 = vadd.f32 %v3929, %v4441
    %v4443 = vpop.f32.mrf.mxu0
    %v4444 = vadd.f32 %v3931, %v4443
    %v4445 = vpop.f32.mrf.mxu0
    %v4446 = vadd.f32 %v3933, %v4445
    %v4447 = vpop.f32.mrf.mxu0
    %v4448 = vadd.f32 %v3935, %v4447
    %4449 = vmatprep.mubr.bf16.mxu0 %v1948
    %4450 = vmatmul.mubr.bf16.gmra.mxu0 %v1947
    %v4451 = vpop.f32.mrf.mxu0
    %v4452 = vadd.f32 %v3939, %v4451
    %v4453 = vpop.f32.mrf.mxu0
    %v4454 = vadd.f32 %v3941, %v4453
    %v4455 = vpop.f32.mrf.mxu0
    %v4456 = vadd.f32 %v3943, %v4455
    %v4457 = vpop.f32.mrf.mxu0
    %v4458 = vadd.f32 %v3945, %v4457
    %4459 = vmatprep.mubr.bf16.mxu0 %v1956
    %4460 = vmatmul.mubr.bf16.gmra.mxu0 %v1955
    %v4461 = vpop.f32.mrf.mxu0
    %v4462 = vadd.f32 %v3949, %v4461
    %v4463 = vpop.f32.mrf.mxu0
    %v4464 = vadd.f32 %v3951, %v4463
    %v4465 = vpop.f32.mrf.mxu0
    %v4466 = vadd.f32 %v3953, %v4465
    %v4467 = vpop.f32.mrf.mxu0
    %v4468 = vadd.f32 %v3955, %v4467
    %4469 = vmatprep.mubr.bf16.mxu0 %v1964
    %4470 = vmatmul.mubr.bf16.gmra.mxu0 %v1963
    %v4471 = vpop.f32.mrf.mxu0
    %v4472 = vadd.f32 %v3959, %v4471
    %v4473 = vpop.f32.mrf.mxu0
    %v4474 = vadd.f32 %v3961, %v4473
    %v4475 = vpop.f32.mrf.mxu0
    %v4476 = vadd.f32 %v3963, %v4475
    %v4477 = vpop.f32.mrf.mxu0
    %v4478 = vadd.f32 %v3965, %v4477
    %4479 = vmatprep.mubr.bf16.mxu0 %v1972
    %4480 = vmatmul.mubr.bf16.gmra.mxu0 %v1971
    %v4481 = vpop.f32.mrf.mxu0
    %v4482 = vadd.f32 %v3969, %v4481
    %v4483 = vpop.f32.mrf.mxu0
    %v4484 = vadd.f32 %v3971, %v4483
    %v4485 = vpop.f32.mrf.mxu0
    %v4486 = vadd.f32 %v3973, %v4485
    %v4487 = vpop.f32.mrf.mxu0
    %v4488 = vadd.f32 %v3975, %v4487
    %4489 = vmatprep.mubr.bf16.mxu0 %v1980
    %4490 = vmatmul.mubr.bf16.gmra.mxu0 %v1979
    %v4491 = vpop.f32.mrf.mxu0
    %v4492 = vadd.f32 %v3979, %v4491
    %v4493 = vpop.f32.mrf.mxu0
    %v4494 = vadd.f32 %v3981, %v4493
    %v4495 = vpop.f32.mrf.mxu0
    %v4496 = vadd.f32 %v3983, %v4495
    %v4497 = vpop.f32.mrf.mxu0
    %v4498 = vadd.f32 %v3985, %v4497
    %4499 = vmatprep.mubr.bf16.mxu0 %v1988
    %4500 = vmatmul.mubr.bf16.gmra.mxu0 %v1987
    %v4501 = vpop.f32.mrf.mxu0
    %v4502 = vadd.f32 %v3989, %v4501
    %v4503 = vpop.f32.mrf.mxu0
    %v4504 = vadd.f32 %v3991, %v4503
    %v4505 = vpop.f32.mrf.mxu0
    %v4506 = vadd.f32 %v3993, %v4505
    %v4507 = vpop.f32.mrf.mxu0
    %v4508 = vadd.f32 %v3995, %v4507
    %4509 = vmatprep.mubr.bf16.mxu0 %v1996
    %4510 = vmatmul.mubr.bf16.gmra.mxu0 %v1995
    %v4511 = vpop.f32.mrf.mxu0
    %v4512 = vadd.f32 %v3999, %v4511
    %v4513 = vpop.f32.mrf.mxu0
    %v4514 = vadd.f32 %v4001, %v4513
    %v4515 = vpop.f32.mrf.mxu0
    %v4516 = vadd.f32 %v4003, %v4515
    %v4517 = vpop.f32.mrf.mxu0
    %v4518 = vadd.f32 %v4005, %v4517
    %4519 = vmatprep.mubr.bf16.mxu0 %v2004
    %4520 = vmatmul.mubr.bf16.gmra.mxu0 %v2003
    %v4521 = vpop.f32.mrf.mxu0
    %v4522 = vadd.f32 %v4009, %v4521
    %v4523 = vpop.f32.mrf.mxu0
    %v4524 = vadd.f32 %v4011, %v4523
    %v4525 = vpop.f32.mrf.mxu0
    %v4526 = vadd.f32 %v4013, %v4525
    %v4527 = vpop.f32.mrf.mxu0
    %v4528 = vadd.f32 %v4015, %v4527
    %4529 = vmatprep.mubr.bf16.mxu0 %v2012
    %4530 = vmatmul.mubr.bf16.gmra.mxu0 %v2011
    %v4531 = vpop.f32.mrf.mxu0
    %v4532 = vadd.f32 %v4019, %v4531
    %v4533 = vpop.f32.mrf.mxu0
    %v4534 = vadd.f32 %v4021, %v4533
    %v4535 = vpop.f32.mrf.mxu0
    %v4536 = vadd.f32 %v4023, %v4535
    %v4537 = vpop.f32.mrf.mxu0
    %v4538 = vadd.f32 %v4025, %v4537
    %4539 = vmatprep.mubr.bf16.mxu0 %v2020
    %4540 = vmatmul.mubr.bf16.gmra.mxu0 %v2019
    %v4541 = vpop.f32.mrf.mxu0
    %v4542 = vadd.f32 %v4029, %v4541
    %v4543 = vpop.f32.mrf.mxu0
    %v4544 = vadd.f32 %v4031, %v4543
    %v4545 = vpop.f32.mrf.mxu0
    %v4546 = vadd.f32 %v4033, %v4545
    %v4547 = vpop.f32.mrf.mxu0
    %v4548 = vadd.f32 %v4035, %v4547
    %4549 = vmatprep.mubr.bf16.mxu0 %v2028
    %4550 = vmatmul.mubr.bf16.gmra.mxu0 %v2027
    %v4551 = vpop.f32.mrf.mxu0
    %v4552 = vadd.f32 %v4039, %v4551
    %v4553 = vpop.f32.mrf.mxu0
    %v4554 = vadd.f32 %v4041, %v4553
    %v4555 = vpop.f32.mrf.mxu0
    %v4556 = vadd.f32 %v4043, %v4555
    %v4557 = vpop.f32.mrf.mxu0
    %v4558 = vadd.f32 %v4045, %v4557
    %4559 = vmatprep.mubr.bf16.mxu0 %v2036
    %4560 = vmatmul.mubr.bf16.gmra.mxu0 %v2035
    %v4561 = vpop.f32.mrf.mxu0
    %v4562 = vadd.f32 %v4049, %v4561
    %v4563 = vpop.f32.mrf.mxu0
    %v4564 = vadd.f32 %v4051, %v4563
    %v4565 = vpop.f32.mrf.mxu0
    %v4566 = vadd.f32 %v4053, %v4565
    %v4567 = vpop.f32.mrf.mxu0
    %v4568 = vadd.f32 %v4055, %v4567
    %4569 = vmatprep.mubr.bf16.mxu0 %v2044
    %4570 = vmatmul.mubr.bf16.gmra.mxu0 %v2043
    %v4571 = vpop.f32.mrf.mxu0
    %v4572 = vadd.f32 %v4059, %v4571
    %v4573 = vpop.f32.mrf.mxu0
    %v4574 = vadd.f32 %v4061, %v4573
    %v4575 = vpop.f32.mrf.mxu0
    %v4576 = vadd.f32 %v4063, %v4575
    %v4577 = vpop.f32.mrf.mxu0
    %v4578 = vadd.f32 %v4065, %v4577
    %4579 = vmatprep.mubr.bf16.mxu0 %v2052
    %4580 = vmatmul.mubr.bf16.gmra.mxu0 %v2051
    %v4581 = vpop.f32.mrf.mxu0
    %v4582 = vadd.f32 %v4069, %v4581
    %v4583 = vpop.f32.mrf.mxu0
    %v4584 = vadd.f32 %v4071, %v4583
    %v4585 = vpop.f32.mrf.mxu0
    %v4586 = vadd.f32 %v4073, %v4585
    %v4587 = vpop.f32.mrf.mxu0
    %v4588 = vadd.f32 %v4075, %v4587
    %4589 = vmatprep.mubr.bf16.mxu0 %v2060
    %4590 = vmatmul.mubr.bf16.gmra.mxu0 %v2059
    %v4591 = vpop.f32.mrf.mxu0
    %v4592 = vadd.f32 %v4079, %v4591
    %v4593 = vpop.f32.mrf.mxu0
    %v4594 = vadd.f32 %v4081, %v4593
    %v4595 = vpop.f32.mrf.mxu0
    %v4596 = vadd.f32 %v4083, %v4595
    %v4597 = vpop.f32.mrf.mxu0
    %v4598 = vadd.f32 %v4085, %v4597
    %4599 = vmatprep.mubr.bf16.mxu0 %v2068
    %4600 = vmatmul.mubr.bf16.gmra.mxu0 %v2067
    %v4601 = vpop.f32.mrf.mxu0
    %v4602 = vadd.f32 %v4089, %v4601
    %v4603 = vpop.f32.mrf.mxu0
    %v4604 = vadd.f32 %v4091, %v4603
    %v4605 = vpop.f32.mrf.mxu0
    %v4606 = vadd.f32 %v4093, %v4605
    %v4607 = vpop.f32.mrf.mxu0
    %v4608 = vadd.f32 %v4095, %v4607
    %4609 = vmatprep.mubr.bf16.mxu0 %v2076
    %4610 = vmatmul.mubr.bf16.gmra.mxu0 %v2075
    %v4611 = vpop.f32.mrf.mxu0
    %v4612 = vadd.f32 %v4099, %v4611
    %v4613 = vpop.f32.mrf.mxu0
    %v4614 = vadd.f32 %v4101, %v4613
    %v4615 = vpop.f32.mrf.mxu0
    %v4616 = vadd.f32 %v4103, %v4615
    %v4617 = vpop.f32.mrf.mxu0
    %v4618 = vadd.f32 %v4105, %v4617
    %4619 = vmatprep.mubr.bf16.mxu0 %v2084
    %4620 = vmatmul.mubr.bf16.gmra.mxu0 %v2083
    %v4621 = vpop.f32.mrf.mxu0
    %v4622 = vadd.f32 %v4109, %v4621
    %v4623 = vpop.f32.mrf.mxu0
    %v4624 = vadd.f32 %v4111, %v4623
    %v4625 = vpop.f32.mrf.mxu0
    %v4626 = vadd.f32 %v4113, %v4625
    %v4627 = vpop.f32.mrf.mxu0
    %v4628 = vadd.f32 %v4115, %v4627
    %4629 = vmatprep.mubr.bf16.mxu0 %v2092
    %4630 = vmatmul.mubr.bf16.gmra.mxu0 %v2091
    %v4631 = vpop.f32.mrf.mxu0
    %v4632 = vadd.f32 %v4119, %v4631
    %v4633 = vpop.f32.mrf.mxu0
    %v4634 = vadd.f32 %v4121, %v4633
    %v4635 = vpop.f32.mrf.mxu0
    %v4636 = vadd.f32 %v4123, %v4635
    %v4637 = vpop.f32.mrf.mxu0
    %v4638 = vadd.f32 %v4125, %v4637
    %4639 = vmatprep.mubr.bf16.mxu0 %v2100
    %4640 = vmatmul.mubr.bf16.gmra.mxu0 %v2099
    %v4641 = vpop.f32.mrf.mxu0
    %v4642 = vadd.f32 %v4129, %v4641
    %v4643 = vpop.f32.mrf.mxu0
    %v4644 = vadd.f32 %v4131, %v4643
    %v4645 = vpop.f32.mrf.mxu0
    %v4646 = vadd.f32 %v4133, %v4645
    %v4647 = vpop.f32.mrf.mxu0
    %v4648 = vadd.f32 %v4135, %v4647
    %4649 = vmatprep.mubr.bf16.mxu0 %v2108
    %4650 = vmatmul.mubr.bf16.gmra.mxu0 %v2107
    %v4651 = vpop.f32.mrf.mxu0
    %v4652 = vadd.f32 %v4139, %v4651
    %v4653 = vpop.f32.mrf.mxu0
    %v4654 = vadd.f32 %v4141, %v4653
    %v4655 = vpop.f32.mrf.mxu0
    %v4656 = vadd.f32 %v4143, %v4655
    %v4657 = vpop.f32.mrf.mxu0
    %v4658 = vadd.f32 %v4145, %v4657
    %4659 = vmatprep.mubr.bf16.mxu0 %v2116
    %4660 = vmatmul.mubr.bf16.gmra.mxu0 %v2115
    %v4661 = vpop.f32.mrf.mxu0
    %v4662 = vadd.f32 %v4149, %v4661
    %v4663 = vpop.f32.mrf.mxu0
    %v4664 = vadd.f32 %v4151, %v4663
    %v4665 = vpop.f32.mrf.mxu0
    %v4666 = vadd.f32 %v4153, %v4665
    %v4667 = vpop.f32.mrf.mxu0
    %v4668 = vadd.f32 %v4155, %v4667
    %4669 = vmatprep.mubr.bf16.mxu0 %v2124
    %4670 = vmatmul.mubr.bf16.gmra.mxu0 %v2123
    %v4671 = vpop.f32.mrf.mxu0
    %v4672 = vadd.f32 %v4159, %v4671
    %v4673 = vpop.f32.mrf.mxu0
    %v4674 = vadd.f32 %v4161, %v4673
    %v4675 = vpop.f32.mrf.mxu0
    %v4676 = vadd.f32 %v4163, %v4675
    %v4677 = vpop.f32.mrf.mxu0
    %v4678 = vadd.f32 %v4165, %v4677
    %4679 = vmatprep.mubr.bf16.mxu0 %v2132
    %4680 = vmatmul.mubr.bf16.gmra.mxu0 %v2131
    %v4681 = vpop.f32.mrf.mxu0
    %v4682 = vadd.f32 %v4169, %v4681
    %v4683 = vpop.f32.mrf.mxu0
    %v4684 = vadd.f32 %v4171, %v4683
    %v4685 = vpop.f32.mrf.mxu0
    %v4686 = vadd.f32 %v4173, %v4685
    %v4687 = vpop.f32.mrf.mxu0
    %v4688 = vadd.f32 %v4175, %v4687
    %4689 = vmatprep.mubr.bf16.mxu0 %v2140
    %4690 = vmatmul.mubr.bf16.gmra.mxu0 %v2139
    %v4691 = vpop.f32.mrf.mxu0
    %v4692 = vadd.f32 %v4179, %v4691
    %v4693 = vpop.f32.mrf.mxu0
    %v4694 = vadd.f32 %v4181, %v4693
    %v4695 = vpop.f32.mrf.mxu0
    %v4696 = vadd.f32 %v4183, %v4695
    %v4697 = vpop.f32.mrf.mxu0
    %v4698 = vadd.f32 %v4185, %v4697
    %4699 = vmatprep.mubr.bf16.mxu0 %v2148
    %4700 = vmatmul.mubr.bf16.gmra.mxu0 %v2147
    %v4701 = vpop.f32.mrf.mxu0
    %v4702 = vadd.f32 %v4189, %v4701
    %v4703 = vpop.f32.mrf.mxu0
    %v4704 = vadd.f32 %v4191, %v4703
    %v4705 = vpop.f32.mrf.mxu0
    %v4706 = vadd.f32 %v4193, %v4705
    %v4707 = vpop.f32.mrf.mxu0
    %v4708 = vadd.f32 %v4195, %v4707
    %4709 = vmatprep.mubr.bf16.mxu0 %v2156
    %4710 = vmatmul.mubr.bf16.gmra.mxu0 %v2155
    %v4711 = vpop.f32.mrf.mxu0
    %v4712 = vadd.f32 %v4199, %v4711
    %v4713 = vpop.f32.mrf.mxu0
    %v4714 = vadd.f32 %v4201, %v4713
    %v4715 = vpop.f32.mrf.mxu0
    %v4716 = vadd.f32 %v4203, %v4715
    %v4717 = vpop.f32.mrf.mxu0
    %v4718 = vadd.f32 %v4205, %v4717
    %4719 = vmatprep.mubr.bf16.mxu0 %v2164
    %4720 = vmatmul.mubr.bf16.gmra.mxu0 %v2163
    %v4721 = vpop.f32.mrf.mxu0
    %v4722 = vadd.f32 %v4209, %v4721
    %v4723 = vpop.f32.mrf.mxu0
    %v4724 = vadd.f32 %v4211, %v4723
    %v4725 = vpop.f32.mrf.mxu0
    %v4726 = vadd.f32 %v4213, %v4725
    %v4727 = vpop.f32.mrf.mxu0
    %v4728 = vadd.f32 %v4215, %v4727
    %4729 = vdwg.mxu0
    %4730 = vmatprep.subr.bf16.mxu0 %v3046
    %4731 = vmatpush1.bf16.msra.mxu0 %v3045
    %4732 = vmatprep.subr.bf16.mxu0 %v3044
    %4733 = vmatpush1.bf16.msra.mxu0 %v3043
    %4734 = vmatprep.subr.bf16.mxu0 %v3042
    %4735 = vmatpush1.bf16.msra.mxu0 %v3041
    %4736 = vmatprep.subr.bf16.mxu0 %v3040
    %4737 = vmatpush1.bf16.msra.mxu0 %v3039
    %4738 = vmatprep.subr.bf16.mxu0 %v3038
    %4739 = vmatpush1.bf16.msra.mxu0 %v3037
    %4740 = vmatprep.subr.bf16.mxu0 %v3036
    %4741 = vmatpush1.bf16.msra.mxu0 %v3035
    %4742 = vmatprep.subr.bf16.mxu0 %v3034
    %4743 = vmatpush1.bf16.msra.mxu0 %v3033
    %4744 = vmatprep.subr.bf16.mxu0 %v3032
    %4745 = vmatpush1.bf16.msra.mxu0 %v3031
    %4746 = vmatprep.subr.bf16.mxu0 %v3062
    %4747 = vmatpush2.bf16.msra.mxu0 %v3061
    %4748 = vmatprep.subr.bf16.mxu0 %v3060
    %4749 = vmatpush2.bf16.msra.mxu0 %v3059
    %4750 = vmatprep.subr.bf16.mxu0 %v3058
    %4751 = vmatpush2.bf16.msra.mxu0 %v3057
    %4752 = vmatprep.subr.bf16.mxu0 %v3056
    %4753 = vmatpush2.bf16.msra.mxu0 %v3055
    %4754 = vmatprep.subr.bf16.mxu0 %v3054
    %4755 = vmatpush2.bf16.msra.mxu0 %v3053
    %4756 = vmatprep.subr.bf16.mxu0 %v3052
    %4757 = vmatpush2.bf16.msra.mxu0 %v3051
    %4758 = vmatprep.subr.bf16.mxu0 %v3050
    %4759 = vmatpush2.bf16.msra.mxu0 %v3049
    %4760 = vmatprep.subr.bf16.mxu0 %v3048
    %4761 = vmatpush2.bf16.msra.mxu0 %v3047
    %4762 = vmatprep.mubr.bf16.mxu0 %v1790
    %4763 = vmatmul.mubr.bf16.gmra.mxu0 %v1789
    %v4764 = vpop.f32.mrf.mxu0
    %v4765 = vadd.f32 %v4252, %v4764
    %v4766 = vpop.f32.mrf.mxu0
    %v4767 = vadd.f32 %v4254, %v4766
    %v4768 = vpop.f32.mrf.mxu0
    %v4769 = vadd.f32 %v4256, %v4768
    %v4770 = vpop.f32.mrf.mxu0
    %v4771 = vadd.f32 %v4258, %v4770
    %4772 = vmatprep.mubr.bf16.mxu0 %v1798
    %4773 = vmatmul.mubr.bf16.gmra.mxu0 %v1797
    %v4774 = vpop.f32.mrf.mxu0
    %v4775 = vadd.f32 %v4262, %v4774
    %v4776 = vpop.f32.mrf.mxu0
    %v4777 = vadd.f32 %v4264, %v4776
    %v4778 = vpop.f32.mrf.mxu0
    %v4779 = vadd.f32 %v4266, %v4778
    %v4780 = vpop.f32.mrf.mxu0
    %v4781 = vadd.f32 %v4268, %v4780
    %4782 = vmatprep.mubr.bf16.mxu0 %v1806
    %4783 = vmatmul.mubr.bf16.gmra.mxu0 %v1805
    %v4784 = vpop.f32.mrf.mxu0
    %v4785 = vadd.f32 %v4272, %v4784
    %v4786 = vpop.f32.mrf.mxu0
    %v4787 = vadd.f32 %v4274, %v4786
    %v4788 = vpop.f32.mrf.mxu0
    %v4789 = vadd.f32 %v4276, %v4788
    %v4790 = vpop.f32.mrf.mxu0
    %v4791 = vadd.f32 %v4278, %v4790
    %4792 = vmatprep.mubr.bf16.mxu0 %v1814
    %4793 = vmatmul.mubr.bf16.gmra.mxu0 %v1813
    %v4794 = vpop.f32.mrf.mxu0
    %v4795 = vadd.f32 %v4282, %v4794
    %v4796 = vpop.f32.mrf.mxu0
    %v4797 = vadd.f32 %v4284, %v4796
    %v4798 = vpop.f32.mrf.mxu0
    %v4799 = vadd.f32 %v4286, %v4798
    %v4800 = vpop.f32.mrf.mxu0
    %v4801 = vadd.f32 %v4288, %v4800
    %4802 = vmatprep.mubr.bf16.mxu0 %v1822
    %4803 = vmatmul.mubr.bf16.gmra.mxu0 %v1821
    %v4804 = vpop.f32.mrf.mxu0
    %v4805 = vadd.f32 %v4292, %v4804
    %v4806 = vpop.f32.mrf.mxu0
    %v4807 = vadd.f32 %v4294, %v4806
    %v4808 = vpop.f32.mrf.mxu0
    %v4809 = vadd.f32 %v4296, %v4808
    %v4810 = vpop.f32.mrf.mxu0
    %v4811 = vadd.f32 %v4298, %v4810
    %4812 = vmatprep.mubr.bf16.mxu0 %v1830
    %4813 = vmatmul.mubr.bf16.gmra.mxu0 %v1829
    %v4814 = vpop.f32.mrf.mxu0
    %v4815 = vadd.f32 %v4302, %v4814
    %v4816 = vpop.f32.mrf.mxu0
    %v4817 = vadd.f32 %v4304, %v4816
    %v4818 = vpop.f32.mrf.mxu0
    %v4819 = vadd.f32 %v4306, %v4818
    %v4820 = vpop.f32.mrf.mxu0
    %v4821 = vadd.f32 %v4308, %v4820
    %4822 = vmatprep.mubr.bf16.mxu0 %v1838
    %4823 = vmatmul.mubr.bf16.gmra.mxu0 %v1837
    %v4824 = vpop.f32.mrf.mxu0
    %v4825 = vadd.f32 %v4312, %v4824
    %v4826 = vpop.f32.mrf.mxu0
    %v4827 = vadd.f32 %v4314, %v4826
    %v4828 = vpop.f32.mrf.mxu0
    %v4829 = vadd.f32 %v4316, %v4828
    %v4830 = vpop.f32.mrf.mxu0
    %v4831 = vadd.f32 %v4318, %v4830
    %4832 = vmatprep.mubr.bf16.mxu0 %v1846
    %4833 = vmatmul.mubr.bf16.gmra.mxu0 %v1845
    %v4834 = vpop.f32.mrf.mxu0
    %v4835 = vadd.f32 %v4322, %v4834
    %v4836 = vpop.f32.mrf.mxu0
    %v4837 = vadd.f32 %v4324, %v4836
    %v4838 = vpop.f32.mrf.mxu0
    %v4839 = vadd.f32 %v4326, %v4838
    %v4840 = vpop.f32.mrf.mxu0
    %v4841 = vadd.f32 %v4328, %v4840
    %4842 = vmatprep.mubr.bf16.mxu0 %v1854
    %4843 = vmatmul.mubr.bf16.gmra.mxu0 %v1853
    %v4844 = vpop.f32.mrf.mxu0
    %v4845 = vadd.f32 %v4332, %v4844
    %v4846 = vpop.f32.mrf.mxu0
    %v4847 = vadd.f32 %v4334, %v4846
    %v4848 = vpop.f32.mrf.mxu0
    %v4849 = vadd.f32 %v4336, %v4848
    %v4850 = vpop.f32.mrf.mxu0
    %v4851 = vadd.f32 %v4338, %v4850
    %4852 = vmatprep.mubr.bf16.mxu0 %v1862
    %4853 = vmatmul.mubr.bf16.gmra.mxu0 %v1861
    %v4854 = vpop.f32.mrf.mxu0
    %v4855 = vadd.f32 %v4342, %v4854
    %v4856 = vpop.f32.mrf.mxu0
    %v4857 = vadd.f32 %v4344, %v4856
    %v4858 = vpop.f32.mrf.mxu0
    %v4859 = vadd.f32 %v4346, %v4858
    %v4860 = vpop.f32.mrf.mxu0
    %v4861 = vadd.f32 %v4348, %v4860
    %4862 = vmatprep.mubr.bf16.mxu0 %v1870
    %4863 = vmatmul.mubr.bf16.gmra.mxu0 %v1869
    %v4864 = vpop.f32.mrf.mxu0
    %v4865 = vadd.f32 %v4352, %v4864
    %v4866 = vpop.f32.mrf.mxu0
    %v4867 = vadd.f32 %v4354, %v4866
    %v4868 = vpop.f32.mrf.mxu0
    %v4869 = vadd.f32 %v4356, %v4868
    %v4870 = vpop.f32.mrf.mxu0
    %v4871 = vadd.f32 %v4358, %v4870
    %4872 = vmatprep.mubr.bf16.mxu0 %v1878
    %4873 = vmatmul.mubr.bf16.gmra.mxu0 %v1877
    %v4874 = vpop.f32.mrf.mxu0
    %v4875 = vadd.f32 %v4362, %v4874
    %v4876 = vpop.f32.mrf.mxu0
    %v4877 = vadd.f32 %v4364, %v4876
    %v4878 = vpop.f32.mrf.mxu0
    %v4879 = vadd.f32 %v4366, %v4878
    %v4880 = vpop.f32.mrf.mxu0
    %v4881 = vadd.f32 %v4368, %v4880
    %4882 = vmatprep.mubr.bf16.mxu0 %v1886
    %4883 = vmatmul.mubr.bf16.gmra.mxu0 %v1885
    %v4884 = vpop.f32.mrf.mxu0
    %v4885 = vadd.f32 %v4372, %v4884
    %v4886 = vpop.f32.mrf.mxu0
    %v4887 = vadd.f32 %v4374, %v4886
    %v4888 = vpop.f32.mrf.mxu0
    %v4889 = vadd.f32 %v4376, %v4888
    %v4890 = vpop.f32.mrf.mxu0
    %v4891 = vadd.f32 %v4378, %v4890
    %4892 = vmatprep.mubr.bf16.mxu0 %v1894
    %4893 = vmatmul.mubr.bf16.gmra.mxu0 %v1893
    %v4894 = vpop.f32.mrf.mxu0
    %v4895 = vadd.f32 %v4382, %v4894
    %v4896 = vpop.f32.mrf.mxu0
    %v4897 = vadd.f32 %v4384, %v4896
    %v4898 = vpop.f32.mrf.mxu0
    %v4899 = vadd.f32 %v4386, %v4898
    %v4900 = vpop.f32.mrf.mxu0
    %v4901 = vadd.f32 %v4388, %v4900
    %4902 = vmatprep.mubr.bf16.mxu0 %v1902
    %4903 = vmatmul.mubr.bf16.gmra.mxu0 %v1901
    %v4904 = vpop.f32.mrf.mxu0
    %v4905 = vadd.f32 %v4392, %v4904
    %v4906 = vpop.f32.mrf.mxu0
    %v4907 = vadd.f32 %v4394, %v4906
    %v4908 = vpop.f32.mrf.mxu0
    %v4909 = vadd.f32 %v4396, %v4908
    %v4910 = vpop.f32.mrf.mxu0
    %v4911 = vadd.f32 %v4398, %v4910
    %4912 = vmatprep.mubr.bf16.mxu0 %v1910
    %4913 = vmatmul.mubr.bf16.gmra.mxu0 %v1909
    %v4914 = vpop.f32.mrf.mxu0
    %v4915 = vadd.f32 %v4402, %v4914
    %v4916 = vpop.f32.mrf.mxu0
    %v4917 = vadd.f32 %v4404, %v4916
    %v4918 = vpop.f32.mrf.mxu0
    %v4919 = vadd.f32 %v4406, %v4918
    %v4920 = vpop.f32.mrf.mxu0
    %v4921 = vadd.f32 %v4408, %v4920
    %4922 = vmatprep.mubr.bf16.mxu0 %v1918
    %4923 = vmatmul.mubr.bf16.gmra.mxu0 %v1917
    %v4924 = vpop.f32.mrf.mxu0
    %v4925 = vadd.f32 %v4412, %v4924
    %v4926 = vpop.f32.mrf.mxu0
    %v4927 = vadd.f32 %v4414, %v4926
    %v4928 = vpop.f32.mrf.mxu0
    %v4929 = vadd.f32 %v4416, %v4928
    %v4930 = vpop.f32.mrf.mxu0
    %v4931 = vadd.f32 %v4418, %v4930
    %4932 = vmatprep.mubr.bf16.mxu0 %v1926
    %4933 = vmatmul.mubr.bf16.gmra.mxu0 %v1925
    %v4934 = vpop.f32.mrf.mxu0
    %v4935 = vadd.f32 %v4422, %v4934
    %v4936 = vpop.f32.mrf.mxu0
    %v4937 = vadd.f32 %v4424, %v4936
    %v4938 = vpop.f32.mrf.mxu0
    %v4939 = vadd.f32 %v4426, %v4938
    %v4940 = vpop.f32.mrf.mxu0
    %v4941 = vadd.f32 %v4428, %v4940
    %4942 = vmatprep.mubr.bf16.mxu0 %v1934
    %4943 = vmatmul.mubr.bf16.gmra.mxu0 %v1933
    %v4944 = vpop.f32.mrf.mxu0
    %v4945 = vadd.f32 %v4432, %v4944
    %v4946 = vpop.f32.mrf.mxu0
    %v4947 = vadd.f32 %v4434, %v4946
    %v4948 = vpop.f32.mrf.mxu0
    %v4949 = vadd.f32 %v4436, %v4948
    %v4950 = vpop.f32.mrf.mxu0
    %v4951 = vadd.f32 %v4438, %v4950
    %4952 = vmatprep.mubr.bf16.mxu0 %v1942
    %4953 = vmatmul.mubr.bf16.gmra.mxu0 %v1941
    %v4954 = vpop.f32.mrf.mxu0
    %v4955 = vadd.f32 %v4442, %v4954
    %v4956 = vpop.f32.mrf.mxu0
    %v4957 = vadd.f32 %v4444, %v4956
    %v4958 = vpop.f32.mrf.mxu0
    %v4959 = vadd.f32 %v4446, %v4958
    %v4960 = vpop.f32.mrf.mxu0
    %v4961 = vadd.f32 %v4448, %v4960
    %4962 = vmatprep.mubr.bf16.mxu0 %v1950
    %4963 = vmatmul.mubr.bf16.gmra.mxu0 %v1949
    %v4964 = vpop.f32.mrf.mxu0
    %v4965 = vadd.f32 %v4452, %v4964
    %v4966 = vpop.f32.mrf.mxu0
    %v4967 = vadd.f32 %v4454, %v4966
    %v4968 = vpop.f32.mrf.mxu0
    %v4969 = vadd.f32 %v4456, %v4968
    %v4970 = vpop.f32.mrf.mxu0
    %v4971 = vadd.f32 %v4458, %v4970
    %4972 = vmatprep.mubr.bf16.mxu0 %v1958
    %4973 = vmatmul.mubr.bf16.gmra.mxu0 %v1957
    %v4974 = vpop.f32.mrf.mxu0
    %v4975 = vadd.f32 %v4462, %v4974
    %v4976 = vpop.f32.mrf.mxu0
    %v4977 = vadd.f32 %v4464, %v4976
    %v4978 = vpop.f32.mrf.mxu0
    %v4979 = vadd.f32 %v4466, %v4978
    %v4980 = vpop.f32.mrf.mxu0
    %v4981 = vadd.f32 %v4468, %v4980
    %4982 = vmatprep.mubr.bf16.mxu0 %v1966
    %4983 = vmatmul.mubr.bf16.gmra.mxu0 %v1965
    %v4984 = vpop.f32.mrf.mxu0
    %v4985 = vadd.f32 %v4472, %v4984
    %v4986 = vpop.f32.mrf.mxu0
    %v4987 = vadd.f32 %v4474, %v4986
    %v4988 = vpop.f32.mrf.mxu0
    %v4989 = vadd.f32 %v4476, %v4988
    %v4990 = vpop.f32.mrf.mxu0
    %v4991 = vadd.f32 %v4478, %v4990
    %4992 = vmatprep.mubr.bf16.mxu0 %v1974
    %4993 = vmatmul.mubr.bf16.gmra.mxu0 %v1973
    %v4994 = vpop.f32.mrf.mxu0
    %v4995 = vadd.f32 %v4482, %v4994
    %v4996 = vpop.f32.mrf.mxu0
    %v4997 = vadd.f32 %v4484, %v4996
    %v4998 = vpop.f32.mrf.mxu0
    %v4999 = vadd.f32 %v4486, %v4998
    %v5000 = vpop.f32.mrf.mxu0
    %v5001 = vadd.f32 %v4488, %v5000
    %5002 = vmatprep.mubr.bf16.mxu0 %v1982
    %5003 = vmatmul.mubr.bf16.gmra.mxu0 %v1981
    %v5004 = vpop.f32.mrf.mxu0
    %v5005 = vadd.f32 %v4492, %v5004
    %v5006 = vpop.f32.mrf.mxu0
    %v5007 = vadd.f32 %v4494, %v5006
    %v5008 = vpop.f32.mrf.mxu0
    %v5009 = vadd.f32 %v4496, %v5008
    %v5010 = vpop.f32.mrf.mxu0
    %v5011 = vadd.f32 %v4498, %v5010
    %5012 = vmatprep.mubr.bf16.mxu0 %v1990
    %5013 = vmatmul.mubr.bf16.gmra.mxu0 %v1989
    %v5014 = vpop.f32.mrf.mxu0
    %v5015 = vadd.f32 %v4502, %v5014
    %v5016 = vpop.f32.mrf.mxu0
    %v5017 = vadd.f32 %v4504, %v5016
    %v5018 = vpop.f32.mrf.mxu0
    %v5019 = vadd.f32 %v4506, %v5018
    %v5020 = vpop.f32.mrf.mxu0
    %v5021 = vadd.f32 %v4508, %v5020
    %5022 = vmatprep.mubr.bf16.mxu0 %v1998
    %5023 = vmatmul.mubr.bf16.gmra.mxu0 %v1997
    %v5024 = vpop.f32.mrf.mxu0
    %v5025 = vadd.f32 %v4512, %v5024
    %v5026 = vpop.f32.mrf.mxu0
    %v5027 = vadd.f32 %v4514, %v5026
    %v5028 = vpop.f32.mrf.mxu0
    %v5029 = vadd.f32 %v4516, %v5028
    %v5030 = vpop.f32.mrf.mxu0
    %v5031 = vadd.f32 %v4518, %v5030
    %5032 = vmatprep.mubr.bf16.mxu0 %v2006
    %5033 = vmatmul.mubr.bf16.gmra.mxu0 %v2005
    %v5034 = vpop.f32.mrf.mxu0
    %v5035 = vadd.f32 %v4522, %v5034
    %v5036 = vpop.f32.mrf.mxu0
    %v5037 = vadd.f32 %v4524, %v5036
    %v5038 = vpop.f32.mrf.mxu0
    %v5039 = vadd.f32 %v4526, %v5038
    %v5040 = vpop.f32.mrf.mxu0
    %v5041 = vadd.f32 %v4528, %v5040
    %5042 = vmatprep.mubr.bf16.mxu0 %v2014
    %5043 = vmatmul.mubr.bf16.gmra.mxu0 %v2013
    %v5044 = vpop.f32.mrf.mxu0
    %v5045 = vadd.f32 %v4532, %v5044
    %v5046 = vpop.f32.mrf.mxu0
    %v5047 = vadd.f32 %v4534, %v5046
    %v5048 = vpop.f32.mrf.mxu0
    %v5049 = vadd.f32 %v4536, %v5048
    %v5050 = vpop.f32.mrf.mxu0
    %v5051 = vadd.f32 %v4538, %v5050
    %5052 = vmatprep.mubr.bf16.mxu0 %v2022
    %5053 = vmatmul.mubr.bf16.gmra.mxu0 %v2021
    %v5054 = vpop.f32.mrf.mxu0
    %v5055 = vadd.f32 %v4542, %v5054
    %v5056 = vpop.f32.mrf.mxu0
    %v5057 = vadd.f32 %v4544, %v5056
    %v5058 = vpop.f32.mrf.mxu0
    %v5059 = vadd.f32 %v4546, %v5058
    %v5060 = vpop.f32.mrf.mxu0
    %v5061 = vadd.f32 %v4548, %v5060
    %5062 = vmatprep.mubr.bf16.mxu0 %v2030
    %5063 = vmatmul.mubr.bf16.gmra.mxu0 %v2029
    %v5064 = vpop.f32.mrf.mxu0
    %v5065 = vadd.f32 %v4552, %v5064
    %v5066 = vpop.f32.mrf.mxu0
    %v5067 = vadd.f32 %v4554, %v5066
    %v5068 = vpop.f32.mrf.mxu0
    %v5069 = vadd.f32 %v4556, %v5068
    %v5070 = vpop.f32.mrf.mxu0
    %v5071 = vadd.f32 %v4558, %v5070
    %5072 = vmatprep.mubr.bf16.mxu0 %v2038
    %5073 = vmatmul.mubr.bf16.gmra.mxu0 %v2037
    %v5074 = vpop.f32.mrf.mxu0
    %v5075 = vadd.f32 %v4562, %v5074
    %v5076 = vpop.f32.mrf.mxu0
    %v5077 = vadd.f32 %v4564, %v5076
    %v5078 = vpop.f32.mrf.mxu0
    %v5079 = vadd.f32 %v4566, %v5078
    %v5080 = vpop.f32.mrf.mxu0
    %v5081 = vadd.f32 %v4568, %v5080
    %5082 = vmatprep.mubr.bf16.mxu0 %v2046
    %5083 = vmatmul.mubr.bf16.gmra.mxu0 %v2045
    %v5084 = vpop.f32.mrf.mxu0
    %v5085 = vadd.f32 %v4572, %v5084
    %v5086 = vpop.f32.mrf.mxu0
    %v5087 = vadd.f32 %v4574, %v5086
    %v5088 = vpop.f32.mrf.mxu0
    %v5089 = vadd.f32 %v4576, %v5088
    %v5090 = vpop.f32.mrf.mxu0
    %v5091 = vadd.f32 %v4578, %v5090
    %5092 = vmatprep.mubr.bf16.mxu0 %v2054
    %5093 = vmatmul.mubr.bf16.gmra.mxu0 %v2053
    %v5094 = vpop.f32.mrf.mxu0
    %v5095 = vadd.f32 %v4582, %v5094
    %v5096 = vpop.f32.mrf.mxu0
    %v5097 = vadd.f32 %v4584, %v5096
    %v5098 = vpop.f32.mrf.mxu0
    %v5099 = vadd.f32 %v4586, %v5098
    %v5100 = vpop.f32.mrf.mxu0
    %v5101 = vadd.f32 %v4588, %v5100
    %5102 = vmatprep.mubr.bf16.mxu0 %v2062
    %5103 = vmatmul.mubr.bf16.gmra.mxu0 %v2061
    %v5104 = vpop.f32.mrf.mxu0
    %v5105 = vadd.f32 %v4592, %v5104
    %v5106 = vpop.f32.mrf.mxu0
    %v5107 = vadd.f32 %v4594, %v5106
    %v5108 = vpop.f32.mrf.mxu0
    %v5109 = vadd.f32 %v4596, %v5108
    %v5110 = vpop.f32.mrf.mxu0
    %v5111 = vadd.f32 %v4598, %v5110
    %5112 = vmatprep.mubr.bf16.mxu0 %v2070
    %5113 = vmatmul.mubr.bf16.gmra.mxu0 %v2069
    %v5114 = vpop.f32.mrf.mxu0
    %v5115 = vadd.f32 %v4602, %v5114
    %v5116 = vpop.f32.mrf.mxu0
    %v5117 = vadd.f32 %v4604, %v5116
    %v5118 = vpop.f32.mrf.mxu0
    %v5119 = vadd.f32 %v4606, %v5118
    %v5120 = vpop.f32.mrf.mxu0
    %v5121 = vadd.f32 %v4608, %v5120
    %5122 = vmatprep.mubr.bf16.mxu0 %v2078
    %5123 = vmatmul.mubr.bf16.gmra.mxu0 %v2077
    %v5124 = vpop.f32.mrf.mxu0
    %v5125 = vadd.f32 %v4612, %v5124
    %v5126 = vpop.f32.mrf.mxu0
    %v5127 = vadd.f32 %v4614, %v5126
    %v5128 = vpop.f32.mrf.mxu0
    %v5129 = vadd.f32 %v4616, %v5128
    %v5130 = vpop.f32.mrf.mxu0
    %v5131 = vadd.f32 %v4618, %v5130
    %5132 = vmatprep.mubr.bf16.mxu0 %v2086
    %5133 = vmatmul.mubr.bf16.gmra.mxu0 %v2085
    %v5134 = vpop.f32.mrf.mxu0
    %v5135 = vadd.f32 %v4622, %v5134
    %v5136 = vpop.f32.mrf.mxu0
    %v5137 = vadd.f32 %v4624, %v5136
    %v5138 = vpop.f32.mrf.mxu0
    %v5139 = vadd.f32 %v4626, %v5138
    %v5140 = vpop.f32.mrf.mxu0
    %v5141 = vadd.f32 %v4628, %v5140
    %5142 = vmatprep.mubr.bf16.mxu0 %v2094
    %5143 = vmatmul.mubr.bf16.gmra.mxu0 %v2093
    %v5144 = vpop.f32.mrf.mxu0
    %v5145 = vadd.f32 %v4632, %v5144
    %v5146 = vpop.f32.mrf.mxu0
    %v5147 = vadd.f32 %v4634, %v5146
    %v5148 = vpop.f32.mrf.mxu0
    %v5149 = vadd.f32 %v4636, %v5148
    %v5150 = vpop.f32.mrf.mxu0
    %v5151 = vadd.f32 %v4638, %v5150
    %5152 = vmatprep.mubr.bf16.mxu0 %v2102
    %5153 = vmatmul.mubr.bf16.gmra.mxu0 %v2101
    %v5154 = vpop.f32.mrf.mxu0
    %v5155 = vadd.f32 %v4642, %v5154
    %v5156 = vpop.f32.mrf.mxu0
    %v5157 = vadd.f32 %v4644, %v5156
    %v5158 = vpop.f32.mrf.mxu0
    %v5159 = vadd.f32 %v4646, %v5158
    %v5160 = vpop.f32.mrf.mxu0
    %v5161 = vadd.f32 %v4648, %v5160
    %5162 = vmatprep.mubr.bf16.mxu0 %v2110
    %5163 = vmatmul.mubr.bf16.gmra.mxu0 %v2109
    %v5164 = vpop.f32.mrf.mxu0
    %v5165 = vadd.f32 %v4652, %v5164
    %v5166 = vpop.f32.mrf.mxu0
    %v5167 = vadd.f32 %v4654, %v5166
    %v5168 = vpop.f32.mrf.mxu0
    %v5169 = vadd.f32 %v4656, %v5168
    %v5170 = vpop.f32.mrf.mxu0
    %v5171 = vadd.f32 %v4658, %v5170
    %5172 = vmatprep.mubr.bf16.mxu0 %v2118
    %5173 = vmatmul.mubr.bf16.gmra.mxu0 %v2117
    %v5174 = vpop.f32.mrf.mxu0
    %v5175 = vadd.f32 %v4662, %v5174
    %v5176 = vpop.f32.mrf.mxu0
    %v5177 = vadd.f32 %v4664, %v5176
    %v5178 = vpop.f32.mrf.mxu0
    %v5179 = vadd.f32 %v4666, %v5178
    %v5180 = vpop.f32.mrf.mxu0
    %v5181 = vadd.f32 %v4668, %v5180
    %5182 = vmatprep.mubr.bf16.mxu0 %v2126
    %5183 = vmatmul.mubr.bf16.gmra.mxu0 %v2125
    %v5184 = vpop.f32.mrf.mxu0
    %v5185 = vadd.f32 %v4672, %v5184
    %v5186 = vpop.f32.mrf.mxu0
    %v5187 = vadd.f32 %v4674, %v5186
    %v5188 = vpop.f32.mrf.mxu0
    %v5189 = vadd.f32 %v4676, %v5188
    %v5190 = vpop.f32.mrf.mxu0
    %v5191 = vadd.f32 %v4678, %v5190
    %5192 = vmatprep.mubr.bf16.mxu0 %v2134
    %5193 = vmatmul.mubr.bf16.gmra.mxu0 %v2133
    %v5194 = vpop.f32.mrf.mxu0
    %v5195 = vadd.f32 %v4682, %v5194
    %v5196 = vpop.f32.mrf.mxu0
    %v5197 = vadd.f32 %v4684, %v5196
    %v5198 = vpop.f32.mrf.mxu0
    %v5199 = vadd.f32 %v4686, %v5198
    %v5200 = vpop.f32.mrf.mxu0
    %v5201 = vadd.f32 %v4688, %v5200
    %5202 = vmatprep.mubr.bf16.mxu0 %v2142
    %5203 = vmatmul.mubr.bf16.gmra.mxu0 %v2141
    %v5204 = vpop.f32.mrf.mxu0
    %v5205 = vadd.f32 %v4692, %v5204
    %v5206 = vpop.f32.mrf.mxu0
    %v5207 = vadd.f32 %v4694, %v5206
    %v5208 = vpop.f32.mrf.mxu0
    %v5209 = vadd.f32 %v4696, %v5208
    %v5210 = vpop.f32.mrf.mxu0
    %v5211 = vadd.f32 %v4698, %v5210
    %5212 = vmatprep.mubr.bf16.mxu0 %v2150
    %5213 = vmatmul.mubr.bf16.gmra.mxu0 %v2149
    %v5214 = vpop.f32.mrf.mxu0
    %v5215 = vadd.f32 %v4702, %v5214
    %v5216 = vpop.f32.mrf.mxu0
    %v5217 = vadd.f32 %v4704, %v5216
    %v5218 = vpop.f32.mrf.mxu0
    %v5219 = vadd.f32 %v4706, %v5218
    %v5220 = vpop.f32.mrf.mxu0
    %v5221 = vadd.f32 %v4708, %v5220
    %5222 = vmatprep.mubr.bf16.mxu0 %v2158
    %5223 = vmatmul.mubr.bf16.gmra.mxu0 %v2157
    %v5224 = vpop.f32.mrf.mxu0
    %v5225 = vadd.f32 %v4712, %v5224
    %v5226 = vpop.f32.mrf.mxu0
    %v5227 = vadd.f32 %v4714, %v5226
    %v5228 = vpop.f32.mrf.mxu0
    %v5229 = vadd.f32 %v4716, %v5228
    %v5230 = vpop.f32.mrf.mxu0
    %v5231 = vadd.f32 %v4718, %v5230
    %5232 = vmatprep.mubr.bf16.mxu0 %v2166
    %5233 = vmatmul.mubr.bf16.gmra.mxu0 %v2165
    %v5234 = vpop.f32.mrf.mxu0
    %v5235 = vadd.f32 %v4722, %v5234
    %v5236 = vpop.f32.mrf.mxu0
    %v5237 = vadd.f32 %v4724, %v5236
    %v5238 = vpop.f32.mrf.mxu0
    %v5239 = vadd.f32 %v4726, %v5238
    %v5240 = vpop.f32.mrf.mxu0
    %v5241 = vadd.f32 %v4728, %v5240
    %5242 = vdwg.mxu0
    %5243 = vst [vmem:[#allocation2] sm:$0xff] 0.0
    %vm5244 = vcmask 261120
    %5245 = vst.msk [vmem:[#allocation2 + $0x8] sm:$0xff] %vm5244, 0.0
    %5246 = vst [vmem:[#allocation2 + $0x10] sm:$0xff] 0.0
    %5247 = vst.msk [vmem:[#allocation2 + $0x18] sm:$0xff] %vm5244, 0.0
    %5248 = vst [vmem:[#allocation2 + $0x20] sm:$0xff] 0.0
    %5249 = vst.msk [vmem:[#allocation2 + $0x28] sm:$0xff] %vm5244, 0.0
    %5250 = vst [vmem:[#allocation2 + $0x30] sm:$0xff] 0.0
    %5251 = vst.msk [vmem:[#allocation2 + $0x38] sm:$0xff] %vm5244, 0.0
    %5252 = vst [vmem:[#allocation2 + $0x40] sm:$0xff] %v4765
    %5253 = vst.msk [vmem:[#allocation2 + $0x48] sm:$0xff] %vm5244, %v4767
    %5254 = vst [vmem:[#allocation2 + $0x50] sm:$0xff] %v4769
    %5255 = vst.msk [vmem:[#allocation2 + $0x58] sm:$0xff] %vm5244, %v4771
    %5256 = vst [vmem:[#allocation2 + $0x60] sm:$0xff] %v4775
    %5257 = vst.msk [vmem:[#allocation2 + $0x68] sm:$0xff] %vm5244, %v4777
    %5258 = vst [vmem:[#allocation2 + $0x70] sm:$0xff] %v4779
    %5259 = vst.msk [vmem:[#allocation2 + $0x78] sm:$0xff] %vm5244, %v4781
    %5260 = vst [vmem:[#allocation2 + $0x80] sm:$0xff] %v4785
    %5261 = vst.msk [vmem:[#allocation2 + $0x88] sm:$0xff] %vm5244, %v4787
    %5262 = vst [vmem:[#allocation2 + $0x90] sm:$0xff] %v4789
    %5263 = vst.msk [vmem:[#allocation2 + $0x98] sm:$0xff] %vm5244, %v4791
    %5264 = vst [vmem:[#allocation2 + $0xa0] sm:$0xff] %v4795
    %5265 = vst.msk [vmem:[#allocation2 + $0xa8] sm:$0xff] %vm5244, %v4797
    %5266 = vst [vmem:[#allocation2 + $0xb0] sm:$0xff] %v4799
    %5267 = vst.msk [vmem:[#allocation2 + $0xb8] sm:$0xff] %vm5244, %v4801
    %5268 = vst [vmem:[#allocation2 + $0xc0] sm:$0xff] %v4805
    %5269 = vst.msk [vmem:[#allocation2 + $0xc8] sm:$0xff] %vm5244, %v4807
    %5270 = vst [vmem:[#allocation2 + $0xd0] sm:$0xff] %v4809
    %5271 = vst.msk [vmem:[#allocation2 + $0xd8] sm:$0xff] %vm5244, %v4811
    %5272 = vst [vmem:[#allocation2 + $0xe0] sm:$0xff] %v4815
    %5273 = vst.msk [vmem:[#allocation2 + $0xe8] sm:$0xff] %vm5244, %v4817
    %5274 = vst [vmem:[#allocation2 + $0xf0] sm:$0xff] %v4819
    %5275 = vst.msk [vmem:[#allocation2 + $0xf8] sm:$0xff] %vm5244, %v4821
    %5276 = vst [vmem:[#allocation2 + $0x100] sm:$0xff] %v4825
    %5277 = vst.msk [vmem:[#allocation2 + $0x108] sm:$0xff] %vm5244, %v4827
    %5278 = vst [vmem:[#allocation2 + $0x110] sm:$0xff] %v4829
    %5279 = vst.msk [vmem:[#allocation2 + $0x118] sm:$0xff] %vm5244, %v4831
    %5280 = vst [vmem:[#allocation2 + $0x120] sm:$0xff] %v4835
    %5281 = vst.msk [vmem:[#allocation2 + $0x128] sm:$0xff] %vm5244, %v4837
    %5282 = vst [vmem:[#allocation2 + $0x130] sm:$0xff] %v4839
    %5283 = vst.msk [vmem:[#allocation2 + $0x138] sm:$0xff] %vm5244, %v4841
    %5284 = vst [vmem:[#allocation2 + $0x140] sm:$0xff] %v4845
    %5285 = vst.msk [vmem:[#allocation2 + $0x148] sm:$0xff] %vm5244, %v4847
    %5286 = vst [vmem:[#allocation2 + $0x150] sm:$0xff] %v4849
    %5287 = vst.msk [vmem:[#allocation2 + $0x158] sm:$0xff] %vm5244, %v4851
    %5288 = vst [vmem:[#allocation2 + $0x160] sm:$0xff] %v4855
    %5289 = vst.msk [vmem:[#allocation2 + $0x168] sm:$0xff] %vm5244, %v4857
    %5290 = vst [vmem:[#allocation2 + $0x170] sm:$0xff] %v4859
    %5291 = vst.msk [vmem:[#allocation2 + $0x178] sm:$0xff] %vm5244, %v4861
    %5292 = vst [vmem:[#allocation2 + $0x180] sm:$0xff] %v4865
    %5293 = vst.msk [vmem:[#allocation2 + $0x188] sm:$0xff] %vm5244, %v4867
    %5294 = vst [vmem:[#allocation2 + $0x190] sm:$0xff] %v4869
    %5295 = vst.msk [vmem:[#allocation2 + $0x198] sm:$0xff] %vm5244, %v4871
    %5296 = vst [vmem:[#allocation2 + $0x1a0] sm:$0xff] %v4875
    %5297 = vst.msk [vmem:[#allocation2 + $0x1a8] sm:$0xff] %vm5244, %v4877
    %5298 = vst [vmem:[#allocation2 + $0x1b0] sm:$0xff] %v4879
    %5299 = vst.msk [vmem:[#allocation2 + $0x1b8] sm:$0xff] %vm5244, %v4881
    %5300 = vst [vmem:[#allocation2 + $0x1c0] sm:$0xff] %v4885
    %5301 = vst.msk [vmem:[#allocation2 + $0x1c8] sm:$0xff] %vm5244, %v4887
    %5302 = vst [vmem:[#allocation2 + $0x1d0] sm:$0xff] %v4889
    %5303 = vst.msk [vmem:[#allocation2 + $0x1d8] sm:$0xff] %vm5244, %v4891
    %5304 = vst [vmem:[#allocation2 + $0x1e0] sm:$0xff] %v4895
    %5305 = vst.msk [vmem:[#allocation2 + $0x1e8] sm:$0xff] %vm5244, %v4897
    %5306 = vst [vmem:[#allocation2 + $0x1f0] sm:$0xff] %v4899
    %5307 = vst.msk [vmem:[#allocation2 + $0x1f8] sm:$0xff] %vm5244, %v4901
    %5308 = vst [vmem:[#allocation2 + $0x200] sm:$0xff] %v4905
    %5309 = vst.msk [vmem:[#allocation2 + $0x208] sm:$0xff] %vm5244, %v4907
    %5310 = vst [vmem:[#allocation2 + $0x210] sm:$0xff] %v4909
    %5311 = vst.msk [vmem:[#allocation2 + $0x218] sm:$0xff] %vm5244, %v4911
    %5312 = vst [vmem:[#allocation2 + $0x220] sm:$0xff] %v4915
    %5313 = vst.msk [vmem:[#allocation2 + $0x228] sm:$0xff] %vm5244, %v4917
    %5314 = vst [vmem:[#allocation2 + $0x230] sm:$0xff] %v4919
    %5315 = vst.msk [vmem:[#allocation2 + $0x238] sm:$0xff] %vm5244, %v4921
    %5316 = vst [vmem:[#allocation2 + $0x240] sm:$0xff] %v4925
    %5317 = vst.msk [vmem:[#allocation2 + $0x248] sm:$0xff] %vm5244, %v4927
    %5318 = vst [vmem:[#allocation2 + $0x250] sm:$0xff] %v4929
    %5319 = vst.msk [vmem:[#allocation2 + $0x258] sm:$0xff] %vm5244, %v4931
    %5320 = vst [vmem:[#allocation2 + $0x260] sm:$0xff] %v4935
    %5321 = vst.msk [vmem:[#allocation2 + $0x268] sm:$0xff] %vm5244, %v4937
    %5322 = vst [vmem:[#allocation2 + $0x270] sm:$0xff] %v4939
    %5323 = vst.msk [vmem:[#allocation2 + $0x278] sm:$0xff] %vm5244, %v4941
    %5324 = vst [vmem:[#allocation2 + $0x280] sm:$0xff] %v4945
    %5325 = vst.msk [vmem:[#allocation2 + $0x288] sm:$0xff] %vm5244, %v4947
    %5326 = vst [vmem:[#allocation2 + $0x290] sm:$0xff] %v4949
    %5327 = vst.msk [vmem:[#allocation2 + $0x298] sm:$0xff] %vm5244, %v4951
    %5328 = vst [vmem:[#allocation2 + $0x2a0] sm:$0xff] %v4955
    %5329 = vst.msk [vmem:[#allocation2 + $0x2a8] sm:$0xff] %vm5244, %v4957
    %5330 = vst [vmem:[#allocation2 + $0x2b0] sm:$0xff] %v4959
    %5331 = vst.msk [vmem:[#allocation2 + $0x2b8] sm:$0xff] %vm5244, %v4961
    %5332 = vst [vmem:[#allocation2 + $0x2c0] sm:$0xff] %v4965
    %5333 = vst.msk [vmem:[#allocation2 + $0x2c8] sm:$0xff] %vm5244, %v4967
    %5334 = vst [vmem:[#allocation2 + $0x2d0] sm:$0xff] %v4969
    %5335 = vst.msk [vmem:[#allocation2 + $0x2d8] sm:$0xff] %vm5244, %v4971
    %5336 = vst [vmem:[#allocation2 + $0x2e0] sm:$0xff] %v4975
    %5337 = vst.msk [vmem:[#allocation2 + $0x2e8] sm:$0xff] %vm5244, %v4977
    %5338 = vst [vmem:[#allocation2 + $0x2f0] sm:$0xff] %v4979
    %5339 = vst.msk [vmem:[#allocation2 + $0x2f8] sm:$0xff] %vm5244, %v4981
    %5340 = vst [vmem:[#allocation2 + $0x300] sm:$0xff] %v4985
    %5341 = vst.msk [vmem:[#allocation2 + $0x308] sm:$0xff] %vm5244, %v4987
    %5342 = vst [vmem:[#allocation2 + $0x310] sm:$0xff] %v4989
    %5343 = vst.msk [vmem:[#allocation2 + $0x318] sm:$0xff] %vm5244, %v4991
    %5344 = vst [vmem:[#allocation2 + $0x320] sm:$0xff] %v4995
    %5345 = vst.msk [vmem:[#allocation2 + $0x328] sm:$0xff] %vm5244, %v4997
    %5346 = vst [vmem:[#allocation2 + $0x330] sm:$0xff] %v4999
    %5347 = vst.msk [vmem:[#allocation2 + $0x338] sm:$0xff] %vm5244, %v5001
    %5348 = vst [vmem:[#allocation2 + $0x340] sm:$0xff] %v5005
    %5349 = vst.msk [vmem:[#allocation2 + $0x348] sm:$0xff] %vm5244, %v5007
    %5350 = vst [vmem:[#allocation2 + $0x350] sm:$0xff] %v5009
    %5351 = vst.msk [vmem:[#allocation2 + $0x358] sm:$0xff] %vm5244, %v5011
    %5352 = vst [vmem:[#allocation2 + $0x360] sm:$0xff] %v5015
    %5353 = vst.msk [vmem:[#allocation2 + $0x368] sm:$0xff] %vm5244, %v5017
    %5354 = vst [vmem:[#allocation2 + $0x370] sm:$0xff] %v5019
    %5355 = vst.msk [vmem:[#allocation2 + $0x378] sm:$0xff] %vm5244, %v5021
    %5356 = vst [vmem:[#allocation2 + $0x380] sm:$0xff] %v5025
    %5357 = vst.msk [vmem:[#allocation2 + $0x388] sm:$0xff] %vm5244, %v5027
    %5358 = vst [vmem:[#allocation2 + $0x390] sm:$0xff] %v5029
    %5359 = vst.msk [vmem:[#allocation2 + $0x398] sm:$0xff] %vm5244, %v5031
    %5360 = vst [vmem:[#allocation2 + $0x3a0] sm:$0xff] %v5035
    %5361 = vst.msk [vmem:[#allocation2 + $0x3a8] sm:$0xff] %vm5244, %v5037
    %5362 = vst [vmem:[#allocation2 + $0x3b0] sm:$0xff] %v5039
    %5363 = vst.msk [vmem:[#allocation2 + $0x3b8] sm:$0xff] %vm5244, %v5041
    %5364 = vst [vmem:[#allocation2 + $0x3c0] sm:$0xff] %v5045
    %5365 = vst.msk [vmem:[#allocation2 + $0x3c8] sm:$0xff] %vm5244, %v5047
    %5366 = vst [vmem:[#allocation2 + $0x3d0] sm:$0xff] %v5049
    %5367 = vst.msk [vmem:[#allocation2 + $0x3d8] sm:$0xff] %vm5244, %v5051
    %5368 = vst [vmem:[#allocation2 + $0x3e0] sm:$0xff] %v5055
    %5369 = vst.msk [vmem:[#allocation2 + $0x3e8] sm:$0xff] %vm5244, %v5057
    %5370 = vst [vmem:[#allocation2 + $0x3f0] sm:$0xff] %v5059
    %5371 = vst.msk [vmem:[#allocation2 + $0x3f8] sm:$0xff] %vm5244, %v5061
    %5372 = vst [vmem:[#allocation2 + $0x400] sm:$0xff] %v5065
    %5373 = vst.msk [vmem:[#allocation2 + $0x408] sm:$0xff] %vm5244, %v5067
    %5374 = vst [vmem:[#allocation2 + $0x410] sm:$0xff] %v5069
    %5375 = vst.msk [vmem:[#allocation2 + $0x418] sm:$0xff] %vm5244, %v5071
    %5376 = vst [vmem:[#allocation2 + $0x420] sm:$0xff] %v5075
    %5377 = vst.msk [vmem:[#allocation2 + $0x428] sm:$0xff] %vm5244, %v5077
    %5378 = vst [vmem:[#allocation2 + $0x430] sm:$0xff] %v5079
    %5379 = vst.msk [vmem:[#allocation2 + $0x438] sm:$0xff] %vm5244, %v5081
    %5380 = vst [vmem:[#allocation2 + $0x440] sm:$0xff] %v5085
    %5381 = vst.msk [vmem:[#allocation2 + $0x448] sm:$0xff] %vm5244, %v5087
    %5382 = vst [vmem:[#allocation2 + $0x450] sm:$0xff] %v5089
    %5383 = vst.msk [vmem:[#allocation2 + $0x458] sm:$0xff] %vm5244, %v5091
    %5384 = vst [vmem:[#allocation2 + $0x460] sm:$0xff] %v5095
    %5385 = vst.msk [vmem:[#allocation2 + $0x468] sm:$0xff] %vm5244, %v5097
    %5386 = vst [vmem:[#allocation2 + $0x470] sm:$0xff] %v5099
    %5387 = vst.msk [vmem:[#allocation2 + $0x478] sm:$0xff] %vm5244, %v5101
    %5388 = vst [vmem:[#allocation2 + $0x480] sm:$0xff] %v5105
    %5389 = vst.msk [vmem:[#allocation2 + $0x488] sm:$0xff] %vm5244, %v5107
    %5390 = vst [vmem:[#allocation2 + $0x490] sm:$0xff] %v5109
    %5391 = vst.msk [vmem:[#allocation2 + $0x498] sm:$0xff] %vm5244, %v5111
    %5392 = vst [vmem:[#allocation2 + $0x4a0] sm:$0xff] %v5115
    %5393 = vst.msk [vmem:[#allocation2 + $0x4a8] sm:$0xff] %vm5244, %v5117
    %5394 = vst [vmem:[#allocation2 + $0x4b0] sm:$0xff] %v5119
    %5395 = vst.msk [vmem:[#allocation2 + $0x4b8] sm:$0xff] %vm5244, %v5121
    %5396 = vst [vmem:[#allocation2 + $0x4c0] sm:$0xff] %v5125
    %5397 = vst.msk [vmem:[#allocation2 + $0x4c8] sm:$0xff] %vm5244, %v5127
    %5398 = vst [vmem:[#allocation2 + $0x4d0] sm:$0xff] %v5129
    %5399 = vst.msk [vmem:[#allocation2 + $0x4d8] sm:$0xff] %vm5244, %v5131
    %5400 = vst [vmem:[#allocation2 + $0x4e0] sm:$0xff] %v5135
    %5401 = vst.msk [vmem:[#allocation2 + $0x4e8] sm:$0xff] %vm5244, %v5137
    %5402 = vst [vmem:[#allocation2 + $0x4f0] sm:$0xff] %v5139
    %5403 = vst.msk [vmem:[#allocation2 + $0x4f8] sm:$0xff] %vm5244, %v5141
    %5404 = vst [vmem:[#allocation2 + $0x500] sm:$0xff] %v5145
    %5405 = vst.msk [vmem:[#allocation2 + $0x508] sm:$0xff] %vm5244, %v5147
    %5406 = vst [vmem:[#allocation2 + $0x510] sm:$0xff] %v5149
    %5407 = vst.msk [vmem:[#allocation2 + $0x518] sm:$0xff] %vm5244, %v5151
    %5408 = vst [vmem:[#allocation2 + $0x520] sm:$0xff] %v5155
    %5409 = vst.msk [vmem:[#allocation2 + $0x528] sm:$0xff] %vm5244, %v5157
    %5410 = vst [vmem:[#allocation2 + $0x530] sm:$0xff] %v5159
    %5411 = vst.msk [vmem:[#allocation2 + $0x538] sm:$0xff] %vm5244, %v5161
    %5412 = vst [vmem:[#allocation2 + $0x540] sm:$0xff] %v5165
    %5413 = vst.msk [vmem:[#allocation2 + $0x548] sm:$0xff] %vm5244, %v5167
    %5414 = vst [vmem:[#allocation2 + $0x550] sm:$0xff] %v5169
    %5415 = vst.msk [vmem:[#allocation2 + $0x558] sm:$0xff] %vm5244, %v5171
    %5416 = vst [vmem:[#allocation2 + $0x560] sm:$0xff] %v5175
    %5417 = vst.msk [vmem:[#allocation2 + $0x568] sm:$0xff] %vm5244, %v5177
    %5418 = vst [vmem:[#allocation2 + $0x570] sm:$0xff] %v5179
    %5419 = vst.msk [vmem:[#allocation2 + $0x578] sm:$0xff] %vm5244, %v5181
    %5420 = vst [vmem:[#allocation2 + $0x580] sm:$0xff] %v5185
    %5421 = vst.msk [vmem:[#allocation2 + $0x588] sm:$0xff] %vm5244, %v5187
    %5422 = vst [vmem:[#allocation2 + $0x590] sm:$0xff] %v5189
    %5423 = vst.msk [vmem:[#allocation2 + $0x598] sm:$0xff] %vm5244, %v5191
    %5424 = vst [vmem:[#allocation2 + $0x5a0] sm:$0xff] %v5195
    %5425 = vst.msk [vmem:[#allocation2 + $0x5a8] sm:$0xff] %vm5244, %v5197
    %5426 = vst [vmem:[#allocation2 + $0x5b0] sm:$0xff] %v5199
    %5427 = vst.msk [vmem:[#allocation2 + $0x5b8] sm:$0xff] %vm5244, %v5201
    %5428 = vst [vmem:[#allocation2 + $0x5c0] sm:$0xff] %v5205
    %5429 = vst.msk [vmem:[#allocation2 + $0x5c8] sm:$0xff] %vm5244, %v5207
    %5430 = vst [vmem:[#allocation2 + $0x5d0] sm:$0xff] %v5209
    %5431 = vst.msk [vmem:[#allocation2 + $0x5d8] sm:$0xff] %vm5244, %v5211
    %5432 = vst [vmem:[#allocation2 + $0x5e0] sm:$0xff] %v5215
    %5433 = vst.msk [vmem:[#allocation2 + $0x5e8] sm:$0xff] %vm5244, %v5217
    %5434 = vst [vmem:[#allocation2 + $0x5f0] sm:$0xff] %v5219
    %5435 = vst.msk [vmem:[#allocation2 + $0x5f8] sm:$0xff] %vm5244, %v5221
    %5436 = vst [vmem:[#allocation2 + $0x600] sm:$0xff] %v5225
    %5437 = vst.msk [vmem:[#allocation2 + $0x608] sm:$0xff] %vm5244, %v5227
    %5438 = vst [vmem:[#allocation2 + $0x610] sm:$0xff] %v5229
    %5439 = vst.msk [vmem:[#allocation2 + $0x618] sm:$0xff] %vm5244, %v5231
    %5440 = vst [vmem:[#allocation2 + $0x620] sm:$0xff] %v5235
    %5441 = vst.msk [vmem:[#allocation2 + $0x628] sm:$0xff] %vm5244, %v5237
    %5442 = vst [vmem:[#allocation2 + $0x630] sm:$0xff] %v5239
    %5443 = vst.msk [vmem:[#allocation2 + $0x638] sm:$0xff] %vm5244, %v5241
    %5444 = vst [vmem:[#allocation2 + $0x640] sm:$0xff] 0.0
    %5445 = vst.msk [vmem:[#allocation2 + $0x648] sm:$0xff] %vm5244, 0.0
    %5446 = vst [vmem:[#allocation2 + $0x650] sm:$0xff] 0.0
    %5447 = vst.msk [vmem:[#allocation2 + $0x658] sm:$0xff] %vm5244, 0.0
    %5448 = vst [vmem:[#allocation2 + $0x660] sm:$0xff] 0.0
    %5449 = vst.msk [vmem:[#allocation2 + $0x668] sm:$0xff] %vm5244, 0.0
    %5450 = vst [vmem:[#allocation2 + $0x670] sm:$0xff] 0.0
    %5451 = vst.msk [vmem:[#allocation2 + $0x678] sm:$0xff] %vm5244, 0.0
    %v5452 = vld [vmem:[#allocation2] sm:$0xff]
    %v5453 = vld [vmem:[#allocation2 + $0x10] sm:$0xff]
    %v5454 = vld [vmem:[#allocation2 + $0x20] sm:$0xff]
    %v5455 = vld [vmem:[#allocation2 + $0x30] sm:$0xff]
    %v5456 = vld [vmem:[#allocation2 + $0x40] sm:$0xff]
    %v5457 = vld [vmem:[#allocation2 + $0x50] sm:$0xff]
    %v5458 = vld [vmem:[#allocation2 + $0x60] sm:$0xff]
    %v5459 = vld [vmem:[#allocation2 + $0x70] sm:$0xff]
    %v5460 = vld [vmem:[#allocation2 + $0x80] sm:$0xff]
    %v5461 = vld [vmem:[#allocation2 + $0x90] sm:$0xff]
    %v5462 = vld [vmem:[#allocation2 + $0xa0] sm:$0xff]
    %v5463 = vld [vmem:[#allocation2 + $0xb0] sm:$0xff]
    %v5464 = vld [vmem:[#allocation2 + $0xc0] sm:$0xff]
    %v5465 = vld [vmem:[#allocation2 + $0xd0] sm:$0xff]
    %v5466 = vld [vmem:[#allocation2 + $0xe0] sm:$0xff]
    %v5467 = vld [vmem:[#allocation2 + $0xf0] sm:$0xff]
    %v5468 = vld [vmem:[#allocation2 + $0x100] sm:$0xff]
    %v5469 = vld [vmem:[#allocation2 + $0x110] sm:$0xff]
    %v5470 = vld [vmem:[#allocation2 + $0x120] sm:$0xff]
    %v5471 = vld [vmem:[#allocation2 + $0x130] sm:$0xff]
    %v5472 = vld [vmem:[#allocation2 + $0x140] sm:$0xff]
    %v5473 = vld [vmem:[#allocation2 + $0x150] sm:$0xff]
    %v5474 = vld [vmem:[#allocation2 + $0x160] sm:$0xff]
    %v5475 = vld [vmem:[#allocation2 + $0x170] sm:$0xff]
    %v5476 = vld [vmem:[#allocation2 + $0x180] sm:$0xff]
    %v5477 = vld [vmem:[#allocation2 + $0x190] sm:$0xff]
    %v5478 = vld [vmem:[#allocation2 + $0x1a0] sm:$0xff]
    %v5479 = vld [vmem:[#allocation2 + $0x1b0] sm:$0xff]
    %v5480 = vld [vmem:[#allocation2 + $0x1c0] sm:$0xff]
    %v5481 = vld [vmem:[#allocation2 + $0x1d0] sm:$0xff]
    %v5482 = vld [vmem:[#allocation2 + $0x1e0] sm:$0xff]
    %v5483 = vld [vmem:[#allocation2 + $0x1f0] sm:$0xff]
    %v5484 = vld [vmem:[#allocation2 + $0x200] sm:$0xff]
    %v5485 = vld [vmem:[#allocation2 + $0x210] sm:$0xff]
    %v5486 = vld [vmem:[#allocation2 + $0x220] sm:$0xff]
    %v5487 = vld [vmem:[#allocation2 + $0x230] sm:$0xff]
    %v5488 = vld [vmem:[#allocation2 + $0x240] sm:$0xff]
    %v5489 = vld [vmem:[#allocation2 + $0x250] sm:$0xff]
    %v5490 = vld [vmem:[#allocation2 + $0x260] sm:$0xff]
    %v5491 = vld [vmem:[#allocation2 + $0x270] sm:$0xff]
    %v5492 = vld [vmem:[#allocation2 + $0x280] sm:$0xff]
    %v5493 = vld [vmem:[#allocation2 + $0x290] sm:$0xff]
    %v5494 = vld [vmem:[#allocation2 + $0x2a0] sm:$0xff]
    %v5495 = vld [vmem:[#allocation2 + $0x2b0] sm:$0xff]
    %v5496 = vld [vmem:[#allocation2 + $0x2c0] sm:$0xff]
    %v5497 = vld [vmem:[#allocation2 + $0x2d0] sm:$0xff]
    %v5498 = vld [vmem:[#allocation2 + $0x2e0] sm:$0xff]
    %v5499 = vld [vmem:[#allocation2 + $0x2f0] sm:$0xff]
    %v5500 = vld [vmem:[#allocation2 + $0x300] sm:$0xff]
    %v5501 = vld [vmem:[#allocation2 + $0x310] sm:$0xff]
    %v5502 = vld [vmem:[#allocation2 + $0x320] sm:$0xff]
    %v5503 = vld [vmem:[#allocation2 + $0x330] sm:$0xff]
    %v5504 = vld [vmem:[#allocation2 + $0x340] sm:$0xff]
    %v5505 = vld [vmem:[#allocation2 + $0x350] sm:$0xff]
    %v5506 = vld [vmem:[#allocation2 + $0x360] sm:$0xff]
    %v5507 = vld [vmem:[#allocation2 + $0x370] sm:$0xff]
    %v5508 = vld [vmem:[#allocation2 + $0x380] sm:$0xff]
    %v5509 = vld [vmem:[#allocation2 + $0x390] sm:$0xff]
    %v5510 = vld [vmem:[#allocation2 + $0x3a0] sm:$0xff]
    %v5511 = vld [vmem:[#allocation2 + $0x3b0] sm:$0xff]
    %v5512 = vld [vmem:[#allocation2 + $0x3c0] sm:$0xff]
    %v5513 = vld [vmem:[#allocation2 + $0x3d0] sm:$0xff]
    %v5514 = vld [vmem:[#allocation2 + $0x3e0] sm:$0xff]
    %v5515 = vld [vmem:[#allocation2 + $0x3f0] sm:$0xff]
    %v5516 = vld [vmem:[#allocation2 + $0x400] sm:$0xff]
    %v5517 = vld [vmem:[#allocation2 + $0x410] sm:$0xff]
    %v5518 = vld [vmem:[#allocation2 + $0x420] sm:$0xff]
    %v5519 = vld [vmem:[#allocation2 + $0x430] sm:$0xff]
    %v5520 = vld [vmem:[#allocation2 + $0x440] sm:$0xff]
    %v5521 = vld [vmem:[#allocation2 + $0x450] sm:$0xff]
    %v5522 = vld [vmem:[#allocation2 + $0x460] sm:$0xff]
    %v5523 = vld [vmem:[#allocation2 + $0x470] sm:$0xff]
    %v5524 = vld [vmem:[#allocation2 + $0x480] sm:$0xff]
    %v5525 = vld [vmem:[#allocation2 + $0x490] sm:$0xff]
    %v5526 = vld [vmem:[#allocation2 + $0x4a0] sm:$0xff]
    %v5527 = vld [vmem:[#allocation2 + $0x4b0] sm:$0xff]
    %v5528 = vld [vmem:[#allocation2 + $0x4c0] sm:$0xff]
    %v5529 = vld [vmem:[#allocation2 + $0x4d0] sm:$0xff]
    %v5530 = vld [vmem:[#allocation2 + $0x4e0] sm:$0xff]
    %v5531 = vld [vmem:[#allocation2 + $0x4f0] sm:$0xff]
    %v5532 = vld [vmem:[#allocation2 + $0x500] sm:$0xff]
    %v5533 = vld [vmem:[#allocation2 + $0x510] sm:$0xff]
    %v5534 = vld [vmem:[#allocation2 + $0x520] sm:$0xff]
    %v5535 = vld [vmem:[#allocation2 + $0x530] sm:$0xff]
    %v5536 = vld [vmem:[#allocation2 + $0x540] sm:$0xff]
    %v5537 = vld [vmem:[#allocation2 + $0x550] sm:$0xff]
    %v5538 = vld [vmem:[#allocation2 + $0x560] sm:$0xff]
    %v5539 = vld [vmem:[#allocation2 + $0x570] sm:$0xff]
    %v5540 = vld [vmem:[#allocation2 + $0x580] sm:$0xff]
    %v5541 = vld [vmem:[#allocation2 + $0x590] sm:$0xff]
    %v5542 = vld [vmem:[#allocation2 + $0x5a0] sm:$0xff]
    %v5543 = vld [vmem:[#allocation2 + $0x5b0] sm:$0xff]
    %v5544 = vld [vmem:[#allocation2 + $0x5c0] sm:$0xff]
    %v5545 = vld [vmem:[#allocation2 + $0x5d0] sm:$0xff]
    %v5546 = vld [vmem:[#allocation2 + $0x5e0] sm:$0xff]
    %v5547 = vld [vmem:[#allocation2 + $0x5f0] sm:$0xff]
    %v5548 = vld [vmem:[#allocation2 + $0x600] sm:$0xff]
    %v5549 = vld [vmem:[#allocation2 + $0x610] sm:$0xff]
    %5646 = vrot.lane.b32.xlu0 %v5454, 96
    %v5647 = vpop.permute.xlu0 %5646
    %5648 = vrot.lane.b32.xlu0 %v5455, 96
    %v5649 = vpop.permute.xlu0 %5648
    %5650 = vrot.lane.b32.xlu0 %v5456, 96
    %v5651 = vpop.permute.xlu0 %5650
    %5652 = vrot.lane.b32.xlu0 %v5457, 96
    %v5653 = vpop.permute.xlu0 %5652
    %5654 = vrot.lane.b32.xlu0 %v5458, 96
    %v5655 = vpop.permute.xlu0 %5654
    %5656 = vrot.lane.b32.xlu0 %v5459, 96
    %v5657 = vpop.permute.xlu0 %5656
    %5658 = vrot.lane.b32.xlu0 %v5460, 96
    %v5659 = vpop.permute.xlu0 %5658
    %5660 = vrot.lane.b32.xlu0 %v5461, 96
    %v5661 = vpop.permute.xlu0 %5660
    %5662 = vrot.lane.b32.xlu0 %v5462, 96
    %v5663 = vpop.permute.xlu0 %5662
    %5664 = vrot.lane.b32.xlu0 %v5463, 96
    %v5665 = vpop.permute.xlu0 %5664
    %5666 = vrot.lane.b32.xlu0 %v5464, 96
    %v5667 = vpop.permute.xlu0 %5666
    %5668 = vrot.lane.b32.xlu0 %v5465, 96
    %v5669 = vpop.permute.xlu0 %5668
    %5670 = vrot.lane.b32.xlu0 %v5466, 96
    %v5671 = vpop.permute.xlu0 %5670
    %5672 = vrot.lane.b32.xlu0 %v5467, 96
    %v5673 = vpop.permute.xlu0 %5672
    %5674 = vrot.lane.b32.xlu0 %v5468, 96
    %v5675 = vpop.permute.xlu0 %5674
    %5676 = vrot.lane.b32.xlu0 %v5469, 96
    %v5677 = vpop.permute.xlu0 %5676
    %5678 = vrot.lane.b32.xlu0 %v5470, 96
    %v5679 = vpop.permute.xlu0 %5678
    %5680 = vrot.lane.b32.xlu0 %v5471, 96
    %v5681 = vpop.permute.xlu0 %5680
    %5682 = vrot.lane.b32.xlu0 %v5472, 96
    %v5683 = vpop.permute.xlu0 %5682
    %5684 = vrot.lane.b32.xlu0 %v5473, 96
    %v5685 = vpop.permute.xlu0 %5684
    %5686 = vrot.lane.b32.xlu0 %v5474, 96
    %v5687 = vpop.permute.xlu0 %5686
    %5688 = vrot.lane.b32.xlu0 %v5475, 96
    %v5689 = vpop.permute.xlu0 %5688
    %5690 = vrot.lane.b32.xlu0 %v5476, 96
    %v5691 = vpop.permute.xlu0 %5690
    %5692 = vrot.lane.b32.xlu0 %v5477, 96
    %v5693 = vpop.permute.xlu0 %5692
    %5694 = vrot.lane.b32.xlu0 %v5478, 96
    %v5695 = vpop.permute.xlu0 %5694
    %5696 = vrot.lane.b32.xlu0 %v5479, 96
    %v5697 = vpop.permute.xlu0 %5696
    %5698 = vrot.lane.b32.xlu0 %v5480, 96
    %v5699 = vpop.permute.xlu0 %5698
    %5700 = vrot.lane.b32.xlu0 %v5481, 96
    %v5701 = vpop.permute.xlu0 %5700
    %5702 = vrot.lane.b32.xlu0 %v5482, 96
    %v5703 = vpop.permute.xlu0 %5702
    %5704 = vrot.lane.b32.xlu0 %v5483, 96
    %v5705 = vpop.permute.xlu0 %5704
    %5706 = vrot.lane.b32.xlu0 %v5484, 96
    %v5707 = vpop.permute.xlu0 %5706
    %5708 = vrot.lane.b32.xlu0 %v5485, 96
    %v5709 = vpop.permute.xlu0 %5708
    %5710 = vrot.lane.b32.xlu0 %v5486, 96
    %v5711 = vpop.permute.xlu0 %5710
    %5712 = vrot.lane.b32.xlu0 %v5487, 96
    %v5713 = vpop.permute.xlu0 %5712
    %5714 = vrot.lane.b32.xlu0 %v5488, 96
    %v5715 = vpop.permute.xlu0 %5714
    %5716 = vrot.lane.b32.xlu0 %v5489, 96
    %v5717 = vpop.permute.xlu0 %5716
    %5718 = vrot.lane.b32.xlu0 %v5490, 96
    %v5719 = vpop.permute.xlu0 %5718
    %5720 = vrot.lane.b32.xlu0 %v5491, 96
    %v5721 = vpop.permute.xlu0 %5720
    %5722 = vrot.lane.b32.xlu0 %v5492, 96
    %v5723 = vpop.permute.xlu0 %5722
    %5724 = vrot.lane.b32.xlu0 %v5493, 96
    %v5725 = vpop.permute.xlu0 %5724
    %5726 = vrot.lane.b32.xlu0 %v5494, 96
    %v5727 = vpop.permute.xlu0 %5726
    %5728 = vrot.lane.b32.xlu0 %v5495, 96
    %v5729 = vpop.permute.xlu0 %5728
    %5730 = vrot.lane.b32.xlu0 %v5496, 96
    %v5731 = vpop.permute.xlu0 %5730
    %5732 = vrot.lane.b32.xlu0 %v5497, 96
    %v5733 = vpop.permute.xlu0 %5732
    %5734 = vrot.lane.b32.xlu0 %v5498, 96
    %v5735 = vpop.permute.xlu0 %5734
    %5736 = vrot.lane.b32.xlu0 %v5499, 96
    %v5737 = vpop.permute.xlu0 %5736
    %5738 = vrot.lane.b32.xlu0 %v5500, 96
    %v5739 = vpop.permute.xlu0 %5738
    %5740 = vrot.lane.b32.xlu0 %v5501, 96
    %v5741 = vpop.permute.xlu0 %5740
    %5742 = vrot.lane.b32.xlu0 %v5502, 96
    %v5743 = vpop.permute.xlu0 %5742
    %5744 = vrot.lane.b32.xlu0 %v5503, 96
    %v5745 = vpop.permute.xlu0 %5744
    %5746 = vrot.lane.b32.xlu0 %v5504, 96
    %v5747 = vpop.permute.xlu0 %5746
    %5748 = vrot.lane.b32.xlu0 %v5505, 96
    %v5749 = vpop.permute.xlu0 %5748
    %5750 = vrot.lane.b32.xlu0 %v5506, 96
    %v5751 = vpop.permute.xlu0 %5750
    %5752 = vrot.lane.b32.xlu0 %v5507, 96
    %v5753 = vpop.permute.xlu0 %5752
    %5754 = vrot.lane.b32.xlu0 %v5508, 96
    %v5755 = vpop.permute.xlu0 %5754
    %5756 = vrot.lane.b32.xlu0 %v5509, 96
    %v5757 = vpop.permute.xlu0 %5756
    %5758 = vrot.lane.b32.xlu0 %v5510, 96
    %v5759 = vpop.permute.xlu0 %5758
    %5760 = vrot.lane.b32.xlu0 %v5511, 96
    %v5761 = vpop.permute.xlu0 %5760
    %5762 = vrot.lane.b32.xlu0 %v5512, 96
    %v5763 = vpop.permute.xlu0 %5762
    %5764 = vrot.lane.b32.xlu0 %v5513, 96
    %v5765 = vpop.permute.xlu0 %5764
    %5766 = vrot.lane.b32.xlu0 %v5514, 96
    %v5767 = vpop.permute.xlu0 %5766
    %5768 = vrot.lane.b32.xlu0 %v5515, 96
    %v5769 = vpop.permute.xlu0 %5768
    %5770 = vrot.lane.b32.xlu0 %v5516, 96
    %v5771 = vpop.permute.xlu0 %5770
    %5772 = vrot.lane.b32.xlu0 %v5517, 96
    %v5773 = vpop.permute.xlu0 %5772
    %5774 = vrot.lane.b32.xlu0 %v5518, 96
    %v5775 = vpop.permute.xlu0 %5774
    %5776 = vrot.lane.b32.xlu0 %v5519, 96
    %v5777 = vpop.permute.xlu0 %5776
    %5778 = vrot.lane.b32.xlu0 %v5520, 96
    %v5779 = vpop.permute.xlu0 %5778
    %5780 = vrot.lane.b32.xlu0 %v5521, 96
    %v5781 = vpop.permute.xlu0 %5780
    %5782 = vrot.lane.b32.xlu0 %v5522, 96
    %v5783 = vpop.permute.xlu0 %5782
    %5784 = vrot.lane.b32.xlu0 %v5523, 96
    %v5785 = vpop.permute.xlu0 %5784
    %5786 = vrot.lane.b32.xlu0 %v5524, 96
    %v5787 = vpop.permute.xlu0 %5786
    %5788 = vrot.lane.b32.xlu0 %v5525, 96
    %v5789 = vpop.permute.xlu0 %5788
    %5790 = vrot.lane.b32.xlu0 %v5526, 96
    %v5791 = vpop.permute.xlu0 %5790
    %5792 = vrot.lane.b32.xlu0 %v5527, 96
    %v5793 = vpop.permute.xlu0 %5792
    %5794 = vrot.lane.b32.xlu0 %v5528, 96
    %v5795 = vpop.permute.xlu0 %5794
    %5796 = vrot.lane.b32.xlu0 %v5529, 96
    %v5797 = vpop.permute.xlu0 %5796
    %5798 = vrot.lane.b32.xlu0 %v5530, 96
    %v5799 = vpop.permute.xlu0 %5798
    %5800 = vrot.lane.b32.xlu0 %v5531, 96
    %v5801 = vpop.permute.xlu0 %5800
    %5802 = vrot.lane.b32.xlu0 %v5532, 96
    %v5803 = vpop.permute.xlu0 %5802
    %5804 = vrot.lane.b32.xlu0 %v5533, 96
    %v5805 = vpop.permute.xlu0 %5804
    %5806 = vrot.lane.b32.xlu0 %v5534, 96
    %v5807 = vpop.permute.xlu0 %5806
    %5808 = vrot.lane.b32.xlu0 %v5535, 96
    %v5809 = vpop.permute.xlu0 %5808
    %5810 = vrot.lane.b32.xlu0 %v5536, 96
    %v5811 = vpop.permute.xlu0 %5810
    %5812 = vrot.lane.b32.xlu0 %v5537, 96
    %v5813 = vpop.permute.xlu0 %5812
    %5814 = vrot.lane.b32.xlu0 %v5538, 96
    %v5815 = vpop.permute.xlu0 %5814
    %5816 = vrot.lane.b32.xlu0 %v5539, 96
    %v5817 = vpop.permute.xlu0 %5816
    %5818 = vrot.lane.b32.xlu0 %v5540, 96
    %v5819 = vpop.permute.xlu0 %5818
    %5820 = vrot.lane.b32.xlu0 %v5541, 96
    %v5821 = vpop.permute.xlu0 %5820
    %5822 = vrot.lane.b32.xlu0 %v5542, 96
    %v5823 = vpop.permute.xlu0 %5822
    %5824 = vrot.lane.b32.xlu0 %v5543, 96
    %v5825 = vpop.permute.xlu0 %5824
    %5826 = vrot.lane.b32.xlu0 %v5544, 96
    %v5827 = vpop.permute.xlu0 %5826
    %5828 = vrot.lane.b32.xlu0 %v5545, 96
    %v5829 = vpop.permute.xlu0 %5828
    %5830 = vrot.lane.b32.xlu0 %v5546, 96
    %v5831 = vpop.permute.xlu0 %5830
    %5832 = vrot.lane.b32.xlu0 %v5547, 96
    %v5833 = vpop.permute.xlu0 %5832
    %5834 = vrot.lane.b32.xlu0 %v5548, 96
    %v5835 = vpop.permute.xlu0 %5834
    %5836 = vrot.lane.b32.xlu0 %v5549, 96
    %v5837 = vpop.permute.xlu0 %5836
    %v5934 = vadd.f32 %v5452, %v5647
    %v5935 = vadd.f32 %v5453, %v5649
    %v5936 = vadd.f32 %v5454, %v5651
    %v5937 = vadd.f32 %v5455, %v5653
    %v5938 = vadd.f32 %v5456, %v5655
    %v5939 = vadd.f32 %v5457, %v5657
    %v5940 = vadd.f32 %v5458, %v5659
    %v5941 = vadd.f32 %v5459, %v5661
    %v5942 = vadd.f32 %v5460, %v5663
    %v5943 = vadd.f32 %v5461, %v5665
    %v5944 = vadd.f32 %v5462, %v5667
    %v5945 = vadd.f32 %v5463, %v5669
    %v5946 = vadd.f32 %v5464, %v5671
    %v5947 = vadd.f32 %v5465, %v5673
    %v5948 = vadd.f32 %v5466, %v5675
    %v5949 = vadd.f32 %v5467, %v5677
    %v5950 = vadd.f32 %v5468, %v5679
    %v5951 = vadd.f32 %v5469, %v5681
    %v5952 = vadd.f32 %v5470, %v5683
    %v5953 = vadd.f32 %v5471, %v5685
    %v5954 = vadd.f32 %v5472, %v5687
    %v5955 = vadd.f32 %v5473, %v5689
    %v5956 = vadd.f32 %v5474, %v5691
    %v5957 = vadd.f32 %v5475, %v5693
    %v5958 = vadd.f32 %v5476, %v5695
    %v5959 = vadd.f32 %v5477, %v5697
    %v5960 = vadd.f32 %v5478, %v5699
    %v5961 = vadd.f32 %v5479, %v5701
    %v5962 = vadd.f32 %v5480, %v5703
    %v5963 = vadd.f32 %v5481, %v5705
    %v5964 = vadd.f32 %v5482, %v5707
    %v5965 = vadd.f32 %v5483, %v5709
    %v5966 = vadd.f32 %v5484, %v5711
    %v5967 = vadd.f32 %v5485, %v5713
    %v5968 = vadd.f32 %v5486, %v5715
    %v5969 = vadd.f32 %v5487, %v5717
    %v5970 = vadd.f32 %v5488, %v5719
    %v5971 = vadd.f32 %v5489, %v5721
    %v5972 = vadd.f32 %v5490, %v5723
    %v5973 = vadd.f32 %v5491, %v5725
    %v5974 = vadd.f32 %v5492, %v5727
    %v5975 = vadd.f32 %v5493, %v5729
    %v5976 = vadd.f32 %v5494, %v5731
    %v5977 = vadd.f32 %v5495, %v5733
    %v5978 = vadd.f32 %v5496, %v5735
    %v5979 = vadd.f32 %v5497, %v5737
    %v5980 = vadd.f32 %v5498, %v5739
    %v5981 = vadd.f32 %v5499, %v5741
    %v5982 = vadd.f32 %v5500, %v5743
    %v5983 = vadd.f32 %v5501, %v5745
    %v5984 = vadd.f32 %v5502, %v5747
    %v5985 = vadd.f32 %v5503, %v5749
    %v5986 = vadd.f32 %v5504, %v5751
    %v5987 = vadd.f32 %v5505, %v5753
    %v5988 = vadd.f32 %v5506, %v5755
    %v5989 = vadd.f32 %v5507, %v5757
    %v5990 = vadd.f32 %v5508, %v5759
    %v5991 = vadd.f32 %v5509, %v5761
    %v5992 = vadd.f32 %v5510, %v5763
    %v5993 = vadd.f32 %v5511, %v5765
    %v5994 = vadd.f32 %v5512, %v5767
    %v5995 = vadd.f32 %v5513, %v5769
    %v5996 = vadd.f32 %v5514, %v5771
    %v5997 = vadd.f32 %v5515, %v5773
    %v5998 = vadd.f32 %v5516, %v5775
    %v5999 = vadd.f32 %v5517, %v5777
    %v6000 = vadd.f32 %v5518, %v5779
    %v6001 = vadd.f32 %v5519, %v5781
    %v6002 = vadd.f32 %v5520, %v5783
    %v6003 = vadd.f32 %v5521, %v5785
    %v6004 = vadd.f32 %v5522, %v5787
    %v6005 = vadd.f32 %v5523, %v5789
    %v6006 = vadd.f32 %v5524, %v5791
    %v6007 = vadd.f32 %v5525, %v5793
    %v6008 = vadd.f32 %v5526, %v5795
    %v6009 = vadd.f32 %v5527, %v5797
    %v6010 = vadd.f32 %v5528, %v5799
    %v6011 = vadd.f32 %v5529, %v5801
    %v6012 = vadd.f32 %v5530, %v5803
    %v6013 = vadd.f32 %v5531, %v5805
    %v6014 = vadd.f32 %v5532, %v5807
    %v6015 = vadd.f32 %v5533, %v5809
    %v6016 = vadd.f32 %v5534, %v5811
    %v6017 = vadd.f32 %v5535, %v5813
    %v6018 = vadd.f32 %v5536, %v5815
    %v6019 = vadd.f32 %v5537, %v5817
    %v6020 = vadd.f32 %v5538, %v5819
    %v6021 = vadd.f32 %v5539, %v5821
    %v6022 = vadd.f32 %v5540, %v5823
    %v6023 = vadd.f32 %v5541, %v5825
    %v6024 = vadd.f32 %v5542, %v5827
    %v6025 = vadd.f32 %v5543, %v5829
    %v6026 = vadd.f32 %v5544, %v5831
    %v6027 = vadd.f32 %v5545, %v5833
    %v6028 = vadd.f32 %v5546, %v5835
    %v6029 = vadd.f32 %v5547, %v5837
    %v6030 = vld [vmem:[#allocation2 + $0x620] sm:$0xff]
    %v6031 = vld [vmem:[#allocation2 + $0x630] sm:$0xff]
    %6034 = vrot.lane.b32.xlu0 %v5456, 64
    %v6035 = vpop.permute.xlu0 %6034
    %6036 = vrot.lane.b32.xlu0 %v5457, 64
    %v6037 = vpop.permute.xlu0 %6036
    %6038 = vrot.lane.b32.xlu0 %v5458, 64
    %v6039 = vpop.permute.xlu0 %6038
    %6040 = vrot.lane.b32.xlu0 %v5459, 64
    %v6041 = vpop.permute.xlu0 %6040
    %6042 = vrot.lane.b32.xlu0 %v5460, 64
    %v6043 = vpop.permute.xlu0 %6042
    %6044 = vrot.lane.b32.xlu0 %v5461, 64
    %v6045 = vpop.permute.xlu0 %6044
    %6046 = vrot.lane.b32.xlu0 %v5462, 64
    %v6047 = vpop.permute.xlu0 %6046
    %6048 = vrot.lane.b32.xlu0 %v5463, 64
    %v6049 = vpop.permute.xlu0 %6048
    %6050 = vrot.lane.b32.xlu0 %v5464, 64
    %v6051 = vpop.permute.xlu0 %6050
    %6052 = vrot.lane.b32.xlu0 %v5465, 64
    %v6053 = vpop.permute.xlu0 %6052
    %6054 = vrot.lane.b32.xlu0 %v5466, 64
    %v6055 = vpop.permute.xlu0 %6054
    %6056 = vrot.lane.b32.xlu0 %v5467, 64
    %v6057 = vpop.permute.xlu0 %6056
    %6058 = vrot.lane.b32.xlu0 %v5468, 64
    %v6059 = vpop.permute.xlu0 %6058
    %6060 = vrot.lane.b32.xlu0 %v5469, 64
    %v6061 = vpop.permute.xlu0 %6060
    %6062 = vrot.lane.b32.xlu0 %v5470, 64
    %v6063 = vpop.permute.xlu0 %6062
    %6064 = vrot.lane.b32.xlu0 %v5471, 64
    %v6065 = vpop.permute.xlu0 %6064
    %6066 = vrot.lane.b32.xlu0 %v5472, 64
    %v6067 = vpop.permute.xlu0 %6066
    %6068 = vrot.lane.b32.xlu0 %v5473, 64
    %v6069 = vpop.permute.xlu0 %6068
    %6070 = vrot.lane.b32.xlu0 %v5474, 64
    %v6071 = vpop.permute.xlu0 %6070
    %6072 = vrot.lane.b32.xlu0 %v5475, 64
    %v6073 = vpop.permute.xlu0 %6072
    %6074 = vrot.lane.b32.xlu0 %v5476, 64
    %v6075 = vpop.permute.xlu0 %6074
    %6076 = vrot.lane.b32.xlu0 %v5477, 64
    %v6077 = vpop.permute.xlu0 %6076
    %6078 = vrot.lane.b32.xlu0 %v5478, 64
    %v6079 = vpop.permute.xlu0 %6078
    %6080 = vrot.lane.b32.xlu0 %v5479, 64
    %v6081 = vpop.permute.xlu0 %6080
    %6082 = vrot.lane.b32.xlu0 %v5480, 64
    %v6083 = vpop.permute.xlu0 %6082
    %6084 = vrot.lane.b32.xlu0 %v5481, 64
    %v6085 = vpop.permute.xlu0 %6084
    %6086 = vrot.lane.b32.xlu0 %v5482, 64
    %v6087 = vpop.permute.xlu0 %6086
    %6088 = vrot.lane.b32.xlu0 %v5483, 64
    %v6089 = vpop.permute.xlu0 %6088
    %6090 = vrot.lane.b32.xlu0 %v5484, 64
    %v6091 = vpop.permute.xlu0 %6090
    %6092 = vrot.lane.b32.xlu0 %v5485, 64
    %v6093 = vpop.permute.xlu0 %6092
    %6094 = vrot.lane.b32.xlu0 %v5486, 64
    %v6095 = vpop.permute.xlu0 %6094
    %6096 = vrot.lane.b32.xlu0 %v5487, 64
    %v6097 = vpop.permute.xlu0 %6096
    %6098 = vrot.lane.b32.xlu0 %v5488, 64
    %v6099 = vpop.permute.xlu0 %6098
    %6100 = vrot.lane.b32.xlu0 %v5489, 64
    %v6101 = vpop.permute.xlu0 %6100
    %6102 = vrot.lane.b32.xlu0 %v5490, 64
    %v6103 = vpop.permute.xlu0 %6102
    %6104 = vrot.lane.b32.xlu0 %v5491, 64
    %v6105 = vpop.permute.xlu0 %6104
    %6106 = vrot.lane.b32.xlu0 %v5492, 64
    %v6107 = vpop.permute.xlu0 %6106
    %6108 = vrot.lane.b32.xlu0 %v5493, 64
    %v6109 = vpop.permute.xlu0 %6108
    %6110 = vrot.lane.b32.xlu0 %v5494, 64
    %v6111 = vpop.permute.xlu0 %6110
    %6112 = vrot.lane.b32.xlu0 %v5495, 64
    %v6113 = vpop.permute.xlu0 %6112
    %6114 = vrot.lane.b32.xlu0 %v5496, 64
    %v6115 = vpop.permute.xlu0 %6114
    %6116 = vrot.lane.b32.xlu0 %v5497, 64
    %v6117 = vpop.permute.xlu0 %6116
    %6118 = vrot.lane.b32.xlu0 %v5498, 64
    %v6119 = vpop.permute.xlu0 %6118
    %6120 = vrot.lane.b32.xlu0 %v5499, 64
    %v6121 = vpop.permute.xlu0 %6120
    %6122 = vrot.lane.b32.xlu0 %v5500, 64
    %v6123 = vpop.permute.xlu0 %6122
    %6124 = vrot.lane.b32.xlu0 %v5501, 64
    %v6125 = vpop.permute.xlu0 %6124
    %6126 = vrot.lane.b32.xlu0 %v5502, 64
    %v6127 = vpop.permute.xlu0 %6126
    %6128 = vrot.lane.b32.xlu0 %v5503, 64
    %v6129 = vpop.permute.xlu0 %6128
    %6130 = vrot.lane.b32.xlu0 %v5504, 64
    %v6131 = vpop.permute.xlu0 %6130
    %6132 = vrot.lane.b32.xlu0 %v5505, 64
    %v6133 = vpop.permute.xlu0 %6132
    %6134 = vrot.lane.b32.xlu0 %v5506, 64
    %v6135 = vpop.permute.xlu0 %6134
    %6136 = vrot.lane.b32.xlu0 %v5507, 64
    %v6137 = vpop.permute.xlu0 %6136
    %6138 = vrot.lane.b32.xlu0 %v5508, 64
    %v6139 = vpop.permute.xlu0 %6138
    %6140 = vrot.lane.b32.xlu0 %v5509, 64
    %v6141 = vpop.permute.xlu0 %6140
    %6142 = vrot.lane.b32.xlu0 %v5510, 64
    %v6143 = vpop.permute.xlu0 %6142
    %6144 = vrot.lane.b32.xlu0 %v5511, 64
    %v6145 = vpop.permute.xlu0 %6144
    %6146 = vrot.lane.b32.xlu0 %v5512, 64
    %v6147 = vpop.permute.xlu0 %6146
    %6148 = vrot.lane.b32.xlu0 %v5513, 64
    %v6149 = vpop.permute.xlu0 %6148
    %6150 = vrot.lane.b32.xlu0 %v5514, 64
    %v6151 = vpop.permute.xlu0 %6150
    %6152 = vrot.lane.b32.xlu0 %v5515, 64
    %v6153 = vpop.permute.xlu0 %6152
    %6154 = vrot.lane.b32.xlu0 %v5516, 64
    %v6155 = vpop.permute.xlu0 %6154
    %6156 = vrot.lane.b32.xlu0 %v5517, 64
    %v6157 = vpop.permute.xlu0 %6156
    %6158 = vrot.lane.b32.xlu0 %v5518, 64
    %v6159 = vpop.permute.xlu0 %6158
    %6160 = vrot.lane.b32.xlu0 %v5519, 64
    %v6161 = vpop.permute.xlu0 %6160
    %6162 = vrot.lane.b32.xlu0 %v5520, 64
    %v6163 = vpop.permute.xlu0 %6162
    %6164 = vrot.lane.b32.xlu0 %v5521, 64
    %v6165 = vpop.permute.xlu0 %6164
    %6166 = vrot.lane.b32.xlu0 %v5522, 64
    %v6167 = vpop.permute.xlu0 %6166
    %6168 = vrot.lane.b32.xlu0 %v5523, 64
    %v6169 = vpop.permute.xlu0 %6168
    %6170 = vrot.lane.b32.xlu0 %v5524, 64
    %v6171 = vpop.permute.xlu0 %6170
    %6172 = vrot.lane.b32.xlu0 %v5525, 64
    %v6173 = vpop.permute.xlu0 %6172
    %6174 = vrot.lane.b32.xlu0 %v5526, 64
    %v6175 = vpop.permute.xlu0 %6174
    %6176 = vrot.lane.b32.xlu0 %v5527, 64
    %v6177 = vpop.permute.xlu0 %6176
    %6178 = vrot.lane.b32.xlu0 %v5528, 64
    %v6179 = vpop.permute.xlu0 %6178
    %6180 = vrot.lane.b32.xlu0 %v5529, 64
    %v6181 = vpop.permute.xlu0 %6180
    %6182 = vrot.lane.b32.xlu0 %v5530, 64
    %v6183 = vpop.permute.xlu0 %6182
    %6184 = vrot.lane.b32.xlu0 %v5531, 64
    %v6185 = vpop.permute.xlu0 %6184
    %6186 = vrot.lane.b32.xlu0 %v5532, 64
    %v6187 = vpop.permute.xlu0 %6186
    %6188 = vrot.lane.b32.xlu0 %v5533, 64
    %v6189 = vpop.permute.xlu0 %6188
    %6190 = vrot.lane.b32.xlu0 %v5534, 64
    %v6191 = vpop.permute.xlu0 %6190
    %6192 = vrot.lane.b32.xlu0 %v5535, 64
    %v6193 = vpop.permute.xlu0 %6192
    %6194 = vrot.lane.b32.xlu0 %v5536, 64
    %v6195 = vpop.permute.xlu0 %6194
    %6196 = vrot.lane.b32.xlu0 %v5537, 64
    %v6197 = vpop.permute.xlu0 %6196
    %6198 = vrot.lane.b32.xlu0 %v5538, 64
    %v6199 = vpop.permute.xlu0 %6198
    %6200 = vrot.lane.b32.xlu0 %v5539, 64
    %v6201 = vpop.permute.xlu0 %6200
    %6202 = vrot.lane.b32.xlu0 %v5540, 64
    %v6203 = vpop.permute.xlu0 %6202
    %6204 = vrot.lane.b32.xlu0 %v5541, 64
    %v6205 = vpop.permute.xlu0 %6204
    %6206 = vrot.lane.b32.xlu0 %v5542, 64
    %v6207 = vpop.permute.xlu0 %6206
    %6208 = vrot.lane.b32.xlu0 %v5543, 64
    %v6209 = vpop.permute.xlu0 %6208
    %6210 = vrot.lane.b32.xlu0 %v5544, 64
    %v6211 = vpop.permute.xlu0 %6210
    %6212 = vrot.lane.b32.xlu0 %v5545, 64
    %v6213 = vpop.permute.xlu0 %6212
    %6214 = vrot.lane.b32.xlu0 %v5546, 64
    %v6215 = vpop.permute.xlu0 %6214
    %6216 = vrot.lane.b32.xlu0 %v5547, 64
    %v6217 = vpop.permute.xlu0 %6216
    %6218 = vrot.lane.b32.xlu0 %v5548, 64
    %v6219 = vpop.permute.xlu0 %6218
    %6220 = vrot.lane.b32.xlu0 %v5549, 64
    %v6221 = vpop.permute.xlu0 %6220
    %6222 = vrot.lane.b32.xlu0 %v6030, 64
    %v6223 = vpop.permute.xlu0 %6222
    %6224 = vrot.lane.b32.xlu0 %v6031, 64
    %v6225 = vpop.permute.xlu0 %6224
    %v6322 = vadd.f32 %v5934, %v6035
    %v6323 = vadd.f32 %v5935, %v6037
    %v6324 = vadd.f32 %v5936, %v6039
    %v6325 = vadd.f32 %v5937, %v6041
    %v6326 = vadd.f32 %v5938, %v6043
    %v6327 = vadd.f32 %v5939, %v6045
    %v6328 = vadd.f32 %v5940, %v6047
    %v6329 = vadd.f32 %v5941, %v6049
    %v6330 = vadd.f32 %v5942, %v6051
    %v6331 = vadd.f32 %v5943, %v6053
    %v6332 = vadd.f32 %v5944, %v6055
    %v6333 = vadd.f32 %v5945, %v6057
    %v6334 = vadd.f32 %v5946, %v6059
    %v6335 = vadd.f32 %v5947, %v6061
    %v6336 = vadd.f32 %v5948, %v6063
    %v6337 = vadd.f32 %v5949, %v6065
    %v6338 = vadd.f32 %v5950, %v6067
    %v6339 = vadd.f32 %v5951, %v6069
    %v6340 = vadd.f32 %v5952, %v6071
    %v6341 = vadd.f32 %v5953, %v6073
    %v6342 = vadd.f32 %v5954, %v6075
    %v6343 = vadd.f32 %v5955, %v6077
    %v6344 = vadd.f32 %v5956, %v6079
    %v6345 = vadd.f32 %v5957, %v6081
    %v6346 = vadd.f32 %v5958, %v6083
    %v6347 = vadd.f32 %v5959, %v6085
    %v6348 = vadd.f32 %v5960, %v6087
    %v6349 = vadd.f32 %v5961, %v6089
    %v6350 = vadd.f32 %v5962, %v6091
    %v6351 = vadd.f32 %v5963, %v6093
    %v6352 = vadd.f32 %v5964, %v6095
    %v6353 = vadd.f32 %v5965, %v6097
    %v6354 = vadd.f32 %v5966, %v6099
    %v6355 = vadd.f32 %v5967, %v6101
    %v6356 = vadd.f32 %v5968, %v6103
    %v6357 = vadd.f32 %v5969, %v6105
    %v6358 = vadd.f32 %v5970, %v6107
    %v6359 = vadd.f32 %v5971, %v6109
    %v6360 = vadd.f32 %v5972, %v6111
    %v6361 = vadd.f32 %v5973, %v6113
    %v6362 = vadd.f32 %v5974, %v6115
    %v6363 = vadd.f32 %v5975, %v6117
    %v6364 = vadd.f32 %v5976, %v6119
    %v6365 = vadd.f32 %v5977, %v6121
    %v6366 = vadd.f32 %v5978, %v6123
    %v6367 = vadd.f32 %v5979, %v6125
    %v6368 = vadd.f32 %v5980, %v6127
    %v6369 = vadd.f32 %v5981, %v6129
    %v6370 = vadd.f32 %v5982, %v6131
    %v6371 = vadd.f32 %v5983, %v6133
    %v6372 = vadd.f32 %v5984, %v6135
    %v6373 = vadd.f32 %v5985, %v6137
    %v6374 = vadd.f32 %v5986, %v6139
    %v6375 = vadd.f32 %v5987, %v6141
    %v6376 = vadd.f32 %v5988, %v6143
    %v6377 = vadd.f32 %v5989, %v6145
    %v6378 = vadd.f32 %v5990, %v6147
    %v6379 = vadd.f32 %v5991, %v6149
    %v6380 = vadd.f32 %v5992, %v6151
    %v6381 = vadd.f32 %v5993, %v6153
    %v6382 = vadd.f32 %v5994, %v6155
    %v6383 = vadd.f32 %v5995, %v6157
    %v6384 = vadd.f32 %v5996, %v6159
    %v6385 = vadd.f32 %v5997, %v6161
    %v6386 = vadd.f32 %v5998, %v6163
    %v6387 = vadd.f32 %v5999, %v6165
    %v6388 = vadd.f32 %v6000, %v6167
    %v6389 = vadd.f32 %v6001, %v6169
    %v6390 = vadd.f32 %v6002, %v6171
    %v6391 = vadd.f32 %v6003, %v6173
    %v6392 = vadd.f32 %v6004, %v6175
    %v6393 = vadd.f32 %v6005, %v6177
    %v6394 = vadd.f32 %v6006, %v6179
    %v6395 = vadd.f32 %v6007, %v6181
    %v6396 = vadd.f32 %v6008, %v6183
    %v6397 = vadd.f32 %v6009, %v6185
    %v6398 = vadd.f32 %v6010, %v6187
    %v6399 = vadd.f32 %v6011, %v6189
    %v6400 = vadd.f32 %v6012, %v6191
    %v6401 = vadd.f32 %v6013, %v6193
    %v6402 = vadd.f32 %v6014, %v6195
    %v6403 = vadd.f32 %v6015, %v6197
    %v6404 = vadd.f32 %v6016, %v6199
    %v6405 = vadd.f32 %v6017, %v6201
    %v6406 = vadd.f32 %v6018, %v6203
    %v6407 = vadd.f32 %v6019, %v6205
    %v6408 = vadd.f32 %v6020, %v6207
    %v6409 = vadd.f32 %v6021, %v6209
    %v6410 = vadd.f32 %v6022, %v6211
    %v6411 = vadd.f32 %v6023, %v6213
    %v6412 = vadd.f32 %v6024, %v6215
    %v6413 = vadd.f32 %v6025, %v6217
    %v6414 = vadd.f32 %v6026, %v6219
    %v6415 = vadd.f32 %v6027, %v6221
    %v6416 = vadd.f32 %v6028, %v6223
    %v6417 = vadd.f32 %v6029, %v6225
    %v6418 = vld [vmem:[#allocation2 + $0x640] sm:$0xff]
    %v6419 = vld [vmem:[#allocation2 + $0x650] sm:$0xff]
    %6422 = vrot.lane.b32.xlu0 %v5458, 32
    %v6423 = vpop.permute.xlu0 %6422
    %6424 = vrot.lane.b32.xlu0 %v5459, 32
    %v6425 = vpop.permute.xlu0 %6424
    %6426 = vrot.lane.b32.xlu0 %v5460, 32
    %v6427 = vpop.permute.xlu0 %6426
    %6428 = vrot.lane.b32.xlu0 %v5461, 32
    %v6429 = vpop.permute.xlu0 %6428
    %6430 = vrot.lane.b32.xlu0 %v5462, 32
    %v6431 = vpop.permute.xlu0 %6430
    %6432 = vrot.lane.b32.xlu0 %v5463, 32
    %v6433 = vpop.permute.xlu0 %6432
    %6434 = vrot.lane.b32.xlu0 %v5464, 32
    %v6435 = vpop.permute.xlu0 %6434
    %6436 = vrot.lane.b32.xlu0 %v5465, 32
    %v6437 = vpop.permute.xlu0 %6436
    %6438 = vrot.lane.b32.xlu0 %v5466, 32
    %v6439 = vpop.permute.xlu0 %6438
    %6440 = vrot.lane.b32.xlu0 %v5467, 32
    %v6441 = vpop.permute.xlu0 %6440
    %6442 = vrot.lane.b32.xlu0 %v5468, 32
    %v6443 = vpop.permute.xlu0 %6442
    %6444 = vrot.lane.b32.xlu0 %v5469, 32
    %v6445 = vpop.permute.xlu0 %6444
    %6446 = vrot.lane.b32.xlu0 %v5470, 32
    %v6447 = vpop.permute.xlu0 %6446
    %6448 = vrot.lane.b32.xlu0 %v5471, 32
    %v6449 = vpop.permute.xlu0 %6448
    %6450 = vrot.lane.b32.xlu0 %v5472, 32
    %v6451 = vpop.permute.xlu0 %6450
    %6452 = vrot.lane.b32.xlu0 %v5473, 32
    %v6453 = vpop.permute.xlu0 %6452
    %6454 = vrot.lane.b32.xlu0 %v5474, 32
    %v6455 = vpop.permute.xlu0 %6454
    %6456 = vrot.lane.b32.xlu0 %v5475, 32
    %v6457 = vpop.permute.xlu0 %6456
    %6458 = vrot.lane.b32.xlu0 %v5476, 32
    %v6459 = vpop.permute.xlu0 %6458
    %6460 = vrot.lane.b32.xlu0 %v5477, 32
    %v6461 = vpop.permute.xlu0 %6460
    %6462 = vrot.lane.b32.xlu0 %v5478, 32
    %v6463 = vpop.permute.xlu0 %6462
    %6464 = vrot.lane.b32.xlu0 %v5479, 32
    %v6465 = vpop.permute.xlu0 %6464
    %6466 = vrot.lane.b32.xlu0 %v5480, 32
    %v6467 = vpop.permute.xlu0 %6466
    %6468 = vrot.lane.b32.xlu0 %v5481, 32
    %v6469 = vpop.permute.xlu0 %6468
    %6470 = vrot.lane.b32.xlu0 %v5482, 32
    %v6471 = vpop.permute.xlu0 %6470
    %6472 = vrot.lane.b32.xlu0 %v5483, 32
    %v6473 = vpop.permute.xlu0 %6472
    %6474 = vrot.lane.b32.xlu0 %v5484, 32
    %v6475 = vpop.permute.xlu0 %6474
    %6476 = vrot.lane.b32.xlu0 %v5485, 32
    %v6477 = vpop.permute.xlu0 %6476
    %6478 = vrot.lane.b32.xlu0 %v5486, 32
    %v6479 = vpop.permute.xlu0 %6478
    %6480 = vrot.lane.b32.xlu0 %v5487, 32
    %v6481 = vpop.permute.xlu0 %6480
    %6482 = vrot.lane.b32.xlu0 %v5488, 32
    %v6483 = vpop.permute.xlu0 %6482
    %6484 = vrot.lane.b32.xlu0 %v5489, 32
    %v6485 = vpop.permute.xlu0 %6484
    %6486 = vrot.lane.b32.xlu0 %v5490, 32
    %v6487 = vpop.permute.xlu0 %6486
    %6488 = vrot.lane.b32.xlu0 %v5491, 32
    %v6489 = vpop.permute.xlu0 %6488
    %6490 = vrot.lane.b32.xlu0 %v5492, 32
    %v6491 = vpop.permute.xlu0 %6490
    %6492 = vrot.lane.b32.xlu0 %v5493, 32
    %v6493 = vpop.permute.xlu0 %6492
    %6494 = vrot.lane.b32.xlu0 %v5494, 32
    %v6495 = vpop.permute.xlu0 %6494
    %6496 = vrot.lane.b32.xlu0 %v5495, 32
    %v6497 = vpop.permute.xlu0 %6496
    %6498 = vrot.lane.b32.xlu0 %v5496, 32
    %v6499 = vpop.permute.xlu0 %6498
    %6500 = vrot.lane.b32.xlu0 %v5497, 32
    %v6501 = vpop.permute.xlu0 %6500
    %6502 = vrot.lane.b32.xlu0 %v5498, 32
    %v6503 = vpop.permute.xlu0 %6502
    %6504 = vrot.lane.b32.xlu0 %v5499, 32
    %v6505 = vpop.permute.xlu0 %6504
    %6506 = vrot.lane.b32.xlu0 %v5500, 32
    %v6507 = vpop.permute.xlu0 %6506
    %6508 = vrot.lane.b32.xlu0 %v5501, 32
    %v6509 = vpop.permute.xlu0 %6508
    %6510 = vrot.lane.b32.xlu0 %v5502, 32
    %v6511 = vpop.permute.xlu0 %6510
    %6512 = vrot.lane.b32.xlu0 %v5503, 32
    %v6513 = vpop.permute.xlu0 %6512
    %6514 = vrot.lane.b32.xlu0 %v5504, 32
    %v6515 = vpop.permute.xlu0 %6514
    %6516 = vrot.lane.b32.xlu0 %v5505, 32
    %v6517 = vpop.permute.xlu0 %6516
    %6518 = vrot.lane.b32.xlu0 %v5506, 32
    %v6519 = vpop.permute.xlu0 %6518
    %6520 = vrot.lane.b32.xlu0 %v5507, 32
    %v6521 = vpop.permute.xlu0 %6520
    %6522 = vrot.lane.b32.xlu0 %v5508, 32
    %v6523 = vpop.permute.xlu0 %6522
    %6524 = vrot.lane.b32.xlu0 %v5509, 32
    %v6525 = vpop.permute.xlu0 %6524
    %6526 = vrot.lane.b32.xlu0 %v5510, 32
    %v6527 = vpop.permute.xlu0 %6526
    %6528 = vrot.lane.b32.xlu0 %v5511, 32
    %v6529 = vpop.permute.xlu0 %6528
    %6530 = vrot.lane.b32.xlu0 %v5512, 32
    %v6531 = vpop.permute.xlu0 %6530
    %6532 = vrot.lane.b32.xlu0 %v5513, 32
    %v6533 = vpop.permute.xlu0 %6532
    %6534 = vrot.lane.b32.xlu0 %v5514, 32
    %v6535 = vpop.permute.xlu0 %6534
    %6536 = vrot.lane.b32.xlu0 %v5515, 32
    %v6537 = vpop.permute.xlu0 %6536
    %6538 = vrot.lane.b32.xlu0 %v5516, 32
    %v6539 = vpop.permute.xlu0 %6538
    %6540 = vrot.lane.b32.xlu0 %v5517, 32
    %v6541 = vpop.permute.xlu0 %6540
    %6542 = vrot.lane.b32.xlu0 %v5518, 32
    %v6543 = vpop.permute.xlu0 %6542
    %6544 = vrot.lane.b32.xlu0 %v5519, 32
    %v6545 = vpop.permute.xlu0 %6544
    %6546 = vrot.lane.b32.xlu0 %v5520, 32
    %v6547 = vpop.permute.xlu0 %6546
    %6548 = vrot.lane.b32.xlu0 %v5521, 32
    %v6549 = vpop.permute.xlu0 %6548
    %6550 = vrot.lane.b32.xlu0 %v5522, 32
    %v6551 = vpop.permute.xlu0 %6550
    %6552 = vrot.lane.b32.xlu0 %v5523, 32
    %v6553 = vpop.permute.xlu0 %6552
    %6554 = vrot.lane.b32.xlu0 %v5524, 32
    %v6555 = vpop.permute.xlu0 %6554
    %6556 = vrot.lane.b32.xlu0 %v5525, 32
    %v6557 = vpop.permute.xlu0 %6556
    %6558 = vrot.lane.b32.xlu0 %v5526, 32
    %v6559 = vpop.permute.xlu0 %6558
    %6560 = vrot.lane.b32.xlu0 %v5527, 32
    %v6561 = vpop.permute.xlu0 %6560
    %6562 = vrot.lane.b32.xlu0 %v5528, 32
    %v6563 = vpop.permute.xlu0 %6562
    %6564 = vrot.lane.b32.xlu0 %v5529, 32
    %v6565 = vpop.permute.xlu0 %6564
    %6566 = vrot.lane.b32.xlu0 %v5530, 32
    %v6567 = vpop.permute.xlu0 %6566
    %6568 = vrot.lane.b32.xlu0 %v5531, 32
    %v6569 = vpop.permute.xlu0 %6568
    %6570 = vrot.lane.b32.xlu0 %v5532, 32
    %v6571 = vpop.permute.xlu0 %6570
    %6572 = vrot.lane.b32.xlu0 %v5533, 32
    %v6573 = vpop.permute.xlu0 %6572
    %6574 = vrot.lane.b32.xlu0 %v5534, 32
    %v6575 = vpop.permute.xlu0 %6574
    %6576 = vrot.lane.b32.xlu0 %v5535, 32
    %v6577 = vpop.permute.xlu0 %6576
    %6578 = vrot.lane.b32.xlu0 %v5536, 32
    %v6579 = vpop.permute.xlu0 %6578
    %6580 = vrot.lane.b32.xlu0 %v5537, 32
    %v6581 = vpop.permute.xlu0 %6580
    %6582 = vrot.lane.b32.xlu0 %v5538, 32
    %v6583 = vpop.permute.xlu0 %6582
    %6584 = vrot.lane.b32.xlu0 %v5539, 32
    %v6585 = vpop.permute.xlu0 %6584
    %6586 = vrot.lane.b32.xlu0 %v5540, 32
    %v6587 = vpop.permute.xlu0 %6586
    %6588 = vrot.lane.b32.xlu0 %v5541, 32
    %v6589 = vpop.permute.xlu0 %6588
    %6590 = vrot.lane.b32.xlu0 %v5542, 32
    %v6591 = vpop.permute.xlu0 %6590
    %6592 = vrot.lane.b32.xlu0 %v5543, 32
    %v6593 = vpop.permute.xlu0 %6592
    %6594 = vrot.lane.b32.xlu0 %v5544, 32
    %v6595 = vpop.permute.xlu0 %6594
    %6596 = vrot.lane.b32.xlu0 %v5545, 32
    %v6597 = vpop.permute.xlu0 %6596
    %6598 = vrot.lane.b32.xlu0 %v5546, 32
    %v6599 = vpop.permute.xlu0 %6598
    %6600 = vrot.lane.b32.xlu0 %v5547, 32
    %v6601 = vpop.permute.xlu0 %6600
    %6602 = vrot.lane.b32.xlu0 %v5548, 32
    %v6603 = vpop.permute.xlu0 %6602
    %6604 = vrot.lane.b32.xlu0 %v5549, 32
    %v6605 = vpop.permute.xlu0 %6604
    %6606 = vrot.lane.b32.xlu0 %v6030, 32
    %v6607 = vpop.permute.xlu0 %6606
    %6608 = vrot.lane.b32.xlu0 %v6031, 32
    %v6609 = vpop.permute.xlu0 %6608
    %6610 = vrot.lane.b32.xlu0 %v6418, 32
    %v6611 = vpop.permute.xlu0 %6610
    %6612 = vrot.lane.b32.xlu0 %v6419, 32
    %v6613 = vpop.permute.xlu0 %6612
    %v6710 = vadd.f32 %v6322, %v6423
    %v6711 = vadd.f32 %v6323, %v6425
    %v6712 = vadd.f32 %v6324, %v6427
    %v6713 = vadd.f32 %v6325, %v6429
    %v6714 = vadd.f32 %v6326, %v6431
    %v6715 = vadd.f32 %v6327, %v6433
    %v6716 = vadd.f32 %v6328, %v6435
    %v6717 = vadd.f32 %v6329, %v6437
    %v6718 = vadd.f32 %v6330, %v6439
    %v6719 = vadd.f32 %v6331, %v6441
    %v6720 = vadd.f32 %v6332, %v6443
    %v6721 = vadd.f32 %v6333, %v6445
    %v6722 = vadd.f32 %v6334, %v6447
    %v6723 = vadd.f32 %v6335, %v6449
    %v6724 = vadd.f32 %v6336, %v6451
    %v6725 = vadd.f32 %v6337, %v6453
    %v6726 = vadd.f32 %v6338, %v6455
    %v6727 = vadd.f32 %v6339, %v6457
    %v6728 = vadd.f32 %v6340, %v6459
    %v6729 = vadd.f32 %v6341, %v6461
    %v6730 = vadd.f32 %v6342, %v6463
    %v6731 = vadd.f32 %v6343, %v6465
    %v6732 = vadd.f32 %v6344, %v6467
    %v6733 = vadd.f32 %v6345, %v6469
    %v6734 = vadd.f32 %v6346, %v6471
    %v6735 = vadd.f32 %v6347, %v6473
    %v6736 = vadd.f32 %v6348, %v6475
    %v6737 = vadd.f32 %v6349, %v6477
    %v6738 = vadd.f32 %v6350, %v6479
    %v6739 = vadd.f32 %v6351, %v6481
    %v6740 = vadd.f32 %v6352, %v6483
    %v6741 = vadd.f32 %v6353, %v6485
    %v6742 = vadd.f32 %v6354, %v6487
    %v6743 = vadd.f32 %v6355, %v6489
    %v6744 = vadd.f32 %v6356, %v6491
    %v6745 = vadd.f32 %v6357, %v6493
    %v6746 = vadd.f32 %v6358, %v6495
    %v6747 = vadd.f32 %v6359, %v6497
    %v6748 = vadd.f32 %v6360, %v6499
    %v6749 = vadd.f32 %v6361, %v6501
    %v6750 = vadd.f32 %v6362, %v6503
    %v6751 = vadd.f32 %v6363, %v6505
    %v6752 = vadd.f32 %v6364, %v6507
    %v6753 = vadd.f32 %v6365, %v6509
    %v6754 = vadd.f32 %v6366, %v6511
    %v6755 = vadd.f32 %v6367, %v6513
    %v6756 = vadd.f32 %v6368, %v6515
    %v6757 = vadd.f32 %v6369, %v6517
    %v6758 = vadd.f32 %v6370, %v6519
    %v6759 = vadd.f32 %v6371, %v6521
    %v6760 = vadd.f32 %v6372, %v6523
    %v6761 = vadd.f32 %v6373, %v6525
    %v6762 = vadd.f32 %v6374, %v6527
    %v6763 = vadd.f32 %v6375, %v6529
    %v6764 = vadd.f32 %v6376, %v6531
    %v6765 = vadd.f32 %v6377, %v6533
    %v6766 = vadd.f32 %v6378, %v6535
    %v6767 = vadd.f32 %v6379, %v6537
    %v6768 = vadd.f32 %v6380, %v6539
    %v6769 = vadd.f32 %v6381, %v6541
    %v6770 = vadd.f32 %v6382, %v6543
    %v6771 = vadd.f32 %v6383, %v6545
    %v6772 = vadd.f32 %v6384, %v6547
    %v6773 = vadd.f32 %v6385, %v6549
    %v6774 = vadd.f32 %v6386, %v6551
    %v6775 = vadd.f32 %v6387, %v6553
    %v6776 = vadd.f32 %v6388, %v6555
    %v6777 = vadd.f32 %v6389, %v6557
    %v6778 = vadd.f32 %v6390, %v6559
    %v6779 = vadd.f32 %v6391, %v6561
    %v6780 = vadd.f32 %v6392, %v6563
    %v6781 = vadd.f32 %v6393, %v6565
    %v6782 = vadd.f32 %v6394, %v6567
    %v6783 = vadd.f32 %v6395, %v6569
    %v6784 = vadd.f32 %v6396, %v6571
    %v6785 = vadd.f32 %v6397, %v6573
    %v6786 = vadd.f32 %v6398, %v6575
    %v6787 = vadd.f32 %v6399, %v6577
    %v6788 = vadd.f32 %v6400, %v6579
    %v6789 = vadd.f32 %v6401, %v6581
    %v6790 = vadd.f32 %v6402, %v6583
    %v6791 = vadd.f32 %v6403, %v6585
    %v6792 = vadd.f32 %v6404, %v6587
    %v6793 = vadd.f32 %v6405, %v6589
    %v6794 = vadd.f32 %v6406, %v6591
    %v6795 = vadd.f32 %v6407, %v6593
    %v6796 = vadd.f32 %v6408, %v6595
    %v6797 = vadd.f32 %v6409, %v6597
    %v6798 = vadd.f32 %v6410, %v6599
    %v6799 = vadd.f32 %v6411, %v6601
    %v6800 = vadd.f32 %v6412, %v6603
    %v6801 = vadd.f32 %v6413, %v6605
    %v6802 = vadd.f32 %v6414, %v6607
    %v6803 = vadd.f32 %v6415, %v6609
    %v6804 = vadd.f32 %v6416, %v6611
    %v6805 = vadd.f32 %v6417, %v6613
    %v6806 = vld [vmem:[#allocation2 + $0x88] sm:$0xff]
    %v6807 = vld [vmem:[#allocation2 + $0x98] sm:$0xff]
    %v6808 = vld [vmem:[#allocation2 + $0xa8] sm:$0xff]
    %v6809 = vld [vmem:[#allocation2 + $0xb8] sm:$0xff]
    %v6810 = vld [vmem:[#allocation2 + $0xc8] sm:$0xff]
    %v6811 = vld [vmem:[#allocation2 + $0xd8] sm:$0xff]
    %v6812 = vld [vmem:[#allocation2 + $0xe8] sm:$0xff]
    %v6813 = vld [vmem:[#allocation2 + $0xf8] sm:$0xff]
    %v6814 = vld [vmem:[#allocation2 + $0x108] sm:$0xff]
    %v6815 = vld [vmem:[#allocation2 + $0x118] sm:$0xff]
    %v6816 = vld [vmem:[#allocation2 + $0x128] sm:$0xff]
    %v6817 = vld [vmem:[#allocation2 + $0x138] sm:$0xff]
    %v6818 = vld [vmem:[#allocation2 + $0x148] sm:$0xff]
    %v6819 = vld [vmem:[#allocation2 + $0x158] sm:$0xff]
    %v6820 = vld [vmem:[#allocation2 + $0x168] sm:$0xff]
    %v6821 = vld [vmem:[#allocation2 + $0x178] sm:$0xff]
    %v6822 = vld [vmem:[#allocation2 + $0x188] sm:$0xff]
    %v6823 = vld [vmem:[#allocation2 + $0x198] sm:$0xff]
    %v6824 = vld [vmem:[#allocation2 + $0x1a8] sm:$0xff]
    %v6825 = vld [vmem:[#allocation2 + $0x1b8] sm:$0xff]
    %v6826 = vld [vmem:[#allocation2 + $0x1c8] sm:$0xff]
    %v6827 = vld [vmem:[#allocation2 + $0x1d8] sm:$0xff]
    %v6828 = vld [vmem:[#allocation2 + $0x1e8] sm:$0xff]
    %v6829 = vld [vmem:[#allocation2 + $0x1f8] sm:$0xff]
    %v6830 = vld [vmem:[#allocation2 + $0x208] sm:$0xff]
    %v6831 = vld [vmem:[#allocation2 + $0x218] sm:$0xff]
    %v6832 = vld [vmem:[#allocation2 + $0x228] sm:$0xff]
    %v6833 = vld [vmem:[#allocation2 + $0x238] sm:$0xff]
    %v6834 = vld [vmem:[#allocation2 + $0x248] sm:$0xff]
    %v6835 = vld [vmem:[#allocation2 + $0x258] sm:$0xff]
    %v6836 = vld [vmem:[#allocation2 + $0x268] sm:$0xff]
    %v6837 = vld [vmem:[#allocation2 + $0x278] sm:$0xff]
    %v6838 = vld [vmem:[#allocation2 + $0x288] sm:$0xff]
    %v6839 = vld [vmem:[#allocation2 + $0x298] sm:$0xff]
    %v6840 = vld [vmem:[#allocation2 + $0x2a8] sm:$0xff]
    %v6841 = vld [vmem:[#allocation2 + $0x2b8] sm:$0xff]
    %v6842 = vld [vmem:[#allocation2 + $0x2c8] sm:$0xff]
    %v6843 = vld [vmem:[#allocation2 + $0x2d8] sm:$0xff]
    %v6844 = vld [vmem:[#allocation2 + $0x2e8] sm:$0xff]
    %v6845 = vld [vmem:[#allocation2 + $0x2f8] sm:$0xff]
    %v6846 = vld [vmem:[#allocation2 + $0x308] sm:$0xff]
    %v6847 = vld [vmem:[#allocation2 + $0x318] sm:$0xff]
    %v6848 = vld [vmem:[#allocation2 + $0x328] sm:$0xff]
    %v6849 = vld [vmem:[#allocation2 + $0x338] sm:$0xff]
    %v6850 = vld [vmem:[#allocation2 + $0x348] sm:$0xff]
    %v6851 = vld [vmem:[#allocation2 + $0x358] sm:$0xff]
    %v6852 = vld [vmem:[#allocation2 + $0x368] sm:$0xff]
    %v6853 = vld [vmem:[#allocation2 + $0x378] sm:$0xff]
    %v6854 = vld [vmem:[#allocation2 + $0x388] sm:$0xff]
    %v6855 = vld [vmem:[#allocation2 + $0x398] sm:$0xff]
    %v6856 = vld [vmem:[#allocation2 + $0x3a8] sm:$0xff]
    %v6857 = vld [vmem:[#allocation2 + $0x3b8] sm:$0xff]
    %v6858 = vld [vmem:[#allocation2 + $0x3c8] sm:$0xff]
    %v6859 = vld [vmem:[#allocation2 + $0x3d8] sm:$0xff]
    %v6860 = vld [vmem:[#allocation2 + $0x3e8] sm:$0xff]
    %v6861 = vld [vmem:[#allocation2 + $0x3f8] sm:$0xff]
    %v6862 = vld [vmem:[#allocation2 + $0x408] sm:$0xff]
    %v6863 = vld [vmem:[#allocation2 + $0x418] sm:$0xff]
    %v6864 = vld [vmem:[#allocation2 + $0x428] sm:$0xff]
    %v6865 = vld [vmem:[#allocation2 + $0x438] sm:$0xff]
    %v6866 = vld [vmem:[#allocation2 + $0x448] sm:$0xff]
    %v6867 = vld [vmem:[#allocation2 + $0x458] sm:$0xff]
    %v6868 = vld [vmem:[#allocation2 + $0x468] sm:$0xff]
    %v6869 = vld [vmem:[#allocation2 + $0x478] sm:$0xff]
    %v6870 = vld [vmem:[#allocation2 + $0x488] sm:$0xff]
    %v6871 = vld [vmem:[#allocation2 + $0x498] sm:$0xff]
    %v6872 = vld [vmem:[#allocation2 + $0x4a8] sm:$0xff]
    %v6873 = vld [vmem:[#allocation2 + $0x4b8] sm:$0xff]
    %v6874 = vld [vmem:[#allocation2 + $0x4c8] sm:$0xff]
    %v6875 = vld [vmem:[#allocation2 + $0x4d8] sm:$0xff]
    %v6876 = vld [vmem:[#allocation2 + $0x4e8] sm:$0xff]
    %v6877 = vld [vmem:[#allocation2 + $0x4f8] sm:$0xff]
    %v6878 = vld [vmem:[#allocation2 + $0x508] sm:$0xff]
    %v6879 = vld [vmem:[#allocation2 + $0x518] sm:$0xff]
    %v6880 = vld [vmem:[#allocation2 + $0x528] sm:$0xff]
    %v6881 = vld [vmem:[#allocation2 + $0x538] sm:$0xff]
    %v6882 = vld [vmem:[#allocation2 + $0x548] sm:$0xff]
    %v6883 = vld [vmem:[#allocation2 + $0x558] sm:$0xff]
    %v6884 = vld [vmem:[#allocation2 + $0x568] sm:$0xff]
    %v6885 = vld [vmem:[#allocation2 + $0x578] sm:$0xff]
    %v6886 = vld [vmem:[#allocation2 + $0x588] sm:$0xff]
    %v6887 = vld [vmem:[#allocation2 + $0x598] sm:$0xff]
    %v6888 = vld [vmem:[#allocation2 + $0x5a8] sm:$0xff]
    %v6889 = vld [vmem:[#allocation2 + $0x5b8] sm:$0xff]
    %v6890 = vld [vmem:[#allocation2 + $0x5c8] sm:$0xff]
    %v6891 = vld [vmem:[#allocation2 + $0x5d8] sm:$0xff]
    %v6892 = vld [vmem:[#allocation2 + $0x5e8] sm:$0xff]
    %v6893 = vld [vmem:[#allocation2 + $0x5f8] sm:$0xff]
    %v6894 = vld [vmem:[#allocation2 + $0x608] sm:$0xff]
    %v6895 = vld [vmem:[#allocation2 + $0x618] sm:$0xff]
    %v6896 = vld [vmem:[#allocation2 + $0x628] sm:$0xff]
    %v6897 = vld [vmem:[#allocation2 + $0x638] sm:$0xff]
    %v6898 = vld [vmem:[#allocation2 + $0x648] sm:$0xff]
    %v6899 = vld [vmem:[#allocation2 + $0x658] sm:$0xff]
    %v6900 = vld [vmem:[#allocation2 + $0x668] sm:$0xff]
    %v6901 = vld [vmem:[#allocation2 + $0x678] sm:$0xff]
    %v6902 = vadd.f32 %v6710, %v6806
    %v6903 = vadd.f32 %v6711, %v6807
    %v6904 = vadd.f32 %v6712, %v6808
    %v6905 = vadd.f32 %v6713, %v6809
    %v6906 = vadd.f32 %v6714, %v6810
    %v6907 = vadd.f32 %v6715, %v6811
    %v6908 = vadd.f32 %v6716, %v6812
    %v6909 = vadd.f32 %v6717, %v6813
    %v6910 = vadd.f32 %v6718, %v6814
    %v6911 = vadd.f32 %v6719, %v6815
    %v6912 = vadd.f32 %v6720, %v6816
    %v6913 = vadd.f32 %v6721, %v6817
    %v6914 = vadd.f32 %v6722, %v6818
    %v6915 = vadd.f32 %v6723, %v6819
    %v6916 = vadd.f32 %v6724, %v6820
    %v6917 = vadd.f32 %v6725, %v6821
    %v6918 = vadd.f32 %v6726, %v6822
    %v6919 = vadd.f32 %v6727, %v6823
    %v6920 = vadd.f32 %v6728, %v6824
    %v6921 = vadd.f32 %v6729, %v6825
    %v6922 = vadd.f32 %v6730, %v6826
    %v6923 = vadd.f32 %v6731, %v6827
    %v6924 = vadd.f32 %v6732, %v6828
    %v6925 = vadd.f32 %v6733, %v6829
    %v6926 = vadd.f32 %v6734, %v6830
    %v6927 = vadd.f32 %v6735, %v6831
    %v6928 = vadd.f32 %v6736, %v6832
    %v6929 = vadd.f32 %v6737, %v6833
    %v6930 = vadd.f32 %v6738, %v6834
    %v6931 = vadd.f32 %v6739, %v6835
    %v6932 = vadd.f32 %v6740, %v6836
    %v6933 = vadd.f32 %v6741, %v6837
    %v6934 = vadd.f32 %v6742, %v6838
    %v6935 = vadd.f32 %v6743, %v6839
    %v6936 = vadd.f32 %v6744, %v6840
    %v6937 = vadd.f32 %v6745, %v6841
    %v6938 = vadd.f32 %v6746, %v6842
    %v6939 = vadd.f32 %v6747, %v6843
    %v6940 = vadd.f32 %v6748, %v6844
    %v6941 = vadd.f32 %v6749, %v6845
    %v6942 = vadd.f32 %v6750, %v6846
    %v6943 = vadd.f32 %v6751, %v6847
    %v6944 = vadd.f32 %v6752, %v6848
    %v6945 = vadd.f32 %v6753, %v6849
    %v6946 = vadd.f32 %v6754, %v6850
    %v6947 = vadd.f32 %v6755, %v6851
    %v6948 = vadd.f32 %v6756, %v6852
    %v6949 = vadd.f32 %v6757, %v6853
    %v6950 = vadd.f32 %v6758, %v6854
    %v6951 = vadd.f32 %v6759, %v6855
    %v6952 = vadd.f32 %v6760, %v6856
    %v6953 = vadd.f32 %v6761, %v6857
    %v6954 = vadd.f32 %v6762, %v6858
    %v6955 = vadd.f32 %v6763, %v6859
    %v6956 = vadd.f32 %v6764, %v6860
    %v6957 = vadd.f32 %v6765, %v6861
    %v6958 = vadd.f32 %v6766, %v6862
    %v6959 = vadd.f32 %v6767, %v6863
    %v6960 = vadd.f32 %v6768, %v6864
    %v6961 = vadd.f32 %v6769, %v6865
    %v6962 = vadd.f32 %v6770, %v6866
    %v6963 = vadd.f32 %v6771, %v6867
    %v6964 = vadd.f32 %v6772, %v6868
    %v6965 = vadd.f32 %v6773, %v6869
    %v6966 = vadd.f32 %v6774, %v6870
    %v6967 = vadd.f32 %v6775, %v6871
    %v6968 = vadd.f32 %v6776, %v6872
    %v6969 = vadd.f32 %v6777, %v6873
    %v6970 = vadd.f32 %v6778, %v6874
    %v6971 = vadd.f32 %v6779, %v6875
    %v6972 = vadd.f32 %v6780, %v6876
    %v6973 = vadd.f32 %v6781, %v6877
    %v6974 = vadd.f32 %v6782, %v6878
    %v6975 = vadd.f32 %v6783, %v6879
    %v6976 = vadd.f32 %v6784, %v6880
    %v6977 = vadd.f32 %v6785, %v6881
    %v6978 = vadd.f32 %v6786, %v6882
    %v6979 = vadd.f32 %v6787, %v6883
    %v6980 = vadd.f32 %v6788, %v6884
    %v6981 = vadd.f32 %v6789, %v6885
    %v6982 = vadd.f32 %v6790, %v6886
    %v6983 = vadd.f32 %v6791, %v6887
    %v6984 = vadd.f32 %v6792, %v6888
    %v6985 = vadd.f32 %v6793, %v6889
    %v6986 = vadd.f32 %v6794, %v6890
    %v6987 = vadd.f32 %v6795, %v6891
    %v6988 = vadd.f32 %v6796, %v6892
    %v6989 = vadd.f32 %v6797, %v6893
    %v6990 = vadd.f32 %v6798, %v6894
    %v6991 = vadd.f32 %v6799, %v6895
    %v6992 = vadd.f32 %v6800, %v6896
    %v6993 = vadd.f32 %v6801, %v6897
    %v6994 = vadd.f32 %v6802, %v6898
    %v6995 = vadd.f32 %v6803, %v6899
    %v6996 = vadd.f32 %v6804, %v6900
    %v6997 = vadd.f32 %v6805, %v6901
    %v6998 = vld [vmem:[#allocation10] sm:$0x1]
    %v7000 = vlaneseq
    %v7001 = vshrl.u32 %v7000, 7
    %v7002 = vsub.s32 0, %v7001
    %v7003 = vrot.slane %v6998, %v7002
    %v7005 = vadd.f32 %v6902, %v7003
    %v7006 = vadd.f32 %v6903, %v7003
    %v7007 = vadd.f32 %v6904, %v7003
    %v7008 = vadd.f32 %v6905, %v7003
    %v7009 = vadd.f32 %v6906, %v7003
    %v7010 = vadd.f32 %v6907, %v7003
    %v7011 = vadd.f32 %v6908, %v7003
    %v7012 = vadd.f32 %v6909, %v7003
    %v7013 = vadd.f32 %v6910, %v7003
    %v7014 = vadd.f32 %v6911, %v7003
    %v7015 = vadd.f32 %v6912, %v7003
    %v7016 = vadd.f32 %v6913, %v7003
    %v7017 = vadd.f32 %v6914, %v7003
    %v7018 = vadd.f32 %v6915, %v7003
    %v7019 = vadd.f32 %v6916, %v7003
    %v7020 = vadd.f32 %v6917, %v7003
    %v7021 = vadd.f32 %v6918, %v7003
    %v7022 = vadd.f32 %v6919, %v7003
    %v7023 = vadd.f32 %v6920, %v7003
    %v7024 = vadd.f32 %v6921, %v7003
    %v7025 = vadd.f32 %v6922, %v7003
    %v7026 = vadd.f32 %v6923, %v7003
    %v7027 = vadd.f32 %v6924, %v7003
    %v7028 = vadd.f32 %v6925, %v7003
    %v7029 = vadd.f32 %v6926, %v7003
    %v7030 = vadd.f32 %v6927, %v7003
    %v7031 = vadd.f32 %v6928, %v7003
    %v7032 = vadd.f32 %v6929, %v7003
    %v7033 = vadd.f32 %v6930, %v7003
    %v7034 = vadd.f32 %v6931, %v7003
    %v7035 = vadd.f32 %v6932, %v7003
    %v7036 = vadd.f32 %v6933, %v7003
    %v7037 = vadd.f32 %v6934, %v7003
    %v7038 = vadd.f32 %v6935, %v7003
    %v7039 = vadd.f32 %v6936, %v7003
    %v7040 = vadd.f32 %v6937, %v7003
    %v7041 = vadd.f32 %v6938, %v7003
    %v7042 = vadd.f32 %v6939, %v7003
    %v7043 = vadd.f32 %v6940, %v7003
    %v7044 = vadd.f32 %v6941, %v7003
    %v7045 = vadd.f32 %v6942, %v7003
    %v7046 = vadd.f32 %v6943, %v7003
    %v7047 = vadd.f32 %v6944, %v7003
    %v7048 = vadd.f32 %v6945, %v7003
    %v7049 = vadd.f32 %v6946, %v7003
    %v7050 = vadd.f32 %v6947, %v7003
    %v7051 = vadd.f32 %v6948, %v7003
    %v7052 = vadd.f32 %v6949, %v7003
    %v7053 = vadd.f32 %v6950, %v7003
    %v7054 = vadd.f32 %v6951, %v7003
    %v7055 = vadd.f32 %v6952, %v7003
    %v7056 = vadd.f32 %v6953, %v7003
    %v7057 = vadd.f32 %v6954, %v7003
    %v7058 = vadd.f32 %v6955, %v7003
    %v7059 = vadd.f32 %v6956, %v7003
    %v7060 = vadd.f32 %v6957, %v7003
    %v7061 = vadd.f32 %v6958, %v7003
    %v7062 = vadd.f32 %v6959, %v7003
    %v7063 = vadd.f32 %v6960, %v7003
    %v7064 = vadd.f32 %v6961, %v7003
    %v7065 = vadd.f32 %v6962, %v7003
    %v7066 = vadd.f32 %v6963, %v7003
    %v7067 = vadd.f32 %v6964, %v7003
    %v7068 = vadd.f32 %v6965, %v7003
    %v7069 = vadd.f32 %v6966, %v7003
    %v7070 = vadd.f32 %v6967, %v7003
    %v7071 = vadd.f32 %v6968, %v7003
    %v7072 = vadd.f32 %v6969, %v7003
    %v7073 = vadd.f32 %v6970, %v7003
    %v7074 = vadd.f32 %v6971, %v7003
    %v7075 = vadd.f32 %v6972, %v7003
    %v7076 = vadd.f32 %v6973, %v7003
    %v7077 = vadd.f32 %v6974, %v7003
    %v7078 = vadd.f32 %v6975, %v7003
    %v7079 = vadd.f32 %v6976, %v7003
    %v7080 = vadd.f32 %v6977, %v7003
    %v7081 = vadd.f32 %v6978, %v7003
    %v7082 = vadd.f32 %v6979, %v7003
    %v7083 = vadd.f32 %v6980, %v7003
    %v7084 = vadd.f32 %v6981, %v7003
    %v7085 = vadd.f32 %v6982, %v7003
    %v7086 = vadd.f32 %v6983, %v7003
    %v7087 = vadd.f32 %v6984, %v7003
    %v7088 = vadd.f32 %v6985, %v7003
    %v7089 = vadd.f32 %v6986, %v7003
    %v7090 = vadd.f32 %v6987, %v7003
    %v7091 = vadd.f32 %v6988, %v7003
    %v7092 = vadd.f32 %v6989, %v7003
    %v7093 = vadd.f32 %v6990, %v7003
    %v7094 = vadd.f32 %v6991, %v7003
    %v7095 = vadd.f32 %v6992, %v7003
    %v7096 = vadd.f32 %v6993, %v7003
    %v7097 = vadd.f32 %v6994, %v7003
    %v7098 = vadd.f32 %v6995, %v7003
    %v7099 = vadd.f32 %v6996, %v7003
    %v7100 = vadd.f32 %v6997, %v7003
    %v7101 = vmax.f32 %v7005, 0.0
    %v7102 = vmax.f32 %v7006, 0.0
    %v7103 = vmax.f32 %v7007, 0.0
    %v7104 = vmax.f32 %v7008, 0.0
    %v7105 = vmax.f32 %v7009, 0.0
    %v7106 = vmax.f32 %v7010, 0.0
    %v7107 = vmax.f32 %v7011, 0.0
    %v7108 = vmax.f32 %v7012, 0.0
    %v7109 = vmax.f32 %v7013, 0.0
    %v7110 = vmax.f32 %v7014, 0.0
    %v7111 = vmax.f32 %v7015, 0.0
    %v7112 = vmax.f32 %v7016, 0.0
    %v7113 = vmax.f32 %v7017, 0.0
    %v7114 = vmax.f32 %v7018, 0.0
    %v7115 = vmax.f32 %v7019, 0.0
    %v7116 = vmax.f32 %v7020, 0.0
    %v7117 = vmax.f32 %v7021, 0.0
    %v7118 = vmax.f32 %v7022, 0.0
    %v7119 = vmax.f32 %v7023, 0.0
    %v7120 = vmax.f32 %v7024, 0.0
    %v7121 = vmax.f32 %v7025, 0.0
    %v7122 = vmax.f32 %v7026, 0.0
    %v7123 = vmax.f32 %v7027, 0.0
    %v7124 = vmax.f32 %v7028, 0.0
    %v7125 = vmax.f32 %v7029, 0.0
    %v7126 = vmax.f32 %v7030, 0.0
    %v7127 = vmax.f32 %v7031, 0.0
    %v7128 = vmax.f32 %v7032, 0.0
    %v7129 = vmax.f32 %v7033, 0.0
    %v7130 = vmax.f32 %v7034, 0.0
    %v7131 = vmax.f32 %v7035, 0.0
    %v7132 = vmax.f32 %v7036, 0.0
    %v7133 = vmax.f32 %v7037, 0.0
    %v7134 = vmax.f32 %v7038, 0.0
    %v7135 = vmax.f32 %v7039, 0.0
    %v7136 = vmax.f32 %v7040, 0.0
    %v7137 = vmax.f32 %v7041, 0.0
    %v7138 = vmax.f32 %v7042, 0.0
    %v7139 = vmax.f32 %v7043, 0.0
    %v7140 = vmax.f32 %v7044, 0.0
    %v7141 = vmax.f32 %v7045, 0.0
    %v7142 = vmax.f32 %v7046, 0.0
    %v7143 = vmax.f32 %v7047, 0.0
    %v7144 = vmax.f32 %v7048, 0.0
    %v7145 = vmax.f32 %v7049, 0.0
    %v7146 = vmax.f32 %v7050, 0.0
    %v7147 = vmax.f32 %v7051, 0.0
    %v7148 = vmax.f32 %v7052, 0.0
    %v7149 = vmax.f32 %v7053, 0.0
    %v7150 = vmax.f32 %v7054, 0.0
    %v7151 = vmax.f32 %v7055, 0.0
    %v7152 = vmax.f32 %v7056, 0.0
    %v7153 = vmax.f32 %v7057, 0.0
    %v7154 = vmax.f32 %v7058, 0.0
    %v7155 = vmax.f32 %v7059, 0.0
    %v7156 = vmax.f32 %v7060, 0.0
    %v7157 = vmax.f32 %v7061, 0.0
    %v7158 = vmax.f32 %v7062, 0.0
    %v7159 = vmax.f32 %v7063, 0.0
    %v7160 = vmax.f32 %v7064, 0.0
    %v7161 = vmax.f32 %v7065, 0.0
    %v7162 = vmax.f32 %v7066, 0.0
    %v7163 = vmax.f32 %v7067, 0.0
    %v7164 = vmax.f32 %v7068, 0.0
    %v7165 = vmax.f32 %v7069, 0.0
    %v7166 = vmax.f32 %v7070, 0.0
    %v7167 = vmax.f32 %v7071, 0.0
    %v7168 = vmax.f32 %v7072, 0.0
    %v7169 = vmax.f32 %v7073, 0.0
    %v7170 = vmax.f32 %v7074, 0.0
    %v7171 = vmax.f32 %v7075, 0.0
    %v7172 = vmax.f32 %v7076, 0.0
    %v7173 = vmax.f32 %v7077, 0.0
    %v7174 = vmax.f32 %v7078, 0.0
    %v7175 = vmax.f32 %v7079, 0.0
    %v7176 = vmax.f32 %v7080, 0.0
    %v7177 = vmax.f32 %v7081, 0.0
    %v7178 = vmax.f32 %v7082, 0.0
    %v7179 = vmax.f32 %v7083, 0.0
    %v7180 = vmax.f32 %v7084, 0.0
    %v7181 = vmax.f32 %v7085, 0.0
    %v7182 = vmax.f32 %v7086, 0.0
    %v7183 = vmax.f32 %v7087, 0.0
    %v7184 = vmax.f32 %v7088, 0.0
    %v7185 = vmax.f32 %v7089, 0.0
    %v7186 = vmax.f32 %v7090, 0.0
    %v7187 = vmax.f32 %v7091, 0.0
    %v7188 = vmax.f32 %v7092, 0.0
    %v7189 = vmax.f32 %v7093, 0.0
    %v7190 = vmax.f32 %v7094, 0.0
    %v7191 = vmax.f32 %v7095, 0.0
    %v7192 = vmax.f32 %v7096, 0.0
    %v7193 = vmax.f32 %v7097, 0.0
    %v7194 = vmax.f32 %v7098, 0.0
    %v7195 = vmax.f32 %v7099, 0.0
    %v7196 = vmax.f32 %v7100, 0.0
    %7197 = vst.msk [vmem:[#allocation3] sm:$0xff] %vm5244, %v7101
    %7198 = vst.msk [vmem:[#allocation3 + $0x8] sm:$0xff] %vm5244, %v7102
    %7199 = vst.msk [vmem:[#allocation3 + $0x10] sm:$0xff] %vm5244, %v7103
    %7200 = vst.msk [vmem:[#allocation3 + $0x18] sm:$0xff] %vm5244, %v7104
    %7201 = vst.msk [vmem:[#allocation3 + $0x20] sm:$0xff] %vm5244, %v7105
    %7202 = vst.msk [vmem:[#allocation3 + $0x28] sm:$0xff] %vm5244, %v7106
    %7203 = vst.msk [vmem:[#allocation3 + $0x30] sm:$0xff] %vm5244, %v7107
    %7204 = vst.msk [vmem:[#allocation3 + $0x38] sm:$0xff] %vm5244, %v7108
    %7205 = vst.msk [vmem:[#allocation3 + $0x40] sm:$0xff] %vm5244, %v7109
    %7206 = vst.msk [vmem:[#allocation3 + $0x48] sm:$0xff] %vm5244, %v7110
    %7207 = vst.msk [vmem:[#allocation3 + $0x50] sm:$0xff] %vm5244, %v7111
    %7208 = vst.msk [vmem:[#allocation3 + $0x58] sm:$0xff] %vm5244, %v7112
    %7209 = vst.msk [vmem:[#allocation3 + $0x60] sm:$0xff] %vm5244, %v7113
    %7210 = vst.msk [vmem:[#allocation3 + $0x68] sm:$0xff] %vm5244, %v7114
    %7211 = vst.msk [vmem:[#allocation3 + $0x70] sm:$0xff] %vm5244, %v7115
    %7212 = vst.msk [vmem:[#allocation3 + $0x78] sm:$0xff] %vm5244, %v7116
    %7213 = vst.msk [vmem:[#allocation3 + $0x80] sm:$0xff] %vm5244, %v7117
    %7214 = vst.msk [vmem:[#allocation3 + $0x88] sm:$0xff] %vm5244, %v7118
    %7215 = vst.msk [vmem:[#allocation3 + $0x90] sm:$0xff] %vm5244, %v7119
    %7216 = vst.msk [vmem:[#allocation3 + $0x98] sm:$0xff] %vm5244, %v7120
    %7217 = vst.msk [vmem:[#allocation3 + $0xa0] sm:$0xff] %vm5244, %v7121
    %7218 = vst.msk [vmem:[#allocation3 + $0xa8] sm:$0xff] %vm5244, %v7122
    %7219 = vst.msk [vmem:[#allocation3 + $0xb0] sm:$0xff] %vm5244, %v7123
    %7220 = vst.msk [vmem:[#allocation3 + $0xb8] sm:$0xff] %vm5244, %v7124
    %7221 = vst.msk [vmem:[#allocation3 + $0xc0] sm:$0xff] %vm5244, %v7125
    %7222 = vst.msk [vmem:[#allocation3 + $0xc8] sm:$0xff] %vm5244, %v7126
    %7223 = vst.msk [vmem:[#allocation3 + $0xd0] sm:$0xff] %vm5244, %v7127
    %7224 = vst.msk [vmem:[#allocation3 + $0xd8] sm:$0xff] %vm5244, %v7128
    %7225 = vst.msk [vmem:[#allocation3 + $0xe0] sm:$0xff] %vm5244, %v7129
    %7226 = vst.msk [vmem:[#allocation3 + $0xe8] sm:$0xff] %vm5244, %v7130
    %7227 = vst.msk [vmem:[#allocation3 + $0xf0] sm:$0xff] %vm5244, %v7131
    %7228 = vst.msk [vmem:[#allocation3 + $0xf8] sm:$0xff] %vm5244, %v7132
    %7229 = vst.msk [vmem:[#allocation3 + $0x100] sm:$0xff] %vm5244, %v7133
    %7230 = vst.msk [vmem:[#allocation3 + $0x108] sm:$0xff] %vm5244, %v7134
    %7231 = vst.msk [vmem:[#allocation3 + $0x110] sm:$0xff] %vm5244, %v7135
    %7232 = vst.msk [vmem:[#allocation3 + $0x118] sm:$0xff] %vm5244, %v7136
    %7233 = vst.msk [vmem:[#allocation3 + $0x120] sm:$0xff] %vm5244, %v7137
    %7234 = vst.msk [vmem:[#allocation3 + $0x128] sm:$0xff] %vm5244, %v7138
    %7235 = vst.msk [vmem:[#allocation3 + $0x130] sm:$0xff] %vm5244, %v7139
    %7236 = vst.msk [vmem:[#allocation3 + $0x138] sm:$0xff] %vm5244, %v7140
    %7237 = vst.msk [vmem:[#allocation3 + $0x140] sm:$0xff] %vm5244, %v7141
    %7238 = vst.msk [vmem:[#allocation3 + $0x148] sm:$0xff] %vm5244, %v7142
    %7239 = vst.msk [vmem:[#allocation3 + $0x150] sm:$0xff] %vm5244, %v7143
    %7240 = vst.msk [vmem:[#allocation3 + $0x158] sm:$0xff] %vm5244, %v7144
    %7241 = vst.msk [vmem:[#allocation3 + $0x160] sm:$0xff] %vm5244, %v7145
    %7242 = vst.msk [vmem:[#allocation3 + $0x168] sm:$0xff] %vm5244, %v7146
    %7243 = vst.msk [vmem:[#allocation3 + $0x170] sm:$0xff] %vm5244, %v7147
    %7244 = vst.msk [vmem:[#allocation3 + $0x178] sm:$0xff] %vm5244, %v7148
    %7245 = vst.msk [vmem:[#allocation3 + $0x180] sm:$0xff] %vm5244, %v7149
    %7246 = vst.msk [vmem:[#allocation3 + $0x188] sm:$0xff] %vm5244, %v7150
    %7247 = vst.msk [vmem:[#allocation3 + $0x190] sm:$0xff] %vm5244, %v7151
    %7248 = vst.msk [vmem:[#allocation3 + $0x198] sm:$0xff] %vm5244, %v7152
    %7249 = vst.msk [vmem:[#allocation3 + $0x1a0] sm:$0xff] %vm5244, %v7153
    %7250 = vst.msk [vmem:[#allocation3 + $0x1a8] sm:$0xff] %vm5244, %v7154
    %7251 = vst.msk [vmem:[#allocation3 + $0x1b0] sm:$0xff] %vm5244, %v7155
    %7252 = vst.msk [vmem:[#allocation3 + $0x1b8] sm:$0xff] %vm5244, %v7156
    %7253 = vst.msk [vmem:[#allocation3 + $0x1c0] sm:$0xff] %vm5244, %v7157
    %7254 = vst.msk [vmem:[#allocation3 + $0x1c8] sm:$0xff] %vm5244, %v7158
    %7255 = vst.msk [vmem:[#allocation3 + $0x1d0] sm:$0xff] %vm5244, %v7159
    %7256 = vst.msk [vmem:[#allocation3 + $0x1d8] sm:$0xff] %vm5244, %v7160
    %7257 = vst.msk [vmem:[#allocation3 + $0x1e0] sm:$0xff] %vm5244, %v7161
    %7258 = vst.msk [vmem:[#allocation3 + $0x1e8] sm:$0xff] %vm5244, %v7162
    %7259 = vst.msk [vmem:[#allocation3 + $0x1f0] sm:$0xff] %vm5244, %v7163
    %7260 = vst.msk [vmem:[#allocation3 + $0x1f8] sm:$0xff] %vm5244, %v7164
    %7261 = vst.msk [vmem:[#allocation3 + $0x200] sm:$0xff] %vm5244, %v7165
    %7262 = vst.msk [vmem:[#allocation3 + $0x208] sm:$0xff] %vm5244, %v7166
    %7263 = vst.msk [vmem:[#allocation3 + $0x210] sm:$0xff] %vm5244, %v7167
    %7264 = vst.msk [vmem:[#allocation3 + $0x218] sm:$0xff] %vm5244, %v7168
    %7265 = vst.msk [vmem:[#allocation3 + $0x220] sm:$0xff] %vm5244, %v7169
    %7266 = vst.msk [vmem:[#allocation3 + $0x228] sm:$0xff] %vm5244, %v7170
    %7267 = vst.msk [vmem:[#allocation3 + $0x230] sm:$0xff] %vm5244, %v7171
    %7268 = vst.msk [vmem:[#allocation3 + $0x238] sm:$0xff] %vm5244, %v7172
    %7269 = vst.msk [vmem:[#allocation3 + $0x240] sm:$0xff] %vm5244, %v7173
    %7270 = vst.msk [vmem:[#allocation3 + $0x248] sm:$0xff] %vm5244, %v7174
    %7271 = vst.msk [vmem:[#allocation3 + $0x250] sm:$0xff] %vm5244, %v7175
    %7272 = vst.msk [vmem:[#allocation3 + $0x258] sm:$0xff] %vm5244, %v7176
    %7273 = vst.msk [vmem:[#allocation3 + $0x260] sm:$0xff] %vm5244, %v7177
    %7274 = vst.msk [vmem:[#allocation3 + $0x268] sm:$0xff] %vm5244, %v7178
    %7275 = vst.msk [vmem:[#allocation3 + $0x270] sm:$0xff] %vm5244, %v7179
    %7276 = vst.msk [vmem:[#allocation3 + $0x278] sm:$0xff] %vm5244, %v7180
    %7277 = vst.msk [vmem:[#allocation3 + $0x280] sm:$0xff] %vm5244, %v7181
    %7278 = vst.msk [vmem:[#allocation3 + $0x288] sm:$0xff] %vm5244, %v7182
    %7279 = vst.msk [vmem:[#allocation3 + $0x290] sm:$0xff] %vm5244, %v7183
    %7280 = vst.msk [vmem:[#allocation3 + $0x298] sm:$0xff] %vm5244, %v7184
    %7281 = vst.msk [vmem:[#allocation3 + $0x2a0] sm:$0xff] %vm5244, %v7185
    %7282 = vst.msk [vmem:[#allocation3 + $0x2a8] sm:$0xff] %vm5244, %v7186
    %7283 = vst.msk [vmem:[#allocation3 + $0x2b0] sm:$0xff] %vm5244, %v7187
    %7284 = vst.msk [vmem:[#allocation3 + $0x2b8] sm:$0xff] %vm5244, %v7188
    %7285 = vst.msk [vmem:[#allocation3 + $0x2c0] sm:$0xff] %vm5244, %v7189
    %7286 = vst.msk [vmem:[#allocation3 + $0x2c8] sm:$0xff] %vm5244, %v7190
    %7287 = vst.msk [vmem:[#allocation3 + $0x2d0] sm:$0xff] %vm5244, %v7191
    %7288 = vst.msk [vmem:[#allocation3 + $0x2d8] sm:$0xff] %vm5244, %v7192
    %7289 = vst.msk [vmem:[#allocation3 + $0x2e0] sm:$0xff] %vm5244, %v7193
    %7290 = vst.msk [vmem:[#allocation3 + $0x2e8] sm:$0xff] %vm5244, %v7194
    %7291 = vst.msk [vmem:[#allocation3 + $0x2f0] sm:$0xff] %vm5244, %v7195
    %7292 = vst.msk [vmem:[#allocation3 + $0x2f8] sm:$0xff] %vm5244, %v7196
    %v7293 = vld [vmem:[#allocation3] sm:$0xff]
    %v7294 = vld [vmem:[#allocation3 + $0x8] sm:$0xff]
    %v7295 = vld [vmem:[#allocation3 + $0x20] sm:$0xff]
    %v7296 = vld [vmem:[#allocation3 + $0x28] sm:$0xff]
    %v7297 = vld [vmem:[#allocation3 + $0x40] sm:$0xff]
    %v7298 = vld [vmem:[#allocation3 + $0x48] sm:$0xff]
    %v7299 = vld [vmem:[#allocation3 + $0x60] sm:$0xff]
    %v7300 = vld [vmem:[#allocation3 + $0x68] sm:$0xff]
    %v7301 = vld [vmem:[#allocation3 + $0x80] sm:$0xff]
    %v7302 = vld [vmem:[#allocation3 + $0x88] sm:$0xff]
    %v7303 = vld [vmem:[#allocation3 + $0xa0] sm:$0xff]
    %v7304 = vld [vmem:[#allocation3 + $0xa8] sm:$0xff]
    %v7305 = vld [vmem:[#allocation3 + $0xc0] sm:$0xff]
    %v7306 = vld [vmem:[#allocation3 + $0xc8] sm:$0xff]
    %v7307 = vld [vmem:[#allocation3 + $0xe0] sm:$0xff]
    %v7308 = vld [vmem:[#allocation3 + $0xe8] sm:$0xff]
    %v7309 = vld [vmem:[#allocation3 + $0x100] sm:$0xff]
    %v7310 = vld [vmem:[#allocation3 + $0x108] sm:$0xff]
    %v7311 = vld [vmem:[#allocation3 + $0x120] sm:$0xff]
    %v7312 = vld [vmem:[#allocation3 + $0x128] sm:$0xff]
    %v7313 = vld [vmem:[#allocation3 + $0x140] sm:$0xff]
    %v7314 = vld [vmem:[#allocation3 + $0x148] sm:$0xff]
    %v7315 = vld [vmem:[#allocation3 + $0x160] sm:$0xff]
    %v7316 = vld [vmem:[#allocation3 + $0x168] sm:$0xff]
    %v7317 = vld [vmem:[#allocation3 + $0x180] sm:$0xff]
    %v7318 = vld [vmem:[#allocation3 + $0x188] sm:$0xff]
    %v7319 = vld [vmem:[#allocation3 + $0x1a0] sm:$0xff]
    %v7320 = vld [vmem:[#allocation3 + $0x1a8] sm:$0xff]
    %v7321 = vld [vmem:[#allocation3 + $0x1c0] sm:$0xff]
    %v7322 = vld [vmem:[#allocation3 + $0x1c8] sm:$0xff]
    %v7323 = vld [vmem:[#allocation3 + $0x1e0] sm:$0xff]
    %v7324 = vld [vmem:[#allocation3 + $0x1e8] sm:$0xff]
    %v7325 = vld [vmem:[#allocation3 + $0x200] sm:$0xff]
    %v7326 = vld [vmem:[#allocation3 + $0x208] sm:$0xff]
    %v7327 = vld [vmem:[#allocation3 + $0x220] sm:$0xff]
    %v7328 = vld [vmem:[#allocation3 + $0x228] sm:$0xff]
    %v7329 = vld [vmem:[#allocation3 + $0x240] sm:$0xff]
    %v7330 = vld [vmem:[#allocation3 + $0x248] sm:$0xff]
    %v7331 = vld [vmem:[#allocation3 + $0x260] sm:$0xff]
    %v7332 = vld [vmem:[#allocation3 + $0x268] sm:$0xff]
    %v7333 = vld [vmem:[#allocation3 + $0x280] sm:$0xff]
    %v7334 = vld [vmem:[#allocation3 + $0x288] sm:$0xff]
    %v7335 = vld [vmem:[#allocation3 + $0x2a0] sm:$0xff]
    %v7336 = vld [vmem:[#allocation3 + $0x2a8] sm:$0xff]
    %v7337 = vld [vmem:[#allocation3 + $0x2c0] sm:$0xff]
    %v7338 = vld [vmem:[#allocation3 + $0x2c8] sm:$0xff]
    %v7339 = vld [vmem:[#allocation3 + $0x2e0] sm:$0xff]
    %v7340 = vld [vmem:[#allocation3 + $0x2e8] sm:$0xff]
    %s7341 = scalar_lea.vmem [#allocation3], 16
    %v7342 = vld [vmem:[%s7341] sm:$0xff]
    %v7343 = vld [vmem:[%s7341 + $0x8] sm:$0xff]
    %v7344 = vld [vmem:[%s7341 + $0x20] sm:$0xff]
    %v7345 = vld [vmem:[%s7341 + $0x28] sm:$0xff]
    %v7346 = vld [vmem:[%s7341 + $0x40] sm:$0xff]
    %v7347 = vld [vmem:[%s7341 + $0x48] sm:$0xff]
    %v7348 = vld [vmem:[%s7341 + $0x60] sm:$0xff]
    %v7349 = vld [vmem:[%s7341 + $0x68] sm:$0xff]
    %v7350 = vld [vmem:[%s7341 + $0x80] sm:$0xff]
    %v7351 = vld [vmem:[%s7341 + $0x88] sm:$0xff]
    %v7352 = vld [vmem:[%s7341 + $0xa0] sm:$0xff]
    %v7353 = vld [vmem:[%s7341 + $0xa8] sm:$0xff]
    %v7354 = vld [vmem:[%s7341 + $0xc0] sm:$0xff]
    %v7355 = vld [vmem:[%s7341 + $0xc8] sm:$0xff]
    %v7356 = vld [vmem:[%s7341 + $0xe0] sm:$0xff]
    %v7357 = vld [vmem:[%s7341 + $0xe8] sm:$0xff]
    %v7358 = vld [vmem:[%s7341 + $0x100] sm:$0xff]
    %v7359 = vld [vmem:[%s7341 + $0x108] sm:$0xff]
    %v7360 = vld [vmem:[%s7341 + $0x120] sm:$0xff]
    %v7361 = vld [vmem:[%s7341 + $0x128] sm:$0xff]
    %v7362 = vld [vmem:[%s7341 + $0x140] sm:$0xff]
    %v7363 = vld [vmem:[%s7341 + $0x148] sm:$0xff]
    %v7364 = vld [vmem:[%s7341 + $0x160] sm:$0xff]
    %v7365 = vld [vmem:[%s7341 + $0x168] sm:$0xff]
    %v7366 = vld [vmem:[%s7341 + $0x180] sm:$0xff]
    %v7367 = vld [vmem:[%s7341 + $0x188] sm:$0xff]
    %v7368 = vld [vmem:[%s7341 + $0x1a0] sm:$0xff]
    %v7369 = vld [vmem:[%s7341 + $0x1a8] sm:$0xff]
    %v7370 = vld [vmem:[%s7341 + $0x1c0] sm:$0xff]
    %v7371 = vld [vmem:[%s7341 + $0x1c8] sm:$0xff]
    %v7372 = vld [vmem:[%s7341 + $0x1e0] sm:$0xff]
    %v7373 = vld [vmem:[%s7341 + $0x1e8] sm:$0xff]
    %v7374 = vld [vmem:[%s7341 + $0x200] sm:$0xff]
    %v7375 = vld [vmem:[%s7341 + $0x208] sm:$0xff]
    %v7376 = vld [vmem:[%s7341 + $0x220] sm:$0xff]
    %v7377 = vld [vmem:[%s7341 + $0x228] sm:$0xff]
    %v7378 = vld [vmem:[%s7341 + $0x240] sm:$0xff]
    %v7379 = vld [vmem:[%s7341 + $0x248] sm:$0xff]
    %v7380 = vld [vmem:[%s7341 + $0x260] sm:$0xff]
    %v7381 = vld [vmem:[%s7341 + $0x268] sm:$0xff]
    %v7382 = vld [vmem:[%s7341 + $0x280] sm:$0xff]
    %v7383 = vld [vmem:[%s7341 + $0x288] sm:$0xff]
    %v7384 = vld [vmem:[%s7341 + $0x2a0] sm:$0xff]
    %v7385 = vld [vmem:[%s7341 + $0x2a8] sm:$0xff]
    %v7386 = vld [vmem:[%s7341 + $0x2c0] sm:$0xff]
    %v7387 = vld [vmem:[%s7341 + $0x2c8] sm:$0xff]
    %v7388 = vld [vmem:[%s7341 + $0x2e0] sm:$0xff]
    %v7389 = vld [vmem:[%s7341 + $0x2e8] sm:$0xff]
    %v7390 = vmax.f32 %v7293, %v7342
    %v7391 = vmax.f32 %v7294, %v7343
    %v7392 = vmax.f32 %v7295, %v7344
    %v7393 = vmax.f32 %v7296, %v7345
    %v7394 = vmax.f32 %v7297, %v7346
    %v7395 = vmax.f32 %v7298, %v7347
    %v7396 = vmax.f32 %v7299, %v7348
    %v7397 = vmax.f32 %v7300, %v7349
    %v7398 = vmax.f32 %v7301, %v7350
    %v7399 = vmax.f32 %v7302, %v7351
    %v7400 = vmax.f32 %v7303, %v7352
    %v7401 = vmax.f32 %v7304, %v7353
    %v7402 = vmax.f32 %v7305, %v7354
    %v7403 = vmax.f32 %v7306, %v7355
    %v7404 = vmax.f32 %v7307, %v7356
    %v7405 = vmax.f32 %v7308, %v7357
    %v7406 = vmax.f32 %v7309, %v7358
    %v7407 = vmax.f32 %v7310, %v7359
    %v7408 = vmax.f32 %v7311, %v7360
    %v7409 = vmax.f32 %v7312, %v7361
    %v7410 = vmax.f32 %v7313, %v7362
    %v7411 = vmax.f32 %v7314, %v7363
    %v7412 = vmax.f32 %v7315, %v7364
    %v7413 = vmax.f32 %v7316, %v7365
    %v7414 = vmax.f32 %v7317, %v7366
    %v7415 = vmax.f32 %v7318, %v7367
    %v7416 = vmax.f32 %v7319, %v7368
    %v7417 = vmax.f32 %v7320, %v7369
    %v7418 = vmax.f32 %v7321, %v7370
    %v7419 = vmax.f32 %v7322, %v7371
    %v7420 = vmax.f32 %v7323, %v7372
    %v7421 = vmax.f32 %v7324, %v7373
    %v7422 = vmax.f32 %v7325, %v7374
    %v7423 = vmax.f32 %v7326, %v7375
    %v7424 = vmax.f32 %v7327, %v7376
    %v7425 = vmax.f32 %v7328, %v7377
    %v7426 = vmax.f32 %v7329, %v7378
    %v7427 = vmax.f32 %v7330, %v7379
    %v7428 = vmax.f32 %v7331, %v7380
    %v7429 = vmax.f32 %v7332, %v7381
    %v7430 = vmax.f32 %v7333, %v7382
    %v7431 = vmax.f32 %v7334, %v7383
    %v7432 = vmax.f32 %v7335, %v7384
    %v7433 = vmax.f32 %v7336, %v7385
    %v7434 = vmax.f32 %v7337, %v7386
    %v7435 = vmax.f32 %v7338, %v7387
    %v7436 = vmax.f32 %v7339, %v7388
    %v7437 = vmax.f32 %v7340, %v7389
    %v7438 = vld [vmem:[#allocation12] sm:$0xff]
    %v7439 = vld [vmem:[#allocation12 + $0x8] sm:$0xff]
    %v7440 = vld [vmem:[#allocation12 + $0x10] sm:$0xff]
    %v7441 = vld [vmem:[#allocation12 + $0x18] sm:$0xff]
    %v7442 = vld [vmem:[#allocation12 + $0x20] sm:$0xff]
    %v7443 = vld [vmem:[#allocation12 + $0x28] sm:$0xff]
    %v7444 = vld [vmem:[#allocation12 + $0x30] sm:$0xff]
    %v7445 = vld [vmem:[#allocation12 + $0x38] sm:$0xff]
    %v7447 = vsel %vm5244, %v7390, 0
    %v7450 = vsel %vm5244, %v7391, 0
    %v7453 = vsel %vm5244, %v7392, 0
    %v7456 = vsel %vm5244, %v7393, 0
    %v7459 = vsel %vm5244, %v7394, 0
    %v7462 = vsel %vm5244, %v7395, 0
    %v7465 = vsel %vm5244, %v7396, 0
    %v7468 = vsel %vm5244, %v7397, 0
    %v7471 = vsel %vm5244, %v7398, 0
    %v7474 = vsel %vm5244, %v7399, 0
    %v7477 = vsel %vm5244, %v7400, 0
    %v7480 = vsel %vm5244, %v7401, 0
    %v7483 = vsel %vm5244, %v7402, 0
    %v7486 = vsel %vm5244, %v7403, 0
    %v7489 = vsel %vm5244, %v7404, 0
    %v7492 = vsel %vm5244, %v7405, 0
    %v7495 = vsel %vm5244, %v7406, 0
    %v7498 = vsel %vm5244, %v7407, 0
    %v7501 = vsel %vm5244, %v7408, 0
    %v7504 = vsel %vm5244, %v7409, 0
    %v7507 = vsel %vm5244, %v7410, 0
    %v7510 = vsel %vm5244, %v7411, 0
    %v7513 = vsel %vm5244, %v7412, 0
    %v7516 = vsel %vm5244, %v7413, 0
    %v7519 = vsel %vm5244, %v7414, 0
    %v7522 = vsel %vm5244, %v7415, 0
    %v7525 = vsel %vm5244, %v7416, 0
    %v7528 = vsel %vm5244, %v7417, 0
    %v7531 = vsel %vm5244, %v7418, 0
    %v7534 = vsel %vm5244, %v7419, 0
    %v7537 = vsel %vm5244, %v7420, 0
    %v7540 = vsel %vm5244, %v7421, 0
    %v7543 = vsel %vm5244, %v7422, 0
    %v7546 = vsel %vm5244, %v7423, 0
    %v7549 = vsel %vm5244, %v7424, 0
    %v7552 = vsel %vm5244, %v7425, 0
    %v7555 = vsel %vm5244, %v7426, 0
    %v7558 = vsel %vm5244, %v7427, 0
    %v7561 = vsel %vm5244, %v7428, 0
    %v7564 = vsel %vm5244, %v7429, 0
    %v7567 = vsel %vm5244, %v7430, 0
    %v7570 = vsel %vm5244, %v7431, 0
    %v7573 = vsel %vm5244, %v7432, 0
    %v7576 = vsel %vm5244, %v7433, 0
    %v7579 = vsel %vm5244, %v7434, 0
    %v7582 = vsel %vm5244, %v7435, 0
    %v7585 = vsel %vm5244, %v7436, 0
    %v7588 = vsel %vm5244, %v7437, 0
    %7590 = vmatprep.subr.mxu0 0.0
    %7591 = vmatpush1.msra.mxu0 0.0
    %7592 = vmatprep.subr.mxu0 0.0
    %7593 = vmatpush1.msra.mxu0 0.0
    %7594 = vmatprep.subr.mxu0 0.0
    %7595 = vmatpush1.msra.mxu0 0.0
    %7596 = vmatprep.subr.mxu0 0.0
    %7597 = vmatpush1.msra.mxu0 0.0
    %7598 = vmatprep.subr.mxu0 0.0
    %7599 = vmatpush1.msra.mxu0 0.0
    %7600 = vmatprep.subr.mxu0 0.0
    %7601 = vmatpush1.msra.mxu0 0.0
    %7602 = vmatprep.subr.mxu0 0.0
    %7603 = vmatpush1.msra.mxu0 0.0
    %7604 = vmatprep.subr.mxu0 0.0
    %7605 = vmatpush1.msra.mxu0 0.0
    %7606 = vmatprep.subr.mxu0 0.0
    %7607 = vmatpush1.msra.mxu0 0.0
    %7608 = vmatprep.subr.mxu0 0.0
    %7609 = vmatpush1.msra.mxu0 0.0
    %7610 = vmatprep.subr.mxu0 0.0
    %7611 = vmatpush1.msra.mxu0 0.0
    %7612 = vmatprep.subr.mxu0 0.0
    %7613 = vmatpush1.msra.mxu0 0.0
    %7614 = vmatprep.subr.mxu0 %v7445
    %7615 = vmatpush1.msra.mxu0 %v7444
    %7616 = vmatprep.subr.mxu0 %v7443
    %7617 = vmatpush1.msra.mxu0 %v7442
    %7618 = vmatprep.subr.mxu0 %v7441
    %7619 = vmatpush1.msra.mxu0 %v7440
    %7620 = vmatprep.subr.mxu0 %v7439
    %7621 = vmatpush1.msra.mxu0 %v7438
    %7622 = vmatprep.subr.mxu0 0.0
    %7623 = vmatpush2.msra.mxu0 0.0
    %7624 = vmatprep.subr.mxu0 0.0
    %7625 = vmatpush2.msra.mxu0 0.0
    %7626 = vmatprep.subr.mxu0 0.0
    %7627 = vmatpush2.msra.mxu0 0.0
    %7628 = vmatprep.subr.mxu0 0.0
    %7629 = vmatpush2.msra.mxu0 0.0
    %7630 = vmatprep.subr.mxu0 0.0
    %7631 = vmatpush2.msra.mxu0 0.0
    %7632 = vmatprep.subr.mxu0 0.0
    %7633 = vmatpush2.msra.mxu0 0.0
    %7634 = vmatprep.subr.mxu0 0.0
    %7635 = vmatpush2.msra.mxu0 0.0
    %7636 = vmatprep.subr.mxu0 0.0
    %7637 = vmatpush2.msra.mxu0 0.0
    %7638 = vmatprep.subr.mxu0 0.0
    %7639 = vmatpush2.msra.mxu0 0.0
    %7640 = vmatprep.subr.mxu0 0.0
    %7641 = vmatpush2.msra.mxu0 0.0
    %7642 = vmatprep.subr.mxu0 0.0
    %7643 = vmatpush2.msra.mxu0 0.0
    %7644 = vmatprep.subr.mxu0 0.0
    %7645 = vmatpush2.msra.mxu0 0.0
    %7646 = vmatprep.subr.mxu0 0.0
    %7647 = vmatpush2.msra.mxu0 0.0
    %7648 = vmatprep.subr.mxu0 0.0
    %7649 = vmatpush2.msra.mxu0 0.0
    %7650 = vmatprep.subr.mxu0 0.0
    %7651 = vmatpush2.msra.mxu0 0.0
    %7652 = vmatprep.subr.mxu0 0.0
    %7653 = vmatpush2.msra.mxu0 0.0
    %7654 = vmatprep.mubr.f32.mxu0 0.0
    %7655 = vmatmul.mubr.f32.gmra.mxu0 %v7447
    %v7656 = vpop.f32.mrf.mxu0
    %v7657 = vadd.f32 0.0, %v7656
    %v7658 = vpop.f32.mrf.mxu0
    %v7659 = vadd.f32 0.0, %v7658
    %7660 = vmatprep.mubr.f32.mxu0 0.0
    %7661 = vmatmul.mubr.f32.gmra.mxu0 %v7450
    %v7662 = vpop.f32.mrf.mxu0
    %v7663 = vadd.f32 0.0, %v7662
    %v7664 = vpop.f32.mrf.mxu0
    %v7665 = vadd.f32 0.0, %v7664
    %7666 = vmatprep.mubr.f32.mxu0 0.0
    %7667 = vmatmul.mubr.f32.gmra.mxu0 %v7453
    %v7668 = vpop.f32.mrf.mxu0
    %v7669 = vadd.f32 0.0, %v7668
    %v7670 = vpop.f32.mrf.mxu0
    %v7671 = vadd.f32 0.0, %v7670
    %7672 = vmatprep.mubr.f32.mxu0 0.0
    %7673 = vmatmul.mubr.f32.gmra.mxu0 %v7456
    %v7674 = vpop.f32.mrf.mxu0
    %v7675 = vadd.f32 0.0, %v7674
    %v7676 = vpop.f32.mrf.mxu0
    %v7677 = vadd.f32 0.0, %v7676
    %7678 = vmatprep.mubr.f32.mxu0 0.0
    %7679 = vmatmul.mubr.f32.gmra.mxu0 %v7459
    %v7680 = vpop.f32.mrf.mxu0
    %v7681 = vadd.f32 0.0, %v7680
    %v7682 = vpop.f32.mrf.mxu0
    %v7683 = vadd.f32 0.0, %v7682
    %7684 = vmatprep.mubr.f32.mxu0 0.0
    %7685 = vmatmul.mubr.f32.gmra.mxu0 %v7462
    %v7686 = vpop.f32.mrf.mxu0
    %v7687 = vadd.f32 0.0, %v7686
    %v7688 = vpop.f32.mrf.mxu0
    %v7689 = vadd.f32 0.0, %v7688
    %7690 = vmatprep.mubr.f32.mxu0 0.0
    %7691 = vmatmul.mubr.f32.gmra.mxu0 %v7465
    %v7692 = vpop.f32.mrf.mxu0
    %v7693 = vadd.f32 0.0, %v7692
    %v7694 = vpop.f32.mrf.mxu0
    %v7695 = vadd.f32 0.0, %v7694
    %7696 = vmatprep.mubr.f32.mxu0 0.0
    %7697 = vmatmul.mubr.f32.gmra.mxu0 %v7468
    %v7698 = vpop.f32.mrf.mxu0
    %v7699 = vadd.f32 0.0, %v7698
    %v7700 = vpop.f32.mrf.mxu0
    %v7701 = vadd.f32 0.0, %v7700
    %7702 = vmatprep.mubr.f32.mxu0 0.0
    %7703 = vmatmul.mubr.f32.gmra.mxu0 %v7471
    %v7704 = vpop.f32.mrf.mxu0
    %v7705 = vadd.f32 0.0, %v7704
    %v7706 = vpop.f32.mrf.mxu0
    %v7707 = vadd.f32 0.0, %v7706
    %7708 = vmatprep.mubr.f32.mxu0 0.0
    %7709 = vmatmul.mubr.f32.gmra.mxu0 %v7474
    %v7710 = vpop.f32.mrf.mxu0
    %v7711 = vadd.f32 0.0, %v7710
    %v7712 = vpop.f32.mrf.mxu0
    %v7713 = vadd.f32 0.0, %v7712
    %7714 = vmatprep.mubr.f32.mxu0 0.0
    %7715 = vmatmul.mubr.f32.gmra.mxu0 %v7477
    %v7716 = vpop.f32.mrf.mxu0
    %v7717 = vadd.f32 0.0, %v7716
    %v7718 = vpop.f32.mrf.mxu0
    %v7719 = vadd.f32 0.0, %v7718
    %7720 = vmatprep.mubr.f32.mxu0 0.0
    %7721 = vmatmul.mubr.f32.gmra.mxu0 %v7480
    %v7722 = vpop.f32.mrf.mxu0
    %v7723 = vadd.f32 0.0, %v7722
    %v7724 = vpop.f32.mrf.mxu0
    %v7725 = vadd.f32 0.0, %v7724
    %7726 = vmatprep.mubr.f32.mxu0 0.0
    %7727 = vmatmul.mubr.f32.gmra.mxu0 %v7483
    %v7728 = vpop.f32.mrf.mxu0
    %v7729 = vadd.f32 0.0, %v7728
    %v7730 = vpop.f32.mrf.mxu0
    %v7731 = vadd.f32 0.0, %v7730
    %7732 = vmatprep.mubr.f32.mxu0 0.0
    %7733 = vmatmul.mubr.f32.gmra.mxu0 %v7486
    %v7734 = vpop.f32.mrf.mxu0
    %v7735 = vadd.f32 0.0, %v7734
    %v7736 = vpop.f32.mrf.mxu0
    %v7737 = vadd.f32 0.0, %v7736
    %7738 = vmatprep.mubr.f32.mxu0 0.0
    %7739 = vmatmul.mubr.f32.gmra.mxu0 %v7489
    %v7740 = vpop.f32.mrf.mxu0
    %v7741 = vadd.f32 0.0, %v7740
    %v7742 = vpop.f32.mrf.mxu0
    %v7743 = vadd.f32 0.0, %v7742
    %7744 = vmatprep.mubr.f32.mxu0 0.0
    %7745 = vmatmul.mubr.f32.gmra.mxu0 %v7492
    %v7746 = vpop.f32.mrf.mxu0
    %v7747 = vadd.f32 0.0, %v7746
    %v7748 = vpop.f32.mrf.mxu0
    %v7749 = vadd.f32 0.0, %v7748
    %7750 = vmatprep.mubr.f32.mxu0 0.0
    %7751 = vmatmul.mubr.f32.gmra.mxu0 %v7495
    %v7752 = vpop.f32.mrf.mxu0
    %v7753 = vadd.f32 0.0, %v7752
    %v7754 = vpop.f32.mrf.mxu0
    %v7755 = vadd.f32 0.0, %v7754
    %7756 = vmatprep.mubr.f32.mxu0 0.0
    %7757 = vmatmul.mubr.f32.gmra.mxu0 %v7498
    %v7758 = vpop.f32.mrf.mxu0
    %v7759 = vadd.f32 0.0, %v7758
    %v7760 = vpop.f32.mrf.mxu0
    %v7761 = vadd.f32 0.0, %v7760
    %7762 = vmatprep.mubr.f32.mxu0 0.0
    %7763 = vmatmul.mubr.f32.gmra.mxu0 %v7501
    %v7764 = vpop.f32.mrf.mxu0
    %v7765 = vadd.f32 0.0, %v7764
    %v7766 = vpop.f32.mrf.mxu0
    %v7767 = vadd.f32 0.0, %v7766
    %7768 = vmatprep.mubr.f32.mxu0 0.0
    %7769 = vmatmul.mubr.f32.gmra.mxu0 %v7504
    %v7770 = vpop.f32.mrf.mxu0
    %v7771 = vadd.f32 0.0, %v7770
    %v7772 = vpop.f32.mrf.mxu0
    %v7773 = vadd.f32 0.0, %v7772
    %7774 = vmatprep.mubr.f32.mxu0 0.0
    %7775 = vmatmul.mubr.f32.gmra.mxu0 %v7507
    %v7776 = vpop.f32.mrf.mxu0
    %v7777 = vadd.f32 0.0, %v7776
    %v7778 = vpop.f32.mrf.mxu0
    %v7779 = vadd.f32 0.0, %v7778
    %7780 = vmatprep.mubr.f32.mxu0 0.0
    %7781 = vmatmul.mubr.f32.gmra.mxu0 %v7510
    %v7782 = vpop.f32.mrf.mxu0
    %v7783 = vadd.f32 0.0, %v7782
    %v7784 = vpop.f32.mrf.mxu0
    %v7785 = vadd.f32 0.0, %v7784
    %7786 = vmatprep.mubr.f32.mxu0 0.0
    %7787 = vmatmul.mubr.f32.gmra.mxu0 %v7513
    %v7788 = vpop.f32.mrf.mxu0
    %v7789 = vadd.f32 0.0, %v7788
    %v7790 = vpop.f32.mrf.mxu0
    %v7791 = vadd.f32 0.0, %v7790
    %7792 = vmatprep.mubr.f32.mxu0 0.0
    %7793 = vmatmul.mubr.f32.gmra.mxu0 %v7516
    %v7794 = vpop.f32.mrf.mxu0
    %v7795 = vadd.f32 0.0, %v7794
    %v7796 = vpop.f32.mrf.mxu0
    %v7797 = vadd.f32 0.0, %v7796
    %7798 = vmatprep.mubr.f32.mxu0 0.0
    %7799 = vmatmul.mubr.f32.gmra.mxu0 %v7519
    %v7800 = vpop.f32.mrf.mxu0
    %v7801 = vadd.f32 0.0, %v7800
    %v7802 = vpop.f32.mrf.mxu0
    %v7803 = vadd.f32 0.0, %v7802
    %7804 = vmatprep.mubr.f32.mxu0 0.0
    %7805 = vmatmul.mubr.f32.gmra.mxu0 %v7522
    %v7806 = vpop.f32.mrf.mxu0
    %v7807 = vadd.f32 0.0, %v7806
    %v7808 = vpop.f32.mrf.mxu0
    %v7809 = vadd.f32 0.0, %v7808
    %7810 = vmatprep.mubr.f32.mxu0 0.0
    %7811 = vmatmul.mubr.f32.gmra.mxu0 %v7525
    %v7812 = vpop.f32.mrf.mxu0
    %v7813 = vadd.f32 0.0, %v7812
    %v7814 = vpop.f32.mrf.mxu0
    %v7815 = vadd.f32 0.0, %v7814
    %7816 = vmatprep.mubr.f32.mxu0 0.0
    %7817 = vmatmul.mubr.f32.gmra.mxu0 %v7528
    %v7818 = vpop.f32.mrf.mxu0
    %v7819 = vadd.f32 0.0, %v7818
    %v7820 = vpop.f32.mrf.mxu0
    %v7821 = vadd.f32 0.0, %v7820
    %7822 = vmatprep.mubr.f32.mxu0 0.0
    %7823 = vmatmul.mubr.f32.gmra.mxu0 %v7531
    %v7824 = vpop.f32.mrf.mxu0
    %v7825 = vadd.f32 0.0, %v7824
    %v7826 = vpop.f32.mrf.mxu0
    %v7827 = vadd.f32 0.0, %v7826
    %7828 = vmatprep.mubr.f32.mxu0 0.0
    %7829 = vmatmul.mubr.f32.gmra.mxu0 %v7534
    %v7830 = vpop.f32.mrf.mxu0
    %v7831 = vadd.f32 0.0, %v7830
    %v7832 = vpop.f32.mrf.mxu0
    %v7833 = vadd.f32 0.0, %v7832
    %7834 = vmatprep.mubr.f32.mxu0 0.0
    %7835 = vmatmul.mubr.f32.gmra.mxu0 %v7537
    %v7836 = vpop.f32.mrf.mxu0
    %v7837 = vadd.f32 0.0, %v7836
    %v7838 = vpop.f32.mrf.mxu0
    %v7839 = vadd.f32 0.0, %v7838
    %7840 = vmatprep.mubr.f32.mxu0 0.0
    %7841 = vmatmul.mubr.f32.gmra.mxu0 %v7540
    %v7842 = vpop.f32.mrf.mxu0
    %v7843 = vadd.f32 0.0, %v7842
    %v7844 = vpop.f32.mrf.mxu0
    %v7845 = vadd.f32 0.0, %v7844
    %7846 = vmatprep.mubr.f32.mxu0 0.0
    %7847 = vmatmul.mubr.f32.gmra.mxu0 %v7543
    %v7848 = vpop.f32.mrf.mxu0
    %v7849 = vadd.f32 0.0, %v7848
    %v7850 = vpop.f32.mrf.mxu0
    %v7851 = vadd.f32 0.0, %v7850
    %7852 = vmatprep.mubr.f32.mxu0 0.0
    %7853 = vmatmul.mubr.f32.gmra.mxu0 %v7546
    %v7854 = vpop.f32.mrf.mxu0
    %v7855 = vadd.f32 0.0, %v7854
    %v7856 = vpop.f32.mrf.mxu0
    %v7857 = vadd.f32 0.0, %v7856
    %7858 = vmatprep.mubr.f32.mxu0 0.0
    %7859 = vmatmul.mubr.f32.gmra.mxu0 %v7549
    %v7860 = vpop.f32.mrf.mxu0
    %v7861 = vadd.f32 0.0, %v7860
    %v7862 = vpop.f32.mrf.mxu0
    %v7863 = vadd.f32 0.0, %v7862
    %7864 = vmatprep.mubr.f32.mxu0 0.0
    %7865 = vmatmul.mubr.f32.gmra.mxu0 %v7552
    %v7866 = vpop.f32.mrf.mxu0
    %v7867 = vadd.f32 0.0, %v7866
    %v7868 = vpop.f32.mrf.mxu0
    %v7869 = vadd.f32 0.0, %v7868
    %7870 = vmatprep.mubr.f32.mxu0 0.0
    %7871 = vmatmul.mubr.f32.gmra.mxu0 %v7555
    %v7872 = vpop.f32.mrf.mxu0
    %v7873 = vadd.f32 0.0, %v7872
    %v7874 = vpop.f32.mrf.mxu0
    %v7875 = vadd.f32 0.0, %v7874
    %7876 = vmatprep.mubr.f32.mxu0 0.0
    %7877 = vmatmul.mubr.f32.gmra.mxu0 %v7558
    %v7878 = vpop.f32.mrf.mxu0
    %v7879 = vadd.f32 0.0, %v7878
    %v7880 = vpop.f32.mrf.mxu0
    %v7881 = vadd.f32 0.0, %v7880
    %7882 = vmatprep.mubr.f32.mxu0 0.0
    %7883 = vmatmul.mubr.f32.gmra.mxu0 %v7561
    %v7884 = vpop.f32.mrf.mxu0
    %v7885 = vadd.f32 0.0, %v7884
    %v7886 = vpop.f32.mrf.mxu0
    %v7887 = vadd.f32 0.0, %v7886
    %7888 = vmatprep.mubr.f32.mxu0 0.0
    %7889 = vmatmul.mubr.f32.gmra.mxu0 %v7564
    %v7890 = vpop.f32.mrf.mxu0
    %v7891 = vadd.f32 0.0, %v7890
    %v7892 = vpop.f32.mrf.mxu0
    %v7893 = vadd.f32 0.0, %v7892
    %7894 = vmatprep.mubr.f32.mxu0 0.0
    %7895 = vmatmul.mubr.f32.gmra.mxu0 %v7567
    %v7896 = vpop.f32.mrf.mxu0
    %v7897 = vadd.f32 0.0, %v7896
    %v7898 = vpop.f32.mrf.mxu0
    %v7899 = vadd.f32 0.0, %v7898
    %7900 = vmatprep.mubr.f32.mxu0 0.0
    %7901 = vmatmul.mubr.f32.gmra.mxu0 %v7570
    %v7902 = vpop.f32.mrf.mxu0
    %v7903 = vadd.f32 0.0, %v7902
    %v7904 = vpop.f32.mrf.mxu0
    %v7905 = vadd.f32 0.0, %v7904
    %7906 = vmatprep.mubr.f32.mxu0 0.0
    %7907 = vmatmul.mubr.f32.gmra.mxu0 %v7573
    %v7908 = vpop.f32.mrf.mxu0
    %v7909 = vadd.f32 0.0, %v7908
    %v7910 = vpop.f32.mrf.mxu0
    %v7911 = vadd.f32 0.0, %v7910
    %7912 = vmatprep.mubr.f32.mxu0 0.0
    %7913 = vmatmul.mubr.f32.gmra.mxu0 %v7576
    %v7914 = vpop.f32.mrf.mxu0
    %v7915 = vadd.f32 0.0, %v7914
    %v7916 = vpop.f32.mrf.mxu0
    %v7917 = vadd.f32 0.0, %v7916
    %7918 = vmatprep.mubr.f32.mxu0 0.0
    %7919 = vmatmul.mubr.f32.gmra.mxu0 %v7579
    %v7920 = vpop.f32.mrf.mxu0
    %v7921 = vadd.f32 0.0, %v7920
    %v7922 = vpop.f32.mrf.mxu0
    %v7923 = vadd.f32 0.0, %v7922
    %7924 = vmatprep.mubr.f32.mxu0 0.0
    %7925 = vmatmul.mubr.f32.gmra.mxu0 %v7582
    %v7926 = vpop.f32.mrf.mxu0
    %v7927 = vadd.f32 0.0, %v7926
    %v7928 = vpop.f32.mrf.mxu0
    %v7929 = vadd.f32 0.0, %v7928
    %7930 = vmatprep.mubr.f32.mxu0 0.0
    %7931 = vmatmul.mubr.f32.gmra.mxu0 %v7585
    %v7932 = vpop.f32.mrf.mxu0
    %v7933 = vadd.f32 0.0, %v7932
    %v7934 = vpop.f32.mrf.mxu0
    %v7935 = vadd.f32 0.0, %v7934
    %7936 = vmatprep.mubr.f32.mxu0 0.0
    %7937 = vmatmul.mubr.f32.gmra.mxu0 %v7588
    %v7938 = vpop.f32.mrf.mxu0
    %v7939 = vadd.f32 0.0, %v7938
    %v7940 = vpop.f32.mrf.mxu0
    %v7941 = vadd.f32 0.0, %v7940
    %7942 = vdwg.mxu0
    %7943 = vst [vmem:[#allocation4] sm:$0xff] 0.0
    %vm7944 = vcmask 523264
    %7945 = vst.msk [vmem:[#allocation4 + $0x8] sm:$0xff] %vm7944, 0.0
    %7946 = vst [vmem:[#allocation4 + $0x10] sm:$0xff] 0.0
    %7947 = vst.msk [vmem:[#allocation4 + $0x18] sm:$0xff] %vm7944, 0.0
    %7948 = vst [vmem:[#allocation4 + $0x20] sm:$0xff] %v7657
    %7949 = vst.msk [vmem:[#allocation4 + $0x28] sm:$0xff] %vm7944, %v7659
    %7950 = vst [vmem:[#allocation4 + $0x30] sm:$0xff] %v7663
    %7951 = vst.msk [vmem:[#allocation4 + $0x38] sm:$0xff] %vm7944, %v7665
    %7952 = vst [vmem:[#allocation4 + $0x40] sm:$0xff] %v7669
    %7953 = vst.msk [vmem:[#allocation4 + $0x48] sm:$0xff] %vm7944, %v7671
    %7954 = vst [vmem:[#allocation4 + $0x50] sm:$0xff] %v7675
    %7955 = vst.msk [vmem:[#allocation4 + $0x58] sm:$0xff] %vm7944, %v7677
    %7956 = vst [vmem:[#allocation4 + $0x60] sm:$0xff] %v7681
    %7957 = vst.msk [vmem:[#allocation4 + $0x68] sm:$0xff] %vm7944, %v7683
    %7958 = vst [vmem:[#allocation4 + $0x70] sm:$0xff] %v7687
    %7959 = vst.msk [vmem:[#allocation4 + $0x78] sm:$0xff] %vm7944, %v7689
    %7960 = vst [vmem:[#allocation4 + $0x80] sm:$0xff] %v7693
    %7961 = vst.msk [vmem:[#allocation4 + $0x88] sm:$0xff] %vm7944, %v7695
    %7962 = vst [vmem:[#allocation4 + $0x90] sm:$0xff] %v7699
    %7963 = vst.msk [vmem:[#allocation4 + $0x98] sm:$0xff] %vm7944, %v7701
    %7964 = vst [vmem:[#allocation4 + $0xa0] sm:$0xff] %v7705
    %7965 = vst.msk [vmem:[#allocation4 + $0xa8] sm:$0xff] %vm7944, %v7707
    %7966 = vst [vmem:[#allocation4 + $0xb0] sm:$0xff] %v7711
    %7967 = vst.msk [vmem:[#allocation4 + $0xb8] sm:$0xff] %vm7944, %v7713
    %7968 = vst [vmem:[#allocation4 + $0xc0] sm:$0xff] %v7717
    %7969 = vst.msk [vmem:[#allocation4 + $0xc8] sm:$0xff] %vm7944, %v7719
    %7970 = vst [vmem:[#allocation4 + $0xd0] sm:$0xff] %v7723
    %7971 = vst.msk [vmem:[#allocation4 + $0xd8] sm:$0xff] %vm7944, %v7725
    %7972 = vst [vmem:[#allocation4 + $0xe0] sm:$0xff] %v7729
    %7973 = vst.msk [vmem:[#allocation4 + $0xe8] sm:$0xff] %vm7944, %v7731
    %7974 = vst [vmem:[#allocation4 + $0xf0] sm:$0xff] %v7735
    %7975 = vst.msk [vmem:[#allocation4 + $0xf8] sm:$0xff] %vm7944, %v7737
    %7976 = vst [vmem:[#allocation4 + $0x100] sm:$0xff] %v7741
    %7977 = vst.msk [vmem:[#allocation4 + $0x108] sm:$0xff] %vm7944, %v7743
    %7978 = vst [vmem:[#allocation4 + $0x110] sm:$0xff] %v7747
    %7979 = vst.msk [vmem:[#allocation4 + $0x118] sm:$0xff] %vm7944, %v7749
    %7980 = vst [vmem:[#allocation4 + $0x120] sm:$0xff] %v7753
    %7981 = vst.msk [vmem:[#allocation4 + $0x128] sm:$0xff] %vm7944, %v7755
    %7982 = vst [vmem:[#allocation4 + $0x130] sm:$0xff] %v7759
    %7983 = vst.msk [vmem:[#allocation4 + $0x138] sm:$0xff] %vm7944, %v7761
    %7984 = vst [vmem:[#allocation4 + $0x140] sm:$0xff] %v7765
    %7985 = vst.msk [vmem:[#allocation4 + $0x148] sm:$0xff] %vm7944, %v7767
    %7986 = vst [vmem:[#allocation4 + $0x150] sm:$0xff] %v7771
    %7987 = vst.msk [vmem:[#allocation4 + $0x158] sm:$0xff] %vm7944, %v7773
    %7988 = vst [vmem:[#allocation4 + $0x160] sm:$0xff] %v7777
    %7989 = vst.msk [vmem:[#allocation4 + $0x168] sm:$0xff] %vm7944, %v7779
    %7990 = vst [vmem:[#allocation4 + $0x170] sm:$0xff] %v7783
    %7991 = vst.msk [vmem:[#allocation4 + $0x178] sm:$0xff] %vm7944, %v7785
    %7992 = vst [vmem:[#allocation4 + $0x180] sm:$0xff] %v7789
    %7993 = vst.msk [vmem:[#allocation4 + $0x188] sm:$0xff] %vm7944, %v7791
    %7994 = vst [vmem:[#allocation4 + $0x190] sm:$0xff] %v7795
    %7995 = vst.msk [vmem:[#allocation4 + $0x198] sm:$0xff] %vm7944, %v7797
    %7996 = vst [vmem:[#allocation4 + $0x1a0] sm:$0xff] %v7801
    %7997 = vst.msk [vmem:[#allocation4 + $0x1a8] sm:$0xff] %vm7944, %v7803
    %7998 = vst [vmem:[#allocation4 + $0x1b0] sm:$0xff] %v7807
    %7999 = vst.msk [vmem:[#allocation4 + $0x1b8] sm:$0xff] %vm7944, %v7809
    %8000 = vst [vmem:[#allocation4 + $0x1c0] sm:$0xff] %v7813
    %8001 = vst.msk [vmem:[#allocation4 + $0x1c8] sm:$0xff] %vm7944, %v7815
    %8002 = vst [vmem:[#allocation4 + $0x1d0] sm:$0xff] %v7819
    %8003 = vst.msk [vmem:[#allocation4 + $0x1d8] sm:$0xff] %vm7944, %v7821
    %8004 = vst [vmem:[#allocation4 + $0x1e0] sm:$0xff] %v7825
    %8005 = vst.msk [vmem:[#allocation4 + $0x1e8] sm:$0xff] %vm7944, %v7827
    %8006 = vst [vmem:[#allocation4 + $0x1f0] sm:$0xff] %v7831
    %8007 = vst.msk [vmem:[#allocation4 + $0x1f8] sm:$0xff] %vm7944, %v7833
    %8008 = vst [vmem:[#allocation4 + $0x200] sm:$0xff] %v7837
    %8009 = vst.msk [vmem:[#allocation4 + $0x208] sm:$0xff] %vm7944, %v7839
    %8010 = vst [vmem:[#allocation4 + $0x210] sm:$0xff] %v7843
    %8011 = vst.msk [vmem:[#allocation4 + $0x218] sm:$0xff] %vm7944, %v7845
    %8012 = vst [vmem:[#allocation4 + $0x220] sm:$0xff] %v7849
    %8013 = vst.msk [vmem:[#allocation4 + $0x228] sm:$0xff] %vm7944, %v7851
    %8014 = vst [vmem:[#allocation4 + $0x230] sm:$0xff] %v7855
    %8015 = vst.msk [vmem:[#allocation4 + $0x238] sm:$0xff] %vm7944, %v7857
    %8016 = vst [vmem:[#allocation4 + $0x240] sm:$0xff] %v7861
    %8017 = vst.msk [vmem:[#allocation4 + $0x248] sm:$0xff] %vm7944, %v7863
    %8018 = vst [vmem:[#allocation4 + $0x250] sm:$0xff] %v7867
    %8019 = vst.msk [vmem:[#allocation4 + $0x258] sm:$0xff] %vm7944, %v7869
    %8020 = vst [vmem:[#allocation4 + $0x260] sm:$0xff] %v7873
    %8021 = vst.msk [vmem:[#allocation4 + $0x268] sm:$0xff] %vm7944, %v7875
    %8022 = vst [vmem:[#allocation4 + $0x270] sm:$0xff] %v7879
    %8023 = vst.msk [vmem:[#allocation4 + $0x278] sm:$0xff] %vm7944, %v7881
    %8024 = vst [vmem:[#allocation4 + $0x280] sm:$0xff] %v7885
    %8025 = vst.msk [vmem:[#allocation4 + $0x288] sm:$0xff] %vm7944, %v7887
    %8026 = vst [vmem:[#allocation4 + $0x290] sm:$0xff] %v7891
    %8027 = vst.msk [vmem:[#allocation4 + $0x298] sm:$0xff] %vm7944, %v7893
    %8028 = vst [vmem:[#allocation4 + $0x2a0] sm:$0xff] %v7897
    %8029 = vst.msk [vmem:[#allocation4 + $0x2a8] sm:$0xff] %vm7944, %v7899
    %8030 = vst [vmem:[#allocation4 + $0x2b0] sm:$0xff] %v7903
    %8031 = vst.msk [vmem:[#allocation4 + $0x2b8] sm:$0xff] %vm7944, %v7905
    %8032 = vst [vmem:[#allocation4 + $0x2c0] sm:$0xff] %v7909
    %8033 = vst.msk [vmem:[#allocation4 + $0x2c8] sm:$0xff] %vm7944, %v7911
    %8034 = vst [vmem:[#allocation4 + $0x2d0] sm:$0xff] %v7915
    %8035 = vst.msk [vmem:[#allocation4 + $0x2d8] sm:$0xff] %vm7944, %v7917
    %8036 = vst [vmem:[#allocation4 + $0x2e0] sm:$0xff] %v7921
    %8037 = vst.msk [vmem:[#allocation4 + $0x2e8] sm:$0xff] %vm7944, %v7923
    %8038 = vst [vmem:[#allocation4 + $0x2f0] sm:$0xff] %v7927
    %8039 = vst.msk [vmem:[#allocation4 + $0x2f8] sm:$0xff] %vm7944, %v7929
    %8040 = vst [vmem:[#allocation4 + $0x300] sm:$0xff] %v7933
    %8041 = vst.msk [vmem:[#allocation4 + $0x308] sm:$0xff] %vm7944, %v7935
    %8042 = vst [vmem:[#allocation4 + $0x310] sm:$0xff] %v7939
    %8043 = vst.msk [vmem:[#allocation4 + $0x318] sm:$0xff] %vm7944, %v7941
    %8044 = vst [vmem:[#allocation4 + $0x320] sm:$0xff] 0.0
    %8045 = vst.msk [vmem:[#allocation4 + $0x328] sm:$0xff] %vm7944, 0.0
    %8046 = vst [vmem:[#allocation4 + $0x330] sm:$0xff] 0.0
    %8047 = vst.msk [vmem:[#allocation4 + $0x338] sm:$0xff] %vm7944, 0.0
    %v8048 = vld [vmem:[#allocation4] sm:$0xff]
    %v8049 = vld [vmem:[#allocation4 + $0x10] sm:$0xff]
    %v8050 = vld [vmem:[#allocation4 + $0x20] sm:$0xff]
    %v8051 = vld [vmem:[#allocation4 + $0x30] sm:$0xff]
    %v8052 = vld [vmem:[#allocation4 + $0x40] sm:$0xff]
    %v8053 = vld [vmem:[#allocation4 + $0x50] sm:$0xff]
    %v8054 = vld [vmem:[#allocation4 + $0x60] sm:$0xff]
    %v8055 = vld [vmem:[#allocation4 + $0x70] sm:$0xff]
    %v8056 = vld [vmem:[#allocation4 + $0x80] sm:$0xff]
    %v8057 = vld [vmem:[#allocation4 + $0x90] sm:$0xff]
    %v8058 = vld [vmem:[#allocation4 + $0xa0] sm:$0xff]
    %v8059 = vld [vmem:[#allocation4 + $0xb0] sm:$0xff]
    %v8060 = vld [vmem:[#allocation4 + $0xc0] sm:$0xff]
    %v8061 = vld [vmem:[#allocation4 + $0xd0] sm:$0xff]
    %v8062 = vld [vmem:[#allocation4 + $0xe0] sm:$0xff]
    %v8063 = vld [vmem:[#allocation4 + $0xf0] sm:$0xff]
    %v8064 = vld [vmem:[#allocation4 + $0x100] sm:$0xff]
    %v8065 = vld [vmem:[#allocation4 + $0x110] sm:$0xff]
    %v8066 = vld [vmem:[#allocation4 + $0x120] sm:$0xff]
    %v8067 = vld [vmem:[#allocation4 + $0x130] sm:$0xff]
    %v8068 = vld [vmem:[#allocation4 + $0x140] sm:$0xff]
    %v8069 = vld [vmem:[#allocation4 + $0x150] sm:$0xff]
    %v8070 = vld [vmem:[#allocation4 + $0x160] sm:$0xff]
    %v8071 = vld [vmem:[#allocation4 + $0x170] sm:$0xff]
    %v8072 = vld [vmem:[#allocation4 + $0x180] sm:$0xff]
    %v8073 = vld [vmem:[#allocation4 + $0x190] sm:$0xff]
    %v8074 = vld [vmem:[#allocation4 + $0x1a0] sm:$0xff]
    %v8075 = vld [vmem:[#allocation4 + $0x1b0] sm:$0xff]
    %v8076 = vld [vmem:[#allocation4 + $0x1c0] sm:$0xff]
    %v8077 = vld [vmem:[#allocation4 + $0x1d0] sm:$0xff]
    %v8078 = vld [vmem:[#allocation4 + $0x1e0] sm:$0xff]
    %v8079 = vld [vmem:[#allocation4 + $0x1f0] sm:$0xff]
    %v8080 = vld [vmem:[#allocation4 + $0x200] sm:$0xff]
    %v8081 = vld [vmem:[#allocation4 + $0x210] sm:$0xff]
    %v8082 = vld [vmem:[#allocation4 + $0x220] sm:$0xff]
    %v8083 = vld [vmem:[#allocation4 + $0x230] sm:$0xff]
    %v8084 = vld [vmem:[#allocation4 + $0x240] sm:$0xff]
    %v8085 = vld [vmem:[#allocation4 + $0x250] sm:$0xff]
    %v8086 = vld [vmem:[#allocation4 + $0x260] sm:$0xff]
    %v8087 = vld [vmem:[#allocation4 + $0x270] sm:$0xff]
    %v8088 = vld [vmem:[#allocation4 + $0x280] sm:$0xff]
    %v8089 = vld [vmem:[#allocation4 + $0x290] sm:$0xff]
    %v8090 = vld [vmem:[#allocation4 + $0x2a0] sm:$0xff]
    %v8091 = vld [vmem:[#allocation4 + $0x2b0] sm:$0xff]
    %v8092 = vld [vmem:[#allocation4 + $0x2c0] sm:$0xff]
    %v8093 = vld [vmem:[#allocation4 + $0x2d0] sm:$0xff]
    %v8094 = vld [vmem:[#allocation4 + $0x2e0] sm:$0xff]
    %v8095 = vld [vmem:[#allocation4 + $0x2f0] sm:$0xff]
    %v8096 = vld [vmem:[#allocation4 + $0x300] sm:$0xff]
    %v8097 = vld [vmem:[#allocation4 + $0x310] sm:$0xff]
    %8146 = vrot.lane.b32.xlu0 %v8050, 64
    %v8147 = vpop.permute.xlu0 %8146
    %8148 = vrot.lane.b32.xlu0 %v8051, 64
    %v8149 = vpop.permute.xlu0 %8148
    %8150 = vrot.lane.b32.xlu0 %v8052, 64
    %v8151 = vpop.permute.xlu0 %8150
    %8152 = vrot.lane.b32.xlu0 %v8053, 64
    %v8153 = vpop.permute.xlu0 %8152
    %8154 = vrot.lane.b32.xlu0 %v8054, 64
    %v8155 = vpop.permute.xlu0 %8154
    %8156 = vrot.lane.b32.xlu0 %v8055, 64
    %v8157 = vpop.permute.xlu0 %8156
    %8158 = vrot.lane.b32.xlu0 %v8056, 64
    %v8159 = vpop.permute.xlu0 %8158
    %8160 = vrot.lane.b32.xlu0 %v8057, 64
    %v8161 = vpop.permute.xlu0 %8160
    %8162 = vrot.lane.b32.xlu0 %v8058, 64
    %v8163 = vpop.permute.xlu0 %8162
    %8164 = vrot.lane.b32.xlu0 %v8059, 64
    %v8165 = vpop.permute.xlu0 %8164
    %8166 = vrot.lane.b32.xlu0 %v8060, 64
    %v8167 = vpop.permute.xlu0 %8166
    %8168 = vrot.lane.b32.xlu0 %v8061, 64
    %v8169 = vpop.permute.xlu0 %8168
    %8170 = vrot.lane.b32.xlu0 %v8062, 64
    %v8171 = vpop.permute.xlu0 %8170
    %8172 = vrot.lane.b32.xlu0 %v8063, 64
    %v8173 = vpop.permute.xlu0 %8172
    %8174 = vrot.lane.b32.xlu0 %v8064, 64
    %v8175 = vpop.permute.xlu0 %8174
    %8176 = vrot.lane.b32.xlu0 %v8065, 64
    %v8177 = vpop.permute.xlu0 %8176
    %8178 = vrot.lane.b32.xlu0 %v8066, 64
    %v8179 = vpop.permute.xlu0 %8178
    %8180 = vrot.lane.b32.xlu0 %v8067, 64
    %v8181 = vpop.permute.xlu0 %8180
    %8182 = vrot.lane.b32.xlu0 %v8068, 64
    %v8183 = vpop.permute.xlu0 %8182
    %8184 = vrot.lane.b32.xlu0 %v8069, 64
    %v8185 = vpop.permute.xlu0 %8184
    %8186 = vrot.lane.b32.xlu0 %v8070, 64
    %v8187 = vpop.permute.xlu0 %8186
    %8188 = vrot.lane.b32.xlu0 %v8071, 64
    %v8189 = vpop.permute.xlu0 %8188
    %8190 = vrot.lane.b32.xlu0 %v8072, 64
    %v8191 = vpop.permute.xlu0 %8190
    %8192 = vrot.lane.b32.xlu0 %v8073, 64
    %v8193 = vpop.permute.xlu0 %8192
    %8194 = vrot.lane.b32.xlu0 %v8074, 64
    %v8195 = vpop.permute.xlu0 %8194
    %8196 = vrot.lane.b32.xlu0 %v8075, 64
    %v8197 = vpop.permute.xlu0 %8196
    %8198 = vrot.lane.b32.xlu0 %v8076, 64
    %v8199 = vpop.permute.xlu0 %8198
    %8200 = vrot.lane.b32.xlu0 %v8077, 64
    %v8201 = vpop.permute.xlu0 %8200
    %8202 = vrot.lane.b32.xlu0 %v8078, 64
    %v8203 = vpop.permute.xlu0 %8202
    %8204 = vrot.lane.b32.xlu0 %v8079, 64
    %v8205 = vpop.permute.xlu0 %8204
    %8206 = vrot.lane.b32.xlu0 %v8080, 64
    %v8207 = vpop.permute.xlu0 %8206
    %8208 = vrot.lane.b32.xlu0 %v8081, 64
    %v8209 = vpop.permute.xlu0 %8208
    %8210 = vrot.lane.b32.xlu0 %v8082, 64
    %v8211 = vpop.permute.xlu0 %8210
    %8212 = vrot.lane.b32.xlu0 %v8083, 64
    %v8213 = vpop.permute.xlu0 %8212
    %8214 = vrot.lane.b32.xlu0 %v8084, 64
    %v8215 = vpop.permute.xlu0 %8214
    %8216 = vrot.lane.b32.xlu0 %v8085, 64
    %v8217 = vpop.permute.xlu0 %8216
    %8218 = vrot.lane.b32.xlu0 %v8086, 64
    %v8219 = vpop.permute.xlu0 %8218
    %8220 = vrot.lane.b32.xlu0 %v8087, 64
    %v8221 = vpop.permute.xlu0 %8220
    %8222 = vrot.lane.b32.xlu0 %v8088, 64
    %v8223 = vpop.permute.xlu0 %8222
    %8224 = vrot.lane.b32.xlu0 %v8089, 64
    %v8225 = vpop.permute.xlu0 %8224
    %8226 = vrot.lane.b32.xlu0 %v8090, 64
    %v8227 = vpop.permute.xlu0 %8226
    %8228 = vrot.lane.b32.xlu0 %v8091, 64
    %v8229 = vpop.permute.xlu0 %8228
    %8230 = vrot.lane.b32.xlu0 %v8092, 64
    %v8231 = vpop.permute.xlu0 %8230
    %8232 = vrot.lane.b32.xlu0 %v8093, 64
    %v8233 = vpop.permute.xlu0 %8232
    %8234 = vrot.lane.b32.xlu0 %v8094, 64
    %v8235 = vpop.permute.xlu0 %8234
    %8236 = vrot.lane.b32.xlu0 %v8095, 64
    %v8237 = vpop.permute.xlu0 %8236
    %8238 = vrot.lane.b32.xlu0 %v8096, 64
    %v8239 = vpop.permute.xlu0 %8238
    %8240 = vrot.lane.b32.xlu0 %v8097, 64
    %v8241 = vpop.permute.xlu0 %8240
    %v8290 = vadd.f32 %v8048, %v8147
    %v8291 = vadd.f32 %v8049, %v8149
    %v8292 = vadd.f32 %v8050, %v8151
    %v8293 = vadd.f32 %v8051, %v8153
    %v8294 = vadd.f32 %v8052, %v8155
    %v8295 = vadd.f32 %v8053, %v8157
    %v8296 = vadd.f32 %v8054, %v8159
    %v8297 = vadd.f32 %v8055, %v8161
    %v8298 = vadd.f32 %v8056, %v8163
    %v8299 = vadd.f32 %v8057, %v8165
    %v8300 = vadd.f32 %v8058, %v8167
    %v8301 = vadd.f32 %v8059, %v8169
    %v8302 = vadd.f32 %v8060, %v8171
    %v8303 = vadd.f32 %v8061, %v8173
    %v8304 = vadd.f32 %v8062, %v8175
    %v8305 = vadd.f32 %v8063, %v8177
    %v8306 = vadd.f32 %v8064, %v8179
    %v8307 = vadd.f32 %v8065, %v8181
    %v8308 = vadd.f32 %v8066, %v8183
    %v8309 = vadd.f32 %v8067, %v8185
    %v8310 = vadd.f32 %v8068, %v8187
    %v8311 = vadd.f32 %v8069, %v8189
    %v8312 = vadd.f32 %v8070, %v8191
    %v8313 = vadd.f32 %v8071, %v8193
    %v8314 = vadd.f32 %v8072, %v8195
    %v8315 = vadd.f32 %v8073, %v8197
    %v8316 = vadd.f32 %v8074, %v8199
    %v8317 = vadd.f32 %v8075, %v8201
    %v8318 = vadd.f32 %v8076, %v8203
    %v8319 = vadd.f32 %v8077, %v8205
    %v8320 = vadd.f32 %v8078, %v8207
    %v8321 = vadd.f32 %v8079, %v8209
    %v8322 = vadd.f32 %v8080, %v8211
    %v8323 = vadd.f32 %v8081, %v8213
    %v8324 = vadd.f32 %v8082, %v8215
    %v8325 = vadd.f32 %v8083, %v8217
    %v8326 = vadd.f32 %v8084, %v8219
    %v8327 = vadd.f32 %v8085, %v8221
    %v8328 = vadd.f32 %v8086, %v8223
    %v8329 = vadd.f32 %v8087, %v8225
    %v8330 = vadd.f32 %v8088, %v8227
    %v8331 = vadd.f32 %v8089, %v8229
    %v8332 = vadd.f32 %v8090, %v8231
    %v8333 = vadd.f32 %v8091, %v8233
    %v8334 = vadd.f32 %v8092, %v8235
    %v8335 = vadd.f32 %v8093, %v8237
    %v8336 = vadd.f32 %v8094, %v8239
    %v8337 = vadd.f32 %v8095, %v8241
    %v8338 = vld [vmem:[#allocation4 + $0x48] sm:$0xff]
    %v8339 = vld [vmem:[#allocation4 + $0x58] sm:$0xff]
    %v8340 = vld [vmem:[#allocation4 + $0x68] sm:$0xff]
    %v8341 = vld [vmem:[#allocation4 + $0x78] sm:$0xff]
    %v8342 = vld [vmem:[#allocation4 + $0x88] sm:$0xff]
    %v8343 = vld [vmem:[#allocation4 + $0x98] sm:$0xff]
    %v8344 = vld [vmem:[#allocation4 + $0xa8] sm:$0xff]
    %v8345 = vld [vmem:[#allocation4 + $0xb8] sm:$0xff]
    %v8346 = vld [vmem:[#allocation4 + $0xc8] sm:$0xff]
    %v8347 = vld [vmem:[#allocation4 + $0xd8] sm:$0xff]
    %v8348 = vld [vmem:[#allocation4 + $0xe8] sm:$0xff]
    %v8349 = vld [vmem:[#allocation4 + $0xf8] sm:$0xff]
    %v8350 = vld [vmem:[#allocation4 + $0x108] sm:$0xff]
    %v8351 = vld [vmem:[#allocation4 + $0x118] sm:$0xff]
    %v8352 = vld [vmem:[#allocation4 + $0x128] sm:$0xff]
    %v8353 = vld [vmem:[#allocation4 + $0x138] sm:$0xff]
    %v8354 = vld [vmem:[#allocation4 + $0x148] sm:$0xff]
    %v8355 = vld [vmem:[#allocation4 + $0x158] sm:$0xff]
    %v8356 = vld [vmem:[#allocation4 + $0x168] sm:$0xff]
    %v8357 = vld [vmem:[#allocation4 + $0x178] sm:$0xff]
    %v8358 = vld [vmem:[#allocation4 + $0x188] sm:$0xff]
    %v8359 = vld [vmem:[#allocation4 + $0x198] sm:$0xff]
    %v8360 = vld [vmem:[#allocation4 + $0x1a8] sm:$0xff]
    %v8361 = vld [vmem:[#allocation4 + $0x1b8] sm:$0xff]
    %v8362 = vld [vmem:[#allocation4 + $0x1c8] sm:$0xff]
    %v8363 = vld [vmem:[#allocation4 + $0x1d8] sm:$0xff]
    %v8364 = vld [vmem:[#allocation4 + $0x1e8] sm:$0xff]
    %v8365 = vld [vmem:[#allocation4 + $0x1f8] sm:$0xff]
    %v8366 = vld [vmem:[#allocation4 + $0x208] sm:$0xff]
    %v8367 = vld [vmem:[#allocation4 + $0x218] sm:$0xff]
    %v8368 = vld [vmem:[#allocation4 + $0x228] sm:$0xff]
    %v8369 = vld [vmem:[#allocation4 + $0x238] sm:$0xff]
    %v8370 = vld [vmem:[#allocation4 + $0x248] sm:$0xff]
    %v8371 = vld [vmem:[#allocation4 + $0x258] sm:$0xff]
    %v8372 = vld [vmem:[#allocation4 + $0x268] sm:$0xff]
    %v8373 = vld [vmem:[#allocation4 + $0x278] sm:$0xff]
    %v8374 = vld [vmem:[#allocation4 + $0x288] sm:$0xff]
    %v8375 = vld [vmem:[#allocation4 + $0x298] sm:$0xff]
    %v8376 = vld [vmem:[#allocation4 + $0x2a8] sm:$0xff]
    %v8377 = vld [vmem:[#allocation4 + $0x2b8] sm:$0xff]
    %v8378 = vld [vmem:[#allocation4 + $0x2c8] sm:$0xff]
    %v8379 = vld [vmem:[#allocation4 + $0x2d8] sm:$0xff]
    %v8380 = vld [vmem:[#allocation4 + $0x2e8] sm:$0xff]
    %v8381 = vld [vmem:[#allocation4 + $0x2f8] sm:$0xff]
    %v8382 = vld [vmem:[#allocation4 + $0x308] sm:$0xff]
    %v8383 = vld [vmem:[#allocation4 + $0x318] sm:$0xff]
    %v8384 = vld [vmem:[#allocation4 + $0x328] sm:$0xff]
    %v8385 = vld [vmem:[#allocation4 + $0x338] sm:$0xff]
    %v8386 = vadd.f32 %v8290, %v8338
    %v8387 = vadd.f32 %v8291, %v8339
    %v8388 = vadd.f32 %v8292, %v8340
    %v8389 = vadd.f32 %v8293, %v8341
    %v8390 = vadd.f32 %v8294, %v8342
    %v8391 = vadd.f32 %v8295, %v8343
    %v8392 = vadd.f32 %v8296, %v8344
    %v8393 = vadd.f32 %v8297, %v8345
    %v8394 = vadd.f32 %v8298, %v8346
    %v8395 = vadd.f32 %v8299, %v8347
    %v8396 = vadd.f32 %v8300, %v8348
    %v8397 = vadd.f32 %v8301, %v8349
    %v8398 = vadd.f32 %v8302, %v8350
    %v8399 = vadd.f32 %v8303, %v8351
    %v8400 = vadd.f32 %v8304, %v8352
    %v8401 = vadd.f32 %v8305, %v8353
    %v8402 = vadd.f32 %v8306, %v8354
    %v8403 = vadd.f32 %v8307, %v8355
    %v8404 = vadd.f32 %v8308, %v8356
    %v8405 = vadd.f32 %v8309, %v8357
    %v8406 = vadd.f32 %v8310, %v8358
    %v8407 = vadd.f32 %v8311, %v8359
    %v8408 = vadd.f32 %v8312, %v8360
    %v8409 = vadd.f32 %v8313, %v8361
    %v8410 = vadd.f32 %v8314, %v8362
    %v8411 = vadd.f32 %v8315, %v8363
    %v8412 = vadd.f32 %v8316, %v8364
    %v8413 = vadd.f32 %v8317, %v8365
    %v8414 = vadd.f32 %v8318, %v8366
    %v8415 = vadd.f32 %v8319, %v8367
    %v8416 = vadd.f32 %v8320, %v8368
    %v8417 = vadd.f32 %v8321, %v8369
    %v8418 = vadd.f32 %v8322, %v8370
    %v8419 = vadd.f32 %v8323, %v8371
    %v8420 = vadd.f32 %v8324, %v8372
    %v8421 = vadd.f32 %v8325, %v8373
    %v8422 = vadd.f32 %v8326, %v8374
    %v8423 = vadd.f32 %v8327, %v8375
    %v8424 = vadd.f32 %v8328, %v8376
    %v8425 = vadd.f32 %v8329, %v8377
    %v8426 = vadd.f32 %v8330, %v8378
    %v8427 = vadd.f32 %v8331, %v8379
    %v8428 = vadd.f32 %v8332, %v8380
    %v8429 = vadd.f32 %v8333, %v8381
    %v8430 = vadd.f32 %v8334, %v8382
    %v8431 = vadd.f32 %v8335, %v8383
    %v8432 = vadd.f32 %v8336, %v8384
    %v8433 = vadd.f32 %v8337, %v8385
    %v8434 = vld [vmem:[#allocation13] sm:$0x1]
    %v8436 = vlaneseq
    %v8437 = vshrl.u32 %v8436, 7
    %v8438 = vsub.s32 0, %v8437
    %v8439 = vrot.slane %v8434, %v8438
    %v8441 = vadd.f32 %v8386, %v8439
    %v8442 = vadd.f32 %v8387, %v8439
    %v8443 = vadd.f32 %v8388, %v8439
    %v8444 = vadd.f32 %v8389, %v8439
    %v8445 = vadd.f32 %v8390, %v8439
    %v8446 = vadd.f32 %v8391, %v8439
    %v8447 = vadd.f32 %v8392, %v8439
    %v8448 = vadd.f32 %v8393, %v8439
    %v8449 = vadd.f32 %v8394, %v8439
    %v8450 = vadd.f32 %v8395, %v8439
    %v8451 = vadd.f32 %v8396, %v8439
    %v8452 = vadd.f32 %v8397, %v8439
    %v8453 = vadd.f32 %v8398, %v8439
    %v8454 = vadd.f32 %v8399, %v8439
    %v8455 = vadd.f32 %v8400, %v8439
    %v8456 = vadd.f32 %v8401, %v8439
    %v8457 = vadd.f32 %v8402, %v8439
    %v8458 = vadd.f32 %v8403, %v8439
    %v8459 = vadd.f32 %v8404, %v8439
    %v8460 = vadd.f32 %v8405, %v8439
    %v8461 = vadd.f32 %v8406, %v8439
    %v8462 = vadd.f32 %v8407, %v8439
    %v8463 = vadd.f32 %v8408, %v8439
    %v8464 = vadd.f32 %v8409, %v8439
    %v8465 = vadd.f32 %v8410, %v8439
    %v8466 = vadd.f32 %v8411, %v8439
    %v8467 = vadd.f32 %v8412, %v8439
    %v8468 = vadd.f32 %v8413, %v8439
    %v8469 = vadd.f32 %v8414, %v8439
    %v8470 = vadd.f32 %v8415, %v8439
    %v8471 = vadd.f32 %v8416, %v8439
    %v8472 = vadd.f32 %v8417, %v8439
    %v8473 = vadd.f32 %v8418, %v8439
    %v8474 = vadd.f32 %v8419, %v8439
    %v8475 = vadd.f32 %v8420, %v8439
    %v8476 = vadd.f32 %v8421, %v8439
    %v8477 = vadd.f32 %v8422, %v8439
    %v8478 = vadd.f32 %v8423, %v8439
    %v8479 = vadd.f32 %v8424, %v8439
    %v8480 = vadd.f32 %v8425, %v8439
    %v8481 = vadd.f32 %v8426, %v8439
    %v8482 = vadd.f32 %v8427, %v8439
    %v8483 = vadd.f32 %v8428, %v8439
    %v8484 = vadd.f32 %v8429, %v8439
    %v8485 = vadd.f32 %v8430, %v8439
    %v8486 = vadd.f32 %v8431, %v8439
    %v8487 = vadd.f32 %v8432, %v8439
    %v8488 = vadd.f32 %v8433, %v8439
    %v8489 = vmax.f32 %v8441, 0.0
    %v8490 = vmax.f32 %v8442, 0.0
    %v8491 = vmax.f32 %v8443, 0.0
    %v8492 = vmax.f32 %v8444, 0.0
    %v8493 = vmax.f32 %v8445, 0.0
    %v8494 = vmax.f32 %v8446, 0.0
    %v8495 = vmax.f32 %v8447, 0.0
    %v8496 = vmax.f32 %v8448, 0.0
    %v8497 = vmax.f32 %v8449, 0.0
    %v8498 = vmax.f32 %v8450, 0.0
    %v8499 = vmax.f32 %v8451, 0.0
    %v8500 = vmax.f32 %v8452, 0.0
    %v8501 = vmax.f32 %v8453, 0.0
    %v8502 = vmax.f32 %v8454, 0.0
    %v8503 = vmax.f32 %v8455, 0.0
    %v8504 = vmax.f32 %v8456, 0.0
    %v8505 = vmax.f32 %v8457, 0.0
    %v8506 = vmax.f32 %v8458, 0.0
    %v8507 = vmax.f32 %v8459, 0.0
    %v8508 = vmax.f32 %v8460, 0.0
    %v8509 = vmax.f32 %v8461, 0.0
    %v8510 = vmax.f32 %v8462, 0.0
    %v8511 = vmax.f32 %v8463, 0.0
    %v8512 = vmax.f32 %v8464, 0.0
    %v8513 = vmax.f32 %v8465, 0.0
    %v8514 = vmax.f32 %v8466, 0.0
    %v8515 = vmax.f32 %v8467, 0.0
    %v8516 = vmax.f32 %v8468, 0.0
    %v8517 = vmax.f32 %v8469, 0.0
    %v8518 = vmax.f32 %v8470, 0.0
    %v8519 = vmax.f32 %v8471, 0.0
    %v8520 = vmax.f32 %v8472, 0.0
    %v8521 = vmax.f32 %v8473, 0.0
    %v8522 = vmax.f32 %v8474, 0.0
    %v8523 = vmax.f32 %v8475, 0.0
    %v8524 = vmax.f32 %v8476, 0.0
    %v8525 = vmax.f32 %v8477, 0.0
    %v8526 = vmax.f32 %v8478, 0.0
    %v8527 = vmax.f32 %v8479, 0.0
    %v8528 = vmax.f32 %v8480, 0.0
    %v8529 = vmax.f32 %v8481, 0.0
    %v8530 = vmax.f32 %v8482, 0.0
    %v8531 = vmax.f32 %v8483, 0.0
    %v8532 = vmax.f32 %v8484, 0.0
    %v8533 = vmax.f32 %v8485, 0.0
    %v8534 = vmax.f32 %v8486, 0.0
    %v8535 = vmax.f32 %v8487, 0.0
    %v8536 = vmax.f32 %v8488, 0.0
    %8537 = vst.msk [vmem:[#allocation5] sm:$0xff] %vm7944, %v8489
    %8538 = vst.msk [vmem:[#allocation5 + $0x8] sm:$0xff] %vm7944, %v8490
    %8539 = vst.msk [vmem:[#allocation5 + $0x10] sm:$0xff] %vm7944, %v8491
    %8540 = vst.msk [vmem:[#allocation5 + $0x18] sm:$0xff] %vm7944, %v8492
    %8541 = vst.msk [vmem:[#allocation5 + $0x20] sm:$0xff] %vm7944, %v8493
    %8542 = vst.msk [vmem:[#allocation5 + $0x28] sm:$0xff] %vm7944, %v8494
    %8543 = vst.msk [vmem:[#allocation5 + $0x30] sm:$0xff] %vm7944, %v8495
    %8544 = vst.msk [vmem:[#allocation5 + $0x38] sm:$0xff] %vm7944, %v8496
    %8545 = vst.msk [vmem:[#allocation5 + $0x40] sm:$0xff] %vm7944, %v8497
    %8546 = vst.msk [vmem:[#allocation5 + $0x48] sm:$0xff] %vm7944, %v8498
    %8547 = vst.msk [vmem:[#allocation5 + $0x50] sm:$0xff] %vm7944, %v8499
    %8548 = vst.msk [vmem:[#allocation5 + $0x58] sm:$0xff] %vm7944, %v8500
    %8549 = vst.msk [vmem:[#allocation5 + $0x60] sm:$0xff] %vm7944, %v8501
    %8550 = vst.msk [vmem:[#allocation5 + $0x68] sm:$0xff] %vm7944, %v8502
    %8551 = vst.msk [vmem:[#allocation5 + $0x70] sm:$0xff] %vm7944, %v8503
    %8552 = vst.msk [vmem:[#allocation5 + $0x78] sm:$0xff] %vm7944, %v8504
    %8553 = vst.msk [vmem:[#allocation5 + $0x80] sm:$0xff] %vm7944, %v8505
    %8554 = vst.msk [vmem:[#allocation5 + $0x88] sm:$0xff] %vm7944, %v8506
    %8555 = vst.msk [vmem:[#allocation5 + $0x90] sm:$0xff] %vm7944, %v8507
    %8556 = vst.msk [vmem:[#allocation5 + $0x98] sm:$0xff] %vm7944, %v8508
    %8557 = vst.msk [vmem:[#allocation5 + $0xa0] sm:$0xff] %vm7944, %v8509
    %8558 = vst.msk [vmem:[#allocation5 + $0xa8] sm:$0xff] %vm7944, %v8510
    %8559 = vst.msk [vmem:[#allocation5 + $0xb0] sm:$0xff] %vm7944, %v8511
    %8560 = vst.msk [vmem:[#allocation5 + $0xb8] sm:$0xff] %vm7944, %v8512
    %8561 = vst.msk [vmem:[#allocation5 + $0xc0] sm:$0xff] %vm7944, %v8513
    %8562 = vst.msk [vmem:[#allocation5 + $0xc8] sm:$0xff] %vm7944, %v8514
    %8563 = vst.msk [vmem:[#allocation5 + $0xd0] sm:$0xff] %vm7944, %v8515
    %8564 = vst.msk [vmem:[#allocation5 + $0xd8] sm:$0xff] %vm7944, %v8516
    %8565 = vst.msk [vmem:[#allocation5 + $0xe0] sm:$0xff] %vm7944, %v8517
    %8566 = vst.msk [vmem:[#allocation5 + $0xe8] sm:$0xff] %vm7944, %v8518
    %8567 = vst.msk [vmem:[#allocation5 + $0xf0] sm:$0xff] %vm7944, %v8519
    %8568 = vst.msk [vmem:[#allocation5 + $0xf8] sm:$0xff] %vm7944, %v8520
    %8569 = vst.msk [vmem:[#allocation5 + $0x100] sm:$0xff] %vm7944, %v8521
    %8570 = vst.msk [vmem:[#allocation5 + $0x108] sm:$0xff] %vm7944, %v8522
    %8571 = vst.msk [vmem:[#allocation5 + $0x110] sm:$0xff] %vm7944, %v8523
    %8572 = vst.msk [vmem:[#allocation5 + $0x118] sm:$0xff] %vm7944, %v8524
    %8573 = vst.msk [vmem:[#allocation5 + $0x120] sm:$0xff] %vm7944, %v8525
    %8574 = vst.msk [vmem:[#allocation5 + $0x128] sm:$0xff] %vm7944, %v8526
    %8575 = vst.msk [vmem:[#allocation5 + $0x130] sm:$0xff] %vm7944, %v8527
    %8576 = vst.msk [vmem:[#allocation5 + $0x138] sm:$0xff] %vm7944, %v8528
    %8577 = vst.msk [vmem:[#allocation5 + $0x140] sm:$0xff] %vm7944, %v8529
    %8578 = vst.msk [vmem:[#allocation5 + $0x148] sm:$0xff] %vm7944, %v8530
    %8579 = vst.msk [vmem:[#allocation5 + $0x150] sm:$0xff] %vm7944, %v8531
    %8580 = vst.msk [vmem:[#allocation5 + $0x158] sm:$0xff] %vm7944, %v8532
    %8581 = vst.msk [vmem:[#allocation5 + $0x160] sm:$0xff] %vm7944, %v8533
    %8582 = vst.msk [vmem:[#allocation5 + $0x168] sm:$0xff] %vm7944, %v8534
    %8583 = vst.msk [vmem:[#allocation5 + $0x170] sm:$0xff] %vm7944, %v8535
    %8584 = vst.msk [vmem:[#allocation5 + $0x178] sm:$0xff] %vm7944, %v8536
    %v8585 = vld [vmem:[#allocation5] sm:$0xff]
    %v8586 = vld [vmem:[#allocation5 + $0x8] sm:$0xff]
    %v8587 = vld [vmem:[#allocation5 + $0x20] sm:$0xff]
    %v8588 = vld [vmem:[#allocation5 + $0x28] sm:$0xff]
    %v8589 = vld [vmem:[#allocation5 + $0x40] sm:$0xff]
    %v8590 = vld [vmem:[#allocation5 + $0x48] sm:$0xff]
    %v8591 = vld [vmem:[#allocation5 + $0x60] sm:$0xff]
    %v8592 = vld [vmem:[#allocation5 + $0x68] sm:$0xff]
    %v8593 = vld [vmem:[#allocation5 + $0x80] sm:$0xff]
    %v8594 = vld [vmem:[#allocation5 + $0x88] sm:$0xff]
    %v8595 = vld [vmem:[#allocation5 + $0xa0] sm:$0xff]
    %v8596 = vld [vmem:[#allocation5 + $0xa8] sm:$0xff]
    %v8597 = vld [vmem:[#allocation5 + $0xc0] sm:$0xff]
    %v8598 = vld [vmem:[#allocation5 + $0xc8] sm:$0xff]
    %v8599 = vld [vmem:[#allocation5 + $0xe0] sm:$0xff]
    %v8600 = vld [vmem:[#allocation5 + $0xe8] sm:$0xff]
    %v8601 = vld [vmem:[#allocation5 + $0x100] sm:$0xff]
    %v8602 = vld [vmem:[#allocation5 + $0x108] sm:$0xff]
    %v8603 = vld [vmem:[#allocation5 + $0x120] sm:$0xff]
    %v8604 = vld [vmem:[#allocation5 + $0x128] sm:$0xff]
    %v8605 = vld [vmem:[#allocation5 + $0x140] sm:$0xff]
    %v8606 = vld [vmem:[#allocation5 + $0x148] sm:$0xff]
    %v8607 = vld [vmem:[#allocation5 + $0x160] sm:$0xff]
    %v8608 = vld [vmem:[#allocation5 + $0x168] sm:$0xff]
    %s8609 = scalar_lea.vmem [#allocation5], 16
    %v8610 = vld [vmem:[%s8609] sm:$0xff]
    %v8611 = vld [vmem:[%s8609 + $0x8] sm:$0xff]
    %v8612 = vld [vmem:[%s8609 + $0x20] sm:$0xff]
    %v8613 = vld [vmem:[%s8609 + $0x28] sm:$0xff]
    %v8614 = vld [vmem:[%s8609 + $0x40] sm:$0xff]
    %v8615 = vld [vmem:[%s8609 + $0x48] sm:$0xff]
    %v8616 = vld [vmem:[%s8609 + $0x60] sm:$0xff]
    %v8617 = vld [vmem:[%s8609 + $0x68] sm:$0xff]
    %v8618 = vld [vmem:[%s8609 + $0x80] sm:$0xff]
    %v8619 = vld [vmem:[%s8609 + $0x88] sm:$0xff]
    %v8620 = vld [vmem:[%s8609 + $0xa0] sm:$0xff]
    %v8621 = vld [vmem:[%s8609 + $0xa8] sm:$0xff]
    %v8622 = vld [vmem:[%s8609 + $0xc0] sm:$0xff]
    %v8623 = vld [vmem:[%s8609 + $0xc8] sm:$0xff]
    %v8624 = vld [vmem:[%s8609 + $0xe0] sm:$0xff]
    %v8625 = vld [vmem:[%s8609 + $0xe8] sm:$0xff]
    %v8626 = vld [vmem:[%s8609 + $0x100] sm:$0xff]
    %v8627 = vld [vmem:[%s8609 + $0x108] sm:$0xff]
    %v8628 = vld [vmem:[%s8609 + $0x120] sm:$0xff]
    %v8629 = vld [vmem:[%s8609 + $0x128] sm:$0xff]
    %v8630 = vld [vmem:[%s8609 + $0x140] sm:$0xff]
    %v8631 = vld [vmem:[%s8609 + $0x148] sm:$0xff]
    %v8632 = vld [vmem:[%s8609 + $0x160] sm:$0xff]
    %v8633 = vld [vmem:[%s8609 + $0x168] sm:$0xff]
    %v8634 = vmax.f32 %v8585, %v8610
    %v8635 = vmax.f32 %v8586, %v8611
    %v8636 = vmax.f32 %v8587, %v8612
    %v8637 = vmax.f32 %v8588, %v8613
    %v8638 = vmax.f32 %v8589, %v8614
    %v8639 = vmax.f32 %v8590, %v8615
    %v8640 = vmax.f32 %v8591, %v8616
    %v8641 = vmax.f32 %v8592, %v8617
    %v8642 = vmax.f32 %v8593, %v8618
    %v8643 = vmax.f32 %v8594, %v8619
    %v8644 = vmax.f32 %v8595, %v8620
    %v8645 = vmax.f32 %v8596, %v8621
    %v8646 = vmax.f32 %v8597, %v8622
    %v8647 = vmax.f32 %v8598, %v8623
    %v8648 = vmax.f32 %v8599, %v8624
    %v8649 = vmax.f32 %v8600, %v8625
    %v8650 = vmax.f32 %v8601, %v8626
    %v8651 = vmax.f32 %v8602, %v8627
    %v8652 = vmax.f32 %v8603, %v8628
    %v8653 = vmax.f32 %v8604, %v8629
    %v8654 = vmax.f32 %v8605, %v8630
    %v8655 = vmax.f32 %v8606, %v8631
    %v8656 = vmax.f32 %v8607, %v8632
    %v8657 = vmax.f32 %v8608, %v8633
    %v8658 = vld [vmem:[#allocation15] sm:$0xff]
    %v8659 = vld [vmem:[#allocation15 + $0x8] sm:$0xff]
    %v8660 = vld [vmem:[#allocation15 + $0x10] sm:$0xff]
    %v8661 = vld [vmem:[#allocation15 + $0x18] sm:$0xff]
    %v8662 = vld [vmem:[#allocation15 + $0x20] sm:$0xff]
    %v8663 = vld [vmem:[#allocation15 + $0x28] sm:$0xff]
    %v8664 = vld [vmem:[#allocation15 + $0x30] sm:$0xff]
    %v8665 = vld [vmem:[#allocation15 + $0x38] sm:$0xff]
    %v8666 = vld [vmem:[#allocation15 + $0x40] sm:$0xff]
    %v8667 = vld [vmem:[#allocation15 + $0x48] sm:$0xff]
    %v8668 = vld [vmem:[#allocation15 + $0x50] sm:$0xff]
    %v8669 = vld [vmem:[#allocation15 + $0x58] sm:$0xff]
    %v8670 = vld [vmem:[#allocation15 + $0x60] sm:$0xff]
    %v8671 = vld [vmem:[#allocation15 + $0x68] sm:$0xff]
    %v8672 = vld [vmem:[#allocation15 + $0x70] sm:$0xff]
    %v8673 = vld [vmem:[#allocation15 + $0x78] sm:$0xff]
    %v8675 = vsel %vm7944, %v8634, 0
    %v8678 = vsel %vm7944, %v8635, 0
    %v8681 = vsel %vm7944, %v8636, 0
    %v8684 = vsel %vm7944, %v8637, 0
    %v8687 = vsel %vm7944, %v8638, 0
    %v8690 = vsel %vm7944, %v8639, 0
    %v8693 = vsel %vm7944, %v8640, 0
    %v8696 = vsel %vm7944, %v8641, 0
    %v8699 = vsel %vm7944, %v8642, 0
    %v8702 = vsel %vm7944, %v8643, 0
    %v8705 = vsel %vm7944, %v8644, 0
    %v8708 = vsel %vm7944, %v8645, 0
    %v8711 = vsel %vm7944, %v8646, 0
    %v8714 = vsel %vm7944, %v8647, 0
    %v8717 = vsel %vm7944, %v8648, 0
    %v8720 = vsel %vm7944, %v8649, 0
    %v8723 = vsel %vm7944, %v8650, 0
    %v8726 = vsel %vm7944, %v8651, 0
    %v8729 = vsel %vm7944, %v8652, 0
    %v8732 = vsel %vm7944, %v8653, 0
    %v8735 = vsel %vm7944, %v8654, 0
    %v8738 = vsel %vm7944, %v8655, 0
    %v8741 = vsel %vm7944, %v8656, 0
    %v8744 = vsel %vm7944, %v8657, 0
    %8746 = vmatprep.subr.mxu0 0.0
    %8747 = vmatpush1.msra.mxu0 0.0
    %8748 = vmatprep.subr.mxu0 0.0
    %8749 = vmatpush1.msra.mxu0 0.0
    %8750 = vmatprep.subr.mxu0 0.0
    %8751 = vmatpush1.msra.mxu0 0.0
    %8752 = vmatprep.subr.mxu0 0.0
    %8753 = vmatpush1.msra.mxu0 0.0
    %8754 = vmatprep.subr.mxu0 0.0
    %8755 = vmatpush1.msra.mxu0 0.0
    %8756 = vmatprep.subr.mxu0 0.0
    %8757 = vmatpush1.msra.mxu0 0.0
    %8758 = vmatprep.subr.mxu0 0.0
    %8759 = vmatpush1.msra.mxu0 0.0
    %8760 = vmatprep.subr.mxu0 0.0
    %8761 = vmatpush1.msra.mxu0 0.0
    %8762 = vmatprep.subr.mxu0 %v8673
    %8763 = vmatpush1.msra.mxu0 %v8672
    %8764 = vmatprep.subr.mxu0 %v8671
    %8765 = vmatpush1.msra.mxu0 %v8670
    %8766 = vmatprep.subr.mxu0 %v8669
    %8767 = vmatpush1.msra.mxu0 %v8668
    %8768 = vmatprep.subr.mxu0 %v8667
    %8769 = vmatpush1.msra.mxu0 %v8666
    %8770 = vmatprep.subr.mxu0 %v8665
    %8771 = vmatpush1.msra.mxu0 %v8664
    %8772 = vmatprep.subr.mxu0 %v8663
    %8773 = vmatpush1.msra.mxu0 %v8662
    %8774 = vmatprep.subr.mxu0 %v8661
    %8775 = vmatpush1.msra.mxu0 %v8660
    %8776 = vmatprep.subr.mxu0 %v8659
    %8777 = vmatpush1.msra.mxu0 %v8658
    %8778 = vmatprep.subr.mxu0 0.0
    %8779 = vmatpush2.msra.mxu0 0.0
    %8780 = vmatprep.subr.mxu0 0.0
    %8781 = vmatpush2.msra.mxu0 0.0
    %8782 = vmatprep.subr.mxu0 0.0
    %8783 = vmatpush2.msra.mxu0 0.0
    %8784 = vmatprep.subr.mxu0 0.0
    %8785 = vmatpush2.msra.mxu0 0.0
    %8786 = vmatprep.subr.mxu0 0.0
    %8787 = vmatpush2.msra.mxu0 0.0
    %8788 = vmatprep.subr.mxu0 0.0
    %8789 = vmatpush2.msra.mxu0 0.0
    %8790 = vmatprep.subr.mxu0 0.0
    %8791 = vmatpush2.msra.mxu0 0.0
    %8792 = vmatprep.subr.mxu0 0.0
    %8793 = vmatpush2.msra.mxu0 0.0
    %8794 = vmatprep.subr.mxu0 0.0
    %8795 = vmatpush2.msra.mxu0 0.0
    %8796 = vmatprep.subr.mxu0 0.0
    %8797 = vmatpush2.msra.mxu0 0.0
    %8798 = vmatprep.subr.mxu0 0.0
    %8799 = vmatpush2.msra.mxu0 0.0
    %8800 = vmatprep.subr.mxu0 0.0
    %8801 = vmatpush2.msra.mxu0 0.0
    %8802 = vmatprep.subr.mxu0 0.0
    %8803 = vmatpush2.msra.mxu0 0.0
    %8804 = vmatprep.subr.mxu0 0.0
    %8805 = vmatpush2.msra.mxu0 0.0
    %8806 = vmatprep.subr.mxu0 0.0
    %8807 = vmatpush2.msra.mxu0 0.0
    %8808 = vmatprep.subr.mxu0 0.0
    %8809 = vmatpush2.msra.mxu0 0.0
    %8810 = vmatprep.mubr.f32.mxu0 0.0
    %8811 = vmatmul.mubr.f32.gmra.mxu0 %v8675
    %v8812 = vpop.f32.mrf.mxu0
    %v8813 = vadd.f32 0.0, %v8812
    %v8814 = vpop.f32.mrf.mxu0
    %v8815 = vadd.f32 0.0, %v8814
    %8816 = vmatprep.mubr.f32.mxu0 0.0
    %8817 = vmatmul.mubr.f32.gmra.mxu0 %v8678
    %v8818 = vpop.f32.mrf.mxu0
    %v8819 = vadd.f32 0.0, %v8818
    %v8820 = vpop.f32.mrf.mxu0
    %v8821 = vadd.f32 0.0, %v8820
    %8822 = vmatprep.mubr.f32.mxu0 0.0
    %8823 = vmatmul.mubr.f32.gmra.mxu0 %v8681
    %v8824 = vpop.f32.mrf.mxu0
    %v8825 = vadd.f32 0.0, %v8824
    %v8826 = vpop.f32.mrf.mxu0
    %v8827 = vadd.f32 0.0, %v8826
    %8828 = vmatprep.mubr.f32.mxu0 0.0
    %8829 = vmatmul.mubr.f32.gmra.mxu0 %v8684
    %v8830 = vpop.f32.mrf.mxu0
    %v8831 = vadd.f32 0.0, %v8830
    %v8832 = vpop.f32.mrf.mxu0
    %v8833 = vadd.f32 0.0, %v8832
    %8834 = vmatprep.mubr.f32.mxu0 0.0
    %8835 = vmatmul.mubr.f32.gmra.mxu0 %v8687
    %v8836 = vpop.f32.mrf.mxu0
    %v8837 = vadd.f32 0.0, %v8836
    %v8838 = vpop.f32.mrf.mxu0
    %v8839 = vadd.f32 0.0, %v8838
    %8840 = vmatprep.mubr.f32.mxu0 0.0
    %8841 = vmatmul.mubr.f32.gmra.mxu0 %v8690
    %v8842 = vpop.f32.mrf.mxu0
    %v8843 = vadd.f32 0.0, %v8842
    %v8844 = vpop.f32.mrf.mxu0
    %v8845 = vadd.f32 0.0, %v8844
    %8846 = vmatprep.mubr.f32.mxu0 0.0
    %8847 = vmatmul.mubr.f32.gmra.mxu0 %v8693
    %v8848 = vpop.f32.mrf.mxu0
    %v8849 = vadd.f32 0.0, %v8848
    %v8850 = vpop.f32.mrf.mxu0
    %v8851 = vadd.f32 0.0, %v8850
    %8852 = vmatprep.mubr.f32.mxu0 0.0
    %8853 = vmatmul.mubr.f32.gmra.mxu0 %v8696
    %v8854 = vpop.f32.mrf.mxu0
    %v8855 = vadd.f32 0.0, %v8854
    %v8856 = vpop.f32.mrf.mxu0
    %v8857 = vadd.f32 0.0, %v8856
    %8858 = vmatprep.mubr.f32.mxu0 0.0
    %8859 = vmatmul.mubr.f32.gmra.mxu0 %v8699
    %v8860 = vpop.f32.mrf.mxu0
    %v8861 = vadd.f32 0.0, %v8860
    %v8862 = vpop.f32.mrf.mxu0
    %v8863 = vadd.f32 0.0, %v8862
    %8864 = vmatprep.mubr.f32.mxu0 0.0
    %8865 = vmatmul.mubr.f32.gmra.mxu0 %v8702
    %v8866 = vpop.f32.mrf.mxu0
    %v8867 = vadd.f32 0.0, %v8866
    %v8868 = vpop.f32.mrf.mxu0
    %v8869 = vadd.f32 0.0, %v8868
    %8870 = vmatprep.mubr.f32.mxu0 0.0
    %8871 = vmatmul.mubr.f32.gmra.mxu0 %v8705
    %v8872 = vpop.f32.mrf.mxu0
    %v8873 = vadd.f32 0.0, %v8872
    %v8874 = vpop.f32.mrf.mxu0
    %v8875 = vadd.f32 0.0, %v8874
    %8876 = vmatprep.mubr.f32.mxu0 0.0
    %8877 = vmatmul.mubr.f32.gmra.mxu0 %v8708
    %v8878 = vpop.f32.mrf.mxu0
    %v8879 = vadd.f32 0.0, %v8878
    %v8880 = vpop.f32.mrf.mxu0
    %v8881 = vadd.f32 0.0, %v8880
    %8882 = vmatprep.mubr.f32.mxu0 0.0
    %8883 = vmatmul.mubr.f32.gmra.mxu0 %v8711
    %v8884 = vpop.f32.mrf.mxu0
    %v8885 = vadd.f32 0.0, %v8884
    %v8886 = vpop.f32.mrf.mxu0
    %v8887 = vadd.f32 0.0, %v8886
    %8888 = vmatprep.mubr.f32.mxu0 0.0
    %8889 = vmatmul.mubr.f32.gmra.mxu0 %v8714
    %v8890 = vpop.f32.mrf.mxu0
    %v8891 = vadd.f32 0.0, %v8890
    %v8892 = vpop.f32.mrf.mxu0
    %v8893 = vadd.f32 0.0, %v8892
    %8894 = vmatprep.mubr.f32.mxu0 0.0
    %8895 = vmatmul.mubr.f32.gmra.mxu0 %v8717
    %v8896 = vpop.f32.mrf.mxu0
    %v8897 = vadd.f32 0.0, %v8896
    %v8898 = vpop.f32.mrf.mxu0
    %v8899 = vadd.f32 0.0, %v8898
    %8900 = vmatprep.mubr.f32.mxu0 0.0
    %8901 = vmatmul.mubr.f32.gmra.mxu0 %v8720
    %v8902 = vpop.f32.mrf.mxu0
    %v8903 = vadd.f32 0.0, %v8902
    %v8904 = vpop.f32.mrf.mxu0
    %v8905 = vadd.f32 0.0, %v8904
    %8906 = vmatprep.mubr.f32.mxu0 0.0
    %8907 = vmatmul.mubr.f32.gmra.mxu0 %v8723
    %v8908 = vpop.f32.mrf.mxu0
    %v8909 = vadd.f32 0.0, %v8908
    %v8910 = vpop.f32.mrf.mxu0
    %v8911 = vadd.f32 0.0, %v8910
    %8912 = vmatprep.mubr.f32.mxu0 0.0
    %8913 = vmatmul.mubr.f32.gmra.mxu0 %v8726
    %v8914 = vpop.f32.mrf.mxu0
    %v8915 = vadd.f32 0.0, %v8914
    %v8916 = vpop.f32.mrf.mxu0
    %v8917 = vadd.f32 0.0, %v8916
    %8918 = vmatprep.mubr.f32.mxu0 0.0
    %8919 = vmatmul.mubr.f32.gmra.mxu0 %v8729
    %v8920 = vpop.f32.mrf.mxu0
    %v8921 = vadd.f32 0.0, %v8920
    %v8922 = vpop.f32.mrf.mxu0
    %v8923 = vadd.f32 0.0, %v8922
    %8924 = vmatprep.mubr.f32.mxu0 0.0
    %8925 = vmatmul.mubr.f32.gmra.mxu0 %v8732
    %v8926 = vpop.f32.mrf.mxu0
    %v8927 = vadd.f32 0.0, %v8926
    %v8928 = vpop.f32.mrf.mxu0
    %v8929 = vadd.f32 0.0, %v8928
    %8930 = vmatprep.mubr.f32.mxu0 0.0
    %8931 = vmatmul.mubr.f32.gmra.mxu0 %v8735
    %v8932 = vpop.f32.mrf.mxu0
    %v8933 = vadd.f32 0.0, %v8932
    %v8934 = vpop.f32.mrf.mxu0
    %v8935 = vadd.f32 0.0, %v8934
    %8936 = vmatprep.mubr.f32.mxu0 0.0
    %8937 = vmatmul.mubr.f32.gmra.mxu0 %v8738
    %v8938 = vpop.f32.mrf.mxu0
    %v8939 = vadd.f32 0.0, %v8938
    %v8940 = vpop.f32.mrf.mxu0
    %v8941 = vadd.f32 0.0, %v8940
    %8942 = vmatprep.mubr.f32.mxu0 0.0
    %8943 = vmatmul.mubr.f32.gmra.mxu0 %v8741
    %v8944 = vpop.f32.mrf.mxu0
    %v8945 = vadd.f32 0.0, %v8944
    %v8946 = vpop.f32.mrf.mxu0
    %v8947 = vadd.f32 0.0, %v8946
    %8948 = vmatprep.mubr.f32.mxu0 0.0
    %8949 = vmatmul.mubr.f32.gmra.mxu0 %v8744
    %v8950 = vpop.f32.mrf.mxu0
    %v8951 = vadd.f32 0.0, %v8950
    %v8952 = vpop.f32.mrf.mxu0
    %v8953 = vadd.f32 0.0, %v8952
    %8954 = vdwg.mxu0
    %8955 = vst [vmem:[#allocation6] sm:$0xff] 0.0
    %8956 = vst.msk [vmem:[#allocation6 + $0x8] sm:$0xff] %vm7944, 0.0
    %8957 = vst [vmem:[#allocation6 + $0x10] sm:$0xff] 0.0
    %8958 = vst.msk [vmem:[#allocation6 + $0x18] sm:$0xff] %vm7944, 0.0
    %8959 = vst [vmem:[#allocation6 + $0x20] sm:$0xff] %v8813
    %8960 = vst.msk [vmem:[#allocation6 + $0x28] sm:$0xff] %vm7944, %v8815
    %8961 = vst [vmem:[#allocation6 + $0x30] sm:$0xff] %v8819
    %8962 = vst.msk [vmem:[#allocation6 + $0x38] sm:$0xff] %vm7944, %v8821
    %8963 = vst [vmem:[#allocation6 + $0x40] sm:$0xff] %v8825
    %8964 = vst.msk [vmem:[#allocation6 + $0x48] sm:$0xff] %vm7944, %v8827
    %8965 = vst [vmem:[#allocation6 + $0x50] sm:$0xff] %v8831
    %8966 = vst.msk [vmem:[#allocation6 + $0x58] sm:$0xff] %vm7944, %v8833
    %8967 = vst [vmem:[#allocation6 + $0x60] sm:$0xff] %v8837
    %8968 = vst.msk [vmem:[#allocation6 + $0x68] sm:$0xff] %vm7944, %v8839
    %8969 = vst [vmem:[#allocation6 + $0x70] sm:$0xff] %v8843
    %8970 = vst.msk [vmem:[#allocation6 + $0x78] sm:$0xff] %vm7944, %v8845
    %8971 = vst [vmem:[#allocation6 + $0x80] sm:$0xff] %v8849
    %8972 = vst.msk [vmem:[#allocation6 + $0x88] sm:$0xff] %vm7944, %v8851
    %8973 = vst [vmem:[#allocation6 + $0x90] sm:$0xff] %v8855
    %8974 = vst.msk [vmem:[#allocation6 + $0x98] sm:$0xff] %vm7944, %v8857
    %8975 = vst [vmem:[#allocation6 + $0xa0] sm:$0xff] %v8861
    %8976 = vst.msk [vmem:[#allocation6 + $0xa8] sm:$0xff] %vm7944, %v8863
    %8977 = vst [vmem:[#allocation6 + $0xb0] sm:$0xff] %v8867
    %8978 = vst.msk [vmem:[#allocation6 + $0xb8] sm:$0xff] %vm7944, %v8869
    %8979 = vst [vmem:[#allocation6 + $0xc0] sm:$0xff] %v8873
    %8980 = vst.msk [vmem:[#allocation6 + $0xc8] sm:$0xff] %vm7944, %v8875
    %8981 = vst [vmem:[#allocation6 + $0xd0] sm:$0xff] %v8879
    %8982 = vst.msk [vmem:[#allocation6 + $0xd8] sm:$0xff] %vm7944, %v8881
    %8983 = vst [vmem:[#allocation6 + $0xe0] sm:$0xff] %v8885
    %8984 = vst.msk [vmem:[#allocation6 + $0xe8] sm:$0xff] %vm7944, %v8887
    %8985 = vst [vmem:[#allocation6 + $0xf0] sm:$0xff] %v8891
    %8986 = vst.msk [vmem:[#allocation6 + $0xf8] sm:$0xff] %vm7944, %v8893
    %8987 = vst [vmem:[#allocation6 + $0x100] sm:$0xff] %v8897
    %8988 = vst.msk [vmem:[#allocation6 + $0x108] sm:$0xff] %vm7944, %v8899
    %8989 = vst [vmem:[#allocation6 + $0x110] sm:$0xff] %v8903
    %8990 = vst.msk [vmem:[#allocation6 + $0x118] sm:$0xff] %vm7944, %v8905
    %8991 = vst [vmem:[#allocation6 + $0x120] sm:$0xff] %v8909
    %8992 = vst.msk [vmem:[#allocation6 + $0x128] sm:$0xff] %vm7944, %v8911
    %8993 = vst [vmem:[#allocation6 + $0x130] sm:$0xff] %v8915
    %8994 = vst.msk [vmem:[#allocation6 + $0x138] sm:$0xff] %vm7944, %v8917
    %8995 = vst [vmem:[#allocation6 + $0x140] sm:$0xff] %v8921
    %8996 = vst.msk [vmem:[#allocation6 + $0x148] sm:$0xff] %vm7944, %v8923
    %8997 = vst [vmem:[#allocation6 + $0x150] sm:$0xff] %v8927
    %8998 = vst.msk [vmem:[#allocation6 + $0x158] sm:$0xff] %vm7944, %v8929
    %8999 = vst [vmem:[#allocation6 + $0x160] sm:$0xff] %v8933
    %9000 = vst.msk [vmem:[#allocation6 + $0x168] sm:$0xff] %vm7944, %v8935
    %9001 = vst [vmem:[#allocation6 + $0x170] sm:$0xff] %v8939
    %9002 = vst.msk [vmem:[#allocation6 + $0x178] sm:$0xff] %vm7944, %v8941
    %9003 = vst [vmem:[#allocation6 + $0x180] sm:$0xff] %v8945
    %9004 = vst.msk [vmem:[#allocation6 + $0x188] sm:$0xff] %vm7944, %v8947
    %9005 = vst [vmem:[#allocation6 + $0x190] sm:$0xff] %v8951
    %9006 = vst.msk [vmem:[#allocation6 + $0x198] sm:$0xff] %vm7944, %v8953
    %9007 = vst [vmem:[#allocation6 + $0x1a0] sm:$0xff] 0.0
    %9008 = vst.msk [vmem:[#allocation6 + $0x1a8] sm:$0xff] %vm7944, 0.0
    %9009 = vst [vmem:[#allocation6 + $0x1b0] sm:$0xff] 0.0
    %9010 = vst.msk [vmem:[#allocation6 + $0x1b8] sm:$0xff] %vm7944, 0.0
    %v9011 = vld [vmem:[#allocation6] sm:$0xff]
    %v9012 = vld [vmem:[#allocation6 + $0x10] sm:$0xff]
    %v9013 = vld [vmem:[#allocation6 + $0x20] sm:$0xff]
    %v9014 = vld [vmem:[#allocation6 + $0x30] sm:$0xff]
    %v9015 = vld [vmem:[#allocation6 + $0x40] sm:$0xff]
    %v9016 = vld [vmem:[#allocation6 + $0x50] sm:$0xff]
    %v9017 = vld [vmem:[#allocation6 + $0x60] sm:$0xff]
    %v9018 = vld [vmem:[#allocation6 + $0x70] sm:$0xff]
    %v9019 = vld [vmem:[#allocation6 + $0x80] sm:$0xff]
    %v9020 = vld [vmem:[#allocation6 + $0x90] sm:$0xff]
    %v9021 = vld [vmem:[#allocation6 + $0xa0] sm:$0xff]
    %v9022 = vld [vmem:[#allocation6 + $0xb0] sm:$0xff]
    %v9023 = vld [vmem:[#allocation6 + $0xc0] sm:$0xff]
    %v9024 = vld [vmem:[#allocation6 + $0xd0] sm:$0xff]
    %v9025 = vld [vmem:[#allocation6 + $0xe0] sm:$0xff]
    %v9026 = vld [vmem:[#allocation6 + $0xf0] sm:$0xff]
    %v9027 = vld [vmem:[#allocation6 + $0x100] sm:$0xff]
    %v9028 = vld [vmem:[#allocation6 + $0x110] sm:$0xff]
    %v9029 = vld [vmem:[#allocation6 + $0x120] sm:$0xff]
    %v9030 = vld [vmem:[#allocation6 + $0x130] sm:$0xff]
    %v9031 = vld [vmem:[#allocation6 + $0x140] sm:$0xff]
    %v9032 = vld [vmem:[#allocation6 + $0x150] sm:$0xff]
    %v9033 = vld [vmem:[#allocation6 + $0x160] sm:$0xff]
    %v9034 = vld [vmem:[#allocation6 + $0x170] sm:$0xff]
    %v9035 = vld [vmem:[#allocation6 + $0x180] sm:$0xff]
    %v9036 = vld [vmem:[#allocation6 + $0x190] sm:$0xff]
    %9061 = vrot.lane.b32.xlu0 %v9013, 64
    %v9062 = vpop.permute.xlu0 %9061
    %9063 = vrot.lane.b32.xlu0 %v9014, 64
    %v9064 = vpop.permute.xlu0 %9063
    %9065 = vrot.lane.b32.xlu0 %v9015, 64
    %v9066 = vpop.permute.xlu0 %9065
    %9067 = vrot.lane.b32.xlu0 %v9016, 64
    %v9068 = vpop.permute.xlu0 %9067
    %9069 = vrot.lane.b32.xlu0 %v9017, 64
    %v9070 = vpop.permute.xlu0 %9069
    %9071 = vrot.lane.b32.xlu0 %v9018, 64
    %v9072 = vpop.permute.xlu0 %9071
    %9073 = vrot.lane.b32.xlu0 %v9019, 64
    %v9074 = vpop.permute.xlu0 %9073
    %9075 = vrot.lane.b32.xlu0 %v9020, 64
    %v9076 = vpop.permute.xlu0 %9075
    %9077 = vrot.lane.b32.xlu0 %v9021, 64
    %v9078 = vpop.permute.xlu0 %9077
    %9079 = vrot.lane.b32.xlu0 %v9022, 64
    %v9080 = vpop.permute.xlu0 %9079
    %9081 = vrot.lane.b32.xlu0 %v9023, 64
    %v9082 = vpop.permute.xlu0 %9081
    %9083 = vrot.lane.b32.xlu0 %v9024, 64
    %v9084 = vpop.permute.xlu0 %9083
    %9085 = vrot.lane.b32.xlu0 %v9025, 64
    %v9086 = vpop.permute.xlu0 %9085
    %9087 = vrot.lane.b32.xlu0 %v9026, 64
    %v9088 = vpop.permute.xlu0 %9087
    %9089 = vrot.lane.b32.xlu0 %v9027, 64
    %v9090 = vpop.permute.xlu0 %9089
    %9091 = vrot.lane.b32.xlu0 %v9028, 64
    %v9092 = vpop.permute.xlu0 %9091
    %9093 = vrot.lane.b32.xlu0 %v9029, 64
    %v9094 = vpop.permute.xlu0 %9093
    %9095 = vrot.lane.b32.xlu0 %v9030, 64
    %v9096 = vpop.permute.xlu0 %9095
    %9097 = vrot.lane.b32.xlu0 %v9031, 64
    %v9098 = vpop.permute.xlu0 %9097
    %9099 = vrot.lane.b32.xlu0 %v9032, 64
    %v9100 = vpop.permute.xlu0 %9099
    %9101 = vrot.lane.b32.xlu0 %v9033, 64
    %v9102 = vpop.permute.xlu0 %9101
    %9103 = vrot.lane.b32.xlu0 %v9034, 64
    %v9104 = vpop.permute.xlu0 %9103
    %9105 = vrot.lane.b32.xlu0 %v9035, 64
    %v9106 = vpop.permute.xlu0 %9105
    %9107 = vrot.lane.b32.xlu0 %v9036, 64
    %v9108 = vpop.permute.xlu0 %9107
    %v9133 = vadd.f32 %v9011, %v9062
    %v9134 = vadd.f32 %v9012, %v9064
    %v9135 = vadd.f32 %v9013, %v9066
    %v9136 = vadd.f32 %v9014, %v9068
    %v9137 = vadd.f32 %v9015, %v9070
    %v9138 = vadd.f32 %v9016, %v9072
    %v9139 = vadd.f32 %v9017, %v9074
    %v9140 = vadd.f32 %v9018, %v9076
    %v9141 = vadd.f32 %v9019, %v9078
    %v9142 = vadd.f32 %v9020, %v9080
    %v9143 = vadd.f32 %v9021, %v9082
    %v9144 = vadd.f32 %v9022, %v9084
    %v9145 = vadd.f32 %v9023, %v9086
    %v9146 = vadd.f32 %v9024, %v9088
    %v9147 = vadd.f32 %v9025, %v9090
    %v9148 = vadd.f32 %v9026, %v9092
    %v9149 = vadd.f32 %v9027, %v9094
    %v9150 = vadd.f32 %v9028, %v9096
    %v9151 = vadd.f32 %v9029, %v9098
    %v9152 = vadd.f32 %v9030, %v9100
    %v9153 = vadd.f32 %v9031, %v9102
    %v9154 = vadd.f32 %v9032, %v9104
    %v9155 = vadd.f32 %v9033, %v9106
    %v9156 = vadd.f32 %v9034, %v9108
    %v9157 = vld [vmem:[#allocation6 + $0x48] sm:$0xff]
    %v9158 = vld [vmem:[#allocation6 + $0x58] sm:$0xff]
    %v9159 = vld [vmem:[#allocation6 + $0x68] sm:$0xff]
    %v9160 = vld [vmem:[#allocation6 + $0x78] sm:$0xff]
    %v9161 = vld [vmem:[#allocation6 + $0x88] sm:$0xff]
    %v9162 = vld [vmem:[#allocation6 + $0x98] sm:$0xff]
    %v9163 = vld [vmem:[#allocation6 + $0xa8] sm:$0xff]
    %v9164 = vld [vmem:[#allocation6 + $0xb8] sm:$0xff]
    %v9165 = vld [vmem:[#allocation6 + $0xc8] sm:$0xff]
    %v9166 = vld [vmem:[#allocation6 + $0xd8] sm:$0xff]
    %v9167 = vld [vmem:[#allocation6 + $0xe8] sm:$0xff]
    %v9168 = vld [vmem:[#allocation6 + $0xf8] sm:$0xff]
    %v9169 = vld [vmem:[#allocation6 + $0x108] sm:$0xff]
    %v9170 = vld [vmem:[#allocation6 + $0x118] sm:$0xff]
    %v9171 = vld [vmem:[#allocation6 + $0x128] sm:$0xff]
    %v9172 = vld [vmem:[#allocation6 + $0x138] sm:$0xff]
    %v9173 = vld [vmem:[#allocation6 + $0x148] sm:$0xff]
    %v9174 = vld [vmem:[#allocation6 + $0x158] sm:$0xff]
    %v9175 = vld [vmem:[#allocation6 + $0x168] sm:$0xff]
    %v9176 = vld [vmem:[#allocation6 + $0x178] sm:$0xff]
    %v9177 = vld [vmem:[#allocation6 + $0x188] sm:$0xff]
    %v9178 = vld [vmem:[#allocation6 + $0x198] sm:$0xff]
    %v9179 = vld [vmem:[#allocation6 + $0x1a8] sm:$0xff]
    %v9180 = vld [vmem:[#allocation6 + $0x1b8] sm:$0xff]
    %v9181 = vadd.f32 %v9133, %v9157
    %v9182 = vadd.f32 %v9134, %v9158
    %v9183 = vadd.f32 %v9135, %v9159
    %v9184 = vadd.f32 %v9136, %v9160
    %v9185 = vadd.f32 %v9137, %v9161
    %v9186 = vadd.f32 %v9138, %v9162
    %v9187 = vadd.f32 %v9139, %v9163
    %v9188 = vadd.f32 %v9140, %v9164
    %v9189 = vadd.f32 %v9141, %v9165
    %v9190 = vadd.f32 %v9142, %v9166
    %v9191 = vadd.f32 %v9143, %v9167
    %v9192 = vadd.f32 %v9144, %v9168
    %v9193 = vadd.f32 %v9145, %v9169
    %v9194 = vadd.f32 %v9146, %v9170
    %v9195 = vadd.f32 %v9147, %v9171
    %v9196 = vadd.f32 %v9148, %v9172
    %v9197 = vadd.f32 %v9149, %v9173
    %v9198 = vadd.f32 %v9150, %v9174
    %v9199 = vadd.f32 %v9151, %v9175
    %v9200 = vadd.f32 %v9152, %v9176
    %v9201 = vadd.f32 %v9153, %v9177
    %v9202 = vadd.f32 %v9154, %v9178
    %v9203 = vadd.f32 %v9155, %v9179
    %v9204 = vadd.f32 %v9156, %v9180
    %v9205 = vld [vmem:[#allocation16] sm:$0x1]
    %v9207 = vlaneseq
    %v9208 = vshrl.u32 %v9207, 7
    %v9209 = vsub.s32 0, %v9208
    %v9210 = vrot.slane %v9205, %v9209
    %v9212 = vadd.f32 %v9181, %v9210
    %v9213 = vadd.f32 %v9182, %v9210
    %v9214 = vadd.f32 %v9183, %v9210
    %v9215 = vadd.f32 %v9184, %v9210
    %v9216 = vadd.f32 %v9185, %v9210
    %v9217 = vadd.f32 %v9186, %v9210
    %v9218 = vadd.f32 %v9187, %v9210
    %v9219 = vadd.f32 %v9188, %v9210
    %v9220 = vadd.f32 %v9189, %v9210
    %v9221 = vadd.f32 %v9190, %v9210
    %v9222 = vadd.f32 %v9191, %v9210
    %v9223 = vadd.f32 %v9192, %v9210
    %v9224 = vadd.f32 %v9193, %v9210
    %v9225 = vadd.f32 %v9194, %v9210
    %v9226 = vadd.f32 %v9195, %v9210
    %v9227 = vadd.f32 %v9196, %v9210
    %v9228 = vadd.f32 %v9197, %v9210
    %v9229 = vadd.f32 %v9198, %v9210
    %v9230 = vadd.f32 %v9199, %v9210
    %v9231 = vadd.f32 %v9200, %v9210
    %v9232 = vadd.f32 %v9201, %v9210
    %v9233 = vadd.f32 %v9202, %v9210
    %v9234 = vadd.f32 %v9203, %v9210
    %v9235 = vadd.f32 %v9204, %v9210
    %v9236 = vmax.f32 %v9212, 0.0
    %v9237 = vmax.f32 %v9213, 0.0
    %v9238 = vmax.f32 %v9214, 0.0
    %v9239 = vmax.f32 %v9215, 0.0
    %v9240 = vmax.f32 %v9216, 0.0
    %v9241 = vmax.f32 %v9217, 0.0
    %v9242 = vmax.f32 %v9218, 0.0
    %v9243 = vmax.f32 %v9219, 0.0
    %v9244 = vmax.f32 %v9220, 0.0
    %v9245 = vmax.f32 %v9221, 0.0
    %v9246 = vmax.f32 %v9222, 0.0
    %v9247 = vmax.f32 %v9223, 0.0
    %v9248 = vmax.f32 %v9224, 0.0
    %v9249 = vmax.f32 %v9225, 0.0
    %v9250 = vmax.f32 %v9226, 0.0
    %v9251 = vmax.f32 %v9227, 0.0
    %v9252 = vmax.f32 %v9228, 0.0
    %v9253 = vmax.f32 %v9229, 0.0
    %v9254 = vmax.f32 %v9230, 0.0
    %v9255 = vmax.f32 %v9231, 0.0
    %v9256 = vmax.f32 %v9232, 0.0
    %v9257 = vmax.f32 %v9233, 0.0
    %v9258 = vmax.f32 %v9234, 0.0
    %v9259 = vmax.f32 %v9235, 0.0
    %9260 = vst.msk [vmem:[#allocation7] sm:$0xff] %vm7944, %v9236
    %9261 = vst.msk [vmem:[#allocation7 + $0x8] sm:$0xff] %vm7944, %v9237
    %9262 = vst.msk [vmem:[#allocation7 + $0x10] sm:$0xff] %vm7944, %v9238
    %9263 = vst.msk [vmem:[#allocation7 + $0x18] sm:$0xff] %vm7944, %v9239
    %9264 = vst.msk [vmem:[#allocation7 + $0x20] sm:$0xff] %vm7944, %v9240
    %9265 = vst.msk [vmem:[#allocation7 + $0x28] sm:$0xff] %vm7944, %v9241
    %9266 = vst.msk [vmem:[#allocation7 + $0x30] sm:$0xff] %vm7944, %v9242
    %9267 = vst.msk [vmem:[#allocation7 + $0x38] sm:$0xff] %vm7944, %v9243
    %9268 = vst.msk [vmem:[#allocation7 + $0x40] sm:$0xff] %vm7944, %v9244
    %9269 = vst.msk [vmem:[#allocation7 + $0x48] sm:$0xff] %vm7944, %v9245
    %9270 = vst.msk [vmem:[#allocation7 + $0x50] sm:$0xff] %vm7944, %v9246
    %9271 = vst.msk [vmem:[#allocation7 + $0x58] sm:$0xff] %vm7944, %v9247
    %9272 = vst.msk [vmem:[#allocation7 + $0x60] sm:$0xff] %vm7944, %v9248
    %9273 = vst.msk [vmem:[#allocation7 + $0x68] sm:$0xff] %vm7944, %v9249
    %9274 = vst.msk [vmem:[#allocation7 + $0x70] sm:$0xff] %vm7944, %v9250
    %9275 = vst.msk [vmem:[#allocation7 + $0x78] sm:$0xff] %vm7944, %v9251
    %9276 = vst.msk [vmem:[#allocation7 + $0x80] sm:$0xff] %vm7944, %v9252
    %9277 = vst.msk [vmem:[#allocation7 + $0x88] sm:$0xff] %vm7944, %v9253
    %9278 = vst.msk [vmem:[#allocation7 + $0x90] sm:$0xff] %vm7944, %v9254
    %9279 = vst.msk [vmem:[#allocation7 + $0x98] sm:$0xff] %vm7944, %v9255
    %9280 = vst.msk [vmem:[#allocation7 + $0xa0] sm:$0xff] %vm7944, %v9256
    %9281 = vst.msk [vmem:[#allocation7 + $0xa8] sm:$0xff] %vm7944, %v9257
    %9282 = vst.msk [vmem:[#allocation7 + $0xb0] sm:$0xff] %vm7944, %v9258
    %9283 = vst.msk [vmem:[#allocation7 + $0xb8] sm:$0xff] %vm7944, %v9259
    %v9284 = vld [vmem:[#allocation7] sm:$0xff]
    %v9285 = vld [vmem:[#allocation7 + $0x8] sm:$0xff]
    %v9286 = vld [vmem:[#allocation7 + $0x20] sm:$0xff]
    %v9287 = vld [vmem:[#allocation7 + $0x28] sm:$0xff]
    %v9288 = vld [vmem:[#allocation7 + $0x40] sm:$0xff]
    %v9289 = vld [vmem:[#allocation7 + $0x48] sm:$0xff]
    %v9290 = vld [vmem:[#allocation7 + $0x60] sm:$0xff]
    %v9291 = vld [vmem:[#allocation7 + $0x68] sm:$0xff]
    %v9292 = vld [vmem:[#allocation7 + $0x80] sm:$0xff]
    %v9293 = vld [vmem:[#allocation7 + $0x88] sm:$0xff]
    %v9294 = vld [vmem:[#allocation7 + $0xa0] sm:$0xff]
    %v9295 = vld [vmem:[#allocation7 + $0xa8] sm:$0xff]
    %s9296 = scalar_lea.vmem [#allocation7], 16
    %v9297 = vld [vmem:[%s9296] sm:$0xff]
    %v9298 = vld [vmem:[%s9296 + $0x8] sm:$0xff]
    %v9299 = vld [vmem:[%s9296 + $0x20] sm:$0xff]
    %v9300 = vld [vmem:[%s9296 + $0x28] sm:$0xff]
    %v9301 = vld [vmem:[%s9296 + $0x40] sm:$0xff]
    %v9302 = vld [vmem:[%s9296 + $0x48] sm:$0xff]
    %v9303 = vld [vmem:[%s9296 + $0x60] sm:$0xff]
    %v9304 = vld [vmem:[%s9296 + $0x68] sm:$0xff]
    %v9305 = vld [vmem:[%s9296 + $0x80] sm:$0xff]
    %v9306 = vld [vmem:[%s9296 + $0x88] sm:$0xff]
    %v9307 = vld [vmem:[%s9296 + $0xa0] sm:$0xff]
    %v9308 = vld [vmem:[%s9296 + $0xa8] sm:$0xff]
    %v9309 = vmax.f32 %v9284, %v9297
    %v9310 = vmax.f32 %v9285, %v9298
    %v9311 = vmax.f32 %v9286, %v9299
    %v9312 = vmax.f32 %v9287, %v9300
    %v9313 = vmax.f32 %v9288, %v9301
    %v9314 = vmax.f32 %v9289, %v9302
    %v9315 = vmax.f32 %v9290, %v9303
    %v9316 = vmax.f32 %v9291, %v9304
    %v9317 = vmax.f32 %v9292, %v9305
    %v9318 = vmax.f32 %v9293, %v9306
    %v9319 = vmax.f32 %v9294, %v9307
    %v9320 = vmax.f32 %v9295, %v9308
    %v9321 = vld [vmem:[%s7] sm:$0xff]
    %v9322 = vld [vmem:[%s7 + $0x8] sm:$0xff]
    %v9323 = vld [vmem:[%s7 + $0x10] sm:$0xff]
    %v9324 = vld [vmem:[%s7 + $0x18] sm:$0xff]
    %v9325 = vld [vmem:[%s7 + $0x20] sm:$0xff]
    %v9326 = vld [vmem:[%s7 + $0x28] sm:$0xff]
    %v9327 = vld [vmem:[%s7 + $0x30] sm:$0xff]
    %v9328 = vld [vmem:[%s7 + $0x38] sm:$0xff]
    %v9330 = vsel %vm7944, %v9309, 0
    %v9333 = vsel %vm7944, %v9310, 0
    %v9336 = vsel %vm7944, %v9311, 0
    %v9339 = vsel %vm7944, %v9312, 0
    %v9342 = vsel %vm7944, %v9313, 0
    %v9345 = vsel %vm7944, %v9314, 0
    %v9348 = vsel %vm7944, %v9315, 0
    %v9351 = vsel %vm7944, %v9316, 0
    %v9354 = vsel %vm7944, %v9317, 0
    %v9357 = vsel %vm7944, %v9318, 0
    %v9360 = vsel %vm7944, %v9319, 0
    %v9363 = vsel %vm7944, %v9320, 0
    %9365 = vmatprep.subr.mxu0 0.0
    %9366 = vmatpush1.msra.mxu0 0.0
    %9367 = vmatprep.subr.mxu0 0.0
    %9368 = vmatpush1.msra.mxu0 0.0
    %9369 = vmatprep.subr.mxu0 0.0
    %9370 = vmatpush1.msra.mxu0 0.0
    %9371 = vmatprep.subr.mxu0 0.0
    %9372 = vmatpush1.msra.mxu0 0.0
    %9373 = vmatprep.subr.mxu0 0.0
    %9374 = vmatpush1.msra.mxu0 0.0
    %9375 = vmatprep.subr.mxu0 0.0
    %9376 = vmatpush1.msra.mxu0 0.0
    %9377 = vmatprep.subr.mxu0 0.0
    %9378 = vmatpush1.msra.mxu0 0.0
    %9379 = vmatprep.subr.mxu0 0.0
    %9380 = vmatpush1.msra.mxu0 0.0
    %9381 = vmatprep.subr.mxu0 0.0
    %9382 = vmatpush1.msra.mxu0 %v9328
    %9383 = vmatprep.subr.mxu0 0.0
    %9384 = vmatpush1.msra.mxu0 %v9327
    %9385 = vmatprep.subr.mxu0 0.0
    %9386 = vmatpush1.msra.mxu0 %v9326
    %9387 = vmatprep.subr.mxu0 0.0
    %9388 = vmatpush1.msra.mxu0 %v9325
    %9389 = vmatprep.subr.mxu0 0.0
    %9390 = vmatpush1.msra.mxu0 %v9324
    %9391 = vmatprep.subr.mxu0 0.0
    %9392 = vmatpush1.msra.mxu0 %v9323
    %9393 = vmatprep.subr.mxu0 0.0
    %9394 = vmatpush1.msra.mxu0 %v9322
    %9395 = vmatprep.subr.mxu0 0.0
    %9396 = vmatpush1.msra.mxu0 %v9321
    %9397 = vmatprep.subr.mxu0 0.0
    %9398 = vmatpush2.msra.mxu0 0.0
    %9399 = vmatprep.subr.mxu0 0.0
    %9400 = vmatpush2.msra.mxu0 0.0
    %9401 = vmatprep.subr.mxu0 0.0
    %9402 = vmatpush2.msra.mxu0 0.0
    %9403 = vmatprep.subr.mxu0 0.0
    %9404 = vmatpush2.msra.mxu0 0.0
    %9405 = vmatprep.subr.mxu0 0.0
    %9406 = vmatpush2.msra.mxu0 0.0
    %9407 = vmatprep.subr.mxu0 0.0
    %9408 = vmatpush2.msra.mxu0 0.0
    %9409 = vmatprep.subr.mxu0 0.0
    %9410 = vmatpush2.msra.mxu0 0.0
    %9411 = vmatprep.subr.mxu0 0.0
    %9412 = vmatpush2.msra.mxu0 0.0
    %9413 = vmatprep.subr.mxu0 0.0
    %9414 = vmatpush2.msra.mxu0 0.0
    %9415 = vmatprep.subr.mxu0 0.0
    %9416 = vmatpush2.msra.mxu0 0.0
    %9417 = vmatprep.subr.mxu0 0.0
    %9418 = vmatpush2.msra.mxu0 0.0
    %9419 = vmatprep.subr.mxu0 0.0
    %9420 = vmatpush2.msra.mxu0 0.0
    %9421 = vmatprep.subr.mxu0 0.0
    %9422 = vmatpush2.msra.mxu0 0.0
    %9423 = vmatprep.subr.mxu0 0.0
    %9424 = vmatpush2.msra.mxu0 0.0
    %9425 = vmatprep.subr.mxu0 0.0
    %9426 = vmatpush2.msra.mxu0 0.0
    %9427 = vmatprep.subr.mxu0 0.0
    %9428 = vmatpush2.msra.mxu0 0.0
    %9429 = vmatprep.mubr.f32.mxu0 0.0
    %9430 = vmatmul.mubr.f32.gmra.mxu0 %v9330
    %v9431 = vpop.f32.mrf.mxu0
    %v9432 = vadd.f32 0.0, %v9431
    %v9433 = vpop.f32.mrf.mxu0
    %9434 = vmatprep.mubr.f32.mxu0 0.0
    %9435 = vmatmul.mubr.f32.gmra.mxu0 %v9333
    %v9436 = vpop.f32.mrf.mxu0
    %v9437 = vadd.f32 0.0, %v9436
    %v9438 = vpop.f32.mrf.mxu0
    %9439 = vmatprep.mubr.f32.mxu0 0.0
    %9440 = vmatmul.mubr.f32.gmra.mxu0 %v9336
    %v9441 = vpop.f32.mrf.mxu0
    %v9442 = vadd.f32 0.0, %v9441
    %v9443 = vpop.f32.mrf.mxu0
    %9444 = vmatprep.mubr.f32.mxu0 0.0
    %9445 = vmatmul.mubr.f32.gmra.mxu0 %v9339
    %v9446 = vpop.f32.mrf.mxu0
    %v9447 = vadd.f32 0.0, %v9446
    %v9448 = vpop.f32.mrf.mxu0
    %9449 = vmatprep.mubr.f32.mxu0 0.0
    %9450 = vmatmul.mubr.f32.gmra.mxu0 %v9342
    %v9451 = vpop.f32.mrf.mxu0
    %v9452 = vadd.f32 0.0, %v9451
    %v9453 = vpop.f32.mrf.mxu0
    %9454 = vmatprep.mubr.f32.mxu0 0.0
    %9455 = vmatmul.mubr.f32.gmra.mxu0 %v9345
    %v9456 = vpop.f32.mrf.mxu0
    %v9457 = vadd.f32 0.0, %v9456
    %v9458 = vpop.f32.mrf.mxu0
    %9459 = vmatprep.mubr.f32.mxu0 0.0
    %9460 = vmatmul.mubr.f32.gmra.mxu0 %v9348
    %v9461 = vpop.f32.mrf.mxu0
    %v9462 = vadd.f32 0.0, %v9461
    %v9463 = vpop.f32.mrf.mxu0
    %9464 = vmatprep.mubr.f32.mxu0 0.0
    %9465 = vmatmul.mubr.f32.gmra.mxu0 %v9351
    %v9466 = vpop.f32.mrf.mxu0
    %v9467 = vadd.f32 0.0, %v9466
    %v9468 = vpop.f32.mrf.mxu0
    %9469 = vmatprep.mubr.f32.mxu0 0.0
    %9470 = vmatmul.mubr.f32.gmra.mxu0 %v9354
    %v9471 = vpop.f32.mrf.mxu0
    %v9472 = vadd.f32 0.0, %v9471
    %v9473 = vpop.f32.mrf.mxu0
    %9474 = vmatprep.mubr.f32.mxu0 0.0
    %9475 = vmatmul.mubr.f32.gmra.mxu0 %v9357
    %v9476 = vpop.f32.mrf.mxu0
    %v9477 = vadd.f32 0.0, %v9476
    %v9478 = vpop.f32.mrf.mxu0
    %9479 = vmatprep.mubr.f32.mxu0 0.0
    %9480 = vmatmul.mubr.f32.gmra.mxu0 %v9360
    %v9481 = vpop.f32.mrf.mxu0
    %v9482 = vadd.f32 0.0, %v9481
    %v9483 = vpop.f32.mrf.mxu0
    %9484 = vmatprep.mubr.f32.mxu0 0.0
    %9485 = vmatmul.mubr.f32.gmra.mxu0 %v9363
    %v9486 = vpop.f32.mrf.mxu0
    %v9487 = vadd.f32 0.0, %v9486
    %v9488 = vpop.f32.mrf.mxu0
    %9489 = vdwg.mxu0
    %v9490 = vld [vmem:[#allocation18] sm:$0x1]
    %v9492 = vlaneseq
    %v9493 = vshrl.u32 %v9492, 7
    %v9494 = vsub.s32 0, %v9493
    %v9495 = vrot.slane %v9490, %v9494
    %v9497 = vadd.f32 %v9495, %v9432
    %v9498 = vadd.f32 %v9495, %v9437
    %9501 = vrot.lane.b32.xlu0 %v9442, 126
    %v9502 = vpop.permute.xlu0 %9501
    %9503 = vrot.lane.b32.xlu0 %v9447, 126
    %v9504 = vpop.permute.xlu0 %9503
    %v9507 = vadd.f32 %v9497, %v9502
    %v9508 = vadd.f32 %v9498, %v9504
    %9511 = vrot.lane.b32.xlu0 %v9452, 124
    %v9512 = vpop.permute.xlu0 %9511
    %9513 = vrot.lane.b32.xlu0 %v9457, 124
    %v9514 = vpop.permute.xlu0 %9513
    %v9517 = vadd.f32 %v9507, %v9512
    %v9518 = vadd.f32 %v9508, %v9514
    %9521 = vrot.lane.b32.xlu0 %v9462, 122
    %v9522 = vpop.permute.xlu0 %9521
    %9523 = vrot.lane.b32.xlu0 %v9467, 122
    %v9524 = vpop.permute.xlu0 %9523
    %v9527 = vadd.f32 %v9517, %v9522
    %v9528 = vadd.f32 %v9518, %v9524
    %9531 = vrot.lane.b32.xlu0 %v9472, 120
    %v9532 = vpop.permute.xlu0 %9531
    %9533 = vrot.lane.b32.xlu0 %v9477, 120
    %v9534 = vpop.permute.xlu0 %9533
    %v9537 = vadd.f32 %v9527, %v9532
    %v9538 = vadd.f32 %v9528, %v9534
    %9541 = vrot.lane.b32.xlu0 %v9482, 118
    %v9542 = vpop.permute.xlu0 %9541
    %9543 = vrot.lane.b32.xlu0 %v9487, 118
    %v9544 = vpop.permute.xlu0 %9543
    %v9547 = vadd.f32 %v9537, %v9542
    %v9548 = vadd.f32 %v9538, %v9544
    %vm9549 = vcmask 15360
    %9550 = vst.msk [vmem:[%s9] sm:$0xff] %vm9549, %v9547
    %9551 = vst.msk [vmem:[%s9 + $0x8] sm:$0xff] %vm9549, %v9548
    // Predicated region
    $region66: #{tpu_custom_call.1} parent=1 // pred_check
      _
    $region67: #{tpu_custom_call.1} parent=1 // pred_check_branch
      %9553 = sbr.rel (0) target = $region69
    $region68: #{tpu_custom_call.1} parent=1 // pred_region
      _
    $region69: #{tpu_custom_call.1} parent=1 // pred_fallthru
      _
    // Predicated region
    $region70: #{tpu_custom_call.1} parent=1 // pred_check
      _
    $region71: #{tpu_custom_call.1} parent=1 // pred_check_branch
      %9555 = sbr.rel (0) target = $region73
    $region72: #{tpu_custom_call.1} parent=1 // pred_region
      _
    $region73: #{tpu_custom_call.1} parent=1 // pred_fallthru
      _
    %9556 = vsyncpa [#allocation9], 1
    %9557 = vsyncpa [#allocation11], 1
    %9558 = vsyncpa [#allocation14], 1
    %9559 = vsyncpa [#allocation17], 1

</llo_original>
